<compile_context>
chip_gen: v6e
topology: v6e:2x2x1
jax: 0.10.0
libtpu: 0.0.40
codegen_flags: <defaults>
</compile_context>

<pallas_src>
import functools

import numpy as np
import jax
import jax.numpy as jnp
from jax.experimental import pallas as pl
from jax.experimental.pallas import tpu as pltpu


# -----------------------------------------------------------------------------
# Host-side (numpy) geometry: equirect pixel -> (face, bilinear taps) matrix.
# Built once at setup time; never traced / executed on device.
# -----------------------------------------------------------------------------
def build_sampling_matrix_T(face_w: int) -> np.ndarray:
    """Returns S^T of shape (6*W*W, 8*W*W) f32: equi_flat = cube_flat @ S^T."""
    W = face_w
    out_h, out_w = 2 * W, 4 * W
    P, K = out_h * out_w, 6 * W * W

    ii, jj = np.meshgrid(np.arange(out_h, dtype=np.float64),
                         np.arange(out_w, dtype=np.float64), indexing="ij")
    theta = (2.0 * (jj + 0.5) / out_w - 1.0) * np.pi            # longitude
    phi = (2.0 * (ii + 0.5) / out_h - 1.0) * (np.pi / 2.0)      # latitude

    x = np.cos(phi) * np.cos(theta)
    y = np.cos(phi) * np.sin(theta)
    z = np.sin(phi)
    ax, ay, az = np.abs(x), np.abs(y), np.abs(z)

    is_x = (ax >= ay) & (ax >= az)
    is_y = (~is_x) & (ay >= az)
    is_z = (~is_x) & (~is_y)

    face = np.where(is_x, np.where(x >= 0, 0, 1),
                    np.where(is_y, np.where(y >= 0, 2, 3),
                             np.where(z >= 0, 4, 5))).astype(np.int32)

    major = np.maximum(np.maximum(ax, ay), az) + 1e-12
    u = np.where(is_x, y, x) / major          # in [-1, 1]
    v = np.where(is_z, y, z) / major          # in [-1, 1]

    # norm_to_cube + grid_sample(align_corners=True): [-1, 1] -> [0, W-1]
    col = (u + 1.0) * 0.5 * (W - 1)
    row = (v + 1.0) * 0.5 * (W - 1)

    x0 = np.clip(np.floor(col), 0, W - 1)
    y0 = np.clip(np.floor(row), 0, W - 1)
    fx, fy = col - x0, row - y0
    x0i, y0i = x0.astype(np.int32), y0.astype(np.int32)
    x1i = np.minimum(x0i + 1, W - 1)
    y1i = np.minimum(y0i + 1, W - 1)

    base = face * (W * W)
    p = (ii.astype(np.int32) * out_w + jj.astype(np.int32)).reshape(-1)

    def flat(yi, xi):
        return (base + yi * W + xi).reshape(-1)

    w00 = ((1.0 - fy) * (1.0 - fx)).reshape(-1).astype(np.float32)
    w01 = ((1.0 - fy) * fx).reshape(-1).astype(np.float32)
    w10 = (fy * (1.0 - fx)).reshape(-1).astype(np.float32)
    w11 = (fy * fx).reshape(-1).astype(np.float32)

    s = np.zeros((P, K), np.float32)
    np.add.at(s, (p, flat(y0i, x0i)), w00)
    np.add.at(s, (p, flat(y0i, x1i)), w01)
    np.add.at(s, (p, flat(y1i, x0i)), w10)
    np.add.at(s, (p, flat(y1i, x1i)), w11)
    return np.ascontiguousarray(s.T)                 # (K, P)


def make_c2eb_constants(face_w, conv_w, gamma, beta, batch):
    """Host-side precompute, hoisted out of the jitted forward (perf review)."""
    W = face_w
    WO = 4 * W
    P = (2 * W) * WO
    C = int(np.asarray(conv_w).shape[0])
    B = batch

    # bf16 sampling matrix: halves HBM/VMEM traffic; MXU-native dtype.
    s_t = jnp.asarray(build_sampling_matrix_T(W), dtype=jnp.bfloat16)  # (K, P)

    # Block-diagonal per-tap conv weights kron(I_B, W[:,:,ky,kx]): one
    # (B*Cout, B*Cin) matmul per tap covers the whole batch.
    # TODO(synk): fold B into the lane dim (activations (C, B*P)) instead of
    # kron to avoid the (B-1)/B wasted MACs when B or C grow.
    w_np = np.asarray(conv_w, np.float32)
    eye_b = np.eye(B, dtype=np.float32)
    bigw = np.stack([np.kron(eye_b, w_np[:, :, ky, kx])
                     for ky in range(3) for kx in range(3)], axis=0)  # (9,BC,BC)

    # Row-wrap validity masks, only for the kx=0 / kx=2 taps (kx=1 needs none).
    wcol = np.arange(P, dtype=np.int64) % WO
    masks = np.stack([(wcol != 0).astype(np.float32),         # kx=0 (dx=-1)
                      (wcol != WO - 1).astype(np.float32)],   # kx=2 (dx=+1)
                     axis=0)                                   # (2, P)

    g3 = jnp.asarray(np.asarray(gamma, np.float32).reshape(1, C, 1))
    b3 = jnp.asarray(np.asarray(beta, np.float32).reshape(1, C, 1))
    return s_t, jnp.asarray(bigw), jnp.asarray(masks), g3, b3


# -----------------------------------------------------------------------------
# Kernel 1: Cube2Equi as a P-tiled MXU matmul (bf16 in, f32 out); K is folded
# into the block so there is no accumulator and no init/finalize.
# -----------------------------------------------------------------------------
def _c2e_matmul_kernel(cube_ref, st_ref, o_ref):
    # cube_ref: (B*C, K) bf16, st_ref: (K, TP) bf16, o_ref: (B*C, TP) f32
    o_ref[...] = jnp.dot(cube_ref[...], st_ref[...],
                         preferred_element_type=jnp.float32)


# -----------------------------------------------------------------------------
# Kernel 2: fused Conv3x3 (9 shifted block-diag MXU matmuls) + training-mode
# BatchNorm2d.  All heavy work is done in 512-lane P chunks to bound vreg
# pressure; o_ref doubles as the conv-output storage (no extra scratch).
# -----------------------------------------------------------------------------
def _conv_bn_kernel(x_ref, w_ref, m_ref, g_ref, b_ref, o_ref, xp_ref,
                    *, B, C, WO, P, eps, halo, chunk):
    # x_ref : (B*C, P) f32   flattened equirect activations (P = H*WO lanes)
    # w_ref : (9, B*C, B*C)  per-tap block-diag weights kron(I_B, W[:,:,ky,kx])
    # m_ref : (2, P)         row-wrap validity masks (kx=0 row 0, kx=2 row 1)
    # g_ref/b_ref : (1, C, 1) BN affine params
    # xp_ref: (B*C, P + 2*halo) VMEM scratch; zero halo handles the H boundary
    BC = B * C
    n_chunks = P // chunk
    inv_n = 1.0 / (B * P)

    # Zero only the two halo strips (not the whole buffer), then copy x in.
    xp_ref[:, :halo] = jnp.zeros((BC, halo), jnp.float32)
    xp_ref[:, halo + P:P + 2 * halo] = jnp.zeros((BC, halo), jnp.float32)
    xp_ref[:, halo:halo + P] = x_ref[...]

    # Pass 1: 3x3 conv, chunked over P; per-channel sums for BN mean are
    # folded into the same pass.
    s = jnp.zeros((1, C, 1), jnp.float32)
    for ci in range(n_chunks):
        p0 = ci * chunk
        acc = jnp.zeros((BC, chunk), jnp.float32)
        for ky in range(3):
            for kx in range(3):
                t = ky * 3 + kx
                d = (ky - 1) * WO + (kx - 1)          # flattened tap offset
                base = halo + d + p0                  # static (Python int)
                shifted = xp_ref[:, base:base + chunk]
                if kx != 1:                           # kx==1 mask is all-ones
                    mrow = 0 if kx == 0 else 1
                    shifted = shifted * m_ref[mrow:mrow + 1, p0:p0 + chunk]
                acc = acc + jnp.dot(w_ref[t], shifted,
                                    preferred_element_type=jnp.float32)
        o_ref[:, p0:p0 + chunk] = acc
        a3 = acc.reshape(B, C, chunk)
        s = s + jnp.sum(jnp.sum(a3, axis=2, keepdims=True),
                        axis=0, keepdims=True)
    mean = s * inv_n                                  # (1, C, 1)

    # Pass 2: per-channel biased variance (two-pass, matches BatchNorm2d).
    v = jnp.zeros((1, C, 1), jnp.float32)
    for ci in range(n_chunks):
        p0 = ci * chunk
        xm = o_ref[:, p0:p0 + chunk].reshape(B, C, chunk) - mean
        v = v + jnp.sum(jnp.sum(xm * xm, axis=2, keepdims=True),
                        axis=0, keepdims=True)
    inv_std = jax.lax.rsqrt(v * inv_n + eps)
    scale = inv_std * g_ref[...]                      # (1, C, 1)
    shift = b_ref[...] - mean * scale                 # (1, C, 1)

    # Pass 3: normalize + affine, chunk by chunk, in place in o_ref.
    for ci in range(n_chunks):
        p0 = ci * chunk
        xc = o_ref[:, p0:p0 + chunk].reshape(B, C, chunk)
        o_ref[:, p0:p0 + chunk] = (xc * scale + shift).reshape(BC, chunk)


# -----------------------------------------------------------------------------
# Wrapper: C2EB.forward (all constants are host-precomputed and passed in).
# -----------------------------------------------------------------------------
@functools.partial(jax.jit, static_argnames=("eps",))
def c2eb_forward(cube_list, s_t, bigw, masks, g3, b3, eps=1e-5):
    B, C, W, W2 = cube_list[0].shape
    assert W == W2 and len(cube_list) == 6
    H, WO = 2 * W, 4 * W
    P, K = H * WO, 6 * W * W
    BC = B * C

    # Faces stacked on axis=2 -> (B, C, 6, W, W); flatten is zero-copy.
    cube_flat = jnp.stack(cube_list, axis=2).reshape(BC, K).astype(jnp.bfloat16)

    TP = 512 if P % 512 == 0 else (256 if P % 256 == 0 else P)

    # --- kernel 1: Cube2Equi (grid_sample) as a P-tiled MXU matmul ----------
    # Per-step VMEM ~= 2*(K*TP + BC*K)*2B + 2*(BC*TP)*4B ~ 3.1 MB -> fits the
    # default scoped VMEM limit on v5e/v6e/v7x.  4 lane-dense "parallel" steps.
    equi_flat = pl.pallas_call(
        _c2e_matmul_kernel,
        out_shape=jax.ShapeDtypeStruct((BC, P), jnp.float32),
        grid=(P // TP,),
        in_specs=[pl.BlockSpec((BC, K), lambda p: (0, 0)),
                  pl.BlockSpec((K, TP), lambda p: (0, p))],
        out_specs=pl.BlockSpec((BC, TP), lambda p: (0, p)),
        compiler_params=pltpu.CompilerParams(
            dimension_semantics=("parallel",)),
        cost_estimate=pl.CostEstimate(
            flops=2 * BC * K * P, transcendentals=0,
            bytes_accessed=K * P * 2 + BC * K * 2 + BC * P * 4),
    )(cube_flat, s_t)

    # --- kernel 2: fused Conv3x3 + BatchNorm2d -------------------------------
    # Single invocation: BatchNorm needs global batch statistics and the whole
    # activation (~64 KB) lives comfortably in VMEM.
    halo = max(128, ((WO + 1 + 127) // 128) * 128)   # lane-aligned, >= WO+1
    chunk = 512 if P % 512 == 0 else P
    out_flat = pl.pallas_call(
        functools.partial(_conv_bn_kernel, B=B, C=C, WO=WO, P=P, eps=eps,
                          halo=halo, chunk=chunk),
        out_shape=jax.ShapeDtypeStruct((BC, P), jnp.float32),
        in_specs=[pl.BlockSpec((BC, P), lambda: (0, 0)),
                  pl.BlockSpec((9, BC, BC), lambda: (0, 0, 0)),
                  pl.BlockSpec((2, P), lambda: (0, 0)),
                  # TODO(synk): gamma/beta are 4 scalars; SMEM would be the
                  # idiomatic home — kept as tiny VMEM blocks for robustness.
                  pl.BlockSpec((1, C, 1), lambda: (0, 0, 0)),
                  pl.BlockSpec((1, C, 1), lambda: (0, 0, 0))],
        out_specs=pl.BlockSpec((BC, P), lambda: (0, 0)),
        scratch_shapes=[pltpu.VMEM((BC, P + 2 * halo), jnp.float32)],
    )(equi_flat, bigw, masks, g3, b3)

    return out_flat.reshape(B, C, H, WO)


# -----------------------------------------------------------------------------
# Pure-JAX reference (same sampling geometry) for a loose numerical cross-check.
# -----------------------------------------------------------------------------
def _reference_forward(cube_list, conv_w, gamma, beta, eps=1e-5):
    B, C, W, _ = cube_list[0].shape
    H, WO = 2 * W, 4 * W
    cube_flat = jnp.stack(cube_list, axis=2).reshape(B * C, 6 * W * W)
    s_t = jnp.asarray(build_sampling_matrix_T(W), jnp.float32)   # (K, P)
    equi = (cube_flat.astype(jnp.float32) @ s_t).reshape(B, C, H, WO)
    conv = jax.lax.conv_general_dilated(
        equi, conv_w.astype(jnp.float32), window_strides=(1, 1),
        padding=((1, 1), (1, 1)),
        dimension_numbers=("NCHW", "OIHW", "NCHW"))
    mean = jnp.mean(conv, axis=(0, 2, 3), keepdims=True)
    var = jnp.mean((conv - mean) ** 2, axis=(0, 2, 3), keepdims=True)
    return ((conv - mean) * jax.lax.rsqrt(var + eps)
            * gamma.reshape(1, C, 1, 1) + beta.reshape(1, C, 1, 1))


if __name__ == "__main__":
    key = jax.random.PRNGKey(0)
    B, C, W = 2, 4, 16                      # inter_channel = 4, face width = 16
    keys = jax.random.split(key, 9)

    # cubefeature_list: 6 cube-face feature maps, each (B, C, W, W)
    cube_list = [jax.random.normal(keys[i], (B, C, W, W), jnp.float32)
                 for i in range(6)]
    # Conv2d(C, C, 3, bias=False) + BatchNorm2d(C) parameters
    conv_w = 0.1 * jax.random.normal(keys[6], (C, C, 3, 3), jnp.float32)
    gamma = 1.0 + 0.1 * jax.random.normal(keys[7], (C,), jnp.float32)
    beta = 0.1 * jax.random.normal(keys[8], (C,), jnp.float32)

    # Host-side precompute (once): sampling matrix, per-tap weights, masks.
    s_t, bigw, masks, g3, b3 = make_c2eb_constants(W, conv_w, gamma, beta, B)

    out = jax.block_until_ready(
        c2eb_forward(cube_list, s_t, bigw, masks, g3, b3))

    assert out.shape == (B, C, 2 * W, 4 * W), out.shape
    assert bool(jnp.all(jnp.isfinite(out)))

    # Loose cross-check (kernel uses bf16 for the sampling matmul -> small
    # numerical differences vs the f32 reference are expected).
    ref = _reference_forward(cube_list, conv_w, gamma, beta)
    err = float(jnp.max(jnp.abs(out - ref)))
    assert err < 0.25, f"max abs err {err}"
    print("KERNEL_OK")
</pallas_src>

<mosaic_0001>
module attributes {stable_mosaic.version = 11 : i64} {
  func.func @_c2e_matmul_kernel(%arg0: i32, %arg1: memref<8x1536xbf16, #tpu.memory_space<vmem>>, %arg2: memref<1536x512xbf16, #tpu.memory_space<vmem>>, %arg3: memref<8x512xf32, #tpu.memory_space<vmem>>) attributes {dimension_semantics = [#tpu.dimension_semantics<parallel>], iteration_bounds = array<i64: 4>, scalar_prefetch = 0 : i64, scratch_operands = 0 : i64, tpu.core_type = #tpu.core_type<tc>, window_params = [{pipeline_mode = #tpu.pipeline_mode<synchronous>, transform_indices = @transform_0, window_bounds = array<i64: 8, 1536>}, {transform_indices = @transform_1, window_bounds = array<i64: 1536, 512>}, {transform_indices = @transform_2, window_bounds = array<i64: 8, 512>}]} {
    %c0 = arith.constant 0 : index
    %c0_0 = arith.constant 0 : index
    %0 = vector.load %arg1[%c0, %c0_0] : memref<8x1536xbf16, #tpu.memory_space<vmem>>, vector<8x1536xbf16>
    %c0_1 = arith.constant 0 : index
    %c0_2 = arith.constant 0 : index
    %1 = vector.load %arg2[%c0_1, %c0_2] : memref<1536x512xbf16, #tpu.memory_space<vmem>>, vector<1536x512xbf16>
    %cst = arith.constant dense<0.000000e+00> : vector<8x512xf32>
    %2 = tpu.matmul %0, %1, %cst {dimension_numbers = #tpu.dot_dimension_numbers<[1], [0], [0], [1], [0, 0, 1, 1], [], []>} : vector<8x1536xbf16>, vector<1536x512xbf16>, vector<8x512xf32> -> vector<8x512xf32>
    %c0_3 = arith.constant 0 : index
    %c0_4 = arith.constant 0 : index
    %3 = vector.load %arg3[%c0_3, %c0_4] : memref<8x512xf32, #tpu.memory_space<vmem>>, vector<8x512xf32>
    tpu.vector_store %arg3[%c0_3, %c0_4], %2 {strides = array<i32>} : memref<8x512xf32, #tpu.memory_space<vmem>>, vector<8x512xf32>,
    return
  }
  func.func @transform_0(%arg0: i32) -> (i32, i32) {
    %c0_i32 = arith.constant 0 : i32
    %c0_i32_0 = arith.constant 0 : i32
    %c0_i32_1 = arith.constant 0 : i32
    return %c0_i32, %c0_i32_0 : i32, i32
  }
  func.func @transform_1(%arg0: i32) -> (i32, i32) {
    %c0_i32 = arith.constant 0 : i32
    %c0_i32_0 = arith.constant 0 : i32
    return %c0_i32, %arg0 : i32, i32
  }
  func.func @transform_2(%arg0: i32) -> (i32, i32) {
    %c0_i32 = arith.constant 0 : i32
    %c0_i32_0 = arith.constant 0 : i32
    return %c0_i32, %arg0 : i32, i32
  }
}

module attributes {stable_mosaic.version = 11 : i64} {
  func.func @_conv_bn_kernel(%arg0: memref<8x2048xf32, #tpu.memory_space<vmem>>, %arg1: memref<9x8x8xf32, #tpu.memory_space<vmem>>, %arg2: memref<2x2048xf32, #tpu.memory_space<vmem>>, %arg3: memref<1x4x1xf32, #tpu.memory_space<vmem>>, %arg4: memref<1x4x1xf32, #tpu.memory_space<vmem>>, %arg5: memref<8x2048xf32, #tpu.memory_space<vmem>>, %arg6: memref<8x2304xf32, #tpu.memory_space<vmem>>) attributes {dimension_semantics = [], scalar_prefetch = 0 : i64, scratch_operands = 1 : i64, tpu.core_type = #tpu.core_type<tc>} {
    %cst = arith.constant 0.000000e+00 : f32
    %0 = vector.broadcast %cst : f32 to vector<8x128xf32>
    %c0 = arith.constant 0 : index
    %c0_0 = arith.constant 0 : index
    %1 = vector.load %arg6[%c0, %c0_0] : memref<8x2304xf32, #tpu.memory_space<vmem>>, vector<8x128xf32>
    tpu.vector_store %arg6[%c0, %c0_0], %0 {strides = array<i32>} : memref<8x2304xf32, #tpu.memory_space<vmem>>, vector<8x128xf32>,
    %cst_1 = arith.constant 0.000000e+00 : f32
    %2 = vector.broadcast %cst_1 : f32 to vector<8x128xf32>
    %c0_2 = arith.constant 0 : index
    %c2176 = arith.constant 2176 : index
    %3 = vector.load %arg6[%c0_2, %c2176] : memref<8x2304xf32, #tpu.memory_space<vmem>>, vector<8x128xf32>
    tpu.vector_store %arg6[%c0_2, %c2176], %2 {strides = array<i32>} : memref<8x2304xf32, #tpu.memory_space<vmem>>, vector<8x128xf32>,
    %c0_3 = arith.constant 0 : index
    %c0_4 = arith.constant 0 : index
    %4 = vector.load %arg0[%c0_3, %c0_4] : memref<8x2048xf32, #tpu.memory_space<vmem>>, vector<8x2048xf32>
    %c0_5 = arith.constant 0 : index
    %c128 = arith.constant 128 : index
    %5 = vector.load %arg6[%c0_5, %c128] : memref<8x2304xf32, #tpu.memory_space<vmem>>, vector<8x2048xf32>
    tpu.vector_store %arg6[%c0_5, %c128], %4 {strides = array<i32>} : memref<8x2304xf32, #tpu.memory_space<vmem>>, vector<8x2048xf32>,
    %cst_6 = arith.constant 0.000000e+00 : f32
    %6 = vector.broadcast %cst_6 : f32 to vector<1x4x1xf32>
    %cst_7 = arith.constant 0.000000e+00 : f32
    %7 = vector.broadcast %cst_7 : f32 to vector<8x512xf32>
    %c0_8 = arith.constant 0 : index
    %c63 = arith.constant 63 : index
    %8 = vector.load %arg6[%c0_8, %c63] : memref<8x2304xf32, #tpu.memory_space<vmem>>, vector<8x512xf32>
    %c0_9 = arith.constant 0 : index
    %c0_10 = arith.constant 0 : index
    %9 = vector.load %arg2[%c0_9, %c0_10] : memref<2x2048xf32, #tpu.memory_space<vmem>>, vector<1x512xf32>
    %10 = vector.broadcast %9 : vector<1x512xf32> to vector<8x512xf32>
    %11 = arith.mulf %8, %10 : vector<8x512xf32>
    %c0_11 = arith.constant 0 : index
    %c0_12 = arith.constant 0 : index
    %c0_13 = arith.constant 0 : index
    %12 = vector.load %arg1[%c0_11, %c0_12, %c0_13] : memref<9x8x8xf32, #tpu.memory_space<vmem>>, vector<1x8x8xf32>
    %13 = vector.shape_cast %12 : vector<1x8x8xf32> to vector<8x8xf32>
    %cst_14 = arith.constant dense<0.000000e+00> : vector<8x512xf32>
    %14 = tpu.matmul %13, %11, %cst_14 {dimension_numbers = #tpu.dot_dimension_numbers<[1], [0], [0], [1], [0, 0, 1, 1], [], []>} : vector<8x8xf32>, vector<8x512xf32>, vector<8x512xf32> -> vector<8x512xf32>
    %15 = arith.addf %7, %14 : vector<8x512xf32>
    %c0_15 = arith.constant 0 : index
    %c64 = arith.constant 64 : index
    %16 = vector.load %arg6[%c0_15, %c64] : memref<8x2304xf32, #tpu.memory_space<vmem>>, vector<8x512xf32>
    %c1 = arith.constant 1 : index
    %c0_16 = arith.constant 0 : index
    %c0_17 = arith.constant 0 : index
    %17 = vector.load %arg1[%c1, %c0_16, %c0_17] : memref<9x8x8xf32, #tpu.memory_space<vmem>>, vector<1x8x8xf32>
    %18 = vector.shape_cast %17 : vector<1x8x8xf32> to vector<8x8xf32>
    %cst_18 = arith.constant dense<0.000000e+00> : vector<8x512xf32>
    %19 = tpu.matmul %18, %16, %cst_18 {dimension_numbers = #tpu.dot_dimension_numbers<[1], [0], [0], [1], [0, 0, 1, 1], [], []>} : vector<8x8xf32>, vector<8x512xf32>, vector<8x512xf32> -> vector<8x512xf32>
    %20 = arith.addf %15, %19 : vector<8x512xf32>
    %c0_19 = arith.constant 0 : index
    %c65 = arith.constant 65 : index
    %21 = vector.load %arg6[%c0_19, %c65] : memref<8x2304xf32, #tpu.memory_space<vmem>>, vector<8x512xf32>
    %c1_20 = arith.constant 1 : index
    %c0_21 = arith.constant 0 : index
    %22 = vector.load %arg2[%c1_20, %c0_21] : memref<2x2048xf32, #tpu.memory_space<vmem>>, vector<1x512xf32>
    %23 = vector.broadcast %22 : vector<1x512xf32> to vector<8x512xf32>
    %24 = arith.mulf %21, %23 : vector<8x512xf32>
    %c2 = arith.constant 2 : index
    %c0_22 = arith.constant 0 : index
    %c0_23 = arith.constant 0 : index
    %25 = vector.load %arg1[%c2, %c0_22, %c0_23] : memref<9x8x8xf32, #tpu.memory_space<vmem>>, vector<1x8x8xf32>
    %26 = vector.shape_cast %25 : vector<1x8x8xf32> to vector<8x8xf32>
    %cst_24 = arith.constant dense<0.000000e+00> : vector<8x512xf32>
    %27 = tpu.matmul %26, %24, %cst_24 {dimension_numbers = #tpu.dot_dimension_numbers<[1], [0], [0], [1], [0, 0, 1, 1], [], []>} : vector<8x8xf32>, vector<8x512xf32>, vector<8x512xf32> -> vector<8x512xf32>
    %28 = arith.addf %20, %27 : vector<8x512xf32>
    %c0_25 = arith.constant 0 : index
    %c127 = arith.constant 127 : index
    %29 = vector.load %arg6[%c0_25, %c127] : memref<8x2304xf32, #tpu.memory_space<vmem>>, vector<8x512xf32>
    %c0_26 = arith.constant 0 : index
    %c0_27 = arith.constant 0 : index
    %30 = vector.load %arg2[%c0_26, %c0_27] : memref<2x2048xf32, #tpu.memory_space<vmem>>, vector<1x512xf32>
    %31 = vector.broadcast %30 : vector<1x512xf32> to vector<8x512xf32>
    %32 = arith.mulf %29, %31 : vector<8x512xf32>
    %c3 = arith.constant 3 : index
    %c0_28 = arith.constant 0 : index
    %c0_29 = arith.constant 0 : index
    %33 = vector.load %arg1[%c3, %c0_28, %c0_29] : memref<9x8x8xf32, #tpu.memory_space<vmem>>, vector<1x8x8xf32>
    %34 = vector.shape_cast %33 : vector<1x8x8xf32> to vector<8x8xf32>
    %cst_30 = arith.constant dense<0.000000e+00> : vector<8x512xf32>
    %35 = tpu.matmul %34, %32, %cst_30 {dimension_numbers = #tpu.dot_dimension_numbers<[1], [0], [0], [1], [0, 0, 1, 1], [], []>} : vector<8x8xf32>, vector<8x512xf32>, vector<8x512xf32> -> vector<8x512xf32>
    %36 = arith.addf %28, %35 : vector<8x512xf32>
    %c0_31 = arith.constant 0 : index
    %c128_32 = arith.constant 128 : index
    %37 = vector.load %arg6[%c0_31, %c128_32] : memref<8x2304xf32, #tpu.memory_space<vmem>>, vector<8x512xf32>
    %c4 = arith.constant 4 : index
    %c0_33 = arith.constant 0 : index
    %c0_34 = arith.constant 0 : index
    %38 = vector.load %arg1[%c4, %c0_33, %c0_34] : memref<9x8x8xf32, #tpu.memory_space<vmem>>, vector<1x8x8xf32>
    %39 = vector.shape_cast %38 : vector<1x8x8xf32> to vector<8x8xf32>
    %cst_35 = arith.constant dense<0.000000e+00> : vector<8x512xf32>
    %40 = tpu.matmul %39, %37, %cst_35 {dimension_numbers = #tpu.dot_dimension_numbers<[1], [0], [0], [1], [0, 0, 1, 1], [], []>} : vector<8x8xf32>, vector<8x512xf32>, vector<8x512xf32> -> vector<8x512xf32>
    %41 = arith.addf %36, %40 : vector<8x512xf32>
    %c0_36 = arith.constant 0 : index
    %c129 = arith.constant 129 : index
    %42 = vector.load %arg6[%c0_36, %c129] : memref<8x2304xf32, #tpu.memory_space<vmem>>, vector<8x512xf32>
    %c1_37 = arith.constant 1 : index
    %c0_38 = arith.constant 0 : index
    %43 = vector.load %arg2[%c1_37, %c0_38] : memref<2x2048xf32, #tpu.memory_space<vmem>>, vector<1x512xf32>
    %44 = vector.broadcast %43 : vector<1x512xf32> to vector<8x512xf32>
    %45 = arith.mulf %42, %44 : vector<8x512xf32>
    %c5 = arith.constant 5 : index
    %c0_39 = arith.constant 0 : index
    %c0_40 = arith.constant 0 : index
    %46 = vector.load %arg1[%c5, %c0_39, %c0_40] : memref<9x8x8xf32, #tpu.memory_space<vmem>>, vector<1x8x8xf32>
    %47 = vector.shape_cast %46 : vector<1x8x8xf32> to vector<8x8xf32>
    %cst_41 = arith.constant dense<0.000000e+00> : vector<8x512xf32>
    %48 = tpu.matmul %47, %45, %cst_41 {dimension_numbers = #tpu.dot_dimension_numbers<[1], [0], [0], [1], [0, 0, 1, 1], [], []>} : vector<8x8xf32>, vector<8x512xf32>, vector<8x512xf32> -> vector<8x512xf32>
    %49 = arith.addf %41, %48 : vector<8x512xf32>
    %c0_42 = arith.constant 0 : index
    %c191 = arith.constant 191 : index
    %50 = vector.load %arg6[%c0_42, %c191] : memref<8x2304xf32, #tpu.memory_space<vmem>>, vector<8x512xf32>
    %c0_43 = arith.constant 0 : index
    %c0_44 = arith.constant 0 : index
    %51 = vector.load %arg2[%c0_43, %c0_44] : memref<2x2048xf32, #tpu.memory_space<vmem>>, vector<1x512xf32>
    %52 = vector.broadcast %51 : vector<1x512xf32> to vector<8x512xf32>
    %53 = arith.mulf %50, %52 : vector<8x512xf32>
    %c6 = arith.constant 6 : index
    %c0_45 = arith.constant 0 : index
    %c0_46 = arith.constant 0 : index
    %54 = vector.load %arg1[%c6, %c0_45, %c0_46] : memref<9x8x8xf32, #tpu.memory_space<vmem>>, vector<1x8x8xf32>
    %55 = vector.shape_cast %54 : vector<1x8x8xf32> to vector<8x8xf32>
    %cst_47 = arith.constant dense<0.000000e+00> : vector<8x512xf32>
    %56 = tpu.matmul %55, %53, %cst_47 {dimension_numbers = #tpu.dot_dimension_numbers<[1], [0], [0], [1], [0, 0, 1, 1], [], []>} : vector<8x8xf32>, vector<8x512xf32>, vector<8x512xf32> -> vector<8x512xf32>
    %57 = arith.addf %49, %56 : vector<8x512xf32>
    %c0_48 = arith.constant 0 : index
    %c192 = arith.constant 192 : index
    %58 = vector.load %arg6[%c0_48, %c192] : memref<8x2304xf32, #tpu.memory_space<vmem>>, vector<8x512xf32>
    %c7 = arith.constant 7 : index
    %c0_49 = arith.constant 0 : index
    %c0_50 = arith.constant 0 : index
    %59 = vector.load %arg1[%c7, %c0_49, %c0_50] : memref<9x8x8xf32, #tpu.memory_space<vmem>>, vector<1x8x8xf32>
    %60 = vector.shape_cast %59 : vector<1x8x8xf32> to vector<8x8xf32>
    %cst_51 = arith.constant dense<0.000000e+00> : vector<8x512xf32>
    %61 = tpu.matmul %60, %58, %cst_51 {dimension_numbers = #tpu.dot_dimension_numbers<[1], [0], [0], [1], [0, 0, 1, 1], [], []>} : vector<8x8xf32>, vector<8x512xf32>, vector<8x512xf32> -> vector<8x512xf32>
    %62 = arith.addf %57, %61 : vector<8x512xf32>
    %c0_52 = arith.constant 0 : index
    %c193 = arith.constant 193 : index
    %63 = vector.load %arg6[%c0_52, %c193] : memref<8x2304xf32, #tpu.memory_space<vmem>>, vector<8x512xf32>
    %c1_53 = arith.constant 1 : index
    %c0_54 = arith.constant 0 : index
    %64 = vector.load %arg2[%c1_53, %c0_54] : memref<2x2048xf32, #tpu.memory_space<vmem>>, vector<1x512xf32>
    %65 = vector.broadcast %64 : vector<1x512xf32> to vector<8x512xf32>
    %66 = arith.mulf %63, %65 : vector<8x512xf32>
    %c8 = arith.constant 8 : index
    %c0_55 = arith.constant 0 : index
    %c0_56 = arith.constant 0 : index
    %67 = vector.load %arg1[%c8, %c0_55, %c0_56] : memref<9x8x8xf32, #tpu.memory_space<vmem>>, vector<1x8x8xf32>
    %68 = vector.shape_cast %67 : vector<1x8x8xf32> to vector<8x8xf32>
    %cst_57 = arith.constant dense<0.000000e+00> : vector<8x512xf32>
    %69 = tpu.matmul %68, %66, %cst_57 {dimension_numbers = #tpu.dot_dimension_numbers<[1], [0], [0], [1], [0, 0, 1, 1], [], []>} : vector<8x8xf32>, vector<8x512xf32>, vector<8x512xf32> -> vector<8x512xf32>
    %70 = arith.addf %62, %69 : vector<8x512xf32>
    %c0_58 = arith.constant 0 : index
    %c0_59 = arith.constant 0 : index
    %71 = vector.load %arg5[%c0_58, %c0_59] : memref<8x2048xf32, #tpu.memory_space<vmem>>, vector<8x512xf32>
    tpu.vector_store %arg5[%c0_58, %c0_59], %70 {strides = array<i32>} : memref<8x2048xf32, #tpu.memory_space<vmem>>, vector<8x512xf32>,
    %72 = vector.shape_cast %70 : vector<8x512xf32> to vector<2x4x512xf32>
    %cst_60 = arith.constant dense<0.000000e+00> : vector<2x4xf32>
    %73 = vector.multi_reduction <add>, %72, %cst_60 [2] : vector<2x4x512xf32> to vector<2x4xf32>
    %74 = vector.shape_cast %73 : vector<2x4xf32> to vector<2x4x1xf32>
    %cst_61 = arith.constant dense<0.000000e+00> : vector<4x1xf32>
    %75 = vector.multi_reduction <add>, %74, %cst_61 [0] : vector<2x4x1xf32> to vector<4x1xf32>
    %76 = vector.shape_cast %75 : vector<4x1xf32> to vector<1x4x1xf32>
    %77 = arith.addf %6, %76 : vector<1x4x1xf32>
    %cst_62 = arith.constant 0.000000e+00 : f32
    %78 = vector.broadcast %cst_62 : f32 to vector<8x512xf32>
    %c0_63 = arith.constant 0 : index
    %c575 = arith.constant 575 : index
    %79 = vector.load %arg6[%c0_63, %c575] : memref<8x2304xf32, #tpu.memory_space<vmem>>, vector<8x512xf32>
    %c0_64 = arith.constant 0 : index
    %c512 = arith.constant 512 : index
    %80 = vector.load %arg2[%c0_64, %c512] : memref<2x2048xf32, #tpu.memory_space<vmem>>, vector<1x512xf32>
    %81 = vector.broadcast %80 : vector<1x512xf32> to vector<8x512xf32>
    %82 = arith.mulf %79, %81 : vector<8x512xf32>
    %c0_65 = arith.constant 0 : index
    %c0_66 = arith.constant 0 : index
    %c0_67 = arith.constant 0 : index
    %83 = vector.load %arg1[%c0_65, %c0_66, %c0_67] : memref<9x8x8xf32, #tpu.memory_space<vmem>>, vector<1x8x8xf32>
    %84 = vector.shape_cast %83 : vector<1x8x8xf32> to vector<8x8xf32>
    %cst_68 = arith.constant dense<0.000000e+00> : vector<8x512xf32>
    %85 = tpu.matmul %84, %82, %cst_68 {dimension_numbers = #tpu.dot_dimension_numbers<[1], [0], [0], [1], [0, 0, 1, 1], [], []>} : vector<8x8xf32>, vector<8x512xf32>, vector<8x512xf32> -> vector<8x512xf32>
    %86 = arith.addf %78, %85 : vector<8x512xf32>
    %c0_69 = arith.constant 0 : index
    %c576 = arith.constant 576 : index
    %87 = vector.load %arg6[%c0_69, %c576] : memref<8x2304xf32, #tpu.memory_space<vmem>>, vector<8x512xf32>
    %c1_70 = arith.constant 1 : index
    %c0_71 = arith.constant 0 : index
    %c0_72 = arith.constant 0 : index
    %88 = vector.load %arg1[%c1_70, %c0_71, %c0_72] : memref<9x8x8xf32, #tpu.memory_space<vmem>>, vector<1x8x8xf32>
    %89 = vector.shape_cast %88 : vector<1x8x8xf32> to vector<8x8xf32>
    %cst_73 = arith.constant dense<0.000000e+00> : vector<8x512xf32>
    %90 = tpu.matmul %89, %87, %cst_73 {dimension_numbers = #tpu.dot_dimension_numbers<[1], [0], [0], [1], [0, 0, 1, 1], [], []>} : vector<8x8xf32>, vector<8x512xf32>, vector<8x512xf32> -> vector<8x512xf32>
    %91 = arith.addf %86, %90 : vector<8x512xf32>
    %c0_74 = arith.constant 0 : index
    %c577 = arith.constant 577 : index
    %92 = vector.load %arg6[%c0_74, %c577] : memref<8x2304xf32, #tpu.memory_space<vmem>>, vector<8x512xf32>
    %c1_75 = arith.constant 1 : index
    %c512_76 = arith.constant 512 : index
    %93 = vector.load %arg2[%c1_75, %c512_76] : memref<2x2048xf32, #tpu.memory_space<vmem>>, vector<1x512xf32>
    %94 = vector.broadcast %93 : vector<1x512xf32> to vector<8x512xf32>
    %95 = arith.mulf %92, %94 : vector<8x512xf32>
    %c2_77 = arith.constant 2 : index
    %c0_78 = arith.constant 0 : index
    %c0_79 = arith.constant 0 : index
    %96 = vector.load %arg1[%c2_77, %c0_78, %c0_79] : memref<9x8x8xf32, #tpu.memory_space<vmem>>, vector<1x8x8xf32>
    %97 = vector.shape_cast %96 : vector<1x8x8xf32> to vector<8x8xf32>
    %cst_80 = arith.constant dense<0.000000e+00> : vector<8x512xf32>
    %98 = tpu.matmul %97, %95, %cst_80 {dimension_numbers = #tpu.dot_dimension_numbers<[1], [0], [0], [1], [0, 0, 1, 1], [], []>} : vector<8x8xf32>, vector<8x512xf32>, vector<8x512xf32> -> vector<8x512xf32>
    %99 = arith.addf %91, %98 : vector<8x512xf32>
    %c0_81 = arith.constant 0 : index
    %c639 = arith.constant 639 : index
    %100 = vector.load %arg6[%c0_81, %c639] : memref<8x2304xf32, #tpu.memory_space<vmem>>, vector<8x512xf32>
    %c0_82 = arith.constant 0 : index
    %c512_83 = arith.constant 512 : index
    %101 = vector.load %arg2[%c0_82, %c512_83] : memref<2x2048xf32, #tpu.memory_space<vmem>>, vector<1x512xf32>
    %102 = vector.broadcast %101 : vector<1x512xf32> to vector<8x512xf32>
    %103 = arith.mulf %100, %102 : vector<8x512xf32>
    %c3_84 = arith.constant 3 : index
    %c0_85 = arith.constant 0 : index
    %c0_86 = arith.constant 0 : index
    %104 = vector.load %arg1[%c3_84, %c0_85, %c0_86] : memref<9x8x8xf32, #tpu.memory_space<vmem>>, vector<1x8x8xf32>
    %105 = vector.shape_cast %104 : vector<1x8x8xf32> to vector<8x8xf32>
    %cst_87 = arith.constant dense<0.000000e+00> : vector<8x512xf32>
    %106 = tpu.matmul %105, %103, %cst_87 {dimension_numbers = #tpu.dot_dimension_numbers<[1], [0], [0], [1], [0, 0, 1, 1], [], []>} : vector<8x8xf32>, vector<8x512xf32>, vector<8x512xf32> -> vector<8x512xf32>
    %107 = arith.addf %99, %106 : vector<8x512xf32>
    %c0_88 = arith.constant 0 : index
    %c640 = arith.constant 640 : index
    %108 = vector.load %arg6[%c0_88, %c640] : memref<8x2304xf32, #tpu.memory_space<vmem>>, vector<8x512xf32>
    %c4_89 = arith.constant 4 : index
    %c0_90 = arith.constant 0 : index
    %c0_91 = arith.constant 0 : index
    %109 = vector.load %arg1[%c4_89, %c0_90, %c0_91] : memref<9x8x8xf32, #tpu.memory_space<vmem>>, vector<1x8x8xf32>
    %110 = vector.shape_cast %109 : vector<1x8x8xf32> to vector<8x8xf32>
    %cst_92 = arith.constant dense<0.000000e+00> : vector<8x512xf32>
    %111 = tpu.matmul %110, %108, %cst_92 {dimension_numbers = #tpu.dot_dimension_numbers<[1], [0], [0], [1], [0, 0, 1, 1], [], []>} : vector<8x8xf32>, vector<8x512xf32>, vector<8x512xf32> -> vector<8x512xf32>
    %112 = arith.addf %107, %111 : vector<8x512xf32>
    %c0_93 = arith.constant 0 : index
    %c641 = arith.constant 641 : index
    %113 = vector.load %arg6[%c0_93, %c641] : memref<8x2304xf32, #tpu.memory_space<vmem>>, vector<8x512xf32>
    %c1_94 = arith.constant 1 : index
    %c512_95 = arith.constant 512 : index
    %114 = vector.load %arg2[%c1_94, %c512_95] : memref<2x2048xf32, #tpu.memory_space<vmem>>, vector<1x512xf32>
    %115 = vector.broadcast %114 : vector<1x512xf32> to vector<8x512xf32>
    %116 = arith.mulf %113, %115 : vector<8x512xf32>
    %c5_96 = arith.constant 5 : index
    %c0_97 = arith.constant 0 : index
    %c0_98 = arith.constant 0 : index
    %117 = vector.load %arg1[%c5_96, %c0_97, %c0_98] : memref<9x8x8xf32, #tpu.memory_space<vmem>>, vector<1x8x8xf32>
    %118 = vector.shape_cast %117 : vector<1x8x8xf32> to vector<8x8xf32>
    %cst_99 = arith.constant dense<0.000000e+00> : vector<8x512xf32>
    %119 = tpu.matmul %118, %116, %cst_99 {dimension_numbers = #tpu.dot_dimension_numbers<[1], [0], [0], [1], [0, 0, 1, 1], [], []>} : vector<8x8xf32>, vector<8x512xf32>, vector<8x512xf32> -> vector<8x512xf32>
    %120 = arith.addf %112, %119 : vector<8x512xf32>
    %c0_100 = arith.constant 0 : index
    %c703 = arith.constant 703 : index
    %121 = vector.load %arg6[%c0_100, %c703] : memref<8x2304xf32, #tpu.memory_space<vmem>>, vector<8x512xf32>
    %c0_101 = arith.constant 0 : index
    %c512_102 = arith.constant 512 : index
    %122 = vector.load %arg2[%c0_101, %c512_102] : memref<2x2048xf32, #tpu.memory_space<vmem>>, vector<1x512xf32>
    %123 = vector.broadcast %122 : vector<1x512xf32> to vector<8x512xf32>
    %124 = arith.mulf %121, %123 : vector<8x512xf32>
    %c6_103 = arith.constant 6 : index
    %c0_104 = arith.constant 0 : index
    %c0_105 = arith.constant 0 : index
    %125 = vector.load %arg1[%c6_103, %c0_104, %c0_105] : memref<9x8x8xf32, #tpu.memory_space<vmem>>, vector<1x8x8xf32>
    %126 = vector.shape_cast %125 : vector<1x8x8xf32> to vector<8x8xf32>
    %cst_106 = arith.constant dense<0.000000e+00> : vector<8x512xf32>
    %127 = tpu.matmul %126, %124, %cst_106 {dimension_numbers = #tpu.dot_dimension_numbers<[1], [0], [0], [1], [0, 0, 1, 1], [], []>} : vector<8x8xf32>, vector<8x512xf32>, vector<8x512xf32> -> vector<8x512xf32>
    %128 = arith.addf %120, %127 : vector<8x512xf32>
    %c0_107 = arith.constant 0 : index
    %c704 = arith.constant 704 : index
    %129 = vector.load %arg6[%c0_107, %c704] : memref<8x2304xf32, #tpu.memory_space<vmem>>, vector<8x512xf32>
    %c7_108 = arith.constant 7 : index
    %c0_109 = arith.constant 0 : index
    %c0_110 = arith.constant 0 : index
    %130 = vector.load %arg1[%c7_108, %c0_109, %c0_110] : memref<9x8x8xf32, #tpu.memory_space<vmem>>, vector<1x8x8xf32>
    %131 = vector.shape_cast %130 : vector<1x8x8xf32> to vector<8x8xf32>
    %cst_111 = arith.constant dense<0.000000e+00> : vector<8x512xf32>
    %132 = tpu.matmul %131, %129, %cst_111 {dimension_numbers = #tpu.dot_dimension_numbers<[1], [0], [0], [1], [0, 0, 1, 1], [], []>} : vector<8x8xf32>, vector<8x512xf32>, vector<8x512xf32> -> vector<8x512xf32>
    %133 = arith.addf %128, %132 : vector<8x512xf32>
    %c0_112 = arith.constant 0 : index
    %c705 = arith.constant 705 : index
    %134 = vector.load %arg6[%c0_112, %c705] : memref<8x2304xf32, #tpu.memory_space<vmem>>, vector<8x512xf32>
    %c1_113 = arith.constant 1 : index
    %c512_114 = arith.constant 512 : index
    %135 = vector.load %arg2[%c1_113, %c512_114] : memref<2x2048xf32, #tpu.memory_space<vmem>>, vector<1x512xf32>
    %136 = vector.broadcast %135 : vector<1x512xf32> to vector<8x512xf32>
    %137 = arith.mulf %134, %136 : vector<8x512xf32>
    %c8_115 = arith.constant 8 : index
    %c0_116 = arith.constant 0 : index
    %c0_117 = arith.constant 0 : index
    %138 = vector.load %arg1[%c8_115, %c0_116, %c0_117] : memref<9x8x8xf32, #tpu.memory_space<vmem>>, vector<1x8x8xf32>
    %139 = vector.shape_cast %138 : vector<1x8x8xf32> to vector<8x8xf32>
    %cst_118 = arith.constant dense<0.000000e+00> : vector<8x512xf32>
    %140 = tpu.matmul %139, %137, %cst_118 {dimension_numbers = #tpu.dot_dimension_numbers<[1], [0], [0], [1], [0, 0, 1, 1], [], []>} : vector<8x8xf32>, vector<8x512xf32>, vector<8x512xf32> -> vector<8x512xf32>
    %141 = arith.addf %133, %140 : vector<8x512xf32>
    %c0_119 = arith.constant 0 : index
    %c512_120 = arith.constant 512 : index
    %142 = vector.load %arg5[%c0_119, %c512_120] : memref<8x2048xf32, #tpu.memory_space<vmem>>, vector<8x512xf32>
    tpu.vector_store %arg5[%c0_119, %c512_120], %141 {strides = array<i32>} : memref<8x2048xf32, #tpu.memory_space<vmem>>, vector<8x512xf32>,
    %143 = vector.shape_cast %141 : vector<8x512xf32> to vector<2x4x512xf32>
    %cst_121 = arith.constant dense<0.000000e+00> : vector<2x4xf32>
    %144 = vector.multi_reduction <add>, %143, %cst_121 [2] : vector<2x4x512xf32> to vector<2x4xf32>
    %145 = vector.shape_cast %144 : vector<2x4xf32> to vector<2x4x1xf32>
    %cst_122 = arith.constant dense<0.000000e+00> : vector<4x1xf32>
    %146 = vector.multi_reduction <add>, %145, %cst_122 [0] : vector<2x4x1xf32> to vector<4x1xf32>
    %147 = vector.shape_cast %146 : vector<4x1xf32> to vector<1x4x1xf32>
    %148 = arith.addf %77, %147 : vector<1x4x1xf32>
    %cst_123 = arith.constant 0.000000e+00 : f32
    %149 = vector.broadcast %cst_123 : f32 to vector<8x512xf32>
    %c0_124 = arith.constant 0 : index
    %c1087 = arith.constant 1087 : index
    %150 = vector.load %arg6[%c0_124, %c1087] : memref<8x2304xf32, #tpu.memory_space<vmem>>, vector<8x512xf32>
    %c0_125 = arith.constant 0 : index
    %c1024 = arith.constant 1024 : index
    %151 = vector.load %arg2[%c0_125, %c1024] : memref<2x2048xf32, #tpu.memory_space<vmem>>, vector<1x512xf32>
    %152 = vector.broadcast %151 : vector<1x512xf32> to vector<8x512xf32>
    %153 = arith.mulf %150, %152 : vector<8x512xf32>
    %c0_126 = arith.constant 0 : index
    %c0_127 = arith.constant 0 : index
    %c0_128 = arith.constant 0 : index
    %154 = vector.load %arg1[%c0_126, %c0_127, %c0_128] : memref<9x8x8xf32, #tpu.memory_space<vmem>>, vector<1x8x8xf32>
    %155 = vector.shape_cast %154 : vector<1x8x8xf32> to vector<8x8xf32>
    %cst_129 = arith.constant dense<0.000000e+00> : vector<8x512xf32>
    %156 = tpu.matmul %155, %153, %cst_129 {dimension_numbers = #tpu.dot_dimension_numbers<[1], [0], [0], [1], [0, 0, 1, 1], [], []>} : vector<8x8xf32>, vector<8x512xf32>, vector<8x512xf32> -> vector<8x512xf32>
    %157 = arith.addf %149, %156 : vector<8x512xf32>
    %c0_130 = arith.constant 0 : index
    %c1088 = arith.constant 1088 : index
    %158 = vector.load %arg6[%c0_130, %c1088] : memref<8x2304xf32, #tpu.memory_space<vmem>>, vector<8x512xf32>
    %c1_131 = arith.constant 1 : index
    %c0_132 = arith.constant 0 : index
    %c0_133 = arith.constant 0 : index
    %159 = vector.load %arg1[%c1_131, %c0_132, %c0_133] : memref<9x8x8xf32, #tpu.memory_space<vmem>>, vector<1x8x8xf32>
    %160 = vector.shape_cast %159 : vector<1x8x8xf32> to vector<8x8xf32>
    %cst_134 = arith.constant dense<0.000000e+00> : vector<8x512xf32>
    %161 = tpu.matmul %160, %158, %cst_134 {dimension_numbers = #tpu.dot_dimension_numbers<[1], [0], [0], [1], [0, 0, 1, 1], [], []>} : vector<8x8xf32>, vector<8x512xf32>, vector<8x512xf32> -> vector<8x512xf32>
    %162 = arith.addf %157, %161 : vector<8x512xf32>
    %c0_135 = arith.constant 0 : index
    %c1089 = arith.constant 1089 : index
    %163 = vector.load %arg6[%c0_135, %c1089] : memref<8x2304xf32, #tpu.memory_space<vmem>>, vector<8x512xf32>
    %c1_136 = arith.constant 1 : index
    %c1024_137 = arith.constant 1024 : index
    %164 = vector.load %arg2[%c1_136, %c1024_137] : memref<2x2048xf32, #tpu.memory_space<vmem>>, vector<1x512xf32>
    %165 = vector.broadcast %164 : vector<1x512xf32> to vector<8x512xf32>
    %166 = arith.mulf %163, %165 : vector<8x512xf32>
    %c2_138 = arith.constant 2 : index
    %c0_139 = arith.constant 0 : index
    %c0_140 = arith.constant 0 : index
    %167 = vector.load %arg1[%c2_138, %c0_139, %c0_140] : memref<9x8x8xf32, #tpu.memory_space<vmem>>, vector<1x8x8xf32>
    %168 = vector.shape_cast %167 : vector<1x8x8xf32> to vector<8x8xf32>
    %cst_141 = arith.constant dense<0.000000e+00> : vector<8x512xf32>
    %169 = tpu.matmul %168, %166, %cst_141 {dimension_numbers = #tpu.dot_dimension_numbers<[1], [0], [0], [1], [0, 0, 1, 1], [], []>} : vector<8x8xf32>, vector<8x512xf32>, vector<8x512xf32> -> vector<8x512xf32>
    %170 = arith.addf %162, %169 : vector<8x512xf32>
    %c0_142 = arith.constant 0 : index
    %c1151 = arith.constant 1151 : index
    %171 = vector.load %arg6[%c0_142, %c1151] : memref<8x2304xf32, #tpu.memory_space<vmem>>, vector<8x512xf32>
    %c0_143 = arith.constant 0 : index
    %c1024_144 = arith.constant 1024 : index
    %172 = vector.load %arg2[%c0_143, %c1024_144] : memref<2x2048xf32, #tpu.memory_space<vmem>>, vector<1x512xf32>
    %173 = vector.broadcast %172 : vector<1x512xf32> to vector<8x512xf32>
    %174 = arith.mulf %171, %173 : vector<8x512xf32>
    %c3_145 = arith.constant 3 : index
    %c0_146 = arith.constant 0 : index
    %c0_147 = arith.constant 0 : index
    %175 = vector.load %arg1[%c3_145, %c0_146, %c0_147] : memref<9x8x8xf32, #tpu.memory_space<vmem>>, vector<1x8x8xf32>
    %176 = vector.shape_cast %175 : vector<1x8x8xf32> to vector<8x8xf32>
    %cst_148 = arith.constant dense<0.000000e+00> : vector<8x512xf32>
    %177 = tpu.matmul %176, %174, %cst_148 {dimension_numbers = #tpu.dot_dimension_numbers<[1], [0], [0], [1], [0, 0, 1, 1], [], []>} : vector<8x8xf32>, vector<8x512xf32>, vector<8x512xf32> -> vector<8x512xf32>
    %178 = arith.addf %170, %177 : vector<8x512xf32>
    %c0_149 = arith.constant 0 : index
    %c1152 = arith.constant 1152 : index
    %179 = vector.load %arg6[%c0_149, %c1152] : memref<8x2304xf32, #tpu.memory_space<vmem>>, vector<8x512xf32>
    %c4_150 = arith.constant 4 : index
    %c0_151 = arith.constant 0 : index
    %c0_152 = arith.constant 0 : index
    %180 = vector.load %arg1[%c4_150, %c0_151, %c0_152] : memref<9x8x8xf32, #tpu.memory_space<vmem>>, vector<1x8x8xf32>
    %181 = vector.shape_cast %180 : vector<1x8x8xf32> to vector<8x8xf32>
    %cst_153 = arith.constant dense<0.000000e+00> : vector<8x512xf32>
    %182 = tpu.matmul %181, %179, %cst_153 {dimension_numbers = #tpu.dot_dimension_numbers<[1], [0], [0], [1], [0, 0, 1, 1], [], []>} : vector<8x8xf32>, vector<8x512xf32>, vector<8x512xf32> -> vector<8x512xf32>
    %183 = arith.addf %178, %182 : vector<8x512xf32>
    %c0_154 = arith.constant 0 : index
    %c1153 = arith.constant 1153 : index
    %184 = vector.load %arg6[%c0_154, %c1153] : memref<8x2304xf32, #tpu.memory_space<vmem>>, vector<8x512xf32>
    %c1_155 = arith.constant 1 : index
    %c1024_156 = arith.constant 1024 : index
    %185 = vector.load %arg2[%c1_155, %c1024_156] : memref<2x2048xf32, #tpu.memory_space<vmem>>, vector<1x512xf32>
    %186 = vector.broadcast %185 : vector<1x512xf32> to vector<8x512xf32>
    %187 = arith.mulf %184, %186 : vector<8x512xf32>
    %c5_157 = arith.constant 5 : index
    %c0_158 = arith.constant 0 : index
    %c0_159 = arith.constant 0 : index
    %188 = vector.load %arg1[%c5_157, %c0_158, %c0_159] : memref<9x8x8xf32, #tpu.memory_space<vmem>>, vector<1x8x8xf32>
    %189 = vector.shape_cast %188 : vector<1x8x8xf32> to vector<8x8xf32>
    %cst_160 = arith.constant dense<0.000000e+00> : vector<8x512xf32>
    %190 = tpu.matmul %189, %187, %cst_160 {dimension_numbers = #tpu.dot_dimension_numbers<[1], [0], [0], [1], [0, 0, 1, 1], [], []>} : vector<8x8xf32>, vector<8x512xf32>, vector<8x512xf32> -> vector<8x512xf32>
    %191 = arith.addf %183, %190 : vector<8x512xf32>
    %c0_161 = arith.constant 0 : index
    %c1215 = arith.constant 1215 : index
    %192 = vector.load %arg6[%c0_161, %c1215] : memref<8x2304xf32, #tpu.memory_space<vmem>>, vector<8x512xf32>
    %c0_162 = arith.constant 0 : index
    %c1024_163 = arith.constant 1024 : index
    %193 = vector.load %arg2[%c0_162, %c1024_163] : memref<2x2048xf32, #tpu.memory_space<vmem>>, vector<1x512xf32>
    %194 = vector.broadcast %193 : vector<1x512xf32> to vector<8x512xf32>
    %195 = arith.mulf %192, %194 : vector<8x512xf32>
    %c6_164 = arith.constant 6 : index
    %c0_165 = arith.constant 0 : index
    %c0_166 = arith.constant 0 : index
    %196 = vector.load %arg1[%c6_164, %c0_165, %c0_166] : memref<9x8x8xf32, #tpu.memory_space<vmem>>, vector<1x8x8xf32>
    %197 = vector.shape_cast %196 : vector<1x8x8xf32> to vector<8x8xf32>
    %cst_167 = arith.constant dense<0.000000e+00> : vector<8x512xf32>
    %198 = tpu.matmul %197, %195, %cst_167 {dimension_numbers = #tpu.dot_dimension_numbers<[1], [0], [0], [1], [0, 0, 1, 1], [], []>} : vector<8x8xf32>, vector<8x512xf32>, vector<8x512xf32> -> vector<8x512xf32>
    %199 = arith.addf %191, %198 : vector<8x512xf32>
    %c0_168 = arith.constant 0 : index
    %c1216 = arith.constant 1216 : index
    %200 = vector.load %arg6[%c0_168, %c1216] : memref<8x2304xf32, #tpu.memory_space<vmem>>, vector<8x512xf32>
    %c7_169 = arith.constant 7 : index
    %c0_170 = arith.constant 0 : index
    %c0_171 = arith.constant 0 : index
    %201 = vector.load %arg1[%c7_169, %c0_170, %c0_171] : memref<9x8x8xf32, #tpu.memory_space<vmem>>, vector<1x8x8xf32>
    %202 = vector.shape_cast %201 : vector<1x8x8xf32> to vector<8x8xf32>
    %cst_172 = arith.constant dense<0.000000e+00> : vector<8x512xf32>
    %203 = tpu.matmul %202, %200, %cst_172 {dimension_numbers = #tpu.dot_dimension_numbers<[1], [0], [0], [1], [0, 0, 1, 1], [], []>} : vector<8x8xf32>, vector<8x512xf32>, vector<8x512xf32> -> vector<8x512xf32>
    %204 = arith.addf %199, %203 : vector<8x512xf32>
    %c0_173 = arith.constant 0 : index
    %c1217 = arith.constant 1217 : index
    %205 = vector.load %arg6[%c0_173, %c1217] : memref<8x2304xf32, #tpu.memory_space<vmem>>, vector<8x512xf32>
    %c1_174 = arith.constant 1 : index
    %c1024_175 = arith.constant 1024 : index
    %206 = vector.load %arg2[%c1_174, %c1024_175] : memref<2x2048xf32, #tpu.memory_space<vmem>>, vector<1x512xf32>
    %207 = vector.broadcast %206 : vector<1x512xf32> to vector<8x512xf32>
    %208 = arith.mulf %205, %207 : vector<8x512xf32>
    %c8_176 = arith.constant 8 : index
    %c0_177 = arith.constant 0 : index
    %c0_178 = arith.constant 0 : index
    %209 = vector.load %arg1[%c8_176, %c0_177, %c0_178] : memref<9x8x8xf32, #tpu.memory_space<vmem>>, vector<1x8x8xf32>
    %210 = vector.shape_cast %209 : vector<1x8x8xf32> to vector<8x8xf32>
    %cst_179 = arith.constant dense<0.000000e+00> : vector<8x512xf32>
    %211 = tpu.matmul %210, %208, %cst_179 {dimension_numbers = #tpu.dot_dimension_numbers<[1], [0], [0], [1], [0, 0, 1, 1], [], []>} : vector<8x8xf32>, vector<8x512xf32>, vector<8x512xf32> -> vector<8x512xf32>
    %212 = arith.addf %204, %211 : vector<8x512xf32>
    %c0_180 = arith.constant 0 : index
    %c1024_181 = arith.constant 1024 : index
    %213 = vector.load %arg5[%c0_180, %c1024_181] : memref<8x2048xf32, #tpu.memory_space<vmem>>, vector<8x512xf32>
    tpu.vector_store %arg5[%c0_180, %c1024_181], %212 {strides = array<i32>} : memref<8x2048xf32, #tpu.memory_space<vmem>>, vector<8x512xf32>,
    %214 = vector.shape_cast %212 : vector<8x512xf32> to vector<2x4x512xf32>
    %cst_182 = arith.constant dense<0.000000e+00> : vector<2x4xf32>
    %215 = vector.multi_reduction <add>, %214, %cst_182 [2] : vector<2x4x512xf32> to vector<2x4xf32>
    %216 = vector.shape_cast %215 : vector<2x4xf32> to vector<2x4x1xf32>
    %cst_183 = arith.constant dense<0.000000e+00> : vector<4x1xf32>
    %217 = vector.multi_reduction <add>, %216, %cst_183 [0] : vector<2x4x1xf32> to vector<4x1xf32>
    %218 = vector.shape_cast %217 : vector<4x1xf32> to vector<1x4x1xf32>
    %219 = arith.addf %148, %218 : vector<1x4x1xf32>
    %cst_184 = arith.constant 0.000000e+00 : f32
    %220 = vector.broadcast %cst_184 : f32 to vector<8x512xf32>
    %c0_185 = arith.constant 0 : index
    %c1599 = arith.constant 1599 : index
    %221 = vector.load %arg6[%c0_185, %c1599] : memref<8x2304xf32, #tpu.memory_space<vmem>>, vector<8x512xf32>
    %c0_186 = arith.constant 0 : index
    %c1536 = arith.constant 1536 : index
    %222 = vector.load %arg2[%c0_186, %c1536] : memref<2x2048xf32, #tpu.memory_space<vmem>>, vector<1x512xf32>
    %223 = vector.broadcast %222 : vector<1x512xf32> to vector<8x512xf32>
    %224 = arith.mulf %221, %223 : vector<8x512xf32>
    %c0_187 = arith.constant 0 : index
    %c0_188 = arith.constant 0 : index
    %c0_189 = arith.constant 0 : index
    %225 = vector.load %arg1[%c0_187, %c0_188, %c0_189] : memref<9x8x8xf32, #tpu.memory_space<vmem>>, vector<1x8x8xf32>
    %226 = vector.shape_cast %225 : vector<1x8x8xf32> to vector<8x8xf32>
    %cst_190 = arith.constant dense<0.000000e+00> : vector<8x512xf32>
    %227 = tpu.matmul %226, %224, %cst_190 {dimension_numbers = #tpu.dot_dimension_numbers<[1], [0], [0], [1], [0, 0, 1, 1], [], []>} : vector<8x8xf32>, vector<8x512xf32>, vector<8x512xf32> -> vector<8x512xf32>
    %228 = arith.addf %220, %227 : vector<8x512xf32>
    %c0_191 = arith.constant 0 : index
    %c1600 = arith.constant 1600 : index
    %229 = vector.load %arg6[%c0_191, %c1600] : memref<8x2304xf32, #tpu.memory_space<vmem>>, vector<8x512xf32>
    %c1_192 = arith.constant 1 : index
    %c0_193 = arith.constant 0 : index
    %c0_194 = arith.constant 0 : index
    %230 = vector.load %arg1[%c1_192, %c0_193, %c0_194] : memref<9x8x8xf32, #tpu.memory_space<vmem>>, vector<1x8x8xf32>
    %231 = vector.shape_cast %230 : vector<1x8x8xf32> to vector<8x8xf32>
    %cst_195 = arith.constant dense<0.000000e+00> : vector<8x512xf32>
    %232 = tpu.matmul %231, %229, %cst_195 {dimension_numbers = #tpu.dot_dimension_numbers<[1], [0], [0], [1], [0, 0, 1, 1], [], []>} : vector<8x8xf32>, vector<8x512xf32>, vector<8x512xf32> -> vector<8x512xf32>
    %233 = arith.addf %228, %232 : vector<8x512xf32>
    %c0_196 = arith.constant 0 : index
    %c1601 = arith.constant 1601 : index
    %234 = vector.load %arg6[%c0_196, %c1601] : memref<8x2304xf32, #tpu.memory_space<vmem>>, vector<8x512xf32>
    %c1_197 = arith.constant 1 : index
    %c1536_198 = arith.constant 1536 : index
    %235 = vector.load %arg2[%c1_197, %c1536_198] : memref<2x2048xf32, #tpu.memory_space<vmem>>, vector<1x512xf32>
    %236 = vector.broadcast %235 : vector<1x512xf32> to vector<8x512xf32>
    %237 = arith.mulf %234, %236 : vector<8x512xf32>
    %c2_199 = arith.constant 2 : index
    %c0_200 = arith.constant 0 : index
    %c0_201 = arith.constant 0 : index
    %238 = vector.load %arg1[%c2_199, %c0_200, %c0_201] : memref<9x8x8xf32, #tpu.memory_space<vmem>>, vector<1x8x8xf32>
    %239 = vector.shape_cast %238 : vector<1x8x8xf32> to vector<8x8xf32>
    %cst_202 = arith.constant dense<0.000000e+00> : vector<8x512xf32>
    %240 = tpu.matmul %239, %237, %cst_202 {dimension_numbers = #tpu.dot_dimension_numbers<[1], [0], [0], [1], [0, 0, 1, 1], [], []>} : vector<8x8xf32>, vector<8x512xf32>, vector<8x512xf32> -> vector<8x512xf32>
    %241 = arith.addf %233, %240 : vector<8x512xf32>
    %c0_203 = arith.constant 0 : index
    %c1663 = arith.constant 1663 : index
    %242 = vector.load %arg6[%c0_203, %c1663] : memref<8x2304xf32, #tpu.memory_space<vmem>>, vector<8x512xf32>
    %c0_204 = arith.constant 0 : index
    %c1536_205 = arith.constant 1536 : index
    %243 = vector.load %arg2[%c0_204, %c1536_205] : memref<2x2048xf32, #tpu.memory_space<vmem>>, vector<1x512xf32>
    %244 = vector.broadcast %243 : vector<1x512xf32> to vector<8x512xf32>
    %245 = arith.mulf %242, %244 : vector<8x512xf32>
    %c3_206 = arith.constant 3 : index
    %c0_207 = arith.constant 0 : index
    %c0_208 = arith.constant 0 : index
    %246 = vector.load %arg1[%c3_206, %c0_207, %c0_208] : memref<9x8x8xf32, #tpu.memory_space<vmem>>, vector<1x8x8xf32>
    %247 = vector.shape_cast %246 : vector<1x8x8xf32> to vector<8x8xf32>
    %cst_209 = arith.constant dense<0.000000e+00> : vector<8x512xf32>
    %248 = tpu.matmul %247, %245, %cst_209 {dimension_numbers = #tpu.dot_dimension_numbers<[1], [0], [0], [1], [0, 0, 1, 1], [], []>} : vector<8x8xf32>, vector<8x512xf32>, vector<8x512xf32> -> vector<8x512xf32>
    %249 = arith.addf %241, %248 : vector<8x512xf32>
    %c0_210 = arith.constant 0 : index
    %c1664 = arith.constant 1664 : index
    %250 = vector.load %arg6[%c0_210, %c1664] : memref<8x2304xf32, #tpu.memory_space<vmem>>, vector<8x512xf32>
    %c4_211 = arith.constant 4 : index
    %c0_212 = arith.constant 0 : index
    %c0_213 = arith.constant 0 : index
    %251 = vector.load %arg1[%c4_211, %c0_212, %c0_213] : memref<9x8x8xf32, #tpu.memory_space<vmem>>, vector<1x8x8xf32>
    %252 = vector.shape_cast %251 : vector<1x8x8xf32> to vector<8x8xf32>
    %cst_214 = arith.constant dense<0.000000e+00> : vector<8x512xf32>
    %253 = tpu.matmul %252, %250, %cst_214 {dimension_numbers = #tpu.dot_dimension_numbers<[1], [0], [0], [1], [0, 0, 1, 1], [], []>} : vector<8x8xf32>, vector<8x512xf32>, vector<8x512xf32> -> vector<8x512xf32>
    %254 = arith.addf %249, %253 : vector<8x512xf32>
    %c0_215 = arith.constant 0 : index
    %c1665 = arith.constant 1665 : index
    %255 = vector.load %arg6[%c0_215, %c1665] : memref<8x2304xf32, #tpu.memory_space<vmem>>, vector<8x512xf32>
    %c1_216 = arith.constant 1 : index
    %c1536_217 = arith.constant 1536 : index
    %256 = vector.load %arg2[%c1_216, %c1536_217] : memref<2x2048xf32, #tpu.memory_space<vmem>>, vector<1x512xf32>
    %257 = vector.broadcast %256 : vector<1x512xf32> to vector<8x512xf32>
    %258 = arith.mulf %255, %257 : vector<8x512xf32>
    %c5_218 = arith.constant 5 : index
    %c0_219 = arith.constant 0 : index
    %c0_220 = arith.constant 0 : index
    %259 = vector.load %arg1[%c5_218, %c0_219, %c0_220] : memref<9x8x8xf32, #tpu.memory_space<vmem>>, vector<1x8x8xf32>
    %260 = vector.shape_cast %259 : vector<1x8x8xf32> to vector<8x8xf32>
    %cst_221 = arith.constant dense<0.000000e+00> : vector<8x512xf32>
    %261 = tpu.matmul %260, %258, %cst_221 {dimension_numbers = #tpu.dot_dimension_numbers<[1], [0], [0], [1], [0, 0, 1, 1], [], []>} : vector<8x8xf32>, vector<8x512xf32>, vector<8x512xf32> -> vector<8x512xf32>
    %262 = arith.addf %254, %261 : vector<8x512xf32>
    %c0_222 = arith.constant 0 : index
    %c1727 = arith.constant 1727 : index
    %263 = vector.load %arg6[%c0_222, %c1727] : memref<8x2304xf32, #tpu.memory_space<vmem>>, vector<8x512xf32>
    %c0_223 = arith.constant 0 : index
    %c1536_224 = arith.constant 1536 : index
    %264 = vector.load %arg2[%c0_223, %c1536_224] : memref<2x2048xf32, #tpu.memory_space<vmem>>, vector<1x512xf32>
    %265 = vector.broadcast %264 : vector<1x512xf32> to vector<8x512xf32>
    %266 = arith.mulf %263, %265 : vector<8x512xf32>
    %c6_225 = arith.constant 6 : index
    %c0_226 = arith.constant 0 : index
    %c0_227 = arith.constant 0 : index
    %267 = vector.load %arg1[%c6_225, %c0_226, %c0_227] : memref<9x8x8xf32, #tpu.memory_space<vmem>>, vector<1x8x8xf32>
    %268 = vector.shape_cast %267 : vector<1x8x8xf32> to vector<8x8xf32>
    %cst_228 = arith.constant dense<0.000000e+00> : vector<8x512xf32>
    %269 = tpu.matmul %268, %266, %cst_228 {dimension_numbers = #tpu.dot_dimension_numbers<[1], [0], [0], [1], [0, 0, 1, 1], [], []>} : vector<8x8xf32>, vector<8x512xf32>, vector<8x512xf32> -> vector<8x512xf32>
    %270 = arith.addf %262, %269 : vector<8x512xf32>
    %c0_229 = arith.constant 0 : index
    %c1728 = arith.constant 1728 : index
    %271 = vector.load %arg6[%c0_229, %c1728] : memref<8x2304xf32, #tpu.memory_space<vmem>>, vector<8x512xf32>
    %c7_230 = arith.constant 7 : index
    %c0_231 = arith.constant 0 : index
    %c0_232 = arith.constant 0 : index
    %272 = vector.load %arg1[%c7_230, %c0_231, %c0_232] : memref<9x8x8xf32, #tpu.memory_space<vmem>>, vector<1x8x8xf32>
    %273 = vector.shape_cast %272 : vector<1x8x8xf32> to vector<8x8xf32>
    %cst_233 = arith.constant dense<0.000000e+00> : vector<8x512xf32>
    %274 = tpu.matmul %273, %271, %cst_233 {dimension_numbers = #tpu.dot_dimension_numbers<[1], [0], [0], [1], [0, 0, 1, 1], [], []>} : vector<8x8xf32>, vector<8x512xf32>, vector<8x512xf32> -> vector<8x512xf32>
    %275 = arith.addf %270, %274 : vector<8x512xf32>
    %c0_234 = arith.constant 0 : index
    %c1729 = arith.constant 1729 : index
    %276 = vector.load %arg6[%c0_234, %c1729] : memref<8x2304xf32, #tpu.memory_space<vmem>>, vector<8x512xf32>
    %c1_235 = arith.constant 1 : index
    %c1536_236 = arith.constant 1536 : index
    %277 = vector.load %arg2[%c1_235, %c1536_236] : memref<2x2048xf32, #tpu.memory_space<vmem>>, vector<1x512xf32>
    %278 = vector.broadcast %277 : vector<1x512xf32> to vector<8x512xf32>
    %279 = arith.mulf %276, %278 : vector<8x512xf32>
    %c8_237 = arith.constant 8 : index
    %c0_238 = arith.constant 0 : index
    %c0_239 = arith.constant 0 : index
    %280 = vector.load %arg1[%c8_237, %c0_238, %c0_239] : memref<9x8x8xf32, #tpu.memory_space<vmem>>, vector<1x8x8xf32>
    %281 = vector.shape_cast %280 : vector<1x8x8xf32> to vector<8x8xf32>
    %cst_240 = arith.constant dense<0.000000e+00> : vector<8x512xf32>
    %282 = tpu.matmul %281, %279, %cst_240 {dimension_numbers = #tpu.dot_dimension_numbers<[1], [0], [0], [1], [0, 0, 1, 1], [], []>} : vector<8x8xf32>, vector<8x512xf32>, vector<8x512xf32> -> vector<8x512xf32>
    %283 = arith.addf %275, %282 : vector<8x512xf32>
    %c0_241 = arith.constant 0 : index
    %c1536_242 = arith.constant 1536 : index
    %284 = vector.load %arg5[%c0_241, %c1536_242] : memref<8x2048xf32, #tpu.memory_space<vmem>>, vector<8x512xf32>
    tpu.vector_store %arg5[%c0_241, %c1536_242], %283 {strides = array<i32>} : memref<8x2048xf32, #tpu.memory_space<vmem>>, vector<8x512xf32>,
    %285 = vector.shape_cast %283 : vector<8x512xf32> to vector<2x4x512xf32>
    %cst_243 = arith.constant dense<0.000000e+00> : vector<2x4xf32>
    %286 = vector.multi_reduction <add>, %285, %cst_243 [2] : vector<2x4x512xf32> to vector<2x4xf32>
    %287 = vector.shape_cast %286 : vector<2x4xf32> to vector<2x4x1xf32>
    %cst_244 = arith.constant dense<0.000000e+00> : vector<4x1xf32>
    %288 = vector.multi_reduction <add>, %287, %cst_244 [0] : vector<2x4x1xf32> to vector<4x1xf32>
    %289 = vector.shape_cast %288 : vector<4x1xf32> to vector<1x4x1xf32>
    %290 = arith.addf %219, %289 : vector<1x4x1xf32>
    %cst_245 = arith.constant 2.44140625E-4 : f32
    %291 = vector.broadcast %cst_245 : f32 to vector<1x4x1xf32>
    %292 = arith.mulf %290, %291 : vector<1x4x1xf32>
    %cst_246 = arith.constant 0.000000e+00 : f32
    %293 = vector.broadcast %cst_246 : f32 to vector<1x4x1xf32>
    %c0_247 = arith.constant 0 : index
    %c0_248 = arith.constant 0 : index
    %294 = vector.load %arg5[%c0_247, %c0_248] : memref<8x2048xf32, #tpu.memory_space<vmem>>, vector<8x512xf32>
    %295 = vector.shape_cast %294 : vector<8x512xf32> to vector<2x4x512xf32>
    %296 = vector.broadcast %292 : vector<1x4x1xf32> to vector<2x4x512xf32>
    %297 = arith.subf %295, %296 : vector<2x4x512xf32>
    %298 = arith.mulf %297, %297 : vector<2x4x512xf32>
    %cst_249 = arith.constant dense<0.000000e+00> : vector<2x4xf32>
    %299 = vector.multi_reduction <add>, %298, %cst_249 [2] : vector<2x4x512xf32> to vector<2x4xf32>
    %300 = vector.shape_cast %299 : vector<2x4xf32> to vector<2x4x1xf32>
    %cst_250 = arith.constant dense<0.000000e+00> : vector<4x1xf32>
    %301 = vector.multi_reduction <add>, %300, %cst_250 [0] : vector<2x4x1xf32> to vector<4x1xf32>
    %302 = vector.shape_cast %301 : vector<4x1xf32> to vector<1x4x1xf32>
    %303 = arith.addf %293, %302 : vector<1x4x1xf32>
    %c0_251 = arith.constant 0 : index
    %c512_252 = arith.constant 512 : index
    %304 = vector.load %arg5[%c0_251, %c512_252] : memref<8x2048xf32, #tpu.memory_space<vmem>>, vector<8x512xf32>
    %305 = vector.shape_cast %304 : vector<8x512xf32> to vector<2x4x512xf32>
    %306 = vector.broadcast %292 : vector<1x4x1xf32> to vector<2x4x512xf32>
    %307 = arith.subf %305, %306 : vector<2x4x512xf32>
    %308 = arith.mulf %307, %307 : vector<2x4x512xf32>
    %cst_253 = arith.constant dense<0.000000e+00> : vector<2x4xf32>
    %309 = vector.multi_reduction <add>, %308, %cst_253 [2] : vector<2x4x512xf32> to vector<2x4xf32>
    %310 = vector.shape_cast %309 : vector<2x4xf32> to vector<2x4x1xf32>
    %cst_254 = arith.constant dense<0.000000e+00> : vector<4x1xf32>
    %311 = vector.multi_reduction <add>, %310, %cst_254 [0] : vector<2x4x1xf32> to vector<4x1xf32>
    %312 = vector.shape_cast %311 : vector<4x1xf32> to vector<1x4x1xf32>
    %313 = arith.addf %303, %312 : vector<1x4x1xf32>
    %c0_255 = arith.constant 0 : index
    %c1024_256 = arith.constant 1024 : index
    %314 = vector.load %arg5[%c0_255, %c1024_256] : memref<8x2048xf32, #tpu.memory_space<vmem>>, vector<8x512xf32>
    %315 = vector.shape_cast %314 : vector<8x512xf32> to vector<2x4x512xf32>
    %316 = vector.broadcast %292 : vector<1x4x1xf32> to vector<2x4x512xf32>
    %317 = arith.subf %315, %316 : vector<2x4x512xf32>
    %318 = arith.mulf %317, %317 : vector<2x4x512xf32>
    %cst_257 = arith.constant dense<0.000000e+00> : vector<2x4xf32>
    %319 = vector.multi_reduction <add>, %318, %cst_257 [2] : vector<2x4x512xf32> to vector<2x4xf32>
    %320 = vector.shape_cast %319 : vector<2x4xf32> to vector<2x4x1xf32>
    %cst_258 = arith.constant dense<0.000000e+00> : vector<4x1xf32>
    %321 = vector.multi_reduction <add>, %320, %cst_258 [0] : vector<2x4x1xf32> to vector<4x1xf32>
    %322 = vector.shape_cast %321 : vector<4x1xf32> to vector<1x4x1xf32>
    %323 = arith.addf %313, %322 : vector<1x4x1xf32>
    %c0_259 = arith.constant 0 : index
    %c1536_260 = arith.constant 1536 : index
    %324 = vector.load %arg5[%c0_259, %c1536_260] : memref<8x2048xf32, #tpu.memory_space<vmem>>, vector<8x512xf32>
    %325 = vector.shape_cast %324 : vector<8x512xf32> to vector<2x4x512xf32>
    %326 = vector.broadcast %292 : vector<1x4x1xf32> to vector<2x4x512xf32>
    %327 = arith.subf %325, %326 : vector<2x4x512xf32>
    %328 = arith.mulf %327, %327 : vector<2x4x512xf32>
    %cst_261 = arith.constant dense<0.000000e+00> : vector<2x4xf32>
    %329 = vector.multi_reduction <add>, %328, %cst_261 [2] : vector<2x4x512xf32> to vector<2x4xf32>
    %330 = vector.shape_cast %329 : vector<2x4xf32> to vector<2x4x1xf32>
    %cst_262 = arith.constant dense<0.000000e+00> : vector<4x1xf32>
    %331 = vector.multi_reduction <add>, %330, %cst_262 [0] : vector<2x4x1xf32> to vector<4x1xf32>
    %332 = vector.shape_cast %331 : vector<4x1xf32> to vector<1x4x1xf32>
    %333 = arith.addf %323, %332 : vector<1x4x1xf32>
    %cst_263 = arith.constant 2.44140625E-4 : f32
    %334 = vector.broadcast %cst_263 : f32 to vector<1x4x1xf32>
    %335 = arith.mulf %333, %334 : vector<1x4x1xf32>
    %cst_264 = arith.constant 9.99999974E-6 : f32
    %336 = vector.broadcast %cst_264 : f32 to vector<1x4x1xf32>
    %337 = arith.addf %335, %336 : vector<1x4x1xf32>
    %338 = math.rsqrt %337 : vector<1x4x1xf32>
    %c0_265 = arith.constant 0 : index
    %c0_266 = arith.constant 0 : index
    %c0_267 = arith.constant 0 : index
    %339 = vector.load %arg3[%c0_265, %c0_266, %c0_267] : memref<1x4x1xf32, #tpu.memory_space<vmem>>, vector<1x4x1xf32>
    %340 = arith.mulf %338, %339 : vector<1x4x1xf32>
    %c0_268 = arith.constant 0 : index
    %c0_269 = arith.constant 0 : index
    %c0_270 = arith.constant 0 : index
    %341 = vector.load %arg4[%c0_268, %c0_269, %c0_270] : memref<1x4x1xf32, #tpu.memory_space<vmem>>, vector<1x4x1xf32>
    %342 = arith.mulf %292, %340 : vector<1x4x1xf32>
    %343 = arith.subf %341, %342 : vector<1x4x1xf32>
    %c0_271 = arith.constant 0 : index
    %c0_272 = arith.constant 0 : index
    %344 = vector.load %arg5[%c0_271, %c0_272] : memref<8x2048xf32, #tpu.memory_space<vmem>>, vector<8x512xf32>
    %345 = vector.shape_cast %344 : vector<8x512xf32> to vector<2x4x512xf32>
    %346 = vector.broadcast %340 : vector<1x4x1xf32> to vector<2x4x512xf32>
    %347 = arith.mulf %345, %346 : vector<2x4x512xf32>
    %348 = vector.broadcast %343 : vector<1x4x1xf32> to vector<2x4x512xf32>
    %349 = arith.addf %347, %348 : vector<2x4x512xf32>
    %350 = vector.shape_cast %349 : vector<2x4x512xf32> to vector<8x512xf32>
    %c0_273 = arith.constant 0 : index
    %c0_274 = arith.constant 0 : index
    %351 = vector.load %arg5[%c0_273, %c0_274] : memref<8x2048xf32, #tpu.memory_space<vmem>>, vector<8x512xf32>
    tpu.vector_store %arg5[%c0_273, %c0_274], %350 {strides = array<i32>} : memref<8x2048xf32, #tpu.memory_space<vmem>>, vector<8x512xf32>,
    %c0_275 = arith.constant 0 : index
    %c512_276 = arith.constant 512 : index
    %352 = vector.load %arg5[%c0_275, %c512_276] : memref<8x2048xf32, #tpu.memory_space<vmem>>, vector<8x512xf32>
    %353 = vector.shape_cast %352 : vector<8x512xf32> to vector<2x4x512xf32>
    %354 = vector.broadcast %340 : vector<1x4x1xf32> to vector<2x4x512xf32>
    %355 = arith.mulf %353, %354 : vector<2x4x512xf32>
    %356 = vector.broadcast %343 : vector<1x4x1xf32> to vector<2x4x512xf32>
    %357 = arith.addf %355, %356 : vector<2x4x512xf32>
    %358 = vector.shape_cast %357 : vector<2x4x512xf32> to vector<8x512xf32>
    %c0_277 = arith.constant 0 : index
    %c512_278 = arith.constant 512 : index
    %359 = vector.load %arg5[%c0_277, %c512_278] : memref<8x2048xf32, #tpu.memory_space<vmem>>, vector<8x512xf32>
    tpu.vector_store %arg5[%c0_277, %c512_278], %358 {strides = array<i32>} : memref<8x2048xf32, #tpu.memory_space<vmem>>, vector<8x512xf32>,
    %c0_279 = arith.constant 0 : index
    %c1024_280 = arith.constant 1024 : index
    %360 = vector.load %arg5[%c0_279, %c1024_280] : memref<8x2048xf32, #tpu.memory_space<vmem>>, vector<8x512xf32>
    %361 = vector.shape_cast %360 : vector<8x512xf32> to vector<2x4x512xf32>
    %362 = vector.broadcast %340 : vector<1x4x1xf32> to vector<2x4x512xf32>
    %363 = arith.mulf %361, %362 : vector<2x4x512xf32>
    %364 = vector.broadcast %343 : vector<1x4x1xf32> to vector<2x4x512xf32>
    %365 = arith.addf %363, %364 : vector<2x4x512xf32>
    %366 = vector.shape_cast %365 : vector<2x4x512xf32> to vector<8x512xf32>
    %c0_281 = arith.constant 0 : index
    %c1024_282 = arith.constant 1024 : index
    %367 = vector.load %arg5[%c0_281, %c1024_282] : memref<8x2048xf32, #tpu.memory_space<vmem>>, vector<8x512xf32>
    tpu.vector_store %arg5[%c0_281, %c1024_282], %366 {strides = array<i32>} : memref<8x2048xf32, #tpu.memory_space<vmem>>, vector<8x512xf32>,
    %c0_283 = arith.constant 0 : index
    %c1536_284 = arith.constant 1536 : index
    %368 = vector.load %arg5[%c0_283, %c1536_284] : memref<8x2048xf32, #tpu.memory_space<vmem>>, vector<8x512xf32>
    %369 = vector.shape_cast %368 : vector<8x512xf32> to vector<2x4x512xf32>
    %370 = vector.broadcast %340 : vector<1x4x1xf32> to vector<2x4x512xf32>
    %371 = arith.mulf %369, %370 : vector<2x4x512xf32>
    %372 = vector.broadcast %343 : vector<1x4x1xf32> to vector<2x4x512xf32>
    %373 = arith.addf %371, %372 : vector<2x4x512xf32>
    %374 = vector.shape_cast %373 : vector<2x4x512xf32> to vector<8x512xf32>
    %c0_285 = arith.constant 0 : index
    %c1536_286 = arith.constant 1536 : index
    %375 = vector.load %arg5[%c0_285, %c1536_286] : memref<8x2048xf32, #tpu.memory_space<vmem>>, vector<8x512xf32>
    tpu.vector_store %arg5[%c0_285, %c1536_286], %374 {strides = array<i32>} : memref<8x2048xf32, #tpu.memory_space<vmem>>, vector<8x512xf32>,
    return
  }
}

</mosaic_0001>

<llo_original>
// kernel: c2eb_forward.2
$region0: #{c2eb_forward.2}
  #allocation0 [shape = 'u32[]', space=smem, size = 0x4, offset = 0x4, fixed_abs, tag = 'smem constant byte address 0x4 - core index']
  #allocation1 [shape = 'u32[144,128]{1,0:T(1,128)}', space=vmem, size = 0x12000, scoped, tag = 'internal scratch']
  %s0 = inlined_call_operand.vmem [shape: bf16[8,1536], index: 0, kind: input, shape index: {}]
  %s1 = inlined_call_operand.hbm [shape: bf16[1536,2048], index: 1, kind: input, shape index: {}]
  %s2 = inlined_call_operand.vmem [shape: f32[8,2048], index: 2, kind: output, shape index: {}]
  %s3 = sld [smem:[#allocation0]]
  $region45: #{c2eb_forward.2} parent=0
    _
  %s5 = ssub.s32 1, %s3
  %s6 = scalar_select 0, %s5, %s3
  $region1: #{c2eb_forward.2} parent=0
    #allocation2 [shape = 'u8[3145728]{0}', space=vmem, size = 0x300000, scoped, tag = 'input window, operand 1']
    #allocation3 [shape = 's32[2]{0}', space=sflag, size = 0x8, scoped, tag = 'scoped memory for c2eb_forward.2']
    %7 = vsyncpa [#allocation3], 0
    %s8 = scalar_lea.sflag [#allocation3], 1
    %9 = vsyncpa %s8, 0
    loop: start=0, step=1, limit=6
    $region2: #{c2eb_forward.2} parent=1 // loop_pre_header
      _
    $region3: #{c2eb_forward.2} parent=1 // loop_header
      %s11 = sphi 0, %s15
      %p12 = scmp.ge.s32.totalorder %s11, 6
      %s19 = sphi 0, %s19
      %s21 = sphi 0, %s19
      %s22 = sphi 0, %s21
      %s36 = sphi 0, %s22
      %s42 = sphi 0, %s44
      %s45 = sphi 0, %s42
      %s46 = sphi 0, %s45
      %s62 = sphi 0, %s46
      %s68 = sphi 0, %s70
      %s71 = sphi 0, %s68
      %s72 = sphi 0, %s71
      %s88 = sphi 0, %s72
    $region4: #{c2eb_forward.2} parent=1 // loop_header_branch
      %14 = sbr.rel (%p12) target = $region8
    $region5: #{c2eb_forward.2} parent=1 // loop_body
      %s16 = ssub.s32 %s11, 1
      %s17 = ssub.s32 %s11, 2
      %s18 = sadd.s32 %s11, 1
      %s20 = sadd.s32 %s19, 1
      %p23 = scmp.eq.s32.totalorder %s11, 3
      %p24 = scmp.ne.s32.totalorder %s19, %s21
      %p25 = scmp.eq.s32.totalorder %s11, 0
      %p26 = por %p24, %p25
      %p27 = scmp.ne.s32.totalorder %s19, %s21
      %p28 = scmp.eq.s32.totalorder %s16, 3
      %p29 = por %p27, %p28
      %p30 = scmp.ne.s32.totalorder %s21, %s22
      %p31 = scmp.eq.s32.totalorder %s16, 0
      %p32 = por %p30, %p31
      %p33 = scmp.ne.s32.totalorder %s21, %s22
      %p34 = scmp.eq.s32.totalorder %s17, 3
      %p35 = por %p33, %p34
      %p37 = scmp.ne.s32.totalorder %s22, %s36
      %p38 = scmp.eq.s32.totalorder %s17, 0
      %p39 = por %p37, %p38
      %s40 = ssub.s32 %s11, %s18
      %p41 = scmp.eq.s32.totalorder %s40, 0
      %s43 = sadd.s32 %s42, 1
      %s44 = scalar_select %p41, %s42, %s43
      %p47 = pneg %p41
      %p48 = scmp.eq.s32.totalorder %s11, 3
      %p49 = por %p47, %p48
      %p50 = scmp.ne.s32.totalorder %s42, %s45
      %p51 = scmp.eq.s32.totalorder %s11, 0
      %p52 = por %p50, %p51
      %p53 = scmp.ne.s32.totalorder %s42, %s45
      %p54 = scmp.eq.s32.totalorder %s16, 3
      %p55 = por %p53, %p54
      %p56 = scmp.ne.s32.totalorder %s45, %s46
      %p57 = scmp.eq.s32.totalorder %s16, 0
      %p58 = por %p56, %p57
      %p59 = scmp.ne.s32.totalorder %s45, %s46
      %p60 = scmp.eq.s32.totalorder %s17, 3
      %p61 = por %p59, %p60
      %p63 = scmp.ne.s32.totalorder %s46, %s62
      %p64 = scmp.eq.s32.totalorder %s17, 0
      %p65 = por %p63, %p64
      %s66 = ssub.s32 %s11, %s18
      %p67 = scmp.eq.s32.totalorder %s66, 0
      %s69 = sadd.s32 %s68, 1
      %s70 = scalar_select %p67, %s68, %s69
      %p73 = pneg %p67
      %p74 = scmp.eq.s32.totalorder %s11, 3
      %p75 = por %p73, %p74
      %p76 = scmp.ne.s32.totalorder %s68, %s71
      %p77 = scmp.eq.s32.totalorder %s11, 0
      %p78 = por %p76, %p77
      %p79 = scmp.ne.s32.totalorder %s68, %s71
      %p80 = scmp.eq.s32.totalorder %s16, 3
      %p81 = por %p79, %p80
      %p82 = scmp.ne.s32.totalorder %s71, %s72
      %p83 = scmp.eq.s32.totalorder %s16, 0
      %p84 = por %p82, %p83
      %p85 = scmp.ne.s32.totalorder %s71, %s72
      %p86 = scmp.eq.s32.totalorder %s17, 3
      %p87 = por %p85, %p86
      %p89 = scmp.ne.s32.totalorder %s72, %s88
      %p90 = scmp.eq.s32.totalorder %s17, 0
      %p91 = por %p89, %p90
      %p92 = scmp.le.s32.totalorder 1, %s11
      %p93 = scmp.lt.s32.totalorder %s11, 5
      %p94 = pnand %p92, %p93
      %p95 = pneg %p94
      // Predicated region
      $region9: #{c2eb_forward.2} parent=5 // pred_check
        _
      $region10: #{c2eb_forward.2} parent=5 // pred_check_branch
        %97 = sbr.rel (%p94) target = $region12
      $region11: #{c2eb_forward.2} parent=5 // pred_region
        %s98 = ssub.s32 %s11, 1
        // Predicated region
        $region13: #{c2eb_forward.2} parent=11 // pred_check
          %p99 = pneg %p32
        $region14: #{c2eb_forward.2} parent=11 // pred_check_branch
          %101 = sbr.rel (%p99) target = $region16
        $region15: #{c2eb_forward.2} parent=11 // pred_region
          _
        $region16: #{c2eb_forward.2} parent=11 // pred_fallthru
          _
      $region12: #{c2eb_forward.2} parent=5 // pred_fallthru
        _
      %p102 = scmp.lt.s32.totalorder %s11, 4
      // Predicated region
      $region17: #{c2eb_forward.2} parent=5 // pred_check
        %p103 = pneg %p102
      $region18: #{c2eb_forward.2} parent=5 // pred_check_branch
        %105 = sbr.rel (%p103) target = $region20
      $region19: #{c2eb_forward.2} parent=5 // pred_region
        // Predicated region
        $region21: #{c2eb_forward.2} parent=19 // pred_check
          %p106 = pneg %p52
        $region22: #{c2eb_forward.2} parent=19 // pred_check_branch
          %108 = sbr.rel (%p106) target = $region24
        $region23: #{c2eb_forward.2} parent=19 // pred_region
          %s109 = sand.u32 %s42, 1
          %s110 = scalar_lea.sflag [#allocation3], %s109
          %s111 = sand.u32 %s42, 1
          %s112 = smul.addr %s111, 3072
          %s113 = scalar_lea.vmem [#allocation2], %s112
          %s114 = smul.u32 4, %s11
          %s116 = ssub.s32 49152, 49152
          %117 = vsyncadd %s110, %s116
          %s118 = smul.addr %s114, 64
          %s119 = scalar_lea.hbm %s1, %s118
          %s120 = sshll.u32 %s113, 4
          %s121 = int_to_ptr.vmem [resolvable:$true] %s120
          %126 = dma.hbm_to_vmem [thread:$0]  %s119, 49152, %s121, %s110, 1024, 256, 16
        $region24: #{c2eb_forward.2} parent=19 // pred_fallthru
          _
      $region20: #{c2eb_forward.2} parent=5 // pred_fallthru
        _
      %p127 = scmp.le.s32.totalorder 1, %s11
      %p128 = scmp.lt.s32.totalorder %s11, 5
      %p129 = pnand %p127, %p128
      %p130 = pneg %p129
      // Predicated region
      $region25: #{c2eb_forward.2} parent=5 // pred_check
        _
      $region26: #{c2eb_forward.2} parent=5 // pred_check_branch
        %132 = sbr.rel (%p129) target = $region28
      $region27: #{c2eb_forward.2} parent=5 // pred_region
        %s133 = ssub.s32 %s11, 1
        %s134 = sand.u32 %s45, 1
        %s135 = scalar_lea.sflag [#allocation3], %s134
        %s136 = sand.u32 %s45, 1
        %s137 = smul.addr %s136, 3072
        %s138 = scalar_lea.vmem [#allocation2], %s137
        // Predicated region
        $region29: #{c2eb_forward.2} parent=27 // pred_check
          %p139 = pneg %p58
        $region30: #{c2eb_forward.2} parent=27 // pred_check_branch
          %141 = sbr.rel (%p139) target = $region32
        $region31: #{c2eb_forward.2} parent=27 // pred_region
          %142 = dma.done %s135, 49152
        $region32: #{c2eb_forward.2} parent=27 // pred_fallthru
          _
        %p143 = pneg %p32
        %p144 = pneg %p29
        %s145 = sand.u32 %s45, 1
        %s146 = scalar_lea.sflag [#allocation3], %s145
        %s147 = sand.u32 %s45, 1
        %s148 = smul.addr %s147, 3072
        %s149 = scalar_lea.vmem [#allocation2], %s148
        %p150 = pneg %p58
        %p151 = pneg %p55
        %p152 = pneg %p84
        %p153 = pneg %p81
        %s154 = smul.u32 4, %s16
        %p155 = scmp.lt.s32.totalorder %s154, 15
        %s156 = scalar_select %p155, %s154, 15
        %s157 = smul.addr %s156, 8
        %s158 = scalar_lea.vmem %s2, %s157
        %s159 = smul.u32 4, %s16
        %s160 = smul.u32 4, %s16
        %p161 = scmp.lt.s32.totalorder %s160, 15
        %s162 = scalar_select %p161, %s160, 15
        %s163 = smul.addr %s162, 8
        %s164 = scalar_lea.vmem %s2, %s163
        %s165 = smul.u32 4, %s16
        %v166 = vld [vmem:[%s0] sm:$0xff]
        %v167 = vld [vmem:[%s0 + $0x8] sm:$0xff]
        %v168 = vld [vmem:[%s0 + $0x10] sm:$0xff]
        %v169 = vld [vmem:[%s0 + $0x18] sm:$0xff]
        %v170 = vld [vmem:[%s0 + $0x20] sm:$0xff]
        %v171 = vld [vmem:[%s0 + $0x28] sm:$0xff]
        %v172 = vld [vmem:[%s138] sm:$0xff]
        %v173 = vld [vmem:[%s138 + $0x8] sm:$0xff]
        %v174 = vld [vmem:[%s138 + $0x10] sm:$0xff]
        %v175 = vld [vmem:[%s138 + $0x18] sm:$0xff]
        %v176 = vld [vmem:[%s138 + $0x20] sm:$0xff]
        %v177 = vld [vmem:[%s138 + $0x28] sm:$0xff]
        %v178 = vld [vmem:[%s138 + $0x30] sm:$0xff]
        %v179 = vld [vmem:[%s138 + $0x38] sm:$0xff]
        %v180 = vld [vmem:[%s138 + $0x40] sm:$0xff]
        %v181 = vld [vmem:[%s138 + $0x48] sm:$0xff]
        %v182 = vld [vmem:[%s138 + $0x50] sm:$0xff]
        %v183 = vld [vmem:[%s138 + $0x58] sm:$0xff]
        %v184 = vld [vmem:[%s138 + $0x60] sm:$0xff]
        %v185 = vld [vmem:[%s138 + $0x68] sm:$0xff]
        %v186 = vld [vmem:[%s138 + $0x70] sm:$0xff]
        %v187 = vld [vmem:[%s138 + $0x78] sm:$0xff]
        %v188 = vld [vmem:[%s138 + $0x80] sm:$0xff]
        %v189 = vld [vmem:[%s138 + $0x88] sm:$0xff]
        %v190 = vld [vmem:[%s138 + $0x90] sm:$0xff]
        %v191 = vld [vmem:[%s138 + $0x98] sm:$0xff]
        %v192 = vld [vmem:[%s138 + $0xa0] sm:$0xff]
        %v193 = vld [vmem:[%s138 + $0xa8] sm:$0xff]
        %v194 = vld [vmem:[%s138 + $0xb0] sm:$0xff]
        %v195 = vld [vmem:[%s138 + $0xb8] sm:$0xff]
        %v196 = vld [vmem:[%s138 + $0xc0] sm:$0xff]
        %v197 = vld [vmem:[%s138 + $0xc8] sm:$0xff]
        %v198 = vld [vmem:[%s138 + $0xd0] sm:$0xff]
        %v199 = vld [vmem:[%s138 + $0xd8] sm:$0xff]
        %v200 = vld [vmem:[%s138 + $0xe0] sm:$0xff]
        %v201 = vld [vmem:[%s138 + $0xe8] sm:$0xff]
        %v202 = vld [vmem:[%s138 + $0xf0] sm:$0xff]
        %v203 = vld [vmem:[%s138 + $0xf8] sm:$0xff]
        %v204 = vld [vmem:[%s138 + $0x100] sm:$0xff]
        %v205 = vld [vmem:[%s138 + $0x108] sm:$0xff]
        %v206 = vld [vmem:[%s138 + $0x110] sm:$0xff]
        %v207 = vld [vmem:[%s138 + $0x118] sm:$0xff]
        %v208 = vld [vmem:[%s138 + $0x120] sm:$0xff]
        %v209 = vld [vmem:[%s138 + $0x128] sm:$0xff]
        %v210 = vld [vmem:[%s138 + $0x130] sm:$0xff]
        %v211 = vld [vmem:[%s138 + $0x138] sm:$0xff]
        %v212 = vld [vmem:[%s138 + $0x140] sm:$0xff]
        %v213 = vld [vmem:[%s138 + $0x148] sm:$0xff]
        %v214 = vld [vmem:[%s138 + $0x150] sm:$0xff]
        %v215 = vld [vmem:[%s138 + $0x158] sm:$0xff]
        %v216 = vld [vmem:[%s138 + $0x160] sm:$0xff]
        %v217 = vld [vmem:[%s138 + $0x168] sm:$0xff]
        %v218 = vld [vmem:[%s138 + $0x170] sm:$0xff]
        %v219 = vld [vmem:[%s138 + $0x178] sm:$0xff]
        %v220 = vld [vmem:[%s138 + $0x180] sm:$0xff]
        %v221 = vld [vmem:[%s138 + $0x188] sm:$0xff]
        %v222 = vld [vmem:[%s138 + $0x190] sm:$0xff]
        %v223 = vld [vmem:[%s138 + $0x198] sm:$0xff]
        %v224 = vld [vmem:[%s138 + $0x1a0] sm:$0xff]
        %v225 = vld [vmem:[%s138 + $0x1a8] sm:$0xff]
        %v226 = vld [vmem:[%s138 + $0x1b0] sm:$0xff]
        %v227 = vld [vmem:[%s138 + $0x1b8] sm:$0xff]
        %v228 = vld [vmem:[%s138 + $0x1c0] sm:$0xff]
        %v229 = vld [vmem:[%s138 + $0x1c8] sm:$0xff]
        %v230 = vld [vmem:[%s138 + $0x1d0] sm:$0xff]
        %v231 = vld [vmem:[%s138 + $0x1d8] sm:$0xff]
        %v232 = vld [vmem:[%s138 + $0x1e0] sm:$0xff]
        %v233 = vld [vmem:[%s138 + $0x1e8] sm:$0xff]
        %v234 = vld [vmem:[%s138 + $0x1f0] sm:$0xff]
        %v235 = vld [vmem:[%s138 + $0x1f8] sm:$0xff]
        %v236 = vld [vmem:[%s138 + $0x200] sm:$0xff]
        %v237 = vld [vmem:[%s138 + $0x208] sm:$0xff]
        %v238 = vld [vmem:[%s138 + $0x210] sm:$0xff]
        %v239 = vld [vmem:[%s138 + $0x218] sm:$0xff]
        %v240 = vld [vmem:[%s138 + $0x220] sm:$0xff]
        %v241 = vld [vmem:[%s138 + $0x228] sm:$0xff]
        %v242 = vld [vmem:[%s138 + $0x230] sm:$0xff]
        %v243 = vld [vmem:[%s138 + $0x238] sm:$0xff]
        %v244 = vld [vmem:[%s138 + $0x240] sm:$0xff]
        %v245 = vld [vmem:[%s138 + $0x248] sm:$0xff]
        %v246 = vld [vmem:[%s138 + $0x250] sm:$0xff]
        %v247 = vld [vmem:[%s138 + $0x258] sm:$0xff]
        %v248 = vld [vmem:[%s138 + $0x260] sm:$0xff]
        %v249 = vld [vmem:[%s138 + $0x268] sm:$0xff]
        %v250 = vld [vmem:[%s138 + $0x270] sm:$0xff]
        %v251 = vld [vmem:[%s138 + $0x278] sm:$0xff]
        %v252 = vld [vmem:[%s138 + $0x280] sm:$0xff]
        %v253 = vld [vmem:[%s138 + $0x288] sm:$0xff]
        %v254 = vld [vmem:[%s138 + $0x290] sm:$0xff]
        %v255 = vld [vmem:[%s138 + $0x298] sm:$0xff]
        %v256 = vld [vmem:[%s138 + $0x2a0] sm:$0xff]
        %v257 = vld [vmem:[%s138 + $0x2a8] sm:$0xff]
        %v258 = vld [vmem:[%s138 + $0x2b0] sm:$0xff]
        %v259 = vld [vmem:[%s138 + $0x2b8] sm:$0xff]
        %v260 = vld [vmem:[%s138 + $0x2c0] sm:$0xff]
        %v261 = vld [vmem:[%s138 + $0x2c8] sm:$0xff]
        %v262 = vld [vmem:[%s138 + $0x2d0] sm:$0xff]
        %v263 = vld [vmem:[%s138 + $0x2d8] sm:$0xff]
        %v264 = vld [vmem:[%s138 + $0x2e0] sm:$0xff]
        %v265 = vld [vmem:[%s138 + $0x2e8] sm:$0xff]
        %v266 = vld [vmem:[%s138 + $0x2f0] sm:$0xff]
        %v267 = vld [vmem:[%s138 + $0x2f8] sm:$0xff]
        %v268 = vld [vmem:[%s138 + $0x300] sm:$0xff]
        %v269 = vld [vmem:[%s138 + $0x308] sm:$0xff]
        %v270 = vld [vmem:[%s138 + $0x310] sm:$0xff]
        %v271 = vld [vmem:[%s138 + $0x318] sm:$0xff]
        %v272 = vld [vmem:[%s138 + $0x320] sm:$0xff]
        %v273 = vld [vmem:[%s138 + $0x328] sm:$0xff]
        %v274 = vld [vmem:[%s138 + $0x330] sm:$0xff]
        %v275 = vld [vmem:[%s138 + $0x338] sm:$0xff]
        %v276 = vld [vmem:[%s138 + $0x340] sm:$0xff]
        %v277 = vld [vmem:[%s138 + $0x348] sm:$0xff]
        %v278 = vld [vmem:[%s138 + $0x350] sm:$0xff]
        %v279 = vld [vmem:[%s138 + $0x358] sm:$0xff]
        %v280 = vld [vmem:[%s138 + $0x360] sm:$0xff]
        %v281 = vld [vmem:[%s138 + $0x368] sm:$0xff]
        %v282 = vld [vmem:[%s138 + $0x370] sm:$0xff]
        %v283 = vld [vmem:[%s138 + $0x378] sm:$0xff]
        %v284 = vld [vmem:[%s138 + $0x380] sm:$0xff]
        %v285 = vld [vmem:[%s138 + $0x388] sm:$0xff]
        %v286 = vld [vmem:[%s138 + $0x390] sm:$0xff]
        %v287 = vld [vmem:[%s138 + $0x398] sm:$0xff]
        %v288 = vld [vmem:[%s138 + $0x3a0] sm:$0xff]
        %v289 = vld [vmem:[%s138 + $0x3a8] sm:$0xff]
        %v290 = vld [vmem:[%s138 + $0x3b0] sm:$0xff]
        %v291 = vld [vmem:[%s138 + $0x3b8] sm:$0xff]
        %v292 = vld [vmem:[%s138 + $0x3c0] sm:$0xff]
        %v293 = vld [vmem:[%s138 + $0x3c8] sm:$0xff]
        %v294 = vld [vmem:[%s138 + $0x3d0] sm:$0xff]
        %v295 = vld [vmem:[%s138 + $0x3d8] sm:$0xff]
        %v296 = vld [vmem:[%s138 + $0x3e0] sm:$0xff]
        %v297 = vld [vmem:[%s138 + $0x3e8] sm:$0xff]
        %v298 = vld [vmem:[%s138 + $0x3f0] sm:$0xff]
        %v299 = vld [vmem:[%s138 + $0x3f8] sm:$0xff]
        %v300 = vld [vmem:[%s138 + $0x400] sm:$0xff]
        %v301 = vld [vmem:[%s138 + $0x408] sm:$0xff]
        %v302 = vld [vmem:[%s138 + $0x410] sm:$0xff]
        %v303 = vld [vmem:[%s138 + $0x418] sm:$0xff]
        %v304 = vld [vmem:[%s138 + $0x420] sm:$0xff]
        %v305 = vld [vmem:[%s138 + $0x428] sm:$0xff]
        %v306 = vld [vmem:[%s138 + $0x430] sm:$0xff]
        %v307 = vld [vmem:[%s138 + $0x438] sm:$0xff]
        %v308 = vld [vmem:[%s138 + $0x440] sm:$0xff]
        %v309 = vld [vmem:[%s138 + $0x448] sm:$0xff]
        %v310 = vld [vmem:[%s138 + $0x450] sm:$0xff]
        %v311 = vld [vmem:[%s138 + $0x458] sm:$0xff]
        %v312 = vld [vmem:[%s138 + $0x460] sm:$0xff]
        %v313 = vld [vmem:[%s138 + $0x468] sm:$0xff]
        %v314 = vld [vmem:[%s138 + $0x470] sm:$0xff]
        %v315 = vld [vmem:[%s138 + $0x478] sm:$0xff]
        %v316 = vld [vmem:[%s138 + $0x480] sm:$0xff]
        %v317 = vld [vmem:[%s138 + $0x488] sm:$0xff]
        %v318 = vld [vmem:[%s138 + $0x490] sm:$0xff]
        %v319 = vld [vmem:[%s138 + $0x498] sm:$0xff]
        %v320 = vld [vmem:[%s138 + $0x4a0] sm:$0xff]
        %v321 = vld [vmem:[%s138 + $0x4a8] sm:$0xff]
        %v322 = vld [vmem:[%s138 + $0x4b0] sm:$0xff]
        %v323 = vld [vmem:[%s138 + $0x4b8] sm:$0xff]
        %v324 = vld [vmem:[%s138 + $0x4c0] sm:$0xff]
        %v325 = vld [vmem:[%s138 + $0x4c8] sm:$0xff]
        %v326 = vld [vmem:[%s138 + $0x4d0] sm:$0xff]
        %v327 = vld [vmem:[%s138 + $0x4d8] sm:$0xff]
        %v328 = vld [vmem:[%s138 + $0x4e0] sm:$0xff]
        %v329 = vld [vmem:[%s138 + $0x4e8] sm:$0xff]
        %v330 = vld [vmem:[%s138 + $0x4f0] sm:$0xff]
        %v331 = vld [vmem:[%s138 + $0x4f8] sm:$0xff]
        %v332 = vld [vmem:[%s138 + $0x500] sm:$0xff]
        %v333 = vld [vmem:[%s138 + $0x508] sm:$0xff]
        %v334 = vld [vmem:[%s138 + $0x510] sm:$0xff]
        %v335 = vld [vmem:[%s138 + $0x518] sm:$0xff]
        %v336 = vld [vmem:[%s138 + $0x520] sm:$0xff]
        %v337 = vld [vmem:[%s138 + $0x528] sm:$0xff]
        %v338 = vld [vmem:[%s138 + $0x530] sm:$0xff]
        %v339 = vld [vmem:[%s138 + $0x538] sm:$0xff]
        %v340 = vld [vmem:[%s138 + $0x540] sm:$0xff]
        %v341 = vld [vmem:[%s138 + $0x548] sm:$0xff]
        %v342 = vld [vmem:[%s138 + $0x550] sm:$0xff]
        %v343 = vld [vmem:[%s138 + $0x558] sm:$0xff]
        %v344 = vld [vmem:[%s138 + $0x560] sm:$0xff]
        %v345 = vld [vmem:[%s138 + $0x568] sm:$0xff]
        %v346 = vld [vmem:[%s138 + $0x570] sm:$0xff]
        %v347 = vld [vmem:[%s138 + $0x578] sm:$0xff]
        %v348 = vld [vmem:[%s138 + $0x580] sm:$0xff]
        %v349 = vld [vmem:[%s138 + $0x588] sm:$0xff]
        %v350 = vld [vmem:[%s138 + $0x590] sm:$0xff]
        %v351 = vld [vmem:[%s138 + $0x598] sm:$0xff]
        %v352 = vld [vmem:[%s138 + $0x5a0] sm:$0xff]
        %v353 = vld [vmem:[%s138 + $0x5a8] sm:$0xff]
        %v354 = vld [vmem:[%s138 + $0x5b0] sm:$0xff]
        %v355 = vld [vmem:[%s138 + $0x5b8] sm:$0xff]
        %v356 = vld [vmem:[%s138 + $0x5c0] sm:$0xff]
        %v357 = vld [vmem:[%s138 + $0x5c8] sm:$0xff]
        %v358 = vld [vmem:[%s138 + $0x5d0] sm:$0xff]
        %v359 = vld [vmem:[%s138 + $0x5d8] sm:$0xff]
        %v360 = vld [vmem:[%s138 + $0x5e0] sm:$0xff]
        %v361 = vld [vmem:[%s138 + $0x5e8] sm:$0xff]
        %v362 = vld [vmem:[%s138 + $0x5f0] sm:$0xff]
        %v363 = vld [vmem:[%s138 + $0x5f8] sm:$0xff]
        %v364 = vld [vmem:[%s138 + $0x600] sm:$0xff]
        %v365 = vld [vmem:[%s138 + $0x608] sm:$0xff]
        %v366 = vld [vmem:[%s138 + $0x610] sm:$0xff]
        %v367 = vld [vmem:[%s138 + $0x618] sm:$0xff]
        %v368 = vld [vmem:[%s138 + $0x620] sm:$0xff]
        %v369 = vld [vmem:[%s138 + $0x628] sm:$0xff]
        %v370 = vld [vmem:[%s138 + $0x630] sm:$0xff]
        %v371 = vld [vmem:[%s138 + $0x638] sm:$0xff]
        %v372 = vld [vmem:[%s138 + $0x640] sm:$0xff]
        %v373 = vld [vmem:[%s138 + $0x648] sm:$0xff]
        %v374 = vld [vmem:[%s138 + $0x650] sm:$0xff]
        %v375 = vld [vmem:[%s138 + $0x658] sm:$0xff]
        %v376 = vld [vmem:[%s138 + $0x660] sm:$0xff]
        %v377 = vld [vmem:[%s138 + $0x668] sm:$0xff]
        %v378 = vld [vmem:[%s138 + $0x670] sm:$0xff]
        %v379 = vld [vmem:[%s138 + $0x678] sm:$0xff]
        %v380 = vld [vmem:[%s138 + $0x680] sm:$0xff]
        %v381 = vld [vmem:[%s138 + $0x688] sm:$0xff]
        %v382 = vld [vmem:[%s138 + $0x690] sm:$0xff]
        %v383 = vld [vmem:[%s138 + $0x698] sm:$0xff]
        %v384 = vld [vmem:[%s138 + $0x6a0] sm:$0xff]
        %v385 = vld [vmem:[%s138 + $0x6a8] sm:$0xff]
        %v386 = vld [vmem:[%s138 + $0x6b0] sm:$0xff]
        %v387 = vld [vmem:[%s138 + $0x6b8] sm:$0xff]
        %v388 = vld [vmem:[%s138 + $0x6c0] sm:$0xff]
        %v389 = vld [vmem:[%s138 + $0x6c8] sm:$0xff]
        %v390 = vld [vmem:[%s138 + $0x6d0] sm:$0xff]
        %v391 = vld [vmem:[%s138 + $0x6d8] sm:$0xff]
        %v392 = vld [vmem:[%s138 + $0x6e0] sm:$0xff]
        %v393 = vld [vmem:[%s138 + $0x6e8] sm:$0xff]
        %v394 = vld [vmem:[%s138 + $0x6f0] sm:$0xff]
        %v395 = vld [vmem:[%s138 + $0x6f8] sm:$0xff]
        %v396 = vld [vmem:[%s138 + $0x700] sm:$0xff]
        %v397 = vld [vmem:[%s138 + $0x708] sm:$0xff]
        %v398 = vld [vmem:[%s138 + $0x710] sm:$0xff]
        %v399 = vld [vmem:[%s138 + $0x718] sm:$0xff]
        %v400 = vld [vmem:[%s138 + $0x720] sm:$0xff]
        %v401 = vld [vmem:[%s138 + $0x728] sm:$0xff]
        %v402 = vld [vmem:[%s138 + $0x730] sm:$0xff]
        %v403 = vld [vmem:[%s138 + $0x738] sm:$0xff]
        %v404 = vld [vmem:[%s138 + $0x740] sm:$0xff]
        %v405 = vld [vmem:[%s138 + $0x748] sm:$0xff]
        %v406 = vld [vmem:[%s138 + $0x750] sm:$0xff]
        %v407 = vld [vmem:[%s138 + $0x758] sm:$0xff]
        %v408 = vld [vmem:[%s138 + $0x760] sm:$0xff]
        %v409 = vld [vmem:[%s138 + $0x768] sm:$0xff]
        %v410 = vld [vmem:[%s138 + $0x770] sm:$0xff]
        %v411 = vld [vmem:[%s138 + $0x778] sm:$0xff]
        %v412 = vld [vmem:[%s138 + $0x780] sm:$0xff]
        %v413 = vld [vmem:[%s138 + $0x788] sm:$0xff]
        %v414 = vld [vmem:[%s138 + $0x790] sm:$0xff]
        %v415 = vld [vmem:[%s138 + $0x798] sm:$0xff]
        %v416 = vld [vmem:[%s138 + $0x7a0] sm:$0xff]
        %v417 = vld [vmem:[%s138 + $0x7a8] sm:$0xff]
        %v418 = vld [vmem:[%s138 + $0x7b0] sm:$0xff]
        %v419 = vld [vmem:[%s138 + $0x7b8] sm:$0xff]
        %v420 = vld [vmem:[%s138 + $0x7c0] sm:$0xff]
        %v421 = vld [vmem:[%s138 + $0x7c8] sm:$0xff]
        %v422 = vld [vmem:[%s138 + $0x7d0] sm:$0xff]
        %v423 = vld [vmem:[%s138 + $0x7d8] sm:$0xff]
        %v424 = vld [vmem:[%s138 + $0x7e0] sm:$0xff]
        %v425 = vld [vmem:[%s138 + $0x7e8] sm:$0xff]
        %v426 = vld [vmem:[%s138 + $0x7f0] sm:$0xff]
        %v427 = vld [vmem:[%s138 + $0x7f8] sm:$0xff]
        %v428 = vld [vmem:[%s138 + $0x800] sm:$0xff]
        %v429 = vld [vmem:[%s138 + $0x808] sm:$0xff]
        %v430 = vld [vmem:[%s138 + $0x810] sm:$0xff]
        %v431 = vld [vmem:[%s138 + $0x818] sm:$0xff]
        %v432 = vld [vmem:[%s138 + $0x820] sm:$0xff]
        %v433 = vld [vmem:[%s138 + $0x828] sm:$0xff]
        %v434 = vld [vmem:[%s138 + $0x830] sm:$0xff]
        %v435 = vld [vmem:[%s138 + $0x838] sm:$0xff]
        %v436 = vld [vmem:[%s138 + $0x840] sm:$0xff]
        %v437 = vld [vmem:[%s138 + $0x848] sm:$0xff]
        %v438 = vld [vmem:[%s138 + $0x850] sm:$0xff]
        %v439 = vld [vmem:[%s138 + $0x858] sm:$0xff]
        %v440 = vld [vmem:[%s138 + $0x860] sm:$0xff]
        %v441 = vld [vmem:[%s138 + $0x868] sm:$0xff]
        %v442 = vld [vmem:[%s138 + $0x870] sm:$0xff]
        %v443 = vld [vmem:[%s138 + $0x878] sm:$0xff]
        %v444 = vld [vmem:[%s138 + $0x880] sm:$0xff]
        %v445 = vld [vmem:[%s138 + $0x888] sm:$0xff]
        %v446 = vld [vmem:[%s138 + $0x890] sm:$0xff]
        %v447 = vld [vmem:[%s138 + $0x898] sm:$0xff]
        %v448 = vld [vmem:[%s138 + $0x8a0] sm:$0xff]
        %v449 = vld [vmem:[%s138 + $0x8a8] sm:$0xff]
        %v450 = vld [vmem:[%s138 + $0x8b0] sm:$0xff]
        %v451 = vld [vmem:[%s138 + $0x8b8] sm:$0xff]
        %v452 = vld [vmem:[%s138 + $0x8c0] sm:$0xff]
        %v453 = vld [vmem:[%s138 + $0x8c8] sm:$0xff]
        %v454 = vld [vmem:[%s138 + $0x8d0] sm:$0xff]
        %v455 = vld [vmem:[%s138 + $0x8d8] sm:$0xff]
        %v456 = vld [vmem:[%s138 + $0x8e0] sm:$0xff]
        %v457 = vld [vmem:[%s138 + $0x8e8] sm:$0xff]
        %v458 = vld [vmem:[%s138 + $0x8f0] sm:$0xff]
        %v459 = vld [vmem:[%s138 + $0x8f8] sm:$0xff]
        %v460 = vld [vmem:[%s138 + $0x900] sm:$0xff]
        %v461 = vld [vmem:[%s138 + $0x908] sm:$0xff]
        %v462 = vld [vmem:[%s138 + $0x910] sm:$0xff]
        %v463 = vld [vmem:[%s138 + $0x918] sm:$0xff]
        %v464 = vld [vmem:[%s138 + $0x920] sm:$0xff]
        %v465 = vld [vmem:[%s138 + $0x928] sm:$0xff]
        %v466 = vld [vmem:[%s138 + $0x930] sm:$0xff]
        %v467 = vld [vmem:[%s138 + $0x938] sm:$0xff]
        %v468 = vld [vmem:[%s138 + $0x940] sm:$0xff]
        %v469 = vld [vmem:[%s138 + $0x948] sm:$0xff]
        %v470 = vld [vmem:[%s138 + $0x950] sm:$0xff]
        %v471 = vld [vmem:[%s138 + $0x958] sm:$0xff]
        %v472 = vld [vmem:[%s138 + $0x960] sm:$0xff]
        %v473 = vld [vmem:[%s138 + $0x968] sm:$0xff]
        %v474 = vld [vmem:[%s138 + $0x970] sm:$0xff]
        %v475 = vld [vmem:[%s138 + $0x978] sm:$0xff]
        %v476 = vld [vmem:[%s138 + $0x980] sm:$0xff]
        %v477 = vld [vmem:[%s138 + $0x988] sm:$0xff]
        %v478 = vld [vmem:[%s138 + $0x990] sm:$0xff]
        %v479 = vld [vmem:[%s138 + $0x998] sm:$0xff]
        %v480 = vld [vmem:[%s138 + $0x9a0] sm:$0xff]
        %v481 = vld [vmem:[%s138 + $0x9a8] sm:$0xff]
        %v482 = vld [vmem:[%s138 + $0x9b0] sm:$0xff]
        %v483 = vld [vmem:[%s138 + $0x9b8] sm:$0xff]
        %v484 = vld [vmem:[%s138 + $0x9c0] sm:$0xff]
        %v485 = vld [vmem:[%s138 + $0x9c8] sm:$0xff]
        %v486 = vld [vmem:[%s138 + $0x9d0] sm:$0xff]
        %v487 = vld [vmem:[%s138 + $0x9d8] sm:$0xff]
        %v488 = vld [vmem:[%s138 + $0x9e0] sm:$0xff]
        %v489 = vld [vmem:[%s138 + $0x9e8] sm:$0xff]
        %v490 = vld [vmem:[%s138 + $0x9f0] sm:$0xff]
        %v491 = vld [vmem:[%s138 + $0x9f8] sm:$0xff]
        %v492 = vld [vmem:[%s138 + $0xa00] sm:$0xff]
        %v493 = vld [vmem:[%s138 + $0xa08] sm:$0xff]
        %v494 = vld [vmem:[%s138 + $0xa10] sm:$0xff]
        %v495 = vld [vmem:[%s138 + $0xa18] sm:$0xff]
        %v496 = vld [vmem:[%s138 + $0xa20] sm:$0xff]
        %v497 = vld [vmem:[%s138 + $0xa28] sm:$0xff]
        %v498 = vld [vmem:[%s138 + $0xa30] sm:$0xff]
        %v499 = vld [vmem:[%s138 + $0xa38] sm:$0xff]
        %v500 = vld [vmem:[%s138 + $0xa40] sm:$0xff]
        %v501 = vld [vmem:[%s138 + $0xa48] sm:$0xff]
        %v502 = vld [vmem:[%s138 + $0xa50] sm:$0xff]
        %v503 = vld [vmem:[%s138 + $0xa58] sm:$0xff]
        %v504 = vld [vmem:[%s138 + $0xa60] sm:$0xff]
        %v505 = vld [vmem:[%s138 + $0xa68] sm:$0xff]
        %v506 = vld [vmem:[%s138 + $0xa70] sm:$0xff]
        %v507 = vld [vmem:[%s138 + $0xa78] sm:$0xff]
        %v508 = vld [vmem:[%s138 + $0xa80] sm:$0xff]
        %v509 = vld [vmem:[%s138 + $0xa88] sm:$0xff]
        %v510 = vld [vmem:[%s138 + $0xa90] sm:$0xff]
        %v511 = vld [vmem:[%s138 + $0xa98] sm:$0xff]
        %v512 = vld [vmem:[%s138 + $0xaa0] sm:$0xff]
        %v513 = vld [vmem:[%s138 + $0xaa8] sm:$0xff]
        %v514 = vld [vmem:[%s138 + $0xab0] sm:$0xff]
        %v515 = vld [vmem:[%s138 + $0xab8] sm:$0xff]
        %v516 = vld [vmem:[%s138 + $0xac0] sm:$0xff]
        %v517 = vld [vmem:[%s138 + $0xac8] sm:$0xff]
        %v518 = vld [vmem:[%s138 + $0xad0] sm:$0xff]
        %v519 = vld [vmem:[%s138 + $0xad8] sm:$0xff]
        %v520 = vld [vmem:[%s138 + $0xae0] sm:$0xff]
        %v521 = vld [vmem:[%s138 + $0xae8] sm:$0xff]
        %v522 = vld [vmem:[%s138 + $0xaf0] sm:$0xff]
        %v523 = vld [vmem:[%s138 + $0xaf8] sm:$0xff]
        %v524 = vld [vmem:[%s138 + $0xb00] sm:$0xff]
        %v525 = vld [vmem:[%s138 + $0xb08] sm:$0xff]
        %v526 = vld [vmem:[%s138 + $0xb10] sm:$0xff]
        %v527 = vld [vmem:[%s138 + $0xb18] sm:$0xff]
        %v528 = vld [vmem:[%s138 + $0xb20] sm:$0xff]
        %v529 = vld [vmem:[%s138 + $0xb28] sm:$0xff]
        %v530 = vld [vmem:[%s138 + $0xb30] sm:$0xff]
        %v531 = vld [vmem:[%s138 + $0xb38] sm:$0xff]
        %v532 = vld [vmem:[%s138 + $0xb40] sm:$0xff]
        %v533 = vld [vmem:[%s138 + $0xb48] sm:$0xff]
        %v534 = vld [vmem:[%s138 + $0xb50] sm:$0xff]
        %v535 = vld [vmem:[%s138 + $0xb58] sm:$0xff]
        %v536 = vld [vmem:[%s138 + $0xb60] sm:$0xff]
        %v537 = vld [vmem:[%s138 + $0xb68] sm:$0xff]
        %v538 = vld [vmem:[%s138 + $0xb70] sm:$0xff]
        %v539 = vld [vmem:[%s138 + $0xb78] sm:$0xff]
        %v540 = vld [vmem:[%s138 + $0xb80] sm:$0xff]
        %v541 = vld [vmem:[%s138 + $0xb88] sm:$0xff]
        %v542 = vld [vmem:[%s138 + $0xb90] sm:$0xff]
        %v543 = vld [vmem:[%s138 + $0xb98] sm:$0xff]
        %v544 = vld [vmem:[%s138 + $0xba0] sm:$0xff]
        %v545 = vld [vmem:[%s138 + $0xba8] sm:$0xff]
        %v546 = vld [vmem:[%s138 + $0xbb0] sm:$0xff]
        %v547 = vld [vmem:[%s138 + $0xbb8] sm:$0xff]
        %v548 = vld [vmem:[%s138 + $0xbc0] sm:$0xff]
        %v549 = vld [vmem:[%s138 + $0xbc8] sm:$0xff]
        %v550 = vld [vmem:[%s138 + $0xbd0] sm:$0xff]
        %v551 = vld [vmem:[%s138 + $0xbd8] sm:$0xff]
        %v552 = vld [vmem:[%s138 + $0xbe0] sm:$0xff]
        %v553 = vld [vmem:[%s138 + $0xbe8] sm:$0xff]
        %v554 = vld [vmem:[%s138 + $0xbf0] sm:$0xff]
        %v555 = vld [vmem:[%s138 + $0xbf8] sm:$0xff]
        %v562 = vunpack.c.l.b16 %v166
        %v563 = vunpack.c.h.b16 %v166
        %v564 = vunpack.c.l.b16 %v167
        %v565 = vunpack.c.h.b16 %v167
        %v566 = vunpack.c.l.b16 %v168
        %v567 = vunpack.c.h.b16 %v168
        %v568 = vunpack.c.l.b16 %v169
        %v569 = vunpack.c.h.b16 %v169
        %v570 = vunpack.c.l.b16 %v170
        %v571 = vunpack.c.h.b16 %v170
        %v572 = vunpack.c.l.b16 %v171
        %v573 = vunpack.c.h.b16 %v171
        %v574 = vpack.c.b16 %v562, %v562
        %v575 = vpack.c.b16 %v563, %v563
        %v576 = vpack.c.b16 %v564, %v564
        %v577 = vpack.c.b16 %v565, %v565
        %v578 = vpack.c.b16 %v566, %v566
        %v579 = vpack.c.b16 %v567, %v567
        %v580 = vpack.c.b16 %v568, %v568
        %v581 = vpack.c.b16 %v569, %v569
        %v582 = vpack.c.b16 %v570, %v570
        %v583 = vpack.c.b16 %v571, %v571
        %v584 = vpack.c.b16 %v572, %v572
        %v585 = vpack.c.b16 %v573, %v573
        %v982 = vunpack.c.l.b16 %v172
        %v983 = vunpack.c.h.b16 %v172
        %v984 = vunpack.c.l.b16 %v173
        %v985 = vunpack.c.h.b16 %v173
        %v986 = vunpack.c.l.b16 %v174
        %v987 = vunpack.c.h.b16 %v174
        %v988 = vunpack.c.l.b16 %v175
        %v989 = vunpack.c.h.b16 %v175
        %v990 = vunpack.c.l.b16 %v176
        %v991 = vunpack.c.h.b16 %v176
        %v992 = vunpack.c.l.b16 %v177
        %v993 = vunpack.c.h.b16 %v177
        %v994 = vunpack.c.l.b16 %v178
        %v995 = vunpack.c.h.b16 %v178
        %v996 = vunpack.c.l.b16 %v179
        %v997 = vunpack.c.h.b16 %v179
        %v998 = vunpack.c.l.b16 %v180
        %v999 = vunpack.c.h.b16 %v180
        %v1000 = vunpack.c.l.b16 %v181
        %v1001 = vunpack.c.h.b16 %v181
        %v1002 = vunpack.c.l.b16 %v182
        %v1003 = vunpack.c.h.b16 %v182
        %v1004 = vunpack.c.l.b16 %v183
        %v1005 = vunpack.c.h.b16 %v183
        %v1006 = vunpack.c.l.b16 %v184
        %v1007 = vunpack.c.h.b16 %v184
        %v1008 = vunpack.c.l.b16 %v185
        %v1009 = vunpack.c.h.b16 %v185
        %v1010 = vunpack.c.l.b16 %v186
        %v1011 = vunpack.c.h.b16 %v186
        %v1012 = vunpack.c.l.b16 %v187
        %v1013 = vunpack.c.h.b16 %v187
        %v1014 = vunpack.c.l.b16 %v188
        %v1015 = vunpack.c.h.b16 %v188
        %v1016 = vunpack.c.l.b16 %v189
        %v1017 = vunpack.c.h.b16 %v189
        %v1018 = vunpack.c.l.b16 %v190
        %v1019 = vunpack.c.h.b16 %v190
        %v1020 = vunpack.c.l.b16 %v191
        %v1021 = vunpack.c.h.b16 %v191
        %v1022 = vunpack.c.l.b16 %v192
        %v1023 = vunpack.c.h.b16 %v192
        %v1024 = vunpack.c.l.b16 %v193
        %v1025 = vunpack.c.h.b16 %v193
        %v1026 = vunpack.c.l.b16 %v194
        %v1027 = vunpack.c.h.b16 %v194
        %v1028 = vunpack.c.l.b16 %v195
        %v1029 = vunpack.c.h.b16 %v195
        %v1030 = vunpack.c.l.b16 %v196
        %v1031 = vunpack.c.h.b16 %v196
        %v1032 = vunpack.c.l.b16 %v197
        %v1033 = vunpack.c.h.b16 %v197
        %v1034 = vunpack.c.l.b16 %v198
        %v1035 = vunpack.c.h.b16 %v198
        %v1036 = vunpack.c.l.b16 %v199
        %v1037 = vunpack.c.h.b16 %v199
        %v1038 = vunpack.c.l.b16 %v200
        %v1039 = vunpack.c.h.b16 %v200
        %v1040 = vunpack.c.l.b16 %v201
        %v1041 = vunpack.c.h.b16 %v201
        %v1042 = vunpack.c.l.b16 %v202
        %v1043 = vunpack.c.h.b16 %v202
        %v1044 = vunpack.c.l.b16 %v203
        %v1045 = vunpack.c.h.b16 %v203
        %v1046 = vunpack.c.l.b16 %v204
        %v1047 = vunpack.c.h.b16 %v204
        %v1048 = vunpack.c.l.b16 %v205
        %v1049 = vunpack.c.h.b16 %v205
        %v1050 = vunpack.c.l.b16 %v206
        %v1051 = vunpack.c.h.b16 %v206
        %v1052 = vunpack.c.l.b16 %v207
        %v1053 = vunpack.c.h.b16 %v207
        %v1054 = vunpack.c.l.b16 %v208
        %v1055 = vunpack.c.h.b16 %v208
        %v1056 = vunpack.c.l.b16 %v209
        %v1057 = vunpack.c.h.b16 %v209
        %v1058 = vunpack.c.l.b16 %v210
        %v1059 = vunpack.c.h.b16 %v210
        %v1060 = vunpack.c.l.b16 %v211
        %v1061 = vunpack.c.h.b16 %v211
        %v1062 = vunpack.c.l.b16 %v212
        %v1063 = vunpack.c.h.b16 %v212
        %v1064 = vunpack.c.l.b16 %v213
        %v1065 = vunpack.c.h.b16 %v213
        %v1066 = vunpack.c.l.b16 %v214
        %v1067 = vunpack.c.h.b16 %v214
        %v1068 = vunpack.c.l.b16 %v215
        %v1069 = vunpack.c.h.b16 %v215
        %v1070 = vunpack.c.l.b16 %v216
        %v1071 = vunpack.c.h.b16 %v216
        %v1072 = vunpack.c.l.b16 %v217
        %v1073 = vunpack.c.h.b16 %v217
        %v1074 = vunpack.c.l.b16 %v218
        %v1075 = vunpack.c.h.b16 %v218
        %v1076 = vunpack.c.l.b16 %v219
        %v1077 = vunpack.c.h.b16 %v219
        %v1078 = vunpack.c.l.b16 %v220
        %v1079 = vunpack.c.h.b16 %v220
        %v1080 = vunpack.c.l.b16 %v221
        %v1081 = vunpack.c.h.b16 %v221
        %v1082 = vunpack.c.l.b16 %v222
        %v1083 = vunpack.c.h.b16 %v222
        %v1084 = vunpack.c.l.b16 %v223
        %v1085 = vunpack.c.h.b16 %v223
        %v1086 = vunpack.c.l.b16 %v224
        %v1087 = vunpack.c.h.b16 %v224
        %v1088 = vunpack.c.l.b16 %v225
        %v1089 = vunpack.c.h.b16 %v225
        %v1090 = vunpack.c.l.b16 %v226
        %v1091 = vunpack.c.h.b16 %v226
        %v1092 = vunpack.c.l.b16 %v227
        %v1093 = vunpack.c.h.b16 %v227
        %v1094 = vunpack.c.l.b16 %v228
        %v1095 = vunpack.c.h.b16 %v228
        %v1096 = vunpack.c.l.b16 %v229
        %v1097 = vunpack.c.h.b16 %v229
        %v1098 = vunpack.c.l.b16 %v230
        %v1099 = vunpack.c.h.b16 %v230
        %v1100 = vunpack.c.l.b16 %v231
        %v1101 = vunpack.c.h.b16 %v231
        %v1102 = vunpack.c.l.b16 %v232
        %v1103 = vunpack.c.h.b16 %v232
        %v1104 = vunpack.c.l.b16 %v233
        %v1105 = vunpack.c.h.b16 %v233
        %v1106 = vunpack.c.l.b16 %v234
        %v1107 = vunpack.c.h.b16 %v234
        %v1108 = vunpack.c.l.b16 %v235
        %v1109 = vunpack.c.h.b16 %v235
        %v1110 = vunpack.c.l.b16 %v236
        %v1111 = vunpack.c.h.b16 %v236
        %v1112 = vunpack.c.l.b16 %v237
        %v1113 = vunpack.c.h.b16 %v237
        %v1114 = vunpack.c.l.b16 %v238
        %v1115 = vunpack.c.h.b16 %v238
        %v1116 = vunpack.c.l.b16 %v239
        %v1117 = vunpack.c.h.b16 %v239
        %v1118 = vunpack.c.l.b16 %v240
        %v1119 = vunpack.c.h.b16 %v240
        %v1120 = vunpack.c.l.b16 %v241
        %v1121 = vunpack.c.h.b16 %v241
        %v1122 = vunpack.c.l.b16 %v242
        %v1123 = vunpack.c.h.b16 %v242
        %v1124 = vunpack.c.l.b16 %v243
        %v1125 = vunpack.c.h.b16 %v243
        %v1126 = vunpack.c.l.b16 %v244
        %v1127 = vunpack.c.h.b16 %v244
        %v1128 = vunpack.c.l.b16 %v245
        %v1129 = vunpack.c.h.b16 %v245
        %v1130 = vunpack.c.l.b16 %v246
        %v1131 = vunpack.c.h.b16 %v246
        %v1132 = vunpack.c.l.b16 %v247
        %v1133 = vunpack.c.h.b16 %v247
        %v1134 = vunpack.c.l.b16 %v248
        %v1135 = vunpack.c.h.b16 %v248
        %v1136 = vunpack.c.l.b16 %v249
        %v1137 = vunpack.c.h.b16 %v249
        %v1138 = vunpack.c.l.b16 %v250
        %v1139 = vunpack.c.h.b16 %v250
        %v1140 = vunpack.c.l.b16 %v251
        %v1141 = vunpack.c.h.b16 %v251
        %v1142 = vunpack.c.l.b16 %v252
        %v1143 = vunpack.c.h.b16 %v252
        %v1144 = vunpack.c.l.b16 %v253
        %v1145 = vunpack.c.h.b16 %v253
        %v1146 = vunpack.c.l.b16 %v254
        %v1147 = vunpack.c.h.b16 %v254
        %v1148 = vunpack.c.l.b16 %v255
        %v1149 = vunpack.c.h.b16 %v255
        %v1150 = vunpack.c.l.b16 %v256
        %v1151 = vunpack.c.h.b16 %v256
        %v1152 = vunpack.c.l.b16 %v257
        %v1153 = vunpack.c.h.b16 %v257
        %v1154 = vunpack.c.l.b16 %v258
        %v1155 = vunpack.c.h.b16 %v258
        %v1156 = vunpack.c.l.b16 %v259
        %v1157 = vunpack.c.h.b16 %v259
        %v1158 = vunpack.c.l.b16 %v260
        %v1159 = vunpack.c.h.b16 %v260
        %v1160 = vunpack.c.l.b16 %v261
        %v1161 = vunpack.c.h.b16 %v261
        %v1162 = vunpack.c.l.b16 %v262
        %v1163 = vunpack.c.h.b16 %v262
        %v1164 = vunpack.c.l.b16 %v263
        %v1165 = vunpack.c.h.b16 %v263
        %v1166 = vunpack.c.l.b16 %v264
        %v1167 = vunpack.c.h.b16 %v264
        %v1168 = vunpack.c.l.b16 %v265
        %v1169 = vunpack.c.h.b16 %v265
        %v1170 = vunpack.c.l.b16 %v266
        %v1171 = vunpack.c.h.b16 %v266
        %v1172 = vunpack.c.l.b16 %v267
        %v1173 = vunpack.c.h.b16 %v267
        %v1174 = vunpack.c.l.b16 %v268
        %v1175 = vunpack.c.h.b16 %v268
        %v1176 = vunpack.c.l.b16 %v269
        %v1177 = vunpack.c.h.b16 %v269
        %v1178 = vunpack.c.l.b16 %v270
        %v1179 = vunpack.c.h.b16 %v270
        %v1180 = vunpack.c.l.b16 %v271
        %v1181 = vunpack.c.h.b16 %v271
        %v1182 = vunpack.c.l.b16 %v272
        %v1183 = vunpack.c.h.b16 %v272
        %v1184 = vunpack.c.l.b16 %v273
        %v1185 = vunpack.c.h.b16 %v273
        %v1186 = vunpack.c.l.b16 %v274
        %v1187 = vunpack.c.h.b16 %v274
        %v1188 = vunpack.c.l.b16 %v275
        %v1189 = vunpack.c.h.b16 %v275
        %v1190 = vunpack.c.l.b16 %v276
        %v1191 = vunpack.c.h.b16 %v276
        %v1192 = vunpack.c.l.b16 %v277
        %v1193 = vunpack.c.h.b16 %v277
        %v1194 = vunpack.c.l.b16 %v278
        %v1195 = vunpack.c.h.b16 %v278
        %v1196 = vunpack.c.l.b16 %v279
        %v1197 = vunpack.c.h.b16 %v279
        %v1198 = vunpack.c.l.b16 %v280
        %v1199 = vunpack.c.h.b16 %v280
        %v1200 = vunpack.c.l.b16 %v281
        %v1201 = vunpack.c.h.b16 %v281
        %v1202 = vunpack.c.l.b16 %v282
        %v1203 = vunpack.c.h.b16 %v282
        %v1204 = vunpack.c.l.b16 %v283
        %v1205 = vunpack.c.h.b16 %v283
        %v1206 = vunpack.c.l.b16 %v284
        %v1207 = vunpack.c.h.b16 %v284
        %v1208 = vunpack.c.l.b16 %v285
        %v1209 = vunpack.c.h.b16 %v285
        %v1210 = vunpack.c.l.b16 %v286
        %v1211 = vunpack.c.h.b16 %v286
        %v1212 = vunpack.c.l.b16 %v287
        %v1213 = vunpack.c.h.b16 %v287
        %v1214 = vunpack.c.l.b16 %v288
        %v1215 = vunpack.c.h.b16 %v288
        %v1216 = vunpack.c.l.b16 %v289
        %v1217 = vunpack.c.h.b16 %v289
        %v1218 = vunpack.c.l.b16 %v290
        %v1219 = vunpack.c.h.b16 %v290
        %v1220 = vunpack.c.l.b16 %v291
        %v1221 = vunpack.c.h.b16 %v291
        %v1222 = vunpack.c.l.b16 %v292
        %v1223 = vunpack.c.h.b16 %v292
        %v1224 = vunpack.c.l.b16 %v293
        %v1225 = vunpack.c.h.b16 %v293
        %v1226 = vunpack.c.l.b16 %v294
        %v1227 = vunpack.c.h.b16 %v294
        %v1228 = vunpack.c.l.b16 %v295
        %v1229 = vunpack.c.h.b16 %v295
        %v1230 = vunpack.c.l.b16 %v296
        %v1231 = vunpack.c.h.b16 %v296
        %v1232 = vunpack.c.l.b16 %v297
        %v1233 = vunpack.c.h.b16 %v297
        %v1234 = vunpack.c.l.b16 %v298
        %v1235 = vunpack.c.h.b16 %v298
        %v1236 = vunpack.c.l.b16 %v299
        %v1237 = vunpack.c.h.b16 %v299
        %v1238 = vunpack.c.l.b16 %v300
        %v1239 = vunpack.c.h.b16 %v300
        %v1240 = vunpack.c.l.b16 %v301
        %v1241 = vunpack.c.h.b16 %v301
        %v1242 = vunpack.c.l.b16 %v302
        %v1243 = vunpack.c.h.b16 %v302
        %v1244 = vunpack.c.l.b16 %v303
        %v1245 = vunpack.c.h.b16 %v303
        %v1246 = vunpack.c.l.b16 %v304
        %v1247 = vunpack.c.h.b16 %v304
        %v1248 = vunpack.c.l.b16 %v305
        %v1249 = vunpack.c.h.b16 %v305
        %v1250 = vunpack.c.l.b16 %v306
        %v1251 = vunpack.c.h.b16 %v306
        %v1252 = vunpack.c.l.b16 %v307
        %v1253 = vunpack.c.h.b16 %v307
        %v1254 = vunpack.c.l.b16 %v308
        %v1255 = vunpack.c.h.b16 %v308
        %v1256 = vunpack.c.l.b16 %v309
        %v1257 = vunpack.c.h.b16 %v309
        %v1258 = vunpack.c.l.b16 %v310
        %v1259 = vunpack.c.h.b16 %v310
        %v1260 = vunpack.c.l.b16 %v311
        %v1261 = vunpack.c.h.b16 %v311
        %v1262 = vunpack.c.l.b16 %v312
        %v1263 = vunpack.c.h.b16 %v312
        %v1264 = vunpack.c.l.b16 %v313
        %v1265 = vunpack.c.h.b16 %v313
        %v1266 = vunpack.c.l.b16 %v314
        %v1267 = vunpack.c.h.b16 %v314
        %v1268 = vunpack.c.l.b16 %v315
        %v1269 = vunpack.c.h.b16 %v315
        %v1270 = vunpack.c.l.b16 %v316
        %v1271 = vunpack.c.h.b16 %v316
        %v1272 = vunpack.c.l.b16 %v317
        %v1273 = vunpack.c.h.b16 %v317
        %v1274 = vunpack.c.l.b16 %v318
        %v1275 = vunpack.c.h.b16 %v318
        %v1276 = vunpack.c.l.b16 %v319
        %v1277 = vunpack.c.h.b16 %v319
        %v1278 = vunpack.c.l.b16 %v320
        %v1279 = vunpack.c.h.b16 %v320
        %v1280 = vunpack.c.l.b16 %v321
        %v1281 = vunpack.c.h.b16 %v321
        %v1282 = vunpack.c.l.b16 %v322
        %v1283 = vunpack.c.h.b16 %v322
        %v1284 = vunpack.c.l.b16 %v323
        %v1285 = vunpack.c.h.b16 %v323
        %v1286 = vunpack.c.l.b16 %v324
        %v1287 = vunpack.c.h.b16 %v324
        %v1288 = vunpack.c.l.b16 %v325
        %v1289 = vunpack.c.h.b16 %v325
        %v1290 = vunpack.c.l.b16 %v326
        %v1291 = vunpack.c.h.b16 %v326
        %v1292 = vunpack.c.l.b16 %v327
        %v1293 = vunpack.c.h.b16 %v327
        %v1294 = vunpack.c.l.b16 %v328
        %v1295 = vunpack.c.h.b16 %v328
        %v1296 = vunpack.c.l.b16 %v329
        %v1297 = vunpack.c.h.b16 %v329
        %v1298 = vunpack.c.l.b16 %v330
        %v1299 = vunpack.c.h.b16 %v330
        %v1300 = vunpack.c.l.b16 %v331
        %v1301 = vunpack.c.h.b16 %v331
        %v1302 = vunpack.c.l.b16 %v332
        %v1303 = vunpack.c.h.b16 %v332
        %v1304 = vunpack.c.l.b16 %v333
        %v1305 = vunpack.c.h.b16 %v333
        %v1306 = vunpack.c.l.b16 %v334
        %v1307 = vunpack.c.h.b16 %v334
        %v1308 = vunpack.c.l.b16 %v335
        %v1309 = vunpack.c.h.b16 %v335
        %v1310 = vunpack.c.l.b16 %v336
        %v1311 = vunpack.c.h.b16 %v336
        %v1312 = vunpack.c.l.b16 %v337
        %v1313 = vunpack.c.h.b16 %v337
        %v1314 = vunpack.c.l.b16 %v338
        %v1315 = vunpack.c.h.b16 %v338
        %v1316 = vunpack.c.l.b16 %v339
        %v1317 = vunpack.c.h.b16 %v339
        %v1318 = vunpack.c.l.b16 %v340
        %v1319 = vunpack.c.h.b16 %v340
        %v1320 = vunpack.c.l.b16 %v341
        %v1321 = vunpack.c.h.b16 %v341
        %v1322 = vunpack.c.l.b16 %v342
        %v1323 = vunpack.c.h.b16 %v342
        %v1324 = vunpack.c.l.b16 %v343
        %v1325 = vunpack.c.h.b16 %v343
        %v1326 = vunpack.c.l.b16 %v344
        %v1327 = vunpack.c.h.b16 %v344
        %v1328 = vunpack.c.l.b16 %v345
        %v1329 = vunpack.c.h.b16 %v345
        %v1330 = vunpack.c.l.b16 %v346
        %v1331 = vunpack.c.h.b16 %v346
        %v1332 = vunpack.c.l.b16 %v347
        %v1333 = vunpack.c.h.b16 %v347
        %v1334 = vunpack.c.l.b16 %v348
        %v1335 = vunpack.c.h.b16 %v348
        %v1336 = vunpack.c.l.b16 %v349
        %v1337 = vunpack.c.h.b16 %v349
        %v1338 = vunpack.c.l.b16 %v350
        %v1339 = vunpack.c.h.b16 %v350
        %v1340 = vunpack.c.l.b16 %v351
        %v1341 = vunpack.c.h.b16 %v351
        %v1342 = vunpack.c.l.b16 %v352
        %v1343 = vunpack.c.h.b16 %v352
        %v1344 = vunpack.c.l.b16 %v353
        %v1345 = vunpack.c.h.b16 %v353
        %v1346 = vunpack.c.l.b16 %v354
        %v1347 = vunpack.c.h.b16 %v354
        %v1348 = vunpack.c.l.b16 %v355
        %v1349 = vunpack.c.h.b16 %v355
        %v1350 = vunpack.c.l.b16 %v356
        %v1351 = vunpack.c.h.b16 %v356
        %v1352 = vunpack.c.l.b16 %v357
        %v1353 = vunpack.c.h.b16 %v357
        %v1354 = vunpack.c.l.b16 %v358
        %v1355 = vunpack.c.h.b16 %v358
        %v1356 = vunpack.c.l.b16 %v359
        %v1357 = vunpack.c.h.b16 %v359
        %v1358 = vunpack.c.l.b16 %v360
        %v1359 = vunpack.c.h.b16 %v360
        %v1360 = vunpack.c.l.b16 %v361
        %v1361 = vunpack.c.h.b16 %v361
        %v1362 = vunpack.c.l.b16 %v362
        %v1363 = vunpack.c.h.b16 %v362
        %v1364 = vunpack.c.l.b16 %v363
        %v1365 = vunpack.c.h.b16 %v363
        %v1366 = vunpack.c.l.b16 %v364
        %v1367 = vunpack.c.h.b16 %v364
        %v1368 = vunpack.c.l.b16 %v365
        %v1369 = vunpack.c.h.b16 %v365
        %v1370 = vunpack.c.l.b16 %v366
        %v1371 = vunpack.c.h.b16 %v366
        %v1372 = vunpack.c.l.b16 %v367
        %v1373 = vunpack.c.h.b16 %v367
        %v1374 = vunpack.c.l.b16 %v368
        %v1375 = vunpack.c.h.b16 %v368
        %v1376 = vunpack.c.l.b16 %v369
        %v1377 = vunpack.c.h.b16 %v369
        %v1378 = vunpack.c.l.b16 %v370
        %v1379 = vunpack.c.h.b16 %v370
        %v1380 = vunpack.c.l.b16 %v371
        %v1381 = vunpack.c.h.b16 %v371
        %v1382 = vunpack.c.l.b16 %v372
        %v1383 = vunpack.c.h.b16 %v372
        %v1384 = vunpack.c.l.b16 %v373
        %v1385 = vunpack.c.h.b16 %v373
        %v1386 = vunpack.c.l.b16 %v374
        %v1387 = vunpack.c.h.b16 %v374
        %v1388 = vunpack.c.l.b16 %v375
        %v1389 = vunpack.c.h.b16 %v375
        %v1390 = vunpack.c.l.b16 %v376
        %v1391 = vunpack.c.h.b16 %v376
        %v1392 = vunpack.c.l.b16 %v377
        %v1393 = vunpack.c.h.b16 %v377
        %v1394 = vunpack.c.l.b16 %v378
        %v1395 = vunpack.c.h.b16 %v378
        %v1396 = vunpack.c.l.b16 %v379
        %v1397 = vunpack.c.h.b16 %v379
        %v1398 = vunpack.c.l.b16 %v380
        %v1399 = vunpack.c.h.b16 %v380
        %v1400 = vunpack.c.l.b16 %v381
        %v1401 = vunpack.c.h.b16 %v381
        %v1402 = vunpack.c.l.b16 %v382
        %v1403 = vunpack.c.h.b16 %v382
        %v1404 = vunpack.c.l.b16 %v383
        %v1405 = vunpack.c.h.b16 %v383
        %v1406 = vunpack.c.l.b16 %v384
        %v1407 = vunpack.c.h.b16 %v384
        %v1408 = vunpack.c.l.b16 %v385
        %v1409 = vunpack.c.h.b16 %v385
        %v1410 = vunpack.c.l.b16 %v386
        %v1411 = vunpack.c.h.b16 %v386
        %v1412 = vunpack.c.l.b16 %v387
        %v1413 = vunpack.c.h.b16 %v387
        %v1414 = vunpack.c.l.b16 %v388
        %v1415 = vunpack.c.h.b16 %v388
        %v1416 = vunpack.c.l.b16 %v389
        %v1417 = vunpack.c.h.b16 %v389
        %v1418 = vunpack.c.l.b16 %v390
        %v1419 = vunpack.c.h.b16 %v390
        %v1420 = vunpack.c.l.b16 %v391
        %v1421 = vunpack.c.h.b16 %v391
        %v1422 = vunpack.c.l.b16 %v392
        %v1423 = vunpack.c.h.b16 %v392
        %v1424 = vunpack.c.l.b16 %v393
        %v1425 = vunpack.c.h.b16 %v393
        %v1426 = vunpack.c.l.b16 %v394
        %v1427 = vunpack.c.h.b16 %v394
        %v1428 = vunpack.c.l.b16 %v395
        %v1429 = vunpack.c.h.b16 %v395
        %v1430 = vunpack.c.l.b16 %v396
        %v1431 = vunpack.c.h.b16 %v396
        %v1432 = vunpack.c.l.b16 %v397
        %v1433 = vunpack.c.h.b16 %v397
        %v1434 = vunpack.c.l.b16 %v398
        %v1435 = vunpack.c.h.b16 %v398
        %v1436 = vunpack.c.l.b16 %v399
        %v1437 = vunpack.c.h.b16 %v399
        %v1438 = vunpack.c.l.b16 %v400
        %v1439 = vunpack.c.h.b16 %v400
        %v1440 = vunpack.c.l.b16 %v401
        %v1441 = vunpack.c.h.b16 %v401
        %v1442 = vunpack.c.l.b16 %v402
        %v1443 = vunpack.c.h.b16 %v402
        %v1444 = vunpack.c.l.b16 %v403
        %v1445 = vunpack.c.h.b16 %v403
        %v1446 = vunpack.c.l.b16 %v404
        %v1447 = vunpack.c.h.b16 %v404
        %v1448 = vunpack.c.l.b16 %v405
        %v1449 = vunpack.c.h.b16 %v405
        %v1450 = vunpack.c.l.b16 %v406
        %v1451 = vunpack.c.h.b16 %v406
        %v1452 = vunpack.c.l.b16 %v407
        %v1453 = vunpack.c.h.b16 %v407
        %v1454 = vunpack.c.l.b16 %v408
        %v1455 = vunpack.c.h.b16 %v408
        %v1456 = vunpack.c.l.b16 %v409
        %v1457 = vunpack.c.h.b16 %v409
        %v1458 = vunpack.c.l.b16 %v410
        %v1459 = vunpack.c.h.b16 %v410
        %v1460 = vunpack.c.l.b16 %v411
        %v1461 = vunpack.c.h.b16 %v411
        %v1462 = vunpack.c.l.b16 %v412
        %v1463 = vunpack.c.h.b16 %v412
        %v1464 = vunpack.c.l.b16 %v413
        %v1465 = vunpack.c.h.b16 %v413
        %v1466 = vunpack.c.l.b16 %v414
        %v1467 = vunpack.c.h.b16 %v414
        %v1468 = vunpack.c.l.b16 %v415
        %v1469 = vunpack.c.h.b16 %v415
        %v1470 = vunpack.c.l.b16 %v416
        %v1471 = vunpack.c.h.b16 %v416
        %v1472 = vunpack.c.l.b16 %v417
        %v1473 = vunpack.c.h.b16 %v417
        %v1474 = vunpack.c.l.b16 %v418
        %v1475 = vunpack.c.h.b16 %v418
        %v1476 = vunpack.c.l.b16 %v419
        %v1477 = vunpack.c.h.b16 %v419
        %v1478 = vunpack.c.l.b16 %v420
        %v1479 = vunpack.c.h.b16 %v420
        %v1480 = vunpack.c.l.b16 %v421
        %v1481 = vunpack.c.h.b16 %v421
        %v1482 = vunpack.c.l.b16 %v422
        %v1483 = vunpack.c.h.b16 %v422
        %v1484 = vunpack.c.l.b16 %v423
        %v1485 = vunpack.c.h.b16 %v423
        %v1486 = vunpack.c.l.b16 %v424
        %v1487 = vunpack.c.h.b16 %v424
        %v1488 = vunpack.c.l.b16 %v425
        %v1489 = vunpack.c.h.b16 %v425
        %v1490 = vunpack.c.l.b16 %v426
        %v1491 = vunpack.c.h.b16 %v426
        %v1492 = vunpack.c.l.b16 %v427
        %v1493 = vunpack.c.h.b16 %v427
        %v1494 = vunpack.c.l.b16 %v428
        %v1495 = vunpack.c.h.b16 %v428
        %v1496 = vunpack.c.l.b16 %v429
        %v1497 = vunpack.c.h.b16 %v429
        %v1498 = vunpack.c.l.b16 %v430
        %v1499 = vunpack.c.h.b16 %v430
        %v1500 = vunpack.c.l.b16 %v431
        %v1501 = vunpack.c.h.b16 %v431
        %v1502 = vunpack.c.l.b16 %v432
        %v1503 = vunpack.c.h.b16 %v432
        %v1504 = vunpack.c.l.b16 %v433
        %v1505 = vunpack.c.h.b16 %v433
        %v1506 = vunpack.c.l.b16 %v434
        %v1507 = vunpack.c.h.b16 %v434
        %v1508 = vunpack.c.l.b16 %v435
        %v1509 = vunpack.c.h.b16 %v435
        %v1510 = vunpack.c.l.b16 %v436
        %v1511 = vunpack.c.h.b16 %v436
        %v1512 = vunpack.c.l.b16 %v437
        %v1513 = vunpack.c.h.b16 %v437
        %v1514 = vunpack.c.l.b16 %v438
        %v1515 = vunpack.c.h.b16 %v438
        %v1516 = vunpack.c.l.b16 %v439
        %v1517 = vunpack.c.h.b16 %v439
        %v1518 = vunpack.c.l.b16 %v440
        %v1519 = vunpack.c.h.b16 %v440
        %v1520 = vunpack.c.l.b16 %v441
        %v1521 = vunpack.c.h.b16 %v441
        %v1522 = vunpack.c.l.b16 %v442
        %v1523 = vunpack.c.h.b16 %v442
        %v1524 = vunpack.c.l.b16 %v443
        %v1525 = vunpack.c.h.b16 %v443
        %v1526 = vunpack.c.l.b16 %v444
        %v1527 = vunpack.c.h.b16 %v444
        %v1528 = vunpack.c.l.b16 %v445
        %v1529 = vunpack.c.h.b16 %v445
        %v1530 = vunpack.c.l.b16 %v446
        %v1531 = vunpack.c.h.b16 %v446
        %v1532 = vunpack.c.l.b16 %v447
        %v1533 = vunpack.c.h.b16 %v447
        %v1534 = vunpack.c.l.b16 %v448
        %v1535 = vunpack.c.h.b16 %v448
        %v1536 = vunpack.c.l.b16 %v449
        %v1537 = vunpack.c.h.b16 %v449
        %v1538 = vunpack.c.l.b16 %v450
        %v1539 = vunpack.c.h.b16 %v450
        %v1540 = vunpack.c.l.b16 %v451
        %v1541 = vunpack.c.h.b16 %v451
        %v1542 = vunpack.c.l.b16 %v452
        %v1543 = vunpack.c.h.b16 %v452
        %v1544 = vunpack.c.l.b16 %v453
        %v1545 = vunpack.c.h.b16 %v453
        %v1546 = vunpack.c.l.b16 %v454
        %v1547 = vunpack.c.h.b16 %v454
        %v1548 = vunpack.c.l.b16 %v455
        %v1549 = vunpack.c.h.b16 %v455
        %v1550 = vunpack.c.l.b16 %v456
        %v1551 = vunpack.c.h.b16 %v456
        %v1552 = vunpack.c.l.b16 %v457
        %v1553 = vunpack.c.h.b16 %v457
        %v1554 = vunpack.c.l.b16 %v458
        %v1555 = vunpack.c.h.b16 %v458
        %v1556 = vunpack.c.l.b16 %v459
        %v1557 = vunpack.c.h.b16 %v459
        %v1558 = vunpack.c.l.b16 %v460
        %v1559 = vunpack.c.h.b16 %v460
        %v1560 = vunpack.c.l.b16 %v461
        %v1561 = vunpack.c.h.b16 %v461
        %v1562 = vunpack.c.l.b16 %v462
        %v1563 = vunpack.c.h.b16 %v462
        %v1564 = vunpack.c.l.b16 %v463
        %v1565 = vunpack.c.h.b16 %v463
        %v1566 = vunpack.c.l.b16 %v464
        %v1567 = vunpack.c.h.b16 %v464
        %v1568 = vunpack.c.l.b16 %v465
        %v1569 = vunpack.c.h.b16 %v465
        %v1570 = vunpack.c.l.b16 %v466
        %v1571 = vunpack.c.h.b16 %v466
        %v1572 = vunpack.c.l.b16 %v467
        %v1573 = vunpack.c.h.b16 %v467
        %v1574 = vunpack.c.l.b16 %v468
        %v1575 = vunpack.c.h.b16 %v468
        %v1576 = vunpack.c.l.b16 %v469
        %v1577 = vunpack.c.h.b16 %v469
        %v1578 = vunpack.c.l.b16 %v470
        %v1579 = vunpack.c.h.b16 %v470
        %v1580 = vunpack.c.l.b16 %v471
        %v1581 = vunpack.c.h.b16 %v471
        %v1582 = vunpack.c.l.b16 %v472
        %v1583 = vunpack.c.h.b16 %v472
        %v1584 = vunpack.c.l.b16 %v473
        %v1585 = vunpack.c.h.b16 %v473
        %v1586 = vunpack.c.l.b16 %v474
        %v1587 = vunpack.c.h.b16 %v474
        %v1588 = vunpack.c.l.b16 %v475
        %v1589 = vunpack.c.h.b16 %v475
        %v1590 = vunpack.c.l.b16 %v476
        %v1591 = vunpack.c.h.b16 %v476
        %v1592 = vunpack.c.l.b16 %v477
        %v1593 = vunpack.c.h.b16 %v477
        %v1594 = vunpack.c.l.b16 %v478
        %v1595 = vunpack.c.h.b16 %v478
        %v1596 = vunpack.c.l.b16 %v479
        %v1597 = vunpack.c.h.b16 %v479
        %v1598 = vunpack.c.l.b16 %v480
        %v1599 = vunpack.c.h.b16 %v480
        %v1600 = vunpack.c.l.b16 %v481
        %v1601 = vunpack.c.h.b16 %v481
        %v1602 = vunpack.c.l.b16 %v482
        %v1603 = vunpack.c.h.b16 %v482
        %v1604 = vunpack.c.l.b16 %v483
        %v1605 = vunpack.c.h.b16 %v483
        %v1606 = vunpack.c.l.b16 %v484
        %v1607 = vunpack.c.h.b16 %v484
        %v1608 = vunpack.c.l.b16 %v485
        %v1609 = vunpack.c.h.b16 %v485
        %v1610 = vunpack.c.l.b16 %v486
        %v1611 = vunpack.c.h.b16 %v486
        %v1612 = vunpack.c.l.b16 %v487
        %v1613 = vunpack.c.h.b16 %v487
        %v1614 = vunpack.c.l.b16 %v488
        %v1615 = vunpack.c.h.b16 %v488
        %v1616 = vunpack.c.l.b16 %v489
        %v1617 = vunpack.c.h.b16 %v489
        %v1618 = vunpack.c.l.b16 %v490
        %v1619 = vunpack.c.h.b16 %v490
        %v1620 = vunpack.c.l.b16 %v491
        %v1621 = vunpack.c.h.b16 %v491
        %v1622 = vunpack.c.l.b16 %v492
        %v1623 = vunpack.c.h.b16 %v492
        %v1624 = vunpack.c.l.b16 %v493
        %v1625 = vunpack.c.h.b16 %v493
        %v1626 = vunpack.c.l.b16 %v494
        %v1627 = vunpack.c.h.b16 %v494
        %v1628 = vunpack.c.l.b16 %v495
        %v1629 = vunpack.c.h.b16 %v495
        %v1630 = vunpack.c.l.b16 %v496
        %v1631 = vunpack.c.h.b16 %v496
        %v1632 = vunpack.c.l.b16 %v497
        %v1633 = vunpack.c.h.b16 %v497
        %v1634 = vunpack.c.l.b16 %v498
        %v1635 = vunpack.c.h.b16 %v498
        %v1636 = vunpack.c.l.b16 %v499
        %v1637 = vunpack.c.h.b16 %v499
        %v1638 = vunpack.c.l.b16 %v500
        %v1639 = vunpack.c.h.b16 %v500
        %v1640 = vunpack.c.l.b16 %v501
        %v1641 = vunpack.c.h.b16 %v501
        %v1642 = vunpack.c.l.b16 %v502
        %v1643 = vunpack.c.h.b16 %v502
        %v1644 = vunpack.c.l.b16 %v503
        %v1645 = vunpack.c.h.b16 %v503
        %v1646 = vunpack.c.l.b16 %v504
        %v1647 = vunpack.c.h.b16 %v504
        %v1648 = vunpack.c.l.b16 %v505
        %v1649 = vunpack.c.h.b16 %v505
        %v1650 = vunpack.c.l.b16 %v506
        %v1651 = vunpack.c.h.b16 %v506
        %v1652 = vunpack.c.l.b16 %v507
        %v1653 = vunpack.c.h.b16 %v507
        %v1654 = vunpack.c.l.b16 %v508
        %v1655 = vunpack.c.h.b16 %v508
        %v1656 = vunpack.c.l.b16 %v509
        %v1657 = vunpack.c.h.b16 %v509
        %v1658 = vunpack.c.l.b16 %v510
        %v1659 = vunpack.c.h.b16 %v510
        %v1660 = vunpack.c.l.b16 %v511
        %v1661 = vunpack.c.h.b16 %v511
        %v1662 = vunpack.c.l.b16 %v512
        %v1663 = vunpack.c.h.b16 %v512
        %v1664 = vunpack.c.l.b16 %v513
        %v1665 = vunpack.c.h.b16 %v513
        %v1666 = vunpack.c.l.b16 %v514
        %v1667 = vunpack.c.h.b16 %v514
        %v1668 = vunpack.c.l.b16 %v515
        %v1669 = vunpack.c.h.b16 %v515
        %v1670 = vunpack.c.l.b16 %v516
        %v1671 = vunpack.c.h.b16 %v516
        %v1672 = vunpack.c.l.b16 %v517
        %v1673 = vunpack.c.h.b16 %v517
        %v1674 = vunpack.c.l.b16 %v518
        %v1675 = vunpack.c.h.b16 %v518
        %v1676 = vunpack.c.l.b16 %v519
        %v1677 = vunpack.c.h.b16 %v519
        %v1678 = vunpack.c.l.b16 %v520
        %v1679 = vunpack.c.h.b16 %v520
        %v1680 = vunpack.c.l.b16 %v521
        %v1681 = vunpack.c.h.b16 %v521
        %v1682 = vunpack.c.l.b16 %v522
        %v1683 = vunpack.c.h.b16 %v522
        %v1684 = vunpack.c.l.b16 %v523
        %v1685 = vunpack.c.h.b16 %v523
        %v1686 = vunpack.c.l.b16 %v524
        %v1687 = vunpack.c.h.b16 %v524
        %v1688 = vunpack.c.l.b16 %v525
        %v1689 = vunpack.c.h.b16 %v525
        %v1690 = vunpack.c.l.b16 %v526
        %v1691 = vunpack.c.h.b16 %v526
        %v1692 = vunpack.c.l.b16 %v527
        %v1693 = vunpack.c.h.b16 %v527
        %v1694 = vunpack.c.l.b16 %v528
        %v1695 = vunpack.c.h.b16 %v528
        %v1696 = vunpack.c.l.b16 %v529
        %v1697 = vunpack.c.h.b16 %v529
        %v1698 = vunpack.c.l.b16 %v530
        %v1699 = vunpack.c.h.b16 %v530
        %v1700 = vunpack.c.l.b16 %v531
        %v1701 = vunpack.c.h.b16 %v531
        %v1702 = vunpack.c.l.b16 %v532
        %v1703 = vunpack.c.h.b16 %v532
        %v1704 = vunpack.c.l.b16 %v533
        %v1705 = vunpack.c.h.b16 %v533
        %v1706 = vunpack.c.l.b16 %v534
        %v1707 = vunpack.c.h.b16 %v534
        %v1708 = vunpack.c.l.b16 %v535
        %v1709 = vunpack.c.h.b16 %v535
        %v1710 = vunpack.c.l.b16 %v536
        %v1711 = vunpack.c.h.b16 %v536
        %v1712 = vunpack.c.l.b16 %v537
        %v1713 = vunpack.c.h.b16 %v537
        %v1714 = vunpack.c.l.b16 %v538
        %v1715 = vunpack.c.h.b16 %v538
        %v1716 = vunpack.c.l.b16 %v539
        %v1717 = vunpack.c.h.b16 %v539
        %v1718 = vunpack.c.l.b16 %v540
        %v1719 = vunpack.c.h.b16 %v540
        %v1720 = vunpack.c.l.b16 %v541
        %v1721 = vunpack.c.h.b16 %v541
        %v1722 = vunpack.c.l.b16 %v542
        %v1723 = vunpack.c.h.b16 %v542
        %v1724 = vunpack.c.l.b16 %v543
        %v1725 = vunpack.c.h.b16 %v543
        %v1726 = vunpack.c.l.b16 %v544
        %v1727 = vunpack.c.h.b16 %v544
        %v1728 = vunpack.c.l.b16 %v545
        %v1729 = vunpack.c.h.b16 %v545
        %v1730 = vunpack.c.l.b16 %v546
        %v1731 = vunpack.c.h.b16 %v546
        %v1732 = vunpack.c.l.b16 %v547
        %v1733 = vunpack.c.h.b16 %v547
        %v1734 = vunpack.c.l.b16 %v548
        %v1735 = vunpack.c.h.b16 %v548
        %v1736 = vunpack.c.l.b16 %v549
        %v1737 = vunpack.c.h.b16 %v549
        %v1738 = vunpack.c.l.b16 %v550
        %v1739 = vunpack.c.h.b16 %v550
        %v1740 = vunpack.c.l.b16 %v551
        %v1741 = vunpack.c.h.b16 %v551
        %v1742 = vunpack.c.l.b16 %v552
        %v1743 = vunpack.c.h.b16 %v552
        %v1744 = vunpack.c.l.b16 %v553
        %v1745 = vunpack.c.h.b16 %v553
        %v1746 = vunpack.c.l.b16 %v554
        %v1747 = vunpack.c.h.b16 %v554
        %v1748 = vunpack.c.l.b16 %v555
        %v1749 = vunpack.c.h.b16 %v555
        %v1750 = vpack.c.b16 %v986, %v982
        %v1751 = vpack.c.b16 %v987, %v983
        %v1752 = vpack.c.b16 %v988, %v984
        %v1753 = vpack.c.b16 %v989, %v985
        %v1754 = vpack.c.b16 %v994, %v990
        %v1755 = vpack.c.b16 %v995, %v991
        %v1756 = vpack.c.b16 %v996, %v992
        %v1757 = vpack.c.b16 %v997, %v993
        %v1758 = vpack.c.b16 %v1002, %v998
        %v1759 = vpack.c.b16 %v1003, %v999
        %v1760 = vpack.c.b16 %v1004, %v1000
        %v1761 = vpack.c.b16 %v1005, %v1001
        %v1762 = vpack.c.b16 %v1010, %v1006
        %v1763 = vpack.c.b16 %v1011, %v1007
        %v1764 = vpack.c.b16 %v1012, %v1008
        %v1765 = vpack.c.b16 %v1013, %v1009
        %v1766 = vpack.c.b16 %v1018, %v1014
        %v1767 = vpack.c.b16 %v1019, %v1015
        %v1768 = vpack.c.b16 %v1020, %v1016
        %v1769 = vpack.c.b16 %v1021, %v1017
        %v1770 = vpack.c.b16 %v1026, %v1022
        %v1771 = vpack.c.b16 %v1027, %v1023
        %v1772 = vpack.c.b16 %v1028, %v1024
        %v1773 = vpack.c.b16 %v1029, %v1025
        %v1774 = vpack.c.b16 %v1034, %v1030
        %v1775 = vpack.c.b16 %v1035, %v1031
        %v1776 = vpack.c.b16 %v1036, %v1032
        %v1777 = vpack.c.b16 %v1037, %v1033
        %v1778 = vpack.c.b16 %v1042, %v1038
        %v1779 = vpack.c.b16 %v1043, %v1039
        %v1780 = vpack.c.b16 %v1044, %v1040
        %v1781 = vpack.c.b16 %v1045, %v1041
        %v1782 = vpack.c.b16 %v1050, %v1046
        %v1783 = vpack.c.b16 %v1051, %v1047
        %v1784 = vpack.c.b16 %v1052, %v1048
        %v1785 = vpack.c.b16 %v1053, %v1049
        %v1786 = vpack.c.b16 %v1058, %v1054
        %v1787 = vpack.c.b16 %v1059, %v1055
        %v1788 = vpack.c.b16 %v1060, %v1056
        %v1789 = vpack.c.b16 %v1061, %v1057
        %v1790 = vpack.c.b16 %v1066, %v1062
        %v1791 = vpack.c.b16 %v1067, %v1063
        %v1792 = vpack.c.b16 %v1068, %v1064
        %v1793 = vpack.c.b16 %v1069, %v1065
        %v1794 = vpack.c.b16 %v1074, %v1070
        %v1795 = vpack.c.b16 %v1075, %v1071
        %v1796 = vpack.c.b16 %v1076, %v1072
        %v1797 = vpack.c.b16 %v1077, %v1073
        %v1798 = vpack.c.b16 %v1082, %v1078
        %v1799 = vpack.c.b16 %v1083, %v1079
        %v1800 = vpack.c.b16 %v1084, %v1080
        %v1801 = vpack.c.b16 %v1085, %v1081
        %v1802 = vpack.c.b16 %v1090, %v1086
        %v1803 = vpack.c.b16 %v1091, %v1087
        %v1804 = vpack.c.b16 %v1092, %v1088
        %v1805 = vpack.c.b16 %v1093, %v1089
        %v1806 = vpack.c.b16 %v1098, %v1094
        %v1807 = vpack.c.b16 %v1099, %v1095
        %v1808 = vpack.c.b16 %v1100, %v1096
        %v1809 = vpack.c.b16 %v1101, %v1097
        %v1810 = vpack.c.b16 %v1106, %v1102
        %v1811 = vpack.c.b16 %v1107, %v1103
        %v1812 = vpack.c.b16 %v1108, %v1104
        %v1813 = vpack.c.b16 %v1109, %v1105
        %v1814 = vpack.c.b16 %v1114, %v1110
        %v1815 = vpack.c.b16 %v1115, %v1111
        %v1816 = vpack.c.b16 %v1116, %v1112
        %v1817 = vpack.c.b16 %v1117, %v1113
        %v1818 = vpack.c.b16 %v1122, %v1118
        %v1819 = vpack.c.b16 %v1123, %v1119
        %v1820 = vpack.c.b16 %v1124, %v1120
        %v1821 = vpack.c.b16 %v1125, %v1121
        %v1822 = vpack.c.b16 %v1130, %v1126
        %v1823 = vpack.c.b16 %v1131, %v1127
        %v1824 = vpack.c.b16 %v1132, %v1128
        %v1825 = vpack.c.b16 %v1133, %v1129
        %v1826 = vpack.c.b16 %v1138, %v1134
        %v1827 = vpack.c.b16 %v1139, %v1135
        %v1828 = vpack.c.b16 %v1140, %v1136
        %v1829 = vpack.c.b16 %v1141, %v1137
        %v1830 = vpack.c.b16 %v1146, %v1142
        %v1831 = vpack.c.b16 %v1147, %v1143
        %v1832 = vpack.c.b16 %v1148, %v1144
        %v1833 = vpack.c.b16 %v1149, %v1145
        %v1834 = vpack.c.b16 %v1154, %v1150
        %v1835 = vpack.c.b16 %v1155, %v1151
        %v1836 = vpack.c.b16 %v1156, %v1152
        %v1837 = vpack.c.b16 %v1157, %v1153
        %v1838 = vpack.c.b16 %v1162, %v1158
        %v1839 = vpack.c.b16 %v1163, %v1159
        %v1840 = vpack.c.b16 %v1164, %v1160
        %v1841 = vpack.c.b16 %v1165, %v1161
        %v1842 = vpack.c.b16 %v1170, %v1166
        %v1843 = vpack.c.b16 %v1171, %v1167
        %v1844 = vpack.c.b16 %v1172, %v1168
        %v1845 = vpack.c.b16 %v1173, %v1169
        %v1846 = vpack.c.b16 %v1178, %v1174
        %v1847 = vpack.c.b16 %v1179, %v1175
        %v1848 = vpack.c.b16 %v1180, %v1176
        %v1849 = vpack.c.b16 %v1181, %v1177
        %v1850 = vpack.c.b16 %v1186, %v1182
        %v1851 = vpack.c.b16 %v1187, %v1183
        %v1852 = vpack.c.b16 %v1188, %v1184
        %v1853 = vpack.c.b16 %v1189, %v1185
        %v1854 = vpack.c.b16 %v1194, %v1190
        %v1855 = vpack.c.b16 %v1195, %v1191
        %v1856 = vpack.c.b16 %v1196, %v1192
        %v1857 = vpack.c.b16 %v1197, %v1193
        %v1858 = vpack.c.b16 %v1202, %v1198
        %v1859 = vpack.c.b16 %v1203, %v1199
        %v1860 = vpack.c.b16 %v1204, %v1200
        %v1861 = vpack.c.b16 %v1205, %v1201
        %v1862 = vpack.c.b16 %v1210, %v1206
        %v1863 = vpack.c.b16 %v1211, %v1207
        %v1864 = vpack.c.b16 %v1212, %v1208
        %v1865 = vpack.c.b16 %v1213, %v1209
        %v1866 = vpack.c.b16 %v1218, %v1214
        %v1867 = vpack.c.b16 %v1219, %v1215
        %v1868 = vpack.c.b16 %v1220, %v1216
        %v1869 = vpack.c.b16 %v1221, %v1217
        %v1870 = vpack.c.b16 %v1226, %v1222
        %v1871 = vpack.c.b16 %v1227, %v1223
        %v1872 = vpack.c.b16 %v1228, %v1224
        %v1873 = vpack.c.b16 %v1229, %v1225
        %v1874 = vpack.c.b16 %v1234, %v1230
        %v1875 = vpack.c.b16 %v1235, %v1231
        %v1876 = vpack.c.b16 %v1236, %v1232
        %v1877 = vpack.c.b16 %v1237, %v1233
        %v1878 = vpack.c.b16 %v1242, %v1238
        %v1879 = vpack.c.b16 %v1243, %v1239
        %v1880 = vpack.c.b16 %v1244, %v1240
        %v1881 = vpack.c.b16 %v1245, %v1241
        %v1882 = vpack.c.b16 %v1250, %v1246
        %v1883 = vpack.c.b16 %v1251, %v1247
        %v1884 = vpack.c.b16 %v1252, %v1248
        %v1885 = vpack.c.b16 %v1253, %v1249
        %v1886 = vpack.c.b16 %v1258, %v1254
        %v1887 = vpack.c.b16 %v1259, %v1255
        %v1888 = vpack.c.b16 %v1260, %v1256
        %v1889 = vpack.c.b16 %v1261, %v1257
        %v1890 = vpack.c.b16 %v1266, %v1262
        %v1891 = vpack.c.b16 %v1267, %v1263
        %v1892 = vpack.c.b16 %v1268, %v1264
        %v1893 = vpack.c.b16 %v1269, %v1265
        %v1894 = vpack.c.b16 %v1274, %v1270
        %v1895 = vpack.c.b16 %v1275, %v1271
        %v1896 = vpack.c.b16 %v1276, %v1272
        %v1897 = vpack.c.b16 %v1277, %v1273
        %v1898 = vpack.c.b16 %v1282, %v1278
        %v1899 = vpack.c.b16 %v1283, %v1279
        %v1900 = vpack.c.b16 %v1284, %v1280
        %v1901 = vpack.c.b16 %v1285, %v1281
        %v1902 = vpack.c.b16 %v1290, %v1286
        %v1903 = vpack.c.b16 %v1291, %v1287
        %v1904 = vpack.c.b16 %v1292, %v1288
        %v1905 = vpack.c.b16 %v1293, %v1289
        %v1906 = vpack.c.b16 %v1298, %v1294
        %v1907 = vpack.c.b16 %v1299, %v1295
        %v1908 = vpack.c.b16 %v1300, %v1296
        %v1909 = vpack.c.b16 %v1301, %v1297
        %v1910 = vpack.c.b16 %v1306, %v1302
        %v1911 = vpack.c.b16 %v1307, %v1303
        %v1912 = vpack.c.b16 %v1308, %v1304
        %v1913 = vpack.c.b16 %v1309, %v1305
        %v1914 = vpack.c.b16 %v1314, %v1310
        %v1915 = vpack.c.b16 %v1315, %v1311
        %v1916 = vpack.c.b16 %v1316, %v1312
        %v1917 = vpack.c.b16 %v1317, %v1313
        %v1918 = vpack.c.b16 %v1322, %v1318
        %v1919 = vpack.c.b16 %v1323, %v1319
        %v1920 = vpack.c.b16 %v1324, %v1320
        %v1921 = vpack.c.b16 %v1325, %v1321
        %v1922 = vpack.c.b16 %v1330, %v1326
        %v1923 = vpack.c.b16 %v1331, %v1327
        %v1924 = vpack.c.b16 %v1332, %v1328
        %v1925 = vpack.c.b16 %v1333, %v1329
        %v1926 = vpack.c.b16 %v1338, %v1334
        %v1927 = vpack.c.b16 %v1339, %v1335
        %v1928 = vpack.c.b16 %v1340, %v1336
        %v1929 = vpack.c.b16 %v1341, %v1337
        %v1930 = vpack.c.b16 %v1346, %v1342
        %v1931 = vpack.c.b16 %v1347, %v1343
        %v1932 = vpack.c.b16 %v1348, %v1344
        %v1933 = vpack.c.b16 %v1349, %v1345
        %v1934 = vpack.c.b16 %v1354, %v1350
        %v1935 = vpack.c.b16 %v1355, %v1351
        %v1936 = vpack.c.b16 %v1356, %v1352
        %v1937 = vpack.c.b16 %v1357, %v1353
        %v1938 = vpack.c.b16 %v1362, %v1358
        %v1939 = vpack.c.b16 %v1363, %v1359
        %v1940 = vpack.c.b16 %v1364, %v1360
        %v1941 = vpack.c.b16 %v1365, %v1361
        %v1942 = vpack.c.b16 %v1370, %v1366
        %v1943 = vpack.c.b16 %v1371, %v1367
        %v1944 = vpack.c.b16 %v1372, %v1368
        %v1945 = vpack.c.b16 %v1373, %v1369
        %v1946 = vpack.c.b16 %v1378, %v1374
        %v1947 = vpack.c.b16 %v1379, %v1375
        %v1948 = vpack.c.b16 %v1380, %v1376
        %v1949 = vpack.c.b16 %v1381, %v1377
        %v1950 = vpack.c.b16 %v1386, %v1382
        %v1951 = vpack.c.b16 %v1387, %v1383
        %v1952 = vpack.c.b16 %v1388, %v1384
        %v1953 = vpack.c.b16 %v1389, %v1385
        %v1954 = vpack.c.b16 %v1394, %v1390
        %v1955 = vpack.c.b16 %v1395, %v1391
        %v1956 = vpack.c.b16 %v1396, %v1392
        %v1957 = vpack.c.b16 %v1397, %v1393
        %v1958 = vpack.c.b16 %v1402, %v1398
        %v1959 = vpack.c.b16 %v1403, %v1399
        %v1960 = vpack.c.b16 %v1404, %v1400
        %v1961 = vpack.c.b16 %v1405, %v1401
        %v1962 = vpack.c.b16 %v1410, %v1406
        %v1963 = vpack.c.b16 %v1411, %v1407
        %v1964 = vpack.c.b16 %v1412, %v1408
        %v1965 = vpack.c.b16 %v1413, %v1409
        %v1966 = vpack.c.b16 %v1418, %v1414
        %v1967 = vpack.c.b16 %v1419, %v1415
        %v1968 = vpack.c.b16 %v1420, %v1416
        %v1969 = vpack.c.b16 %v1421, %v1417
        %v1970 = vpack.c.b16 %v1426, %v1422
        %v1971 = vpack.c.b16 %v1427, %v1423
        %v1972 = vpack.c.b16 %v1428, %v1424
        %v1973 = vpack.c.b16 %v1429, %v1425
        %v1974 = vpack.c.b16 %v1434, %v1430
        %v1975 = vpack.c.b16 %v1435, %v1431
        %v1976 = vpack.c.b16 %v1436, %v1432
        %v1977 = vpack.c.b16 %v1437, %v1433
        %v1978 = vpack.c.b16 %v1442, %v1438
        %v1979 = vpack.c.b16 %v1443, %v1439
        %v1980 = vpack.c.b16 %v1444, %v1440
        %v1981 = vpack.c.b16 %v1445, %v1441
        %v1982 = vpack.c.b16 %v1450, %v1446
        %v1983 = vpack.c.b16 %v1451, %v1447
        %v1984 = vpack.c.b16 %v1452, %v1448
        %v1985 = vpack.c.b16 %v1453, %v1449
        %v1986 = vpack.c.b16 %v1458, %v1454
        %v1987 = vpack.c.b16 %v1459, %v1455
        %v1988 = vpack.c.b16 %v1460, %v1456
        %v1989 = vpack.c.b16 %v1461, %v1457
        %v1990 = vpack.c.b16 %v1466, %v1462
        %v1991 = vpack.c.b16 %v1467, %v1463
        %v1992 = vpack.c.b16 %v1468, %v1464
        %v1993 = vpack.c.b16 %v1469, %v1465
        %v1994 = vpack.c.b16 %v1474, %v1470
        %v1995 = vpack.c.b16 %v1475, %v1471
        %v1996 = vpack.c.b16 %v1476, %v1472
        %v1997 = vpack.c.b16 %v1477, %v1473
        %v1998 = vpack.c.b16 %v1482, %v1478
        %v1999 = vpack.c.b16 %v1483, %v1479
        %v2000 = vpack.c.b16 %v1484, %v1480
        %v2001 = vpack.c.b16 %v1485, %v1481
        %v2002 = vpack.c.b16 %v1490, %v1486
        %v2003 = vpack.c.b16 %v1491, %v1487
        %v2004 = vpack.c.b16 %v1492, %v1488
        %v2005 = vpack.c.b16 %v1493, %v1489
        %v2006 = vpack.c.b16 %v1498, %v1494
        %v2007 = vpack.c.b16 %v1499, %v1495
        %v2008 = vpack.c.b16 %v1500, %v1496
        %v2009 = vpack.c.b16 %v1501, %v1497
        %v2010 = vpack.c.b16 %v1506, %v1502
        %v2011 = vpack.c.b16 %v1507, %v1503
        %v2012 = vpack.c.b16 %v1508, %v1504
        %v2013 = vpack.c.b16 %v1509, %v1505
        %v2014 = vpack.c.b16 %v1514, %v1510
        %v2015 = vpack.c.b16 %v1515, %v1511
        %v2016 = vpack.c.b16 %v1516, %v1512
        %v2017 = vpack.c.b16 %v1517, %v1513
        %v2018 = vpack.c.b16 %v1522, %v1518
        %v2019 = vpack.c.b16 %v1523, %v1519
        %v2020 = vpack.c.b16 %v1524, %v1520
        %v2021 = vpack.c.b16 %v1525, %v1521
        %v2022 = vpack.c.b16 %v1530, %v1526
        %v2023 = vpack.c.b16 %v1531, %v1527
        %v2024 = vpack.c.b16 %v1532, %v1528
        %v2025 = vpack.c.b16 %v1533, %v1529
        %v2026 = vpack.c.b16 %v1538, %v1534
        %v2027 = vpack.c.b16 %v1539, %v1535
        %v2028 = vpack.c.b16 %v1540, %v1536
        %v2029 = vpack.c.b16 %v1541, %v1537
        %v2030 = vpack.c.b16 %v1546, %v1542
        %v2031 = vpack.c.b16 %v1547, %v1543
        %v2032 = vpack.c.b16 %v1548, %v1544
        %v2033 = vpack.c.b16 %v1549, %v1545
        %v2034 = vpack.c.b16 %v1554, %v1550
        %v2035 = vpack.c.b16 %v1555, %v1551
        %v2036 = vpack.c.b16 %v1556, %v1552
        %v2037 = vpack.c.b16 %v1557, %v1553
        %v2038 = vpack.c.b16 %v1562, %v1558
        %v2039 = vpack.c.b16 %v1563, %v1559
        %v2040 = vpack.c.b16 %v1564, %v1560
        %v2041 = vpack.c.b16 %v1565, %v1561
        %v2042 = vpack.c.b16 %v1570, %v1566
        %v2043 = vpack.c.b16 %v1571, %v1567
        %v2044 = vpack.c.b16 %v1572, %v1568
        %v2045 = vpack.c.b16 %v1573, %v1569
        %v2046 = vpack.c.b16 %v1578, %v1574
        %v2047 = vpack.c.b16 %v1579, %v1575
        %v2048 = vpack.c.b16 %v1580, %v1576
        %v2049 = vpack.c.b16 %v1581, %v1577
        %v2050 = vpack.c.b16 %v1586, %v1582
        %v2051 = vpack.c.b16 %v1587, %v1583
        %v2052 = vpack.c.b16 %v1588, %v1584
        %v2053 = vpack.c.b16 %v1589, %v1585
        %v2054 = vpack.c.b16 %v1594, %v1590
        %v2055 = vpack.c.b16 %v1595, %v1591
        %v2056 = vpack.c.b16 %v1596, %v1592
        %v2057 = vpack.c.b16 %v1597, %v1593
        %v2058 = vpack.c.b16 %v1602, %v1598
        %v2059 = vpack.c.b16 %v1603, %v1599
        %v2060 = vpack.c.b16 %v1604, %v1600
        %v2061 = vpack.c.b16 %v1605, %v1601
        %v2062 = vpack.c.b16 %v1610, %v1606
        %v2063 = vpack.c.b16 %v1611, %v1607
        %v2064 = vpack.c.b16 %v1612, %v1608
        %v2065 = vpack.c.b16 %v1613, %v1609
        %v2066 = vpack.c.b16 %v1618, %v1614
        %v2067 = vpack.c.b16 %v1619, %v1615
        %v2068 = vpack.c.b16 %v1620, %v1616
        %v2069 = vpack.c.b16 %v1621, %v1617
        %v2070 = vpack.c.b16 %v1626, %v1622
        %v2071 = vpack.c.b16 %v1627, %v1623
        %v2072 = vpack.c.b16 %v1628, %v1624
        %v2073 = vpack.c.b16 %v1629, %v1625
        %v2074 = vpack.c.b16 %v1634, %v1630
        %v2075 = vpack.c.b16 %v1635, %v1631
        %v2076 = vpack.c.b16 %v1636, %v1632
        %v2077 = vpack.c.b16 %v1637, %v1633
        %v2078 = vpack.c.b16 %v1642, %v1638
        %v2079 = vpack.c.b16 %v1643, %v1639
        %v2080 = vpack.c.b16 %v1644, %v1640
        %v2081 = vpack.c.b16 %v1645, %v1641
        %v2082 = vpack.c.b16 %v1650, %v1646
        %v2083 = vpack.c.b16 %v1651, %v1647
        %v2084 = vpack.c.b16 %v1652, %v1648
        %v2085 = vpack.c.b16 %v1653, %v1649
        %v2086 = vpack.c.b16 %v1658, %v1654
        %v2087 = vpack.c.b16 %v1659, %v1655
        %v2088 = vpack.c.b16 %v1660, %v1656
        %v2089 = vpack.c.b16 %v1661, %v1657
        %v2090 = vpack.c.b16 %v1666, %v1662
        %v2091 = vpack.c.b16 %v1667, %v1663
        %v2092 = vpack.c.b16 %v1668, %v1664
        %v2093 = vpack.c.b16 %v1669, %v1665
        %v2094 = vpack.c.b16 %v1674, %v1670
        %v2095 = vpack.c.b16 %v1675, %v1671
        %v2096 = vpack.c.b16 %v1676, %v1672
        %v2097 = vpack.c.b16 %v1677, %v1673
        %v2098 = vpack.c.b16 %v1682, %v1678
        %v2099 = vpack.c.b16 %v1683, %v1679
        %v2100 = vpack.c.b16 %v1684, %v1680
        %v2101 = vpack.c.b16 %v1685, %v1681
        %v2102 = vpack.c.b16 %v1690, %v1686
        %v2103 = vpack.c.b16 %v1691, %v1687
        %v2104 = vpack.c.b16 %v1692, %v1688
        %v2105 = vpack.c.b16 %v1693, %v1689
        %v2106 = vpack.c.b16 %v1698, %v1694
        %v2107 = vpack.c.b16 %v1699, %v1695
        %v2108 = vpack.c.b16 %v1700, %v1696
        %v2109 = vpack.c.b16 %v1701, %v1697
        %v2110 = vpack.c.b16 %v1706, %v1702
        %v2111 = vpack.c.b16 %v1707, %v1703
        %v2112 = vpack.c.b16 %v1708, %v1704
        %v2113 = vpack.c.b16 %v1709, %v1705
        %v2114 = vpack.c.b16 %v1714, %v1710
        %v2115 = vpack.c.b16 %v1715, %v1711
        %v2116 = vpack.c.b16 %v1716, %v1712
        %v2117 = vpack.c.b16 %v1717, %v1713
        %v2118 = vpack.c.b16 %v1722, %v1718
        %v2119 = vpack.c.b16 %v1723, %v1719
        %v2120 = vpack.c.b16 %v1724, %v1720
        %v2121 = vpack.c.b16 %v1725, %v1721
        %v2122 = vpack.c.b16 %v1730, %v1726
        %v2123 = vpack.c.b16 %v1731, %v1727
        %v2124 = vpack.c.b16 %v1732, %v1728
        %v2125 = vpack.c.b16 %v1733, %v1729
        %v2126 = vpack.c.b16 %v1738, %v1734
        %v2127 = vpack.c.b16 %v1739, %v1735
        %v2128 = vpack.c.b16 %v1740, %v1736
        %v2129 = vpack.c.b16 %v1741, %v1737
        %v2130 = vpack.c.b16 %v1746, %v1742
        %v2131 = vpack.c.b16 %v1747, %v1743
        %v2132 = vpack.c.b16 %v1748, %v1744
        %v2133 = vpack.c.b16 %v1749, %v1745
        %2518 = vmatprep.subr.bf16.mxu0 %v1779
        %2519 = vmatpush1.bf16.msra.mxu0 %v1778
        %2520 = vmatprep.subr.bf16.mxu0 %v1775
        %2521 = vmatpush1.bf16.msra.mxu0 %v1774
        %2522 = vmatprep.subr.bf16.mxu0 %v1771
        %2523 = vmatpush1.bf16.msra.mxu0 %v1770
        %2524 = vmatprep.subr.bf16.mxu0 %v1767
        %2525 = vmatpush1.bf16.msra.mxu0 %v1766
        %2526 = vmatprep.subr.bf16.mxu0 %v1763
        %2527 = vmatpush1.bf16.msra.mxu0 %v1762
        %2528 = vmatprep.subr.bf16.mxu0 %v1759
        %2529 = vmatpush1.bf16.msra.mxu0 %v1758
        %2530 = vmatprep.subr.bf16.mxu0 %v1755
        %2531 = vmatpush1.bf16.msra.mxu0 %v1754
        %2532 = vmatprep.subr.bf16.mxu0 %v1751
        %2533 = vmatpush1.bf16.msra.mxu0 %v1750
        %2534 = vmatprep.subr.bf16.mxu0 %v1811
        %2535 = vmatpush2.bf16.msra.mxu0 %v1810
        %2536 = vmatprep.subr.bf16.mxu0 %v1807
        %2537 = vmatpush2.bf16.msra.mxu0 %v1806
        %2538 = vmatprep.subr.bf16.mxu0 %v1803
        %2539 = vmatpush2.bf16.msra.mxu0 %v1802
        %2540 = vmatprep.subr.bf16.mxu0 %v1799
        %2541 = vmatpush2.bf16.msra.mxu0 %v1798
        %2542 = vmatprep.subr.bf16.mxu0 %v1795
        %2543 = vmatpush2.bf16.msra.mxu0 %v1794
        %2544 = vmatprep.subr.bf16.mxu0 %v1791
        %2545 = vmatpush2.bf16.msra.mxu0 %v1790
        %2546 = vmatprep.subr.bf16.mxu0 %v1787
        %2547 = vmatpush2.bf16.msra.mxu0 %v1786
        %2548 = vmatprep.subr.bf16.mxu0 %v1783
        %2549 = vmatpush2.bf16.msra.mxu0 %v1782
        %2550 = vmatprep.mubr.bf16.mxu0 %v575
        %2551 = vmatmul.mubr.bf16.gmra.mxu0 %v574
        %v2552 = vpop.f32.mrf.mxu0
        %v2553 = vadd.f32 0.0, %v2552
        %v2554 = vpop.f32.mrf.mxu0
        %v2555 = vadd.f32 0.0, %v2554
        %v2556 = vpop.f32.mrf.mxu0
        %v2557 = vpop.f32.mrf.mxu0
        %2558 = vdwg.mxu0
        %2559 = vmatprep.subr.bf16.mxu0 %v1843
        %2560 = vmatpush1.bf16.msra.mxu0 %v1842
        %2561 = vmatprep.subr.bf16.mxu0 %v1839
        %2562 = vmatpush1.bf16.msra.mxu0 %v1838
        %2563 = vmatprep.subr.bf16.mxu0 %v1835
        %2564 = vmatpush1.bf16.msra.mxu0 %v1834
        %2565 = vmatprep.subr.bf16.mxu0 %v1831
        %2566 = vmatpush1.bf16.msra.mxu0 %v1830
        %2567 = vmatprep.subr.bf16.mxu0 %v1827
        %2568 = vmatpush1.bf16.msra.mxu0 %v1826
        %2569 = vmatprep.subr.bf16.mxu0 %v1823
        %2570 = vmatpush1.bf16.msra.mxu0 %v1822
        %2571 = vmatprep.subr.bf16.mxu0 %v1819
        %2572 = vmatpush1.bf16.msra.mxu0 %v1818
        %2573 = vmatprep.subr.bf16.mxu0 %v1815
        %2574 = vmatpush1.bf16.msra.mxu0 %v1814
        %2575 = vmatprep.subr.bf16.mxu0 %v1875
        %2576 = vmatpush2.bf16.msra.mxu0 %v1874
        %2577 = vmatprep.subr.bf16.mxu0 %v1871
        %2578 = vmatpush2.bf16.msra.mxu0 %v1870
        %2579 = vmatprep.subr.bf16.mxu0 %v1867
        %2580 = vmatpush2.bf16.msra.mxu0 %v1866
        %2581 = vmatprep.subr.bf16.mxu0 %v1863
        %2582 = vmatpush2.bf16.msra.mxu0 %v1862
        %2583 = vmatprep.subr.bf16.mxu0 %v1859
        %2584 = vmatpush2.bf16.msra.mxu0 %v1858
        %2585 = vmatprep.subr.bf16.mxu0 %v1855
        %2586 = vmatpush2.bf16.msra.mxu0 %v1854
        %2587 = vmatprep.subr.bf16.mxu0 %v1851
        %2588 = vmatpush2.bf16.msra.mxu0 %v1850
        %2589 = vmatprep.subr.bf16.mxu0 %v1847
        %2590 = vmatpush2.bf16.msra.mxu0 %v1846
        %2591 = vmatprep.mubr.bf16.mxu0 %v577
        %2592 = vmatmul.mubr.bf16.gmra.mxu0 %v576
        %v2593 = vpop.f32.mrf.mxu0
        %v2594 = vadd.f32 %v2553, %v2593
        %v2595 = vpop.f32.mrf.mxu0
        %v2596 = vadd.f32 %v2555, %v2595
        %v2597 = vpop.f32.mrf.mxu0
        %v2598 = vpop.f32.mrf.mxu0
        %2599 = vdwg.mxu0
        %2600 = vmatprep.subr.bf16.mxu0 %v1907
        %2601 = vmatpush1.bf16.msra.mxu0 %v1906
        %2602 = vmatprep.subr.bf16.mxu0 %v1903
        %2603 = vmatpush1.bf16.msra.mxu0 %v1902
        %2604 = vmatprep.subr.bf16.mxu0 %v1899
        %2605 = vmatpush1.bf16.msra.mxu0 %v1898
        %2606 = vmatprep.subr.bf16.mxu0 %v1895
        %2607 = vmatpush1.bf16.msra.mxu0 %v1894
        %2608 = vmatprep.subr.bf16.mxu0 %v1891
        %2609 = vmatpush1.bf16.msra.mxu0 %v1890
        %2610 = vmatprep.subr.bf16.mxu0 %v1887
        %2611 = vmatpush1.bf16.msra.mxu0 %v1886
        %2612 = vmatprep.subr.bf16.mxu0 %v1883
        %2613 = vmatpush1.bf16.msra.mxu0 %v1882
        %2614 = vmatprep.subr.bf16.mxu0 %v1879
        %2615 = vmatpush1.bf16.msra.mxu0 %v1878
        %2616 = vmatprep.subr.bf16.mxu0 %v1939
        %2617 = vmatpush2.bf16.msra.mxu0 %v1938
        %2618 = vmatprep.subr.bf16.mxu0 %v1935
        %2619 = vmatpush2.bf16.msra.mxu0 %v1934
        %2620 = vmatprep.subr.bf16.mxu0 %v1931
        %2621 = vmatpush2.bf16.msra.mxu0 %v1930
        %2622 = vmatprep.subr.bf16.mxu0 %v1927
        %2623 = vmatpush2.bf16.msra.mxu0 %v1926
        %2624 = vmatprep.subr.bf16.mxu0 %v1923
        %2625 = vmatpush2.bf16.msra.mxu0 %v1922
        %2626 = vmatprep.subr.bf16.mxu0 %v1919
        %2627 = vmatpush2.bf16.msra.mxu0 %v1918
        %2628 = vmatprep.subr.bf16.mxu0 %v1915
        %2629 = vmatpush2.bf16.msra.mxu0 %v1914
        %2630 = vmatprep.subr.bf16.mxu0 %v1911
        %2631 = vmatpush2.bf16.msra.mxu0 %v1910
        %2632 = vmatprep.mubr.bf16.mxu0 %v579
        %2633 = vmatmul.mubr.bf16.gmra.mxu0 %v578
        %v2634 = vpop.f32.mrf.mxu0
        %v2635 = vadd.f32 %v2594, %v2634
        %v2636 = vpop.f32.mrf.mxu0
        %v2637 = vadd.f32 %v2596, %v2636
        %v2638 = vpop.f32.mrf.mxu0
        %v2639 = vpop.f32.mrf.mxu0
        %2640 = vdwg.mxu0
        %2641 = vmatprep.subr.bf16.mxu0 %v1971
        %2642 = vmatpush1.bf16.msra.mxu0 %v1970
        %2643 = vmatprep.subr.bf16.mxu0 %v1967
        %2644 = vmatpush1.bf16.msra.mxu0 %v1966
        %2645 = vmatprep.subr.bf16.mxu0 %v1963
        %2646 = vmatpush1.bf16.msra.mxu0 %v1962
        %2647 = vmatprep.subr.bf16.mxu0 %v1959
        %2648 = vmatpush1.bf16.msra.mxu0 %v1958
        %2649 = vmatprep.subr.bf16.mxu0 %v1955
        %2650 = vmatpush1.bf16.msra.mxu0 %v1954
        %2651 = vmatprep.subr.bf16.mxu0 %v1951
        %2652 = vmatpush1.bf16.msra.mxu0 %v1950
        %2653 = vmatprep.subr.bf16.mxu0 %v1947
        %2654 = vmatpush1.bf16.msra.mxu0 %v1946
        %2655 = vmatprep.subr.bf16.mxu0 %v1943
        %2656 = vmatpush1.bf16.msra.mxu0 %v1942
        %2657 = vmatprep.subr.bf16.mxu0 %v2003
        %2658 = vmatpush2.bf16.msra.mxu0 %v2002
        %2659 = vmatprep.subr.bf16.mxu0 %v1999
        %2660 = vmatpush2.bf16.msra.mxu0 %v1998
        %2661 = vmatprep.subr.bf16.mxu0 %v1995
        %2662 = vmatpush2.bf16.msra.mxu0 %v1994
        %2663 = vmatprep.subr.bf16.mxu0 %v1991
        %2664 = vmatpush2.bf16.msra.mxu0 %v1990
        %2665 = vmatprep.subr.bf16.mxu0 %v1987
        %2666 = vmatpush2.bf16.msra.mxu0 %v1986
        %2667 = vmatprep.subr.bf16.mxu0 %v1983
        %2668 = vmatpush2.bf16.msra.mxu0 %v1982
        %2669 = vmatprep.subr.bf16.mxu0 %v1979
        %2670 = vmatpush2.bf16.msra.mxu0 %v1978
        %2671 = vmatprep.subr.bf16.mxu0 %v1975
        %2672 = vmatpush2.bf16.msra.mxu0 %v1974
        %2673 = vmatprep.mubr.bf16.mxu0 %v581
        %2674 = vmatmul.mubr.bf16.gmra.mxu0 %v580
        %v2675 = vpop.f32.mrf.mxu0
        %v2676 = vadd.f32 %v2635, %v2675
        %v2677 = vpop.f32.mrf.mxu0
        %v2678 = vadd.f32 %v2637, %v2677
        %v2679 = vpop.f32.mrf.mxu0
        %v2680 = vpop.f32.mrf.mxu0
        %2681 = vdwg.mxu0
        %2682 = vmatprep.subr.bf16.mxu0 %v2035
        %2683 = vmatpush1.bf16.msra.mxu0 %v2034
        %2684 = vmatprep.subr.bf16.mxu0 %v2031
        %2685 = vmatpush1.bf16.msra.mxu0 %v2030
        %2686 = vmatprep.subr.bf16.mxu0 %v2027
        %2687 = vmatpush1.bf16.msra.mxu0 %v2026
        %2688 = vmatprep.subr.bf16.mxu0 %v2023
        %2689 = vmatpush1.bf16.msra.mxu0 %v2022
        %2690 = vmatprep.subr.bf16.mxu0 %v2019
        %2691 = vmatpush1.bf16.msra.mxu0 %v2018
        %2692 = vmatprep.subr.bf16.mxu0 %v2015
        %2693 = vmatpush1.bf16.msra.mxu0 %v2014
        %2694 = vmatprep.subr.bf16.mxu0 %v2011
        %2695 = vmatpush1.bf16.msra.mxu0 %v2010
        %2696 = vmatprep.subr.bf16.mxu0 %v2007
        %2697 = vmatpush1.bf16.msra.mxu0 %v2006
        %2698 = vmatprep.subr.bf16.mxu0 %v2067
        %2699 = vmatpush2.bf16.msra.mxu0 %v2066
        %2700 = vmatprep.subr.bf16.mxu0 %v2063
        %2701 = vmatpush2.bf16.msra.mxu0 %v2062
        %2702 = vmatprep.subr.bf16.mxu0 %v2059
        %2703 = vmatpush2.bf16.msra.mxu0 %v2058
        %2704 = vmatprep.subr.bf16.mxu0 %v2055
        %2705 = vmatpush2.bf16.msra.mxu0 %v2054
        %2706 = vmatprep.subr.bf16.mxu0 %v2051
        %2707 = vmatpush2.bf16.msra.mxu0 %v2050
        %2708 = vmatprep.subr.bf16.mxu0 %v2047
        %2709 = vmatpush2.bf16.msra.mxu0 %v2046
        %2710 = vmatprep.subr.bf16.mxu0 %v2043
        %2711 = vmatpush2.bf16.msra.mxu0 %v2042
        %2712 = vmatprep.subr.bf16.mxu0 %v2039
        %2713 = vmatpush2.bf16.msra.mxu0 %v2038
        %2714 = vmatprep.mubr.bf16.mxu0 %v583
        %2715 = vmatmul.mubr.bf16.gmra.mxu0 %v582
        %v2716 = vpop.f32.mrf.mxu0
        %v2717 = vadd.f32 %v2676, %v2716
        %v2718 = vpop.f32.mrf.mxu0
        %v2719 = vadd.f32 %v2678, %v2718
        %v2720 = vpop.f32.mrf.mxu0
        %v2721 = vpop.f32.mrf.mxu0
        %2722 = vdwg.mxu0
        %2723 = vmatprep.subr.bf16.mxu0 %v2099
        %2724 = vmatpush1.bf16.msra.mxu0 %v2098
        %2725 = vmatprep.subr.bf16.mxu0 %v2095
        %2726 = vmatpush1.bf16.msra.mxu0 %v2094
        %2727 = vmatprep.subr.bf16.mxu0 %v2091
        %2728 = vmatpush1.bf16.msra.mxu0 %v2090
        %2729 = vmatprep.subr.bf16.mxu0 %v2087
        %2730 = vmatpush1.bf16.msra.mxu0 %v2086
        %2731 = vmatprep.subr.bf16.mxu0 %v2083
        %2732 = vmatpush1.bf16.msra.mxu0 %v2082
        %2733 = vmatprep.subr.bf16.mxu0 %v2079
        %2734 = vmatpush1.bf16.msra.mxu0 %v2078
        %2735 = vmatprep.subr.bf16.mxu0 %v2075
        %2736 = vmatpush1.bf16.msra.mxu0 %v2074
        %2737 = vmatprep.subr.bf16.mxu0 %v2071
        %2738 = vmatpush1.bf16.msra.mxu0 %v2070
        %2739 = vmatprep.subr.bf16.mxu0 %v2131
        %2740 = vmatpush2.bf16.msra.mxu0 %v2130
        %2741 = vmatprep.subr.bf16.mxu0 %v2127
        %2742 = vmatpush2.bf16.msra.mxu0 %v2126
        %2743 = vmatprep.subr.bf16.mxu0 %v2123
        %2744 = vmatpush2.bf16.msra.mxu0 %v2122
        %2745 = vmatprep.subr.bf16.mxu0 %v2119
        %2746 = vmatpush2.bf16.msra.mxu0 %v2118
        %2747 = vmatprep.subr.bf16.mxu0 %v2115
        %2748 = vmatpush2.bf16.msra.mxu0 %v2114
        %2749 = vmatprep.subr.bf16.mxu0 %v2111
        %2750 = vmatpush2.bf16.msra.mxu0 %v2110
        %2751 = vmatprep.subr.bf16.mxu0 %v2107
        %2752 = vmatpush2.bf16.msra.mxu0 %v2106
        %2753 = vmatprep.subr.bf16.mxu0 %v2103
        %2754 = vmatpush2.bf16.msra.mxu0 %v2102
        %2755 = vmatprep.mubr.bf16.mxu0 %v585
        %2756 = vmatmul.mubr.bf16.gmra.mxu0 %v584
        %v2757 = vpop.f32.mrf.mxu0
        %v2758 = vadd.f32 %v2717, %v2757
        %v2759 = vpop.f32.mrf.mxu0
        %v2760 = vadd.f32 %v2719, %v2759
        %v2761 = vpop.f32.mrf.mxu0
        %v2762 = vpop.f32.mrf.mxu0
        %2763 = vdwg.mxu0
        %2764 = vmatprep.subr.bf16.mxu0 %v1781
        %2765 = vmatpush1.bf16.msra.mxu0 %v1780
        %2766 = vmatprep.subr.bf16.mxu0 %v1777
        %2767 = vmatpush1.bf16.msra.mxu0 %v1776
        %2768 = vmatprep.subr.bf16.mxu0 %v1773
        %2769 = vmatpush1.bf16.msra.mxu0 %v1772
        %2770 = vmatprep.subr.bf16.mxu0 %v1769
        %2771 = vmatpush1.bf16.msra.mxu0 %v1768
        %2772 = vmatprep.subr.bf16.mxu0 %v1765
        %2773 = vmatpush1.bf16.msra.mxu0 %v1764
        %2774 = vmatprep.subr.bf16.mxu0 %v1761
        %2775 = vmatpush1.bf16.msra.mxu0 %v1760
        %2776 = vmatprep.subr.bf16.mxu0 %v1757
        %2777 = vmatpush1.bf16.msra.mxu0 %v1756
        %2778 = vmatprep.subr.bf16.mxu0 %v1753
        %2779 = vmatpush1.bf16.msra.mxu0 %v1752
        %2780 = vmatprep.subr.bf16.mxu0 %v1813
        %2781 = vmatpush2.bf16.msra.mxu0 %v1812
        %2782 = vmatprep.subr.bf16.mxu0 %v1809
        %2783 = vmatpush2.bf16.msra.mxu0 %v1808
        %2784 = vmatprep.subr.bf16.mxu0 %v1805
        %2785 = vmatpush2.bf16.msra.mxu0 %v1804
        %2786 = vmatprep.subr.bf16.mxu0 %v1801
        %2787 = vmatpush2.bf16.msra.mxu0 %v1800
        %2788 = vmatprep.subr.bf16.mxu0 %v1797
        %2789 = vmatpush2.bf16.msra.mxu0 %v1796
        %2790 = vmatprep.subr.bf16.mxu0 %v1793
        %2791 = vmatpush2.bf16.msra.mxu0 %v1792
        %2792 = vmatprep.subr.bf16.mxu0 %v1789
        %2793 = vmatpush2.bf16.msra.mxu0 %v1788
        %2794 = vmatprep.subr.bf16.mxu0 %v1785
        %2795 = vmatpush2.bf16.msra.mxu0 %v1784
        %2796 = vmatprep.mubr.bf16.mxu0 %v575
        %2797 = vmatmul.mubr.bf16.gmra.mxu0 %v574
        %v2798 = vpop.f32.mrf.mxu0
        %v2799 = vadd.f32 0.0, %v2798
        %v2800 = vpop.f32.mrf.mxu0
        %v2801 = vadd.f32 0.0, %v2800
        %v2802 = vpop.f32.mrf.mxu0
        %v2803 = vpop.f32.mrf.mxu0
        %2804 = vdwg.mxu0
        %2805 = vmatprep.subr.bf16.mxu0 %v1845
        %2806 = vmatpush1.bf16.msra.mxu0 %v1844
        %2807 = vmatprep.subr.bf16.mxu0 %v1841
        %2808 = vmatpush1.bf16.msra.mxu0 %v1840
        %2809 = vmatprep.subr.bf16.mxu0 %v1837
        %2810 = vmatpush1.bf16.msra.mxu0 %v1836
        %2811 = vmatprep.subr.bf16.mxu0 %v1833
        %2812 = vmatpush1.bf16.msra.mxu0 %v1832
        %2813 = vmatprep.subr.bf16.mxu0 %v1829
        %2814 = vmatpush1.bf16.msra.mxu0 %v1828
        %2815 = vmatprep.subr.bf16.mxu0 %v1825
        %2816 = vmatpush1.bf16.msra.mxu0 %v1824
        %2817 = vmatprep.subr.bf16.mxu0 %v1821
        %2818 = vmatpush1.bf16.msra.mxu0 %v1820
        %2819 = vmatprep.subr.bf16.mxu0 %v1817
        %2820 = vmatpush1.bf16.msra.mxu0 %v1816
        %2821 = vmatprep.subr.bf16.mxu0 %v1877
        %2822 = vmatpush2.bf16.msra.mxu0 %v1876
        %2823 = vmatprep.subr.bf16.mxu0 %v1873
        %2824 = vmatpush2.bf16.msra.mxu0 %v1872
        %2825 = vmatprep.subr.bf16.mxu0 %v1869
        %2826 = vmatpush2.bf16.msra.mxu0 %v1868
        %2827 = vmatprep.subr.bf16.mxu0 %v1865
        %2828 = vmatpush2.bf16.msra.mxu0 %v1864
        %2829 = vmatprep.subr.bf16.mxu0 %v1861
        %2830 = vmatpush2.bf16.msra.mxu0 %v1860
        %2831 = vmatprep.subr.bf16.mxu0 %v1857
        %2832 = vmatpush2.bf16.msra.mxu0 %v1856
        %2833 = vmatprep.subr.bf16.mxu0 %v1853
        %2834 = vmatpush2.bf16.msra.mxu0 %v1852
        %2835 = vmatprep.subr.bf16.mxu0 %v1849
        %2836 = vmatpush2.bf16.msra.mxu0 %v1848
        %2837 = vmatprep.mubr.bf16.mxu0 %v577
        %2838 = vmatmul.mubr.bf16.gmra.mxu0 %v576
        %v2839 = vpop.f32.mrf.mxu0
        %v2840 = vadd.f32 %v2799, %v2839
        %v2841 = vpop.f32.mrf.mxu0
        %v2842 = vadd.f32 %v2801, %v2841
        %v2843 = vpop.f32.mrf.mxu0
        %v2844 = vpop.f32.mrf.mxu0
        %2845 = vdwg.mxu0
        %2846 = vmatprep.subr.bf16.mxu0 %v1909
        %2847 = vmatpush1.bf16.msra.mxu0 %v1908
        %2848 = vmatprep.subr.bf16.mxu0 %v1905
        %2849 = vmatpush1.bf16.msra.mxu0 %v1904
        %2850 = vmatprep.subr.bf16.mxu0 %v1901
        %2851 = vmatpush1.bf16.msra.mxu0 %v1900
        %2852 = vmatprep.subr.bf16.mxu0 %v1897
        %2853 = vmatpush1.bf16.msra.mxu0 %v1896
        %2854 = vmatprep.subr.bf16.mxu0 %v1893
        %2855 = vmatpush1.bf16.msra.mxu0 %v1892
        %2856 = vmatprep.subr.bf16.mxu0 %v1889
        %2857 = vmatpush1.bf16.msra.mxu0 %v1888
        %2858 = vmatprep.subr.bf16.mxu0 %v1885
        %2859 = vmatpush1.bf16.msra.mxu0 %v1884
        %2860 = vmatprep.subr.bf16.mxu0 %v1881
        %2861 = vmatpush1.bf16.msra.mxu0 %v1880
        %2862 = vmatprep.subr.bf16.mxu0 %v1941
        %2863 = vmatpush2.bf16.msra.mxu0 %v1940
        %2864 = vmatprep.subr.bf16.mxu0 %v1937
        %2865 = vmatpush2.bf16.msra.mxu0 %v1936
        %2866 = vmatprep.subr.bf16.mxu0 %v1933
        %2867 = vmatpush2.bf16.msra.mxu0 %v1932
        %2868 = vmatprep.subr.bf16.mxu0 %v1929
        %2869 = vmatpush2.bf16.msra.mxu0 %v1928
        %2870 = vmatprep.subr.bf16.mxu0 %v1925
        %2871 = vmatpush2.bf16.msra.mxu0 %v1924
        %2872 = vmatprep.subr.bf16.mxu0 %v1921
        %2873 = vmatpush2.bf16.msra.mxu0 %v1920
        %2874 = vmatprep.subr.bf16.mxu0 %v1917
        %2875 = vmatpush2.bf16.msra.mxu0 %v1916
        %2876 = vmatprep.subr.bf16.mxu0 %v1913
        %2877 = vmatpush2.bf16.msra.mxu0 %v1912
        %2878 = vmatprep.mubr.bf16.mxu0 %v579
        %2879 = vmatmul.mubr.bf16.gmra.mxu0 %v578
        %v2880 = vpop.f32.mrf.mxu0
        %v2881 = vadd.f32 %v2840, %v2880
        %v2882 = vpop.f32.mrf.mxu0
        %v2883 = vadd.f32 %v2842, %v2882
        %v2884 = vpop.f32.mrf.mxu0
        %v2885 = vpop.f32.mrf.mxu0
        %2886 = vdwg.mxu0
        %2887 = vmatprep.subr.bf16.mxu0 %v1973
        %2888 = vmatpush1.bf16.msra.mxu0 %v1972
        %2889 = vmatprep.subr.bf16.mxu0 %v1969
        %2890 = vmatpush1.bf16.msra.mxu0 %v1968
        %2891 = vmatprep.subr.bf16.mxu0 %v1965
        %2892 = vmatpush1.bf16.msra.mxu0 %v1964
        %2893 = vmatprep.subr.bf16.mxu0 %v1961
        %2894 = vmatpush1.bf16.msra.mxu0 %v1960
        %2895 = vmatprep.subr.bf16.mxu0 %v1957
        %2896 = vmatpush1.bf16.msra.mxu0 %v1956
        %2897 = vmatprep.subr.bf16.mxu0 %v1953
        %2898 = vmatpush1.bf16.msra.mxu0 %v1952
        %2899 = vmatprep.subr.bf16.mxu0 %v1949
        %2900 = vmatpush1.bf16.msra.mxu0 %v1948
        %2901 = vmatprep.subr.bf16.mxu0 %v1945
        %2902 = vmatpush1.bf16.msra.mxu0 %v1944
        %2903 = vmatprep.subr.bf16.mxu0 %v2005
        %2904 = vmatpush2.bf16.msra.mxu0 %v2004
        %2905 = vmatprep.subr.bf16.mxu0 %v2001
        %2906 = vmatpush2.bf16.msra.mxu0 %v2000
        %2907 = vmatprep.subr.bf16.mxu0 %v1997
        %2908 = vmatpush2.bf16.msra.mxu0 %v1996
        %2909 = vmatprep.subr.bf16.mxu0 %v1993
        %2910 = vmatpush2.bf16.msra.mxu0 %v1992
        %2911 = vmatprep.subr.bf16.mxu0 %v1989
        %2912 = vmatpush2.bf16.msra.mxu0 %v1988
        %2913 = vmatprep.subr.bf16.mxu0 %v1985
        %2914 = vmatpush2.bf16.msra.mxu0 %v1984
        %2915 = vmatprep.subr.bf16.mxu0 %v1981
        %2916 = vmatpush2.bf16.msra.mxu0 %v1980
        %2917 = vmatprep.subr.bf16.mxu0 %v1977
        %2918 = vmatpush2.bf16.msra.mxu0 %v1976
        %2919 = vmatprep.mubr.bf16.mxu0 %v581
        %2920 = vmatmul.mubr.bf16.gmra.mxu0 %v580
        %v2921 = vpop.f32.mrf.mxu0
        %v2922 = vadd.f32 %v2881, %v2921
        %v2923 = vpop.f32.mrf.mxu0
        %v2924 = vadd.f32 %v2883, %v2923
        %v2925 = vpop.f32.mrf.mxu0
        %v2926 = vpop.f32.mrf.mxu0
        %2927 = vdwg.mxu0
        %2928 = vmatprep.subr.bf16.mxu0 %v2037
        %2929 = vmatpush1.bf16.msra.mxu0 %v2036
        %2930 = vmatprep.subr.bf16.mxu0 %v2033
        %2931 = vmatpush1.bf16.msra.mxu0 %v2032
        %2932 = vmatprep.subr.bf16.mxu0 %v2029
        %2933 = vmatpush1.bf16.msra.mxu0 %v2028
        %2934 = vmatprep.subr.bf16.mxu0 %v2025
        %2935 = vmatpush1.bf16.msra.mxu0 %v2024
        %2936 = vmatprep.subr.bf16.mxu0 %v2021
        %2937 = vmatpush1.bf16.msra.mxu0 %v2020
        %2938 = vmatprep.subr.bf16.mxu0 %v2017
        %2939 = vmatpush1.bf16.msra.mxu0 %v2016
        %2940 = vmatprep.subr.bf16.mxu0 %v2013
        %2941 = vmatpush1.bf16.msra.mxu0 %v2012
        %2942 = vmatprep.subr.bf16.mxu0 %v2009
        %2943 = vmatpush1.bf16.msra.mxu0 %v2008
        %2944 = vmatprep.subr.bf16.mxu0 %v2069
        %2945 = vmatpush2.bf16.msra.mxu0 %v2068
        %2946 = vmatprep.subr.bf16.mxu0 %v2065
        %2947 = vmatpush2.bf16.msra.mxu0 %v2064
        %2948 = vmatprep.subr.bf16.mxu0 %v2061
        %2949 = vmatpush2.bf16.msra.mxu0 %v2060
        %2950 = vmatprep.subr.bf16.mxu0 %v2057
        %2951 = vmatpush2.bf16.msra.mxu0 %v2056
        %2952 = vmatprep.subr.bf16.mxu0 %v2053
        %2953 = vmatpush2.bf16.msra.mxu0 %v2052
        %2954 = vmatprep.subr.bf16.mxu0 %v2049
        %2955 = vmatpush2.bf16.msra.mxu0 %v2048
        %2956 = vmatprep.subr.bf16.mxu0 %v2045
        %2957 = vmatpush2.bf16.msra.mxu0 %v2044
        %2958 = vmatprep.subr.bf16.mxu0 %v2041
        %2959 = vmatpush2.bf16.msra.mxu0 %v2040
        %2960 = vmatprep.mubr.bf16.mxu0 %v583
        %2961 = vmatmul.mubr.bf16.gmra.mxu0 %v582
        %v2962 = vpop.f32.mrf.mxu0
        %v2963 = vadd.f32 %v2922, %v2962
        %v2964 = vpop.f32.mrf.mxu0
        %v2965 = vadd.f32 %v2924, %v2964
        %v2966 = vpop.f32.mrf.mxu0
        %v2967 = vpop.f32.mrf.mxu0
        %2968 = vdwg.mxu0
        %2969 = vmatprep.subr.bf16.mxu0 %v2101
        %2970 = vmatpush1.bf16.msra.mxu0 %v2100
        %2971 = vmatprep.subr.bf16.mxu0 %v2097
        %2972 = vmatpush1.bf16.msra.mxu0 %v2096
        %2973 = vmatprep.subr.bf16.mxu0 %v2093
        %2974 = vmatpush1.bf16.msra.mxu0 %v2092
        %2975 = vmatprep.subr.bf16.mxu0 %v2089
        %2976 = vmatpush1.bf16.msra.mxu0 %v2088
        %2977 = vmatprep.subr.bf16.mxu0 %v2085
        %2978 = vmatpush1.bf16.msra.mxu0 %v2084
        %2979 = vmatprep.subr.bf16.mxu0 %v2081
        %2980 = vmatpush1.bf16.msra.mxu0 %v2080
        %2981 = vmatprep.subr.bf16.mxu0 %v2077
        %2982 = vmatpush1.bf16.msra.mxu0 %v2076
        %2983 = vmatprep.subr.bf16.mxu0 %v2073
        %2984 = vmatpush1.bf16.msra.mxu0 %v2072
        %2985 = vmatprep.subr.bf16.mxu0 %v2133
        %2986 = vmatpush2.bf16.msra.mxu0 %v2132
        %2987 = vmatprep.subr.bf16.mxu0 %v2129
        %2988 = vmatpush2.bf16.msra.mxu0 %v2128
        %2989 = vmatprep.subr.bf16.mxu0 %v2125
        %2990 = vmatpush2.bf16.msra.mxu0 %v2124
        %2991 = vmatprep.subr.bf16.mxu0 %v2121
        %2992 = vmatpush2.bf16.msra.mxu0 %v2120
        %2993 = vmatprep.subr.bf16.mxu0 %v2117
        %2994 = vmatpush2.bf16.msra.mxu0 %v2116
        %2995 = vmatprep.subr.bf16.mxu0 %v2113
        %2996 = vmatpush2.bf16.msra.mxu0 %v2112
        %2997 = vmatprep.subr.bf16.mxu0 %v2109
        %2998 = vmatpush2.bf16.msra.mxu0 %v2108
        %2999 = vmatprep.subr.bf16.mxu0 %v2105
        %3000 = vmatpush2.bf16.msra.mxu0 %v2104
        %3001 = vmatprep.mubr.bf16.mxu0 %v585
        %3002 = vmatmul.mubr.bf16.gmra.mxu0 %v584
        %v3003 = vpop.f32.mrf.mxu0
        %v3004 = vadd.f32 %v2963, %v3003
        %v3005 = vpop.f32.mrf.mxu0
        %v3006 = vadd.f32 %v2965, %v3005
        %v3007 = vpop.f32.mrf.mxu0
        %v3008 = vpop.f32.mrf.mxu0
        %3009 = vdwg.mxu0
        %3010 = vst [vmem:[%s164] sm:$0xff] %v2758
        %3011 = vst [vmem:[%s164 + $0x8] sm:$0xff] %v2760
        %3012 = vst [vmem:[%s164 + $0x10] sm:$0xff] %v3004
        %3013 = vst [vmem:[%s164 + $0x18] sm:$0xff] %v3006
        %s3014 = smul.u32 4, %s16
        %p3015 = scmp.lt.s32.totalorder %s3014, 15
        %s3016 = scalar_select %p3015, %s3014, 15
        %s3017 = smul.addr %s3016, 8
        %s3018 = scalar_lea.vmem %s2, %s3017
        // Predicated region
        $region33: #{c2eb_forward.2} parent=27 // pred_check
          %p3019 = pneg %p81
        $region34: #{c2eb_forward.2} parent=27 // pred_check_branch
          %3021 = sbr.rel (%p3019) target = $region36
        $region35: #{c2eb_forward.2} parent=27 // pred_region
          %s3022 = smul.u32 4, %s16
        $region36: #{c2eb_forward.2} parent=27 // pred_fallthru
          _
      $region28: #{c2eb_forward.2} parent=5 // pred_fallthru
        _
      %p3023 = scmp.le.s32.totalorder 2, %s11
      // Predicated region
      $region37: #{c2eb_forward.2} parent=5 // pred_check
        %p3024 = pneg %p3023
      $region38: #{c2eb_forward.2} parent=5 // pred_check_branch
        %3026 = sbr.rel (%p3024) target = $region40
      $region39: #{c2eb_forward.2} parent=5 // pred_region
        %s3027 = ssub.s32 %s11, 2
        // Predicated region
        $region41: #{c2eb_forward.2} parent=39 // pred_check
          %p3028 = pneg %p87
        $region42: #{c2eb_forward.2} parent=39 // pred_check_branch
          %3030 = sbr.rel (%p3028) target = $region44
        $region43: #{c2eb_forward.2} parent=39 // pred_region
          %s3031 = smul.u32 4, %s17
          %p3032 = scmp.lt.s32.totalorder %s3031, 15
          %s3033 = scalar_select %p3032, %s3031, 15
          %s3034 = smul.addr %s3033, 8
          %s3035 = scalar_lea.vmem %s2, %s3034
        $region44: #{c2eb_forward.2} parent=39 // pred_fallthru
          _
      $region40: #{c2eb_forward.2} parent=5 // pred_fallthru
        _
    $region6: #{c2eb_forward.2} parent=1 // loop_footer
      %s15 = sadd.s32 1, %s11
    $region7: #{c2eb_forward.2} parent=1 // loop_footer_branch
      %10 = sbr.rel target = $region3
    $region8: #{c2eb_forward.2} parent=1 // loop_exit
      _
    %3036 = vsyncpa [#allocation3], 1
    %s3037 = scalar_lea.sflag [#allocation3], 1
    %3038 = vsyncpa %s3037, 1

// kernel: c2eb_forward.3
$region0: #{c2eb_forward.3}
  #allocation0 [shape = 'u32[]', space=smem, size = 0x4, offset = 0x4, fixed_abs, tag = 'smem constant byte address 0x4 - core index']
  #allocation1 [shape = 'u32[144,128]{1,0:T(1,128)}', space=vmem, size = 0x12000, scoped, tag = 'internal scratch']
  #allocation2 [shape = 'f32[8,2304]{1,0:T(8,128)}', space=vmem, size = 0x12000, scoped, tag = 'scratch operand']
  %s0 = inlined_call_operand.vmem [shape: f32[8,2048], index: 0, kind: input, shape index: {}]
  %s1 = inlined_call_operand.vmem [shape: f32[9,8,8], index: 1, kind: input, shape index: {}]
  %s2 = inlined_call_operand.vmem [shape: f32[2,2048], index: 2, kind: input, shape index: {}]
  %s3 = inlined_call_operand.vmem [shape: f32[1,4,1], index: 3, kind: input, shape index: {}]
  %s4 = inlined_call_operand.vmem [shape: f32[1,4,1], index: 4, kind: input, shape index: {}]
  %s5 = inlined_call_operand.vmem [shape: f32[8,2048], index: 5, kind: output, shape index: {}]
  %s6 = sld [smem:[#allocation0]]
  $region30: #{c2eb_forward.3} parent=0
    _
  %s8 = ssub.s32 1, %s6
  %s9 = scalar_select 0, %s8, %s6
  // Predicated region
  $region2: #{c2eb_forward.3} parent=0 // pred_check
    _
  $region3: #{c2eb_forward.3} parent=0 // pred_check_branch
    %11 = sbr.rel (0) target = $region5
  $region4: #{c2eb_forward.3} parent=0 // pred_region
    _
  $region5: #{c2eb_forward.3} parent=0 // pred_fallthru
    _
  // Predicated region
  $region6: #{c2eb_forward.3} parent=0 // pred_check
    _
  $region7: #{c2eb_forward.3} parent=0 // pred_check_branch
    %13 = sbr.rel (0) target = $region9
  $region8: #{c2eb_forward.3} parent=0 // pred_region
    _
  $region9: #{c2eb_forward.3} parent=0 // pred_fallthru
    _
  // Predicated region
  $region10: #{c2eb_forward.3} parent=0 // pred_check
    _
  $region11: #{c2eb_forward.3} parent=0 // pred_check_branch
    %15 = sbr.rel (0) target = $region13
  $region12: #{c2eb_forward.3} parent=0 // pred_region
    _
  $region13: #{c2eb_forward.3} parent=0 // pred_fallthru
    _
  // Predicated region
  $region14: #{c2eb_forward.3} parent=0 // pred_check
    _
  $region15: #{c2eb_forward.3} parent=0 // pred_check_branch
    %17 = sbr.rel (0) target = $region17
  $region16: #{c2eb_forward.3} parent=0 // pred_region
    _
  $region17: #{c2eb_forward.3} parent=0 // pred_fallthru
    _
  // Predicated region
  $region18: #{c2eb_forward.3} parent=0 // pred_check
    _
  $region19: #{c2eb_forward.3} parent=0 // pred_check_branch
    %19 = sbr.rel (0) target = $region21
  $region20: #{c2eb_forward.3} parent=0 // pred_region
    _
  $region21: #{c2eb_forward.3} parent=0 // pred_fallthru
    _
  %20 = vst [vmem:[#allocation2] sm:$0xff] 0.0
  %21 = vst [vmem:[#allocation2 + $0x88] sm:$0xff] 0.0
  %v22 = vld [vmem:[%s0] sm:$0xff]
  %v23 = vld [vmem:[%s0 + $0x8] sm:$0xff]
  %v24 = vld [vmem:[%s0 + $0x10] sm:$0xff]
  %v25 = vld [vmem:[%s0 + $0x18] sm:$0xff]
  %v26 = vld [vmem:[%s0 + $0x20] sm:$0xff]
  %v27 = vld [vmem:[%s0 + $0x28] sm:$0xff]
  %v28 = vld [vmem:[%s0 + $0x30] sm:$0xff]
  %v29 = vld [vmem:[%s0 + $0x38] sm:$0xff]
  %v30 = vld [vmem:[%s0 + $0x40] sm:$0xff]
  %v31 = vld [vmem:[%s0 + $0x48] sm:$0xff]
  %v32 = vld [vmem:[%s0 + $0x50] sm:$0xff]
  %v33 = vld [vmem:[%s0 + $0x58] sm:$0xff]
  %v34 = vld [vmem:[%s0 + $0x60] sm:$0xff]
  %v35 = vld [vmem:[%s0 + $0x68] sm:$0xff]
  %v36 = vld [vmem:[%s0 + $0x70] sm:$0xff]
  %v37 = vld [vmem:[%s0 + $0x78] sm:$0xff]
  %38 = vst [vmem:[#allocation2 + $0x8] sm:$0xff] %v22
  %39 = vst [vmem:[#allocation2 + $0x10] sm:$0xff] %v23
  %40 = vst [vmem:[#allocation2 + $0x18] sm:$0xff] %v24
  %41 = vst [vmem:[#allocation2 + $0x20] sm:$0xff] %v25
  %42 = vst [vmem:[#allocation2 + $0x28] sm:$0xff] %v26
  %43 = vst [vmem:[#allocation2 + $0x30] sm:$0xff] %v27
  %44 = vst [vmem:[#allocation2 + $0x38] sm:$0xff] %v28
  %45 = vst [vmem:[#allocation2 + $0x40] sm:$0xff] %v29
  %46 = vst [vmem:[#allocation2 + $0x48] sm:$0xff] %v30
  %47 = vst [vmem:[#allocation2 + $0x50] sm:$0xff] %v31
  %48 = vst [vmem:[#allocation2 + $0x58] sm:$0xff] %v32
  %49 = vst [vmem:[#allocation2 + $0x60] sm:$0xff] %v33
  %50 = vst [vmem:[#allocation2 + $0x68] sm:$0xff] %v34
  %51 = vst [vmem:[#allocation2 + $0x70] sm:$0xff] %v35
  %52 = vst [vmem:[#allocation2 + $0x78] sm:$0xff] %v36
  %53 = vst [vmem:[#allocation2 + $0x80] sm:$0xff] %v37
  %v54 = vld [vmem:[#allocation2] sm:$0xff]
  %v55 = vld [vmem:[#allocation2 + $0x8] sm:$0xff]
  %v56 = vld [vmem:[#allocation2 + $0x10] sm:$0xff]
  %v57 = vld [vmem:[#allocation2 + $0x18] sm:$0xff]
  %v58 = vld [vmem:[#allocation2 + $0x20] sm:$0xff]
  %v59 = vld [vmem:[%s2] ss:$2 sm:$0xf]
  %v61 = vlaneseq
  %v62 = vshrl.u32 %v61, 7
  %v63 = vsub.s32 0, %v62
  %v64 = vrot.slane %v59, %v63
  %v65 = vlaneseq
  %v66 = vshrl.u32 %v65, 7
  %v67 = vsub.s32 1, %v66
  %v68 = vrot.slane %v59, %v67
  %v69 = vlaneseq
  %v70 = vshrl.u32 %v69, 7
  %v71 = vsub.s32 2, %v70
  %v72 = vrot.slane %v59, %v71
  %v73 = vlaneseq
  %v74 = vshrl.u32 %v73, 7
  %v75 = vsub.s32 3, %v74
  %v76 = vrot.slane %v59, %v75
  %77 = vrot.lane.b32.xlu0 %v64, 63
  %v78 = vpop.permute.xlu0 %77
  %79 = vrot.lane.b32.xlu0 %v68, 63
  %v80 = vpop.permute.xlu0 %79
  %81 = vrot.lane.b32.xlu0 %v72, 63
  %v82 = vpop.permute.xlu0 %81
  %83 = vrot.lane.b32.xlu0 %v76, 63
  %v84 = vpop.permute.xlu0 %83
  %vm85 = vcmask 515072
  %v86 = vsel %vm85, %v78, %v80
  %v87 = vsel %vm85, %v80, %v82
  %v88 = vsel %vm85, %v82, %v84
  %v94 = vmul.f32 %v54, %v78
  %v95 = vmul.f32 %v55, %v86
  %v96 = vmul.f32 %v56, %v87
  %v97 = vmul.f32 %v57, %v88
  %v98 = vmul.f32 %v58, %v84
  %v99 = vld [vmem:[%s1] sm:$0xff]
  %s100 = scalar_lea.vmem %s1, 8
  %v101 = vld [vmem:[%s100] sm:$0xff]
  %107 = vrot.lane.b32.xlu0 %v54, 64
  %v108 = vpop.permute.xlu0 %107
  %109 = vrot.lane.b32.xlu0 %v55, 64
  %v110 = vpop.permute.xlu0 %109
  %111 = vrot.lane.b32.xlu0 %v56, 64
  %v112 = vpop.permute.xlu0 %111
  %113 = vrot.lane.b32.xlu0 %v57, 64
  %v114 = vpop.permute.xlu0 %113
  %115 = vrot.lane.b32.xlu0 %v58, 64
  %v116 = vpop.permute.xlu0 %115
  %vm117 = vcmask 523264
  %v118 = vsel %vm117, %v108, %v110
  %v119 = vsel %vm117, %v110, %v112
  %v120 = vsel %vm117, %v112, %v114
  %v121 = vsel %vm117, %v114, %v116
  %vm126 = vcmask 64512
  %v128 = vsel %vm126, %v101, 0
  %130 = vmatprep.subr.mxu0 0.0
  %131 = vmatpush1.msra.mxu0 0.0
  %132 = vmatprep.subr.mxu0 0.0
  %133 = vmatpush1.msra.mxu0 0.0
  %134 = vmatprep.subr.mxu0 0.0
  %135 = vmatpush1.msra.mxu0 0.0
  %136 = vmatprep.subr.mxu0 0.0
  %137 = vmatpush1.msra.mxu0 0.0
  %138 = vmatprep.subr.mxu0 0.0
  %139 = vmatpush1.msra.mxu0 0.0
  %140 = vmatprep.subr.mxu0 0.0
  %141 = vmatpush1.msra.mxu0 0.0
  %142 = vmatprep.subr.mxu0 0.0
  %143 = vmatpush1.msra.mxu0 0.0
  %144 = vmatprep.subr.mxu0 0.0
  %145 = vmatpush1.msra.mxu0 0.0
  %146 = vmatprep.subr.mxu0 0.0
  %147 = vmatpush1.msra.mxu0 0.0
  %148 = vmatprep.subr.mxu0 0.0
  %149 = vmatpush1.msra.mxu0 0.0
  %150 = vmatprep.subr.mxu0 0.0
  %151 = vmatpush1.msra.mxu0 0.0
  %152 = vmatprep.subr.mxu0 0.0
  %153 = vmatpush1.msra.mxu0 0.0
  %154 = vmatprep.subr.mxu0 0.0
  %155 = vmatpush1.msra.mxu0 0.0
  %156 = vmatprep.subr.mxu0 0.0
  %157 = vmatpush1.msra.mxu0 0.0
  %158 = vmatprep.subr.mxu0 0.0
  %159 = vmatpush1.msra.mxu0 0.0
  %160 = vmatprep.subr.mxu0 %v119
  %161 = vmatpush1.msra.mxu0 %v118
  %162 = vmatprep.subr.mxu0 0.0
  %163 = vmatpush2.msra.mxu0 0.0
  %164 = vmatprep.subr.mxu0 0.0
  %165 = vmatpush2.msra.mxu0 0.0
  %166 = vmatprep.subr.mxu0 0.0
  %167 = vmatpush2.msra.mxu0 0.0
  %168 = vmatprep.subr.mxu0 0.0
  %169 = vmatpush2.msra.mxu0 0.0
  %170 = vmatprep.subr.mxu0 0.0
  %171 = vmatpush2.msra.mxu0 0.0
  %172 = vmatprep.subr.mxu0 0.0
  %173 = vmatpush2.msra.mxu0 0.0
  %174 = vmatprep.subr.mxu0 0.0
  %175 = vmatpush2.msra.mxu0 0.0
  %176 = vmatprep.subr.mxu0 0.0
  %177 = vmatpush2.msra.mxu0 0.0
  %178 = vmatprep.subr.mxu0 0.0
  %179 = vmatpush2.msra.mxu0 0.0
  %180 = vmatprep.subr.mxu0 0.0
  %181 = vmatpush2.msra.mxu0 0.0
  %182 = vmatprep.subr.mxu0 0.0
  %183 = vmatpush2.msra.mxu0 0.0
  %184 = vmatprep.subr.mxu0 0.0
  %185 = vmatpush2.msra.mxu0 0.0
  %186 = vmatprep.subr.mxu0 0.0
  %187 = vmatpush2.msra.mxu0 0.0
  %188 = vmatprep.subr.mxu0 0.0
  %189 = vmatpush2.msra.mxu0 0.0
  %190 = vmatprep.subr.mxu0 0.0
  %191 = vmatpush2.msra.mxu0 0.0
  %192 = vmatprep.subr.mxu0 0.0
  %193 = vmatpush2.msra.mxu0 0.0
  %194 = vmatprep.mubr.f32.mxu0 0.0
  %195 = vmatmul.mubr.f32.gmra.mxu0 %v128
  %v196 = vpop.f32.mrf.mxu0
  %v197 = vadd.f32 0.0, %v196
  %v198 = vpop.f32.mrf.mxu0
  %v199 = vadd.f32 0.0, %v198
  %200 = vdwg.mxu0
  %201 = vmatprep.subr.mxu0 0.0
  %202 = vmatpush1.msra.mxu0 0.0
  %203 = vmatprep.subr.mxu0 0.0
  %204 = vmatpush1.msra.mxu0 0.0
  %205 = vmatprep.subr.mxu0 0.0
  %206 = vmatpush1.msra.mxu0 0.0
  %207 = vmatprep.subr.mxu0 0.0
  %208 = vmatpush1.msra.mxu0 0.0
  %209 = vmatprep.subr.mxu0 0.0
  %210 = vmatpush1.msra.mxu0 0.0
  %211 = vmatprep.subr.mxu0 0.0
  %212 = vmatpush1.msra.mxu0 0.0
  %213 = vmatprep.subr.mxu0 0.0
  %214 = vmatpush1.msra.mxu0 0.0
  %215 = vmatprep.subr.mxu0 0.0
  %216 = vmatpush1.msra.mxu0 0.0
  %217 = vmatprep.subr.mxu0 0.0
  %218 = vmatpush1.msra.mxu0 0.0
  %219 = vmatprep.subr.mxu0 0.0
  %220 = vmatpush1.msra.mxu0 0.0
  %221 = vmatprep.subr.mxu0 0.0
  %222 = vmatpush1.msra.mxu0 0.0
  %223 = vmatprep.subr.mxu0 0.0
  %224 = vmatpush1.msra.mxu0 0.0
  %225 = vmatprep.subr.mxu0 0.0
  %226 = vmatpush1.msra.mxu0 0.0
  %227 = vmatprep.subr.mxu0 0.0
  %228 = vmatpush1.msra.mxu0 0.0
  %229 = vmatprep.subr.mxu0 0.0
  %230 = vmatpush1.msra.mxu0 0.0
  %231 = vmatprep.subr.mxu0 %v121
  %232 = vmatpush1.msra.mxu0 %v120
  %233 = vmatprep.subr.mxu0 0.0
  %234 = vmatpush2.msra.mxu0 0.0
  %235 = vmatprep.subr.mxu0 0.0
  %236 = vmatpush2.msra.mxu0 0.0
  %237 = vmatprep.subr.mxu0 0.0
  %238 = vmatpush2.msra.mxu0 0.0
  %239 = vmatprep.subr.mxu0 0.0
  %240 = vmatpush2.msra.mxu0 0.0
  %241 = vmatprep.subr.mxu0 0.0
  %242 = vmatpush2.msra.mxu0 0.0
  %243 = vmatprep.subr.mxu0 0.0
  %244 = vmatpush2.msra.mxu0 0.0
  %245 = vmatprep.subr.mxu0 0.0
  %246 = vmatpush2.msra.mxu0 0.0
  %247 = vmatprep.subr.mxu0 0.0
  %248 = vmatpush2.msra.mxu0 0.0
  %249 = vmatprep.subr.mxu0 0.0
  %250 = vmatpush2.msra.mxu0 0.0
  %251 = vmatprep.subr.mxu0 0.0
  %252 = vmatpush2.msra.mxu0 0.0
  %253 = vmatprep.subr.mxu0 0.0
  %254 = vmatpush2.msra.mxu0 0.0
  %255 = vmatprep.subr.mxu0 0.0
  %256 = vmatpush2.msra.mxu0 0.0
  %257 = vmatprep.subr.mxu0 0.0
  %258 = vmatpush2.msra.mxu0 0.0
  %259 = vmatprep.subr.mxu0 0.0
  %260 = vmatpush2.msra.mxu0 0.0
  %261 = vmatprep.subr.mxu0 0.0
  %262 = vmatpush2.msra.mxu0 0.0
  %263 = vmatprep.subr.mxu0 0.0
  %264 = vmatpush2.msra.mxu0 0.0
  %265 = vmatprep.mubr.f32.mxu0 0.0
  %266 = vmatmul.mubr.f32.gmra.mxu0 %v128
  %v267 = vpop.f32.mrf.mxu0
  %v268 = vadd.f32 0.0, %v267
  %v269 = vpop.f32.mrf.mxu0
  %v270 = vadd.f32 0.0, %v269
  %271 = vdwg.mxu0
  %277 = vrot.lane.b32.xlu0 %v94, 65
  %v278 = vpop.permute.xlu0 %277
  %279 = vrot.lane.b32.xlu0 %v95, 65
  %v280 = vpop.permute.xlu0 %279
  %281 = vrot.lane.b32.xlu0 %v96, 65
  %v282 = vpop.permute.xlu0 %281
  %283 = vrot.lane.b32.xlu0 %v97, 65
  %v284 = vpop.permute.xlu0 %283
  %285 = vrot.lane.b32.xlu0 %v98, 65
  %v286 = vpop.permute.xlu0 %285
  %vm287 = vcmask 531456
  %v288 = vsel %vm287, %v278, %v280
  %v289 = vsel %vm287, %v280, %v282
  %v290 = vsel %vm287, %v282, %v284
  %v291 = vsel %vm287, %v284, %v286
  %v297 = vsel %vm126, %v99, 0
  %299 = vmatprep.subr.mxu0 0.0
  %300 = vmatpush1.msra.mxu0 0.0
  %301 = vmatprep.subr.mxu0 0.0
  %302 = vmatpush1.msra.mxu0 0.0
  %303 = vmatprep.subr.mxu0 0.0
  %304 = vmatpush1.msra.mxu0 0.0
  %305 = vmatprep.subr.mxu0 0.0
  %306 = vmatpush1.msra.mxu0 0.0
  %307 = vmatprep.subr.mxu0 0.0
  %308 = vmatpush1.msra.mxu0 0.0
  %309 = vmatprep.subr.mxu0 0.0
  %310 = vmatpush1.msra.mxu0 0.0
  %311 = vmatprep.subr.mxu0 0.0
  %312 = vmatpush1.msra.mxu0 0.0
  %313 = vmatprep.subr.mxu0 0.0
  %314 = vmatpush1.msra.mxu0 0.0
  %315 = vmatprep.subr.mxu0 0.0
  %316 = vmatpush1.msra.mxu0 0.0
  %317 = vmatprep.subr.mxu0 0.0
  %318 = vmatpush1.msra.mxu0 0.0
  %319 = vmatprep.subr.mxu0 0.0
  %320 = vmatpush1.msra.mxu0 0.0
  %321 = vmatprep.subr.mxu0 0.0
  %322 = vmatpush1.msra.mxu0 0.0
  %323 = vmatprep.subr.mxu0 0.0
  %324 = vmatpush1.msra.mxu0 0.0
  %325 = vmatprep.subr.mxu0 0.0
  %326 = vmatpush1.msra.mxu0 0.0
  %327 = vmatprep.subr.mxu0 0.0
  %328 = vmatpush1.msra.mxu0 0.0
  %329 = vmatprep.subr.mxu0 %v289
  %330 = vmatpush1.msra.mxu0 %v288
  %331 = vmatprep.subr.mxu0 0.0
  %332 = vmatpush2.msra.mxu0 0.0
  %333 = vmatprep.subr.mxu0 0.0
  %334 = vmatpush2.msra.mxu0 0.0
  %335 = vmatprep.subr.mxu0 0.0
  %336 = vmatpush2.msra.mxu0 0.0
  %337 = vmatprep.subr.mxu0 0.0
  %338 = vmatpush2.msra.mxu0 0.0
  %339 = vmatprep.subr.mxu0 0.0
  %340 = vmatpush2.msra.mxu0 0.0
  %341 = vmatprep.subr.mxu0 0.0
  %342 = vmatpush2.msra.mxu0 0.0
  %343 = vmatprep.subr.mxu0 0.0
  %344 = vmatpush2.msra.mxu0 0.0
  %345 = vmatprep.subr.mxu0 0.0
  %346 = vmatpush2.msra.mxu0 0.0
  %347 = vmatprep.subr.mxu0 0.0
  %348 = vmatpush2.msra.mxu0 0.0
  %349 = vmatprep.subr.mxu0 0.0
  %350 = vmatpush2.msra.mxu0 0.0
  %351 = vmatprep.subr.mxu0 0.0
  %352 = vmatpush2.msra.mxu0 0.0
  %353 = vmatprep.subr.mxu0 0.0
  %354 = vmatpush2.msra.mxu0 0.0
  %355 = vmatprep.subr.mxu0 0.0
  %356 = vmatpush2.msra.mxu0 0.0
  %357 = vmatprep.subr.mxu0 0.0
  %358 = vmatpush2.msra.mxu0 0.0
  %359 = vmatprep.subr.mxu0 0.0
  %360 = vmatpush2.msra.mxu0 0.0
  %361 = vmatprep.subr.mxu0 0.0
  %362 = vmatpush2.msra.mxu0 0.0
  %363 = vmatprep.mubr.f32.mxu0 0.0
  %364 = vmatmul.mubr.f32.gmra.mxu0 %v297
  %v365 = vpop.f32.mrf.mxu0
  %v366 = vadd.f32 %v197, %v365
  %v367 = vpop.f32.mrf.mxu0
  %v368 = vadd.f32 %v199, %v367
  %369 = vdwg.mxu0
  %370 = vmatprep.subr.mxu0 0.0
  %371 = vmatpush1.msra.mxu0 0.0
  %372 = vmatprep.subr.mxu0 0.0
  %373 = vmatpush1.msra.mxu0 0.0
  %374 = vmatprep.subr.mxu0 0.0
  %375 = vmatpush1.msra.mxu0 0.0
  %376 = vmatprep.subr.mxu0 0.0
  %377 = vmatpush1.msra.mxu0 0.0
  %378 = vmatprep.subr.mxu0 0.0
  %379 = vmatpush1.msra.mxu0 0.0
  %380 = vmatprep.subr.mxu0 0.0
  %381 = vmatpush1.msra.mxu0 0.0
  %382 = vmatprep.subr.mxu0 0.0
  %383 = vmatpush1.msra.mxu0 0.0
  %384 = vmatprep.subr.mxu0 0.0
  %385 = vmatpush1.msra.mxu0 0.0
  %386 = vmatprep.subr.mxu0 0.0
  %387 = vmatpush1.msra.mxu0 0.0
  %388 = vmatprep.subr.mxu0 0.0
  %389 = vmatpush1.msra.mxu0 0.0
  %390 = vmatprep.subr.mxu0 0.0
  %391 = vmatpush1.msra.mxu0 0.0
  %392 = vmatprep.subr.mxu0 0.0
  %393 = vmatpush1.msra.mxu0 0.0
  %394 = vmatprep.subr.mxu0 0.0
  %395 = vmatpush1.msra.mxu0 0.0
  %396 = vmatprep.subr.mxu0 0.0
  %397 = vmatpush1.msra.mxu0 0.0
  %398 = vmatprep.subr.mxu0 0.0
  %399 = vmatpush1.msra.mxu0 0.0
  %400 = vmatprep.subr.mxu0 %v291
  %401 = vmatpush1.msra.mxu0 %v290
  %402 = vmatprep.subr.mxu0 0.0
  %403 = vmatpush2.msra.mxu0 0.0
  %404 = vmatprep.subr.mxu0 0.0
  %405 = vmatpush2.msra.mxu0 0.0
  %406 = vmatprep.subr.mxu0 0.0
  %407 = vmatpush2.msra.mxu0 0.0
  %408 = vmatprep.subr.mxu0 0.0
  %409 = vmatpush2.msra.mxu0 0.0
  %410 = vmatprep.subr.mxu0 0.0
  %411 = vmatpush2.msra.mxu0 0.0
  %412 = vmatprep.subr.mxu0 0.0
  %413 = vmatpush2.msra.mxu0 0.0
  %414 = vmatprep.subr.mxu0 0.0
  %415 = vmatpush2.msra.mxu0 0.0
  %416 = vmatprep.subr.mxu0 0.0
  %417 = vmatpush2.msra.mxu0 0.0
  %418 = vmatprep.subr.mxu0 0.0
  %419 = vmatpush2.msra.mxu0 0.0
  %420 = vmatprep.subr.mxu0 0.0
  %421 = vmatpush2.msra.mxu0 0.0
  %422 = vmatprep.subr.mxu0 0.0
  %423 = vmatpush2.msra.mxu0 0.0
  %424 = vmatprep.subr.mxu0 0.0
  %425 = vmatpush2.msra.mxu0 0.0
  %426 = vmatprep.subr.mxu0 0.0
  %427 = vmatpush2.msra.mxu0 0.0
  %428 = vmatprep.subr.mxu0 0.0
  %429 = vmatpush2.msra.mxu0 0.0
  %430 = vmatprep.subr.mxu0 0.0
  %431 = vmatpush2.msra.mxu0 0.0
  %432 = vmatprep.subr.mxu0 0.0
  %433 = vmatpush2.msra.mxu0 0.0
  %434 = vmatprep.mubr.f32.mxu0 0.0
  %435 = vmatmul.mubr.f32.gmra.mxu0 %v297
  %v436 = vpop.f32.mrf.mxu0
  %v437 = vadd.f32 %v268, %v436
  %v438 = vpop.f32.mrf.mxu0
  %v439 = vadd.f32 %v270, %v438
  %440 = vdwg.mxu0
  %s441 = scalar_lea.vmem %s2, 1
  %v442 = vld [vmem:[%s441] ss:$2 sm:$0xf]
  %v444 = vlaneseq
  %v445 = vshrl.u32 %v444, 7
  %v446 = vsub.s32 0, %v445
  %v447 = vrot.slane %v442, %v446
  %v448 = vlaneseq
  %v449 = vshrl.u32 %v448, 7
  %v450 = vsub.s32 1, %v449
  %v451 = vrot.slane %v442, %v450
  %v452 = vlaneseq
  %v453 = vshrl.u32 %v452, 7
  %v454 = vsub.s32 2, %v453
  %v455 = vrot.slane %v442, %v454
  %v456 = vlaneseq
  %v457 = vshrl.u32 %v456, 7
  %v458 = vsub.s32 3, %v457
  %v459 = vrot.slane %v442, %v458
  %460 = vrot.lane.b32.xlu0 %v447, 65
  %v461 = vpop.permute.xlu0 %460
  %462 = vrot.lane.b32.xlu0 %v451, 65
  %v463 = vpop.permute.xlu0 %462
  %464 = vrot.lane.b32.xlu0 %v455, 65
  %v465 = vpop.permute.xlu0 %464
  %466 = vrot.lane.b32.xlu0 %v459, 65
  %v467 = vpop.permute.xlu0 %466
  %v468 = vsel %vm287, %v461, %v463
  %v469 = vsel %vm287, %v463, %v465
  %v470 = vsel %vm287, %v465, %v467
  %v476 = vmul.f32 %v54, %v461
  %v477 = vmul.f32 %v55, %v468
  %v478 = vmul.f32 %v56, %v469
  %v479 = vmul.f32 %v57, %v470
  %v480 = vmul.f32 %v58, %v467
  %s481 = scalar_lea.vmem %s1, 16
  %v482 = vld [vmem:[%s481] sm:$0xff]
  %488 = vrot.lane.b32.xlu0 %v476, 63
  %v489 = vpop.permute.xlu0 %488
  %490 = vrot.lane.b32.xlu0 %v477, 63
  %v491 = vpop.permute.xlu0 %490
  %492 = vrot.lane.b32.xlu0 %v478, 63
  %v493 = vpop.permute.xlu0 %492
  %494 = vrot.lane.b32.xlu0 %v479, 63
  %v495 = vpop.permute.xlu0 %494
  %496 = vrot.lane.b32.xlu0 %v480, 63
  %v497 = vpop.permute.xlu0 %496
  %v498 = vsel %vm85, %v489, %v491
  %v499 = vsel %vm85, %v491, %v493
  %v500 = vsel %vm85, %v493, %v495
  %v501 = vsel %vm85, %v495, %v497
  %v507 = vsel %vm126, %v482, 0
  %509 = vmatprep.subr.mxu0 0.0
  %510 = vmatpush1.msra.mxu0 0.0
  %511 = vmatprep.subr.mxu0 0.0
  %512 = vmatpush1.msra.mxu0 0.0
  %513 = vmatprep.subr.mxu0 0.0
  %514 = vmatpush1.msra.mxu0 0.0
  %515 = vmatprep.subr.mxu0 0.0
  %516 = vmatpush1.msra.mxu0 0.0
  %517 = vmatprep.subr.mxu0 0.0
  %518 = vmatpush1.msra.mxu0 0.0
  %519 = vmatprep.subr.mxu0 0.0
  %520 = vmatpush1.msra.mxu0 0.0
  %521 = vmatprep.subr.mxu0 0.0
  %522 = vmatpush1.msra.mxu0 0.0
  %523 = vmatprep.subr.mxu0 0.0
  %524 = vmatpush1.msra.mxu0 0.0
  %525 = vmatprep.subr.mxu0 0.0
  %526 = vmatpush1.msra.mxu0 0.0
  %527 = vmatprep.subr.mxu0 0.0
  %528 = vmatpush1.msra.mxu0 0.0
  %529 = vmatprep.subr.mxu0 0.0
  %530 = vmatpush1.msra.mxu0 0.0
  %531 = vmatprep.subr.mxu0 0.0
  %532 = vmatpush1.msra.mxu0 0.0
  %533 = vmatprep.subr.mxu0 0.0
  %534 = vmatpush1.msra.mxu0 0.0
  %535 = vmatprep.subr.mxu0 0.0
  %536 = vmatpush1.msra.mxu0 0.0
  %537 = vmatprep.subr.mxu0 0.0
  %538 = vmatpush1.msra.mxu0 0.0
  %539 = vmatprep.subr.mxu0 %v499
  %540 = vmatpush1.msra.mxu0 %v498
  %541 = vmatprep.subr.mxu0 0.0
  %542 = vmatpush2.msra.mxu0 0.0
  %543 = vmatprep.subr.mxu0 0.0
  %544 = vmatpush2.msra.mxu0 0.0
  %545 = vmatprep.subr.mxu0 0.0
  %546 = vmatpush2.msra.mxu0 0.0
  %547 = vmatprep.subr.mxu0 0.0
  %548 = vmatpush2.msra.mxu0 0.0
  %549 = vmatprep.subr.mxu0 0.0
  %550 = vmatpush2.msra.mxu0 0.0
  %551 = vmatprep.subr.mxu0 0.0
  %552 = vmatpush2.msra.mxu0 0.0
  %553 = vmatprep.subr.mxu0 0.0
  %554 = vmatpush2.msra.mxu0 0.0
  %555 = vmatprep.subr.mxu0 0.0
  %556 = vmatpush2.msra.mxu0 0.0
  %557 = vmatprep.subr.mxu0 0.0
  %558 = vmatpush2.msra.mxu0 0.0
  %559 = vmatprep.subr.mxu0 0.0
  %560 = vmatpush2.msra.mxu0 0.0
  %561 = vmatprep.subr.mxu0 0.0
  %562 = vmatpush2.msra.mxu0 0.0
  %563 = vmatprep.subr.mxu0 0.0
  %564 = vmatpush2.msra.mxu0 0.0
  %565 = vmatprep.subr.mxu0 0.0
  %566 = vmatpush2.msra.mxu0 0.0
  %567 = vmatprep.subr.mxu0 0.0
  %568 = vmatpush2.msra.mxu0 0.0
  %569 = vmatprep.subr.mxu0 0.0
  %570 = vmatpush2.msra.mxu0 0.0
  %571 = vmatprep.subr.mxu0 0.0
  %572 = vmatpush2.msra.mxu0 0.0
  %573 = vmatprep.mubr.f32.mxu0 0.0
  %574 = vmatmul.mubr.f32.gmra.mxu0 %v507
  %v575 = vpop.f32.mrf.mxu0
  %v576 = vadd.f32 0.0, %v575
  %v577 = vpop.f32.mrf.mxu0
  %v578 = vadd.f32 0.0, %v577
  %579 = vdwg.mxu0
  %580 = vmatprep.subr.mxu0 0.0
  %581 = vmatpush1.msra.mxu0 0.0
  %582 = vmatprep.subr.mxu0 0.0
  %583 = vmatpush1.msra.mxu0 0.0
  %584 = vmatprep.subr.mxu0 0.0
  %585 = vmatpush1.msra.mxu0 0.0
  %586 = vmatprep.subr.mxu0 0.0
  %587 = vmatpush1.msra.mxu0 0.0
  %588 = vmatprep.subr.mxu0 0.0
  %589 = vmatpush1.msra.mxu0 0.0
  %590 = vmatprep.subr.mxu0 0.0
  %591 = vmatpush1.msra.mxu0 0.0
  %592 = vmatprep.subr.mxu0 0.0
  %593 = vmatpush1.msra.mxu0 0.0
  %594 = vmatprep.subr.mxu0 0.0
  %595 = vmatpush1.msra.mxu0 0.0
  %596 = vmatprep.subr.mxu0 0.0
  %597 = vmatpush1.msra.mxu0 0.0
  %598 = vmatprep.subr.mxu0 0.0
  %599 = vmatpush1.msra.mxu0 0.0
  %600 = vmatprep.subr.mxu0 0.0
  %601 = vmatpush1.msra.mxu0 0.0
  %602 = vmatprep.subr.mxu0 0.0
  %603 = vmatpush1.msra.mxu0 0.0
  %604 = vmatprep.subr.mxu0 0.0
  %605 = vmatpush1.msra.mxu0 0.0
  %606 = vmatprep.subr.mxu0 0.0
  %607 = vmatpush1.msra.mxu0 0.0
  %608 = vmatprep.subr.mxu0 0.0
  %609 = vmatpush1.msra.mxu0 0.0
  %610 = vmatprep.subr.mxu0 %v501
  %611 = vmatpush1.msra.mxu0 %v500
  %612 = vmatprep.subr.mxu0 0.0
  %613 = vmatpush2.msra.mxu0 0.0
  %614 = vmatprep.subr.mxu0 0.0
  %615 = vmatpush2.msra.mxu0 0.0
  %616 = vmatprep.subr.mxu0 0.0
  %617 = vmatpush2.msra.mxu0 0.0
  %618 = vmatprep.subr.mxu0 0.0
  %619 = vmatpush2.msra.mxu0 0.0
  %620 = vmatprep.subr.mxu0 0.0
  %621 = vmatpush2.msra.mxu0 0.0
  %622 = vmatprep.subr.mxu0 0.0
  %623 = vmatpush2.msra.mxu0 0.0
  %624 = vmatprep.subr.mxu0 0.0
  %625 = vmatpush2.msra.mxu0 0.0
  %626 = vmatprep.subr.mxu0 0.0
  %627 = vmatpush2.msra.mxu0 0.0
  %628 = vmatprep.subr.mxu0 0.0
  %629 = vmatpush2.msra.mxu0 0.0
  %630 = vmatprep.subr.mxu0 0.0
  %631 = vmatpush2.msra.mxu0 0.0
  %632 = vmatprep.subr.mxu0 0.0
  %633 = vmatpush2.msra.mxu0 0.0
  %634 = vmatprep.subr.mxu0 0.0
  %635 = vmatpush2.msra.mxu0 0.0
  %636 = vmatprep.subr.mxu0 0.0
  %637 = vmatpush2.msra.mxu0 0.0
  %638 = vmatprep.subr.mxu0 0.0
  %639 = vmatpush2.msra.mxu0 0.0
  %640 = vmatprep.subr.mxu0 0.0
  %641 = vmatpush2.msra.mxu0 0.0
  %642 = vmatprep.subr.mxu0 0.0
  %643 = vmatpush2.msra.mxu0 0.0
  %644 = vmatprep.mubr.f32.mxu0 0.0
  %645 = vmatmul.mubr.f32.gmra.mxu0 %v507
  %v646 = vpop.f32.mrf.mxu0
  %v647 = vadd.f32 0.0, %v646
  %v648 = vpop.f32.mrf.mxu0
  %v649 = vadd.f32 0.0, %v648
  %650 = vdwg.mxu0
  %v651 = vadd.f32 %v366, %v576
  %v652 = vadd.f32 %v368, %v578
  %v653 = vadd.f32 %v437, %v647
  %v654 = vadd.f32 %v439, %v649
  %655 = vrot.lane.b32.xlu0 %v64, 127
  %v656 = vpop.permute.xlu0 %655
  %657 = vrot.lane.b32.xlu0 %v68, 127
  %v658 = vpop.permute.xlu0 %657
  %659 = vrot.lane.b32.xlu0 %v72, 127
  %v660 = vpop.permute.xlu0 %659
  %661 = vrot.lane.b32.xlu0 %v76, 127
  %v662 = vpop.permute.xlu0 %661
  %vm663 = vcmask 1039360
  %v664 = vsel %vm663, %v656, %v658
  %v665 = vsel %vm663, %v658, %v660
  %v666 = vsel %vm663, %v660, %v662
  %v672 = vmul.f32 %v54, %v656
  %v673 = vmul.f32 %v55, %v664
  %v674 = vmul.f32 %v56, %v665
  %v675 = vmul.f32 %v57, %v666
  %v676 = vmul.f32 %v58, %v662
  %s677 = scalar_lea.vmem %s1, 24
  %v678 = vld [vmem:[%s677] sm:$0xff]
  %684 = vrot.lane.b32.xlu0 %v672, 1
  %v685 = vpop.permute.xlu0 %684
  %686 = vrot.lane.b32.xlu0 %v673, 1
  %v687 = vpop.permute.xlu0 %686
  %688 = vrot.lane.b32.xlu0 %v674, 1
  %v689 = vpop.permute.xlu0 %688
  %690 = vrot.lane.b32.xlu0 %v675, 1
  %v691 = vpop.permute.xlu0 %690
  %692 = vrot.lane.b32.xlu0 %v676, 1
  %v693 = vpop.permute.xlu0 %692
  %vm694 = vcmask 7168
  %v695 = vsel %vm694, %v685, %v687
  %v696 = vsel %vm694, %v687, %v689
  %v697 = vsel %vm694, %v689, %v691
  %v698 = vsel %vm694, %v691, %v693
  %v704 = vsel %vm126, %v678, 0
  %706 = vmatprep.subr.mxu0 0.0
  %707 = vmatpush1.msra.mxu0 0.0
  %708 = vmatprep.subr.mxu0 0.0
  %709 = vmatpush1.msra.mxu0 0.0
  %710 = vmatprep.subr.mxu0 0.0
  %711 = vmatpush1.msra.mxu0 0.0
  %712 = vmatprep.subr.mxu0 0.0
  %713 = vmatpush1.msra.mxu0 0.0
  %714 = vmatprep.subr.mxu0 0.0
  %715 = vmatpush1.msra.mxu0 0.0
  %716 = vmatprep.subr.mxu0 0.0
  %717 = vmatpush1.msra.mxu0 0.0
  %718 = vmatprep.subr.mxu0 0.0
  %719 = vmatpush1.msra.mxu0 0.0
  %720 = vmatprep.subr.mxu0 0.0
  %721 = vmatpush1.msra.mxu0 0.0
  %722 = vmatprep.subr.mxu0 0.0
  %723 = vmatpush1.msra.mxu0 0.0
  %724 = vmatprep.subr.mxu0 0.0
  %725 = vmatpush1.msra.mxu0 0.0
  %726 = vmatprep.subr.mxu0 0.0
  %727 = vmatpush1.msra.mxu0 0.0
  %728 = vmatprep.subr.mxu0 0.0
  %729 = vmatpush1.msra.mxu0 0.0
  %730 = vmatprep.subr.mxu0 0.0
  %731 = vmatpush1.msra.mxu0 0.0
  %732 = vmatprep.subr.mxu0 0.0
  %733 = vmatpush1.msra.mxu0 0.0
  %734 = vmatprep.subr.mxu0 0.0
  %735 = vmatpush1.msra.mxu0 0.0
  %736 = vmatprep.subr.mxu0 %v696
  %737 = vmatpush1.msra.mxu0 %v695
  %738 = vmatprep.subr.mxu0 0.0
  %739 = vmatpush2.msra.mxu0 0.0
  %740 = vmatprep.subr.mxu0 0.0
  %741 = vmatpush2.msra.mxu0 0.0
  %742 = vmatprep.subr.mxu0 0.0
  %743 = vmatpush2.msra.mxu0 0.0
  %744 = vmatprep.subr.mxu0 0.0
  %745 = vmatpush2.msra.mxu0 0.0
  %746 = vmatprep.subr.mxu0 0.0
  %747 = vmatpush2.msra.mxu0 0.0
  %748 = vmatprep.subr.mxu0 0.0
  %749 = vmatpush2.msra.mxu0 0.0
  %750 = vmatprep.subr.mxu0 0.0
  %751 = vmatpush2.msra.mxu0 0.0
  %752 = vmatprep.subr.mxu0 0.0
  %753 = vmatpush2.msra.mxu0 0.0
  %754 = vmatprep.subr.mxu0 0.0
  %755 = vmatpush2.msra.mxu0 0.0
  %756 = vmatprep.subr.mxu0 0.0
  %757 = vmatpush2.msra.mxu0 0.0
  %758 = vmatprep.subr.mxu0 0.0
  %759 = vmatpush2.msra.mxu0 0.0
  %760 = vmatprep.subr.mxu0 0.0
  %761 = vmatpush2.msra.mxu0 0.0
  %762 = vmatprep.subr.mxu0 0.0
  %763 = vmatpush2.msra.mxu0 0.0
  %764 = vmatprep.subr.mxu0 0.0
  %765 = vmatpush2.msra.mxu0 0.0
  %766 = vmatprep.subr.mxu0 0.0
  %767 = vmatpush2.msra.mxu0 0.0
  %768 = vmatprep.subr.mxu0 0.0
  %769 = vmatpush2.msra.mxu0 0.0
  %770 = vmatprep.mubr.f32.mxu0 0.0
  %771 = vmatmul.mubr.f32.gmra.mxu0 %v704
  %v772 = vpop.f32.mrf.mxu0
  %v773 = vadd.f32 0.0, %v772
  %v774 = vpop.f32.mrf.mxu0
  %v775 = vadd.f32 0.0, %v774
  %776 = vdwg.mxu0
  %777 = vmatprep.subr.mxu0 0.0
  %778 = vmatpush1.msra.mxu0 0.0
  %779 = vmatprep.subr.mxu0 0.0
  %780 = vmatpush1.msra.mxu0 0.0
  %781 = vmatprep.subr.mxu0 0.0
  %782 = vmatpush1.msra.mxu0 0.0
  %783 = vmatprep.subr.mxu0 0.0
  %784 = vmatpush1.msra.mxu0 0.0
  %785 = vmatprep.subr.mxu0 0.0
  %786 = vmatpush1.msra.mxu0 0.0
  %787 = vmatprep.subr.mxu0 0.0
  %788 = vmatpush1.msra.mxu0 0.0
  %789 = vmatprep.subr.mxu0 0.0
  %790 = vmatpush1.msra.mxu0 0.0
  %791 = vmatprep.subr.mxu0 0.0
  %792 = vmatpush1.msra.mxu0 0.0
  %793 = vmatprep.subr.mxu0 0.0
  %794 = vmatpush1.msra.mxu0 0.0
  %795 = vmatprep.subr.mxu0 0.0
  %796 = vmatpush1.msra.mxu0 0.0
  %797 = vmatprep.subr.mxu0 0.0
  %798 = vmatpush1.msra.mxu0 0.0
  %799 = vmatprep.subr.mxu0 0.0
  %800 = vmatpush1.msra.mxu0 0.0
  %801 = vmatprep.subr.mxu0 0.0
  %802 = vmatpush1.msra.mxu0 0.0
  %803 = vmatprep.subr.mxu0 0.0
  %804 = vmatpush1.msra.mxu0 0.0
  %805 = vmatprep.subr.mxu0 0.0
  %806 = vmatpush1.msra.mxu0 0.0
  %807 = vmatprep.subr.mxu0 %v698
  %808 = vmatpush1.msra.mxu0 %v697
  %809 = vmatprep.subr.mxu0 0.0
  %810 = vmatpush2.msra.mxu0 0.0
  %811 = vmatprep.subr.mxu0 0.0
  %812 = vmatpush2.msra.mxu0 0.0
  %813 = vmatprep.subr.mxu0 0.0
  %814 = vmatpush2.msra.mxu0 0.0
  %815 = vmatprep.subr.mxu0 0.0
  %816 = vmatpush2.msra.mxu0 0.0
  %817 = vmatprep.subr.mxu0 0.0
  %818 = vmatpush2.msra.mxu0 0.0
  %819 = vmatprep.subr.mxu0 0.0
  %820 = vmatpush2.msra.mxu0 0.0
  %821 = vmatprep.subr.mxu0 0.0
  %822 = vmatpush2.msra.mxu0 0.0
  %823 = vmatprep.subr.mxu0 0.0
  %824 = vmatpush2.msra.mxu0 0.0
  %825 = vmatprep.subr.mxu0 0.0
  %826 = vmatpush2.msra.mxu0 0.0
  %827 = vmatprep.subr.mxu0 0.0
  %828 = vmatpush2.msra.mxu0 0.0
  %829 = vmatprep.subr.mxu0 0.0
  %830 = vmatpush2.msra.mxu0 0.0
  %831 = vmatprep.subr.mxu0 0.0
  %832 = vmatpush2.msra.mxu0 0.0
  %833 = vmatprep.subr.mxu0 0.0
  %834 = vmatpush2.msra.mxu0 0.0
  %835 = vmatprep.subr.mxu0 0.0
  %836 = vmatpush2.msra.mxu0 0.0
  %837 = vmatprep.subr.mxu0 0.0
  %838 = vmatpush2.msra.mxu0 0.0
  %839 = vmatprep.subr.mxu0 0.0
  %840 = vmatpush2.msra.mxu0 0.0
  %841 = vmatprep.mubr.f32.mxu0 0.0
  %842 = vmatmul.mubr.f32.gmra.mxu0 %v704
  %v843 = vpop.f32.mrf.mxu0
  %v844 = vadd.f32 0.0, %v843
  %v845 = vpop.f32.mrf.mxu0
  %v846 = vadd.f32 0.0, %v845
  %847 = vdwg.mxu0
  %v848 = vadd.f32 %v651, %v773
  %v849 = vadd.f32 %v652, %v775
  %v850 = vadd.f32 %v653, %v844
  %v851 = vadd.f32 %v654, %v846
  %s852 = scalar_lea.vmem %s1, 32
  %v853 = vld [vmem:[%s852] sm:$0xff]
  %v855 = vsel %vm126, %v853, 0
  %857 = vmatprep.subr.mxu0 0.0
  %858 = vmatpush1.msra.mxu0 0.0
  %859 = vmatprep.subr.mxu0 0.0
  %860 = vmatpush1.msra.mxu0 0.0
  %861 = vmatprep.subr.mxu0 0.0
  %862 = vmatpush1.msra.mxu0 0.0
  %863 = vmatprep.subr.mxu0 0.0
  %864 = vmatpush1.msra.mxu0 0.0
  %865 = vmatprep.subr.mxu0 0.0
  %866 = vmatpush1.msra.mxu0 0.0
  %867 = vmatprep.subr.mxu0 0.0
  %868 = vmatpush1.msra.mxu0 0.0
  %869 = vmatprep.subr.mxu0 0.0
  %870 = vmatpush1.msra.mxu0 0.0
  %871 = vmatprep.subr.mxu0 0.0
  %872 = vmatpush1.msra.mxu0 0.0
  %873 = vmatprep.subr.mxu0 0.0
  %874 = vmatpush1.msra.mxu0 0.0
  %875 = vmatprep.subr.mxu0 0.0
  %876 = vmatpush1.msra.mxu0 0.0
  %877 = vmatprep.subr.mxu0 0.0
  %878 = vmatpush1.msra.mxu0 0.0
  %879 = vmatprep.subr.mxu0 0.0
  %880 = vmatpush1.msra.mxu0 0.0
  %881 = vmatprep.subr.mxu0 0.0
  %882 = vmatpush1.msra.mxu0 0.0
  %883 = vmatprep.subr.mxu0 0.0
  %884 = vmatpush1.msra.mxu0 0.0
  %885 = vmatprep.subr.mxu0 0.0
  %886 = vmatpush1.msra.mxu0 0.0
  %887 = vmatprep.subr.mxu0 %v56
  %888 = vmatpush1.msra.mxu0 %v55
  %889 = vmatprep.subr.mxu0 0.0
  %890 = vmatpush2.msra.mxu0 0.0
  %891 = vmatprep.subr.mxu0 0.0
  %892 = vmatpush2.msra.mxu0 0.0
  %893 = vmatprep.subr.mxu0 0.0
  %894 = vmatpush2.msra.mxu0 0.0
  %895 = vmatprep.subr.mxu0 0.0
  %896 = vmatpush2.msra.mxu0 0.0
  %897 = vmatprep.subr.mxu0 0.0
  %898 = vmatpush2.msra.mxu0 0.0
  %899 = vmatprep.subr.mxu0 0.0
  %900 = vmatpush2.msra.mxu0 0.0
  %901 = vmatprep.subr.mxu0 0.0
  %902 = vmatpush2.msra.mxu0 0.0
  %903 = vmatprep.subr.mxu0 0.0
  %904 = vmatpush2.msra.mxu0 0.0
  %905 = vmatprep.subr.mxu0 0.0
  %906 = vmatpush2.msra.mxu0 0.0
  %907 = vmatprep.subr.mxu0 0.0
  %908 = vmatpush2.msra.mxu0 0.0
  %909 = vmatprep.subr.mxu0 0.0
  %910 = vmatpush2.msra.mxu0 0.0
  %911 = vmatprep.subr.mxu0 0.0
  %912 = vmatpush2.msra.mxu0 0.0
  %913 = vmatprep.subr.mxu0 0.0
  %914 = vmatpush2.msra.mxu0 0.0
  %915 = vmatprep.subr.mxu0 0.0
  %916 = vmatpush2.msra.mxu0 0.0
  %917 = vmatprep.subr.mxu0 0.0
  %918 = vmatpush2.msra.mxu0 0.0
  %919 = vmatprep.subr.mxu0 0.0
  %920 = vmatpush2.msra.mxu0 0.0
  %921 = vmatprep.mubr.f32.mxu0 0.0
  %922 = vmatmul.mubr.f32.gmra.mxu0 %v855
  %v923 = vpop.f32.mrf.mxu0
  %v924 = vadd.f32 0.0, %v923
  %v925 = vpop.f32.mrf.mxu0
  %v926 = vadd.f32 0.0, %v925
  %927 = vdwg.mxu0
  %928 = vmatprep.subr.mxu0 0.0
  %929 = vmatpush1.msra.mxu0 0.0
  %930 = vmatprep.subr.mxu0 0.0
  %931 = vmatpush1.msra.mxu0 0.0
  %932 = vmatprep.subr.mxu0 0.0
  %933 = vmatpush1.msra.mxu0 0.0
  %934 = vmatprep.subr.mxu0 0.0
  %935 = vmatpush1.msra.mxu0 0.0
  %936 = vmatprep.subr.mxu0 0.0
  %937 = vmatpush1.msra.mxu0 0.0
  %938 = vmatprep.subr.mxu0 0.0
  %939 = vmatpush1.msra.mxu0 0.0
  %940 = vmatprep.subr.mxu0 0.0
  %941 = vmatpush1.msra.mxu0 0.0
  %942 = vmatprep.subr.mxu0 0.0
  %943 = vmatpush1.msra.mxu0 0.0
  %944 = vmatprep.subr.mxu0 0.0
  %945 = vmatpush1.msra.mxu0 0.0
  %946 = vmatprep.subr.mxu0 0.0
  %947 = vmatpush1.msra.mxu0 0.0
  %948 = vmatprep.subr.mxu0 0.0
  %949 = vmatpush1.msra.mxu0 0.0
  %950 = vmatprep.subr.mxu0 0.0
  %951 = vmatpush1.msra.mxu0 0.0
  %952 = vmatprep.subr.mxu0 0.0
  %953 = vmatpush1.msra.mxu0 0.0
  %954 = vmatprep.subr.mxu0 0.0
  %955 = vmatpush1.msra.mxu0 0.0
  %956 = vmatprep.subr.mxu0 0.0
  %957 = vmatpush1.msra.mxu0 0.0
  %958 = vmatprep.subr.mxu0 %v58
  %959 = vmatpush1.msra.mxu0 %v57
  %960 = vmatprep.subr.mxu0 0.0
  %961 = vmatpush2.msra.mxu0 0.0
  %962 = vmatprep.subr.mxu0 0.0
  %963 = vmatpush2.msra.mxu0 0.0
  %964 = vmatprep.subr.mxu0 0.0
  %965 = vmatpush2.msra.mxu0 0.0
  %966 = vmatprep.subr.mxu0 0.0
  %967 = vmatpush2.msra.mxu0 0.0
  %968 = vmatprep.subr.mxu0 0.0
  %969 = vmatpush2.msra.mxu0 0.0
  %970 = vmatprep.subr.mxu0 0.0
  %971 = vmatpush2.msra.mxu0 0.0
  %972 = vmatprep.subr.mxu0 0.0
  %973 = vmatpush2.msra.mxu0 0.0
  %974 = vmatprep.subr.mxu0 0.0
  %975 = vmatpush2.msra.mxu0 0.0
  %976 = vmatprep.subr.mxu0 0.0
  %977 = vmatpush2.msra.mxu0 0.0
  %978 = vmatprep.subr.mxu0 0.0
  %979 = vmatpush2.msra.mxu0 0.0
  %980 = vmatprep.subr.mxu0 0.0
  %981 = vmatpush2.msra.mxu0 0.0
  %982 = vmatprep.subr.mxu0 0.0
  %983 = vmatpush2.msra.mxu0 0.0
  %984 = vmatprep.subr.mxu0 0.0
  %985 = vmatpush2.msra.mxu0 0.0
  %986 = vmatprep.subr.mxu0 0.0
  %987 = vmatpush2.msra.mxu0 0.0
  %988 = vmatprep.subr.mxu0 0.0
  %989 = vmatpush2.msra.mxu0 0.0
  %990 = vmatprep.subr.mxu0 0.0
  %991 = vmatpush2.msra.mxu0 0.0
  %992 = vmatprep.mubr.f32.mxu0 0.0
  %993 = vmatmul.mubr.f32.gmra.mxu0 %v855
  %v994 = vpop.f32.mrf.mxu0
  %v995 = vadd.f32 0.0, %v994
  %v996 = vpop.f32.mrf.mxu0
  %v997 = vadd.f32 0.0, %v996
  %998 = vdwg.mxu0
  %v999 = vadd.f32 %v848, %v924
  %v1000 = vadd.f32 %v849, %v926
  %v1001 = vadd.f32 %v850, %v995
  %v1002 = vadd.f32 %v851, %v997
  %v1003 = vld [vmem:[#allocation2 + $0x8] sm:$0xff]
  %v1004 = vld [vmem:[#allocation2 + $0x10] sm:$0xff]
  %v1005 = vld [vmem:[#allocation2 + $0x18] sm:$0xff]
  %v1006 = vld [vmem:[#allocation2 + $0x20] sm:$0xff]
  %v1007 = vld [vmem:[#allocation2 + $0x28] sm:$0xff]
  %1008 = vrot.lane.b32.xlu0 %v447, 1
  %v1009 = vpop.permute.xlu0 %1008
  %1010 = vrot.lane.b32.xlu0 %v451, 1
  %v1011 = vpop.permute.xlu0 %1010
  %1012 = vrot.lane.b32.xlu0 %v455, 1
  %v1013 = vpop.permute.xlu0 %1012
  %1014 = vrot.lane.b32.xlu0 %v459, 1
  %v1015 = vpop.permute.xlu0 %1014
  %v1016 = vsel %vm694, %v1009, %v1011
  %v1017 = vsel %vm694, %v1011, %v1013
  %v1018 = vsel %vm694, %v1013, %v1015
  %v1024 = vmul.f32 %v1003, %v1009
  %v1025 = vmul.f32 %v1004, %v1016
  %v1026 = vmul.f32 %v1005, %v1017
  %v1027 = vmul.f32 %v1006, %v1018
  %v1028 = vmul.f32 %v1007, %v1015
  %s1029 = scalar_lea.vmem %s1, 40
  %v1030 = vld [vmem:[%s1029] sm:$0xff]
  %1036 = vrot.lane.b32.xlu0 %v1024, 127
  %v1037 = vpop.permute.xlu0 %1036
  %1038 = vrot.lane.b32.xlu0 %v1025, 127
  %v1039 = vpop.permute.xlu0 %1038
  %1040 = vrot.lane.b32.xlu0 %v1026, 127
  %v1041 = vpop.permute.xlu0 %1040
  %1042 = vrot.lane.b32.xlu0 %v1027, 127
  %v1043 = vpop.permute.xlu0 %1042
  %1044 = vrot.lane.b32.xlu0 %v1028, 127
  %v1045 = vpop.permute.xlu0 %1044
  %v1046 = vsel %vm663, %v1037, %v1039
  %v1047 = vsel %vm663, %v1039, %v1041
  %v1048 = vsel %vm663, %v1041, %v1043
  %v1049 = vsel %vm663, %v1043, %v1045
  %v1055 = vsel %vm126, %v1030, 0
  %1057 = vmatprep.subr.mxu0 0.0
  %1058 = vmatpush1.msra.mxu0 0.0
  %1059 = vmatprep.subr.mxu0 0.0
  %1060 = vmatpush1.msra.mxu0 0.0
  %1061 = vmatprep.subr.mxu0 0.0
  %1062 = vmatpush1.msra.mxu0 0.0
  %1063 = vmatprep.subr.mxu0 0.0
  %1064 = vmatpush1.msra.mxu0 0.0
  %1065 = vmatprep.subr.mxu0 0.0
  %1066 = vmatpush1.msra.mxu0 0.0
  %1067 = vmatprep.subr.mxu0 0.0
  %1068 = vmatpush1.msra.mxu0 0.0
  %1069 = vmatprep.subr.mxu0 0.0
  %1070 = vmatpush1.msra.mxu0 0.0
  %1071 = vmatprep.subr.mxu0 0.0
  %1072 = vmatpush1.msra.mxu0 0.0
  %1073 = vmatprep.subr.mxu0 0.0
  %1074 = vmatpush1.msra.mxu0 0.0
  %1075 = vmatprep.subr.mxu0 0.0
  %1076 = vmatpush1.msra.mxu0 0.0
  %1077 = vmatprep.subr.mxu0 0.0
  %1078 = vmatpush1.msra.mxu0 0.0
  %1079 = vmatprep.subr.mxu0 0.0
  %1080 = vmatpush1.msra.mxu0 0.0
  %1081 = vmatprep.subr.mxu0 0.0
  %1082 = vmatpush1.msra.mxu0 0.0
  %1083 = vmatprep.subr.mxu0 0.0
  %1084 = vmatpush1.msra.mxu0 0.0
  %1085 = vmatprep.subr.mxu0 0.0
  %1086 = vmatpush1.msra.mxu0 0.0
  %1087 = vmatprep.subr.mxu0 %v1047
  %1088 = vmatpush1.msra.mxu0 %v1046
  %1089 = vmatprep.subr.mxu0 0.0
  %1090 = vmatpush2.msra.mxu0 0.0
  %1091 = vmatprep.subr.mxu0 0.0
  %1092 = vmatpush2.msra.mxu0 0.0
  %1093 = vmatprep.subr.mxu0 0.0
  %1094 = vmatpush2.msra.mxu0 0.0
  %1095 = vmatprep.subr.mxu0 0.0
  %1096 = vmatpush2.msra.mxu0 0.0
  %1097 = vmatprep.subr.mxu0 0.0
  %1098 = vmatpush2.msra.mxu0 0.0
  %1099 = vmatprep.subr.mxu0 0.0
  %1100 = vmatpush2.msra.mxu0 0.0
  %1101 = vmatprep.subr.mxu0 0.0
  %1102 = vmatpush2.msra.mxu0 0.0
  %1103 = vmatprep.subr.mxu0 0.0
  %1104 = vmatpush2.msra.mxu0 0.0
  %1105 = vmatprep.subr.mxu0 0.0
  %1106 = vmatpush2.msra.mxu0 0.0
  %1107 = vmatprep.subr.mxu0 0.0
  %1108 = vmatpush2.msra.mxu0 0.0
  %1109 = vmatprep.subr.mxu0 0.0
  %1110 = vmatpush2.msra.mxu0 0.0
  %1111 = vmatprep.subr.mxu0 0.0
  %1112 = vmatpush2.msra.mxu0 0.0
  %1113 = vmatprep.subr.mxu0 0.0
  %1114 = vmatpush2.msra.mxu0 0.0
  %1115 = vmatprep.subr.mxu0 0.0
  %1116 = vmatpush2.msra.mxu0 0.0
  %1117 = vmatprep.subr.mxu0 0.0
  %1118 = vmatpush2.msra.mxu0 0.0
  %1119 = vmatprep.subr.mxu0 0.0
  %1120 = vmatpush2.msra.mxu0 0.0
  %1121 = vmatprep.mubr.f32.mxu0 0.0
  %1122 = vmatmul.mubr.f32.gmra.mxu0 %v1055
  %v1123 = vpop.f32.mrf.mxu0
  %v1124 = vadd.f32 0.0, %v1123
  %v1125 = vpop.f32.mrf.mxu0
  %v1126 = vadd.f32 0.0, %v1125
  %1127 = vdwg.mxu0
  %1128 = vmatprep.subr.mxu0 0.0
  %1129 = vmatpush1.msra.mxu0 0.0
  %1130 = vmatprep.subr.mxu0 0.0
  %1131 = vmatpush1.msra.mxu0 0.0
  %1132 = vmatprep.subr.mxu0 0.0
  %1133 = vmatpush1.msra.mxu0 0.0
  %1134 = vmatprep.subr.mxu0 0.0
  %1135 = vmatpush1.msra.mxu0 0.0
  %1136 = vmatprep.subr.mxu0 0.0
  %1137 = vmatpush1.msra.mxu0 0.0
  %1138 = vmatprep.subr.mxu0 0.0
  %1139 = vmatpush1.msra.mxu0 0.0
  %1140 = vmatprep.subr.mxu0 0.0
  %1141 = vmatpush1.msra.mxu0 0.0
  %1142 = vmatprep.subr.mxu0 0.0
  %1143 = vmatpush1.msra.mxu0 0.0
  %1144 = vmatprep.subr.mxu0 0.0
  %1145 = vmatpush1.msra.mxu0 0.0
  %1146 = vmatprep.subr.mxu0 0.0
  %1147 = vmatpush1.msra.mxu0 0.0
  %1148 = vmatprep.subr.mxu0 0.0
  %1149 = vmatpush1.msra.mxu0 0.0
  %1150 = vmatprep.subr.mxu0 0.0
  %1151 = vmatpush1.msra.mxu0 0.0
  %1152 = vmatprep.subr.mxu0 0.0
  %1153 = vmatpush1.msra.mxu0 0.0
  %1154 = vmatprep.subr.mxu0 0.0
  %1155 = vmatpush1.msra.mxu0 0.0
  %1156 = vmatprep.subr.mxu0 0.0
  %1157 = vmatpush1.msra.mxu0 0.0
  %1158 = vmatprep.subr.mxu0 %v1049
  %1159 = vmatpush1.msra.mxu0 %v1048
  %1160 = vmatprep.subr.mxu0 0.0
  %1161 = vmatpush2.msra.mxu0 0.0
  %1162 = vmatprep.subr.mxu0 0.0
  %1163 = vmatpush2.msra.mxu0 0.0
  %1164 = vmatprep.subr.mxu0 0.0
  %1165 = vmatpush2.msra.mxu0 0.0
  %1166 = vmatprep.subr.mxu0 0.0
  %1167 = vmatpush2.msra.mxu0 0.0
  %1168 = vmatprep.subr.mxu0 0.0
  %1169 = vmatpush2.msra.mxu0 0.0
  %1170 = vmatprep.subr.mxu0 0.0
  %1171 = vmatpush2.msra.mxu0 0.0
  %1172 = vmatprep.subr.mxu0 0.0
  %1173 = vmatpush2.msra.mxu0 0.0
  %1174 = vmatprep.subr.mxu0 0.0
  %1175 = vmatpush2.msra.mxu0 0.0
  %1176 = vmatprep.subr.mxu0 0.0
  %1177 = vmatpush2.msra.mxu0 0.0
  %1178 = vmatprep.subr.mxu0 0.0
  %1179 = vmatpush2.msra.mxu0 0.0
  %1180 = vmatprep.subr.mxu0 0.0
  %1181 = vmatpush2.msra.mxu0 0.0
  %1182 = vmatprep.subr.mxu0 0.0
  %1183 = vmatpush2.msra.mxu0 0.0
  %1184 = vmatprep.subr.mxu0 0.0
  %1185 = vmatpush2.msra.mxu0 0.0
  %1186 = vmatprep.subr.mxu0 0.0
  %1187 = vmatpush2.msra.mxu0 0.0
  %1188 = vmatprep.subr.mxu0 0.0
  %1189 = vmatpush2.msra.mxu0 0.0
  %1190 = vmatprep.subr.mxu0 0.0
  %1191 = vmatpush2.msra.mxu0 0.0
  %1192 = vmatprep.mubr.f32.mxu0 0.0
  %1193 = vmatmul.mubr.f32.gmra.mxu0 %v1055
  %v1194 = vpop.f32.mrf.mxu0
  %v1195 = vadd.f32 0.0, %v1194
  %v1196 = vpop.f32.mrf.mxu0
  %v1197 = vadd.f32 0.0, %v1196
  %1198 = vdwg.mxu0
  %v1199 = vadd.f32 %v999, %v1124
  %v1200 = vadd.f32 %v1000, %v1126
  %v1201 = vadd.f32 %v1001, %v1195
  %v1202 = vadd.f32 %v1002, %v1197
  %v1203 = vmul.f32 %v1003, %v78
  %v1204 = vmul.f32 %v1004, %v86
  %v1205 = vmul.f32 %v1005, %v87
  %v1206 = vmul.f32 %v1006, %v88
  %v1207 = vmul.f32 %v1007, %v84
  %s1208 = scalar_lea.vmem %s1, 48
  %v1209 = vld [vmem:[%s1208] sm:$0xff]
  %1215 = vrot.lane.b32.xlu0 %v1203, 65
  %v1216 = vpop.permute.xlu0 %1215
  %1217 = vrot.lane.b32.xlu0 %v1204, 65
  %v1218 = vpop.permute.xlu0 %1217
  %1219 = vrot.lane.b32.xlu0 %v1205, 65
  %v1220 = vpop.permute.xlu0 %1219
  %1221 = vrot.lane.b32.xlu0 %v1206, 65
  %v1222 = vpop.permute.xlu0 %1221
  %1223 = vrot.lane.b32.xlu0 %v1207, 65
  %v1224 = vpop.permute.xlu0 %1223
  %v1225 = vsel %vm287, %v1216, %v1218
  %v1226 = vsel %vm287, %v1218, %v1220
  %v1227 = vsel %vm287, %v1220, %v1222
  %v1228 = vsel %vm287, %v1222, %v1224
  %v1234 = vsel %vm126, %v1209, 0
  %1236 = vmatprep.subr.mxu0 0.0
  %1237 = vmatpush1.msra.mxu0 0.0
  %1238 = vmatprep.subr.mxu0 0.0
  %1239 = vmatpush1.msra.mxu0 0.0
  %1240 = vmatprep.subr.mxu0 0.0
  %1241 = vmatpush1.msra.mxu0 0.0
  %1242 = vmatprep.subr.mxu0 0.0
  %1243 = vmatpush1.msra.mxu0 0.0
  %1244 = vmatprep.subr.mxu0 0.0
  %1245 = vmatpush1.msra.mxu0 0.0
  %1246 = vmatprep.subr.mxu0 0.0
  %1247 = vmatpush1.msra.mxu0 0.0
  %1248 = vmatprep.subr.mxu0 0.0
  %1249 = vmatpush1.msra.mxu0 0.0
  %1250 = vmatprep.subr.mxu0 0.0
  %1251 = vmatpush1.msra.mxu0 0.0
  %1252 = vmatprep.subr.mxu0 0.0
  %1253 = vmatpush1.msra.mxu0 0.0
  %1254 = vmatprep.subr.mxu0 0.0
  %1255 = vmatpush1.msra.mxu0 0.0
  %1256 = vmatprep.subr.mxu0 0.0
  %1257 = vmatpush1.msra.mxu0 0.0
  %1258 = vmatprep.subr.mxu0 0.0
  %1259 = vmatpush1.msra.mxu0 0.0
  %1260 = vmatprep.subr.mxu0 0.0
  %1261 = vmatpush1.msra.mxu0 0.0
  %1262 = vmatprep.subr.mxu0 0.0
  %1263 = vmatpush1.msra.mxu0 0.0
  %1264 = vmatprep.subr.mxu0 0.0
  %1265 = vmatpush1.msra.mxu0 0.0
  %1266 = vmatprep.subr.mxu0 %v1226
  %1267 = vmatpush1.msra.mxu0 %v1225
  %1268 = vmatprep.subr.mxu0 0.0
  %1269 = vmatpush2.msra.mxu0 0.0
  %1270 = vmatprep.subr.mxu0 0.0
  %1271 = vmatpush2.msra.mxu0 0.0
  %1272 = vmatprep.subr.mxu0 0.0
  %1273 = vmatpush2.msra.mxu0 0.0
  %1274 = vmatprep.subr.mxu0 0.0
  %1275 = vmatpush2.msra.mxu0 0.0
  %1276 = vmatprep.subr.mxu0 0.0
  %1277 = vmatpush2.msra.mxu0 0.0
  %1278 = vmatprep.subr.mxu0 0.0
  %1279 = vmatpush2.msra.mxu0 0.0
  %1280 = vmatprep.subr.mxu0 0.0
  %1281 = vmatpush2.msra.mxu0 0.0
  %1282 = vmatprep.subr.mxu0 0.0
  %1283 = vmatpush2.msra.mxu0 0.0
  %1284 = vmatprep.subr.mxu0 0.0
  %1285 = vmatpush2.msra.mxu0 0.0
  %1286 = vmatprep.subr.mxu0 0.0
  %1287 = vmatpush2.msra.mxu0 0.0
  %1288 = vmatprep.subr.mxu0 0.0
  %1289 = vmatpush2.msra.mxu0 0.0
  %1290 = vmatprep.subr.mxu0 0.0
  %1291 = vmatpush2.msra.mxu0 0.0
  %1292 = vmatprep.subr.mxu0 0.0
  %1293 = vmatpush2.msra.mxu0 0.0
  %1294 = vmatprep.subr.mxu0 0.0
  %1295 = vmatpush2.msra.mxu0 0.0
  %1296 = vmatprep.subr.mxu0 0.0
  %1297 = vmatpush2.msra.mxu0 0.0
  %1298 = vmatprep.subr.mxu0 0.0
  %1299 = vmatpush2.msra.mxu0 0.0
  %1300 = vmatprep.mubr.f32.mxu0 0.0
  %1301 = vmatmul.mubr.f32.gmra.mxu0 %v1234
  %v1302 = vpop.f32.mrf.mxu0
  %v1303 = vadd.f32 0.0, %v1302
  %v1304 = vpop.f32.mrf.mxu0
  %v1305 = vadd.f32 0.0, %v1304
  %1306 = vdwg.mxu0
  %1307 = vmatprep.subr.mxu0 0.0
  %1308 = vmatpush1.msra.mxu0 0.0
  %1309 = vmatprep.subr.mxu0 0.0
  %1310 = vmatpush1.msra.mxu0 0.0
  %1311 = vmatprep.subr.mxu0 0.0
  %1312 = vmatpush1.msra.mxu0 0.0
  %1313 = vmatprep.subr.mxu0 0.0
  %1314 = vmatpush1.msra.mxu0 0.0
  %1315 = vmatprep.subr.mxu0 0.0
  %1316 = vmatpush1.msra.mxu0 0.0
  %1317 = vmatprep.subr.mxu0 0.0
  %1318 = vmatpush1.msra.mxu0 0.0
  %1319 = vmatprep.subr.mxu0 0.0
  %1320 = vmatpush1.msra.mxu0 0.0
  %1321 = vmatprep.subr.mxu0 0.0
  %1322 = vmatpush1.msra.mxu0 0.0
  %1323 = vmatprep.subr.mxu0 0.0
  %1324 = vmatpush1.msra.mxu0 0.0
  %1325 = vmatprep.subr.mxu0 0.0
  %1326 = vmatpush1.msra.mxu0 0.0
  %1327 = vmatprep.subr.mxu0 0.0
  %1328 = vmatpush1.msra.mxu0 0.0
  %1329 = vmatprep.subr.mxu0 0.0
  %1330 = vmatpush1.msra.mxu0 0.0
  %1331 = vmatprep.subr.mxu0 0.0
  %1332 = vmatpush1.msra.mxu0 0.0
  %1333 = vmatprep.subr.mxu0 0.0
  %1334 = vmatpush1.msra.mxu0 0.0
  %1335 = vmatprep.subr.mxu0 0.0
  %1336 = vmatpush1.msra.mxu0 0.0
  %1337 = vmatprep.subr.mxu0 %v1228
  %1338 = vmatpush1.msra.mxu0 %v1227
  %1339 = vmatprep.subr.mxu0 0.0
  %1340 = vmatpush2.msra.mxu0 0.0
  %1341 = vmatprep.subr.mxu0 0.0
  %1342 = vmatpush2.msra.mxu0 0.0
  %1343 = vmatprep.subr.mxu0 0.0
  %1344 = vmatpush2.msra.mxu0 0.0
  %1345 = vmatprep.subr.mxu0 0.0
  %1346 = vmatpush2.msra.mxu0 0.0
  %1347 = vmatprep.subr.mxu0 0.0
  %1348 = vmatpush2.msra.mxu0 0.0
  %1349 = vmatprep.subr.mxu0 0.0
  %1350 = vmatpush2.msra.mxu0 0.0
  %1351 = vmatprep.subr.mxu0 0.0
  %1352 = vmatpush2.msra.mxu0 0.0
  %1353 = vmatprep.subr.mxu0 0.0
  %1354 = vmatpush2.msra.mxu0 0.0
  %1355 = vmatprep.subr.mxu0 0.0
  %1356 = vmatpush2.msra.mxu0 0.0
  %1357 = vmatprep.subr.mxu0 0.0
  %1358 = vmatpush2.msra.mxu0 0.0
  %1359 = vmatprep.subr.mxu0 0.0
  %1360 = vmatpush2.msra.mxu0 0.0
  %1361 = vmatprep.subr.mxu0 0.0
  %1362 = vmatpush2.msra.mxu0 0.0
  %1363 = vmatprep.subr.mxu0 0.0
  %1364 = vmatpush2.msra.mxu0 0.0
  %1365 = vmatprep.subr.mxu0 0.0
  %1366 = vmatpush2.msra.mxu0 0.0
  %1367 = vmatprep.subr.mxu0 0.0
  %1368 = vmatpush2.msra.mxu0 0.0
  %1369 = vmatprep.subr.mxu0 0.0
  %1370 = vmatpush2.msra.mxu0 0.0
  %1371 = vmatprep.mubr.f32.mxu0 0.0
  %1372 = vmatmul.mubr.f32.gmra.mxu0 %v1234
  %v1373 = vpop.f32.mrf.mxu0
  %v1374 = vadd.f32 0.0, %v1373
  %v1375 = vpop.f32.mrf.mxu0
  %v1376 = vadd.f32 0.0, %v1375
  %1377 = vdwg.mxu0
  %v1378 = vadd.f32 %v1199, %v1303
  %v1379 = vadd.f32 %v1200, %v1305
  %v1380 = vadd.f32 %v1201, %v1374
  %v1381 = vadd.f32 %v1202, %v1376
  %s1382 = scalar_lea.vmem %s1, 56
  %v1383 = vld [vmem:[%s1382] sm:$0xff]
  %1389 = vrot.lane.b32.xlu0 %v1003, 64
  %v1390 = vpop.permute.xlu0 %1389
  %1391 = vrot.lane.b32.xlu0 %v1004, 64
  %v1392 = vpop.permute.xlu0 %1391
  %1393 = vrot.lane.b32.xlu0 %v1005, 64
  %v1394 = vpop.permute.xlu0 %1393
  %1395 = vrot.lane.b32.xlu0 %v1006, 64
  %v1396 = vpop.permute.xlu0 %1395
  %1397 = vrot.lane.b32.xlu0 %v1007, 64
  %v1398 = vpop.permute.xlu0 %1397
  %v1399 = vsel %vm117, %v1390, %v1392
  %v1400 = vsel %vm117, %v1392, %v1394
  %v1401 = vsel %vm117, %v1394, %v1396
  %v1402 = vsel %vm117, %v1396, %v1398
  %v1408 = vsel %vm126, %v1383, 0
  %1410 = vmatprep.subr.mxu0 0.0
  %1411 = vmatpush1.msra.mxu0 0.0
  %1412 = vmatprep.subr.mxu0 0.0
  %1413 = vmatpush1.msra.mxu0 0.0
  %1414 = vmatprep.subr.mxu0 0.0
  %1415 = vmatpush1.msra.mxu0 0.0
  %1416 = vmatprep.subr.mxu0 0.0
  %1417 = vmatpush1.msra.mxu0 0.0
  %1418 = vmatprep.subr.mxu0 0.0
  %1419 = vmatpush1.msra.mxu0 0.0
  %1420 = vmatprep.subr.mxu0 0.0
  %1421 = vmatpush1.msra.mxu0 0.0
  %1422 = vmatprep.subr.mxu0 0.0
  %1423 = vmatpush1.msra.mxu0 0.0
  %1424 = vmatprep.subr.mxu0 0.0
  %1425 = vmatpush1.msra.mxu0 0.0
  %1426 = vmatprep.subr.mxu0 0.0
  %1427 = vmatpush1.msra.mxu0 0.0
  %1428 = vmatprep.subr.mxu0 0.0
  %1429 = vmatpush1.msra.mxu0 0.0
  %1430 = vmatprep.subr.mxu0 0.0
  %1431 = vmatpush1.msra.mxu0 0.0
  %1432 = vmatprep.subr.mxu0 0.0
  %1433 = vmatpush1.msra.mxu0 0.0
  %1434 = vmatprep.subr.mxu0 0.0
  %1435 = vmatpush1.msra.mxu0 0.0
  %1436 = vmatprep.subr.mxu0 0.0
  %1437 = vmatpush1.msra.mxu0 0.0
  %1438 = vmatprep.subr.mxu0 0.0
  %1439 = vmatpush1.msra.mxu0 0.0
  %1440 = vmatprep.subr.mxu0 %v1400
  %1441 = vmatpush1.msra.mxu0 %v1399
  %1442 = vmatprep.subr.mxu0 0.0
  %1443 = vmatpush2.msra.mxu0 0.0
  %1444 = vmatprep.subr.mxu0 0.0
  %1445 = vmatpush2.msra.mxu0 0.0
  %1446 = vmatprep.subr.mxu0 0.0
  %1447 = vmatpush2.msra.mxu0 0.0
  %1448 = vmatprep.subr.mxu0 0.0
  %1449 = vmatpush2.msra.mxu0 0.0
  %1450 = vmatprep.subr.mxu0 0.0
  %1451 = vmatpush2.msra.mxu0 0.0
  %1452 = vmatprep.subr.mxu0 0.0
  %1453 = vmatpush2.msra.mxu0 0.0
  %1454 = vmatprep.subr.mxu0 0.0
  %1455 = vmatpush2.msra.mxu0 0.0
  %1456 = vmatprep.subr.mxu0 0.0
  %1457 = vmatpush2.msra.mxu0 0.0
  %1458 = vmatprep.subr.mxu0 0.0
  %1459 = vmatpush2.msra.mxu0 0.0
  %1460 = vmatprep.subr.mxu0 0.0
  %1461 = vmatpush2.msra.mxu0 0.0
  %1462 = vmatprep.subr.mxu0 0.0
  %1463 = vmatpush2.msra.mxu0 0.0
  %1464 = vmatprep.subr.mxu0 0.0
  %1465 = vmatpush2.msra.mxu0 0.0
  %1466 = vmatprep.subr.mxu0 0.0
  %1467 = vmatpush2.msra.mxu0 0.0
  %1468 = vmatprep.subr.mxu0 0.0
  %1469 = vmatpush2.msra.mxu0 0.0
  %1470 = vmatprep.subr.mxu0 0.0
  %1471 = vmatpush2.msra.mxu0 0.0
  %1472 = vmatprep.subr.mxu0 0.0
  %1473 = vmatpush2.msra.mxu0 0.0
  %1474 = vmatprep.mubr.f32.mxu0 0.0
  %1475 = vmatmul.mubr.f32.gmra.mxu0 %v1408
  %v1476 = vpop.f32.mrf.mxu0
  %v1477 = vadd.f32 0.0, %v1476
  %v1478 = vpop.f32.mrf.mxu0
  %v1479 = vadd.f32 0.0, %v1478
  %1480 = vdwg.mxu0
  %1481 = vmatprep.subr.mxu0 0.0
  %1482 = vmatpush1.msra.mxu0 0.0
  %1483 = vmatprep.subr.mxu0 0.0
  %1484 = vmatpush1.msra.mxu0 0.0
  %1485 = vmatprep.subr.mxu0 0.0
  %1486 = vmatpush1.msra.mxu0 0.0
  %1487 = vmatprep.subr.mxu0 0.0
  %1488 = vmatpush1.msra.mxu0 0.0
  %1489 = vmatprep.subr.mxu0 0.0
  %1490 = vmatpush1.msra.mxu0 0.0
  %1491 = vmatprep.subr.mxu0 0.0
  %1492 = vmatpush1.msra.mxu0 0.0
  %1493 = vmatprep.subr.mxu0 0.0
  %1494 = vmatpush1.msra.mxu0 0.0
  %1495 = vmatprep.subr.mxu0 0.0
  %1496 = vmatpush1.msra.mxu0 0.0
  %1497 = vmatprep.subr.mxu0 0.0
  %1498 = vmatpush1.msra.mxu0 0.0
  %1499 = vmatprep.subr.mxu0 0.0
  %1500 = vmatpush1.msra.mxu0 0.0
  %1501 = vmatprep.subr.mxu0 0.0
  %1502 = vmatpush1.msra.mxu0 0.0
  %1503 = vmatprep.subr.mxu0 0.0
  %1504 = vmatpush1.msra.mxu0 0.0
  %1505 = vmatprep.subr.mxu0 0.0
  %1506 = vmatpush1.msra.mxu0 0.0
  %1507 = vmatprep.subr.mxu0 0.0
  %1508 = vmatpush1.msra.mxu0 0.0
  %1509 = vmatprep.subr.mxu0 0.0
  %1510 = vmatpush1.msra.mxu0 0.0
  %1511 = vmatprep.subr.mxu0 %v1402
  %1512 = vmatpush1.msra.mxu0 %v1401
  %1513 = vmatprep.subr.mxu0 0.0
  %1514 = vmatpush2.msra.mxu0 0.0
  %1515 = vmatprep.subr.mxu0 0.0
  %1516 = vmatpush2.msra.mxu0 0.0
  %1517 = vmatprep.subr.mxu0 0.0
  %1518 = vmatpush2.msra.mxu0 0.0
  %1519 = vmatprep.subr.mxu0 0.0
  %1520 = vmatpush2.msra.mxu0 0.0
  %1521 = vmatprep.subr.mxu0 0.0
  %1522 = vmatpush2.msra.mxu0 0.0
  %1523 = vmatprep.subr.mxu0 0.0
  %1524 = vmatpush2.msra.mxu0 0.0
  %1525 = vmatprep.subr.mxu0 0.0
  %1526 = vmatpush2.msra.mxu0 0.0
  %1527 = vmatprep.subr.mxu0 0.0
  %1528 = vmatpush2.msra.mxu0 0.0
  %1529 = vmatprep.subr.mxu0 0.0
  %1530 = vmatpush2.msra.mxu0 0.0
  %1531 = vmatprep.subr.mxu0 0.0
  %1532 = vmatpush2.msra.mxu0 0.0
  %1533 = vmatprep.subr.mxu0 0.0
  %1534 = vmatpush2.msra.mxu0 0.0
  %1535 = vmatprep.subr.mxu0 0.0
  %1536 = vmatpush2.msra.mxu0 0.0
  %1537 = vmatprep.subr.mxu0 0.0
  %1538 = vmatpush2.msra.mxu0 0.0
  %1539 = vmatprep.subr.mxu0 0.0
  %1540 = vmatpush2.msra.mxu0 0.0
  %1541 = vmatprep.subr.mxu0 0.0
  %1542 = vmatpush2.msra.mxu0 0.0
  %1543 = vmatprep.subr.mxu0 0.0
  %1544 = vmatpush2.msra.mxu0 0.0
  %1545 = vmatprep.mubr.f32.mxu0 0.0
  %1546 = vmatmul.mubr.f32.gmra.mxu0 %v1408
  %v1547 = vpop.f32.mrf.mxu0
  %v1548 = vadd.f32 0.0, %v1547
  %v1549 = vpop.f32.mrf.mxu0
  %v1550 = vadd.f32 0.0, %v1549
  %1551 = vdwg.mxu0
  %v1552 = vadd.f32 %v1378, %v1477
  %v1553 = vadd.f32 %v1379, %v1479
  %v1554 = vadd.f32 %v1380, %v1548
  %v1555 = vadd.f32 %v1381, %v1550
  %v1556 = vmul.f32 %v1003, %v461
  %v1557 = vmul.f32 %v1004, %v468
  %v1558 = vmul.f32 %v1005, %v469
  %v1559 = vmul.f32 %v1006, %v470
  %v1560 = vmul.f32 %v1007, %v467
  %s1561 = scalar_lea.vmem %s1, 64
  %v1562 = vld [vmem:[%s1561] sm:$0xff]
  %1568 = vrot.lane.b32.xlu0 %v1556, 63
  %v1569 = vpop.permute.xlu0 %1568
  %1570 = vrot.lane.b32.xlu0 %v1557, 63
  %v1571 = vpop.permute.xlu0 %1570
  %1572 = vrot.lane.b32.xlu0 %v1558, 63
  %v1573 = vpop.permute.xlu0 %1572
  %1574 = vrot.lane.b32.xlu0 %v1559, 63
  %v1575 = vpop.permute.xlu0 %1574
  %1576 = vrot.lane.b32.xlu0 %v1560, 63
  %v1577 = vpop.permute.xlu0 %1576
  %v1578 = vsel %vm85, %v1569, %v1571
  %v1579 = vsel %vm85, %v1571, %v1573
  %v1580 = vsel %vm85, %v1573, %v1575
  %v1581 = vsel %vm85, %v1575, %v1577
  %v1587 = vsel %vm126, %v1562, 0
  %1589 = vmatprep.subr.mxu0 0.0
  %1590 = vmatpush1.msra.mxu0 0.0
  %1591 = vmatprep.subr.mxu0 0.0
  %1592 = vmatpush1.msra.mxu0 0.0
  %1593 = vmatprep.subr.mxu0 0.0
  %1594 = vmatpush1.msra.mxu0 0.0
  %1595 = vmatprep.subr.mxu0 0.0
  %1596 = vmatpush1.msra.mxu0 0.0
  %1597 = vmatprep.subr.mxu0 0.0
  %1598 = vmatpush1.msra.mxu0 0.0
  %1599 = vmatprep.subr.mxu0 0.0
  %1600 = vmatpush1.msra.mxu0 0.0
  %1601 = vmatprep.subr.mxu0 0.0
  %1602 = vmatpush1.msra.mxu0 0.0
  %1603 = vmatprep.subr.mxu0 0.0
  %1604 = vmatpush1.msra.mxu0 0.0
  %1605 = vmatprep.subr.mxu0 0.0
  %1606 = vmatpush1.msra.mxu0 0.0
  %1607 = vmatprep.subr.mxu0 0.0
  %1608 = vmatpush1.msra.mxu0 0.0
  %1609 = vmatprep.subr.mxu0 0.0
  %1610 = vmatpush1.msra.mxu0 0.0
  %1611 = vmatprep.subr.mxu0 0.0
  %1612 = vmatpush1.msra.mxu0 0.0
  %1613 = vmatprep.subr.mxu0 0.0
  %1614 = vmatpush1.msra.mxu0 0.0
  %1615 = vmatprep.subr.mxu0 0.0
  %1616 = vmatpush1.msra.mxu0 0.0
  %1617 = vmatprep.subr.mxu0 0.0
  %1618 = vmatpush1.msra.mxu0 0.0
  %1619 = vmatprep.subr.mxu0 %v1579
  %1620 = vmatpush1.msra.mxu0 %v1578
  %1621 = vmatprep.subr.mxu0 0.0
  %1622 = vmatpush2.msra.mxu0 0.0
  %1623 = vmatprep.subr.mxu0 0.0
  %1624 = vmatpush2.msra.mxu0 0.0
  %1625 = vmatprep.subr.mxu0 0.0
  %1626 = vmatpush2.msra.mxu0 0.0
  %1627 = vmatprep.subr.mxu0 0.0
  %1628 = vmatpush2.msra.mxu0 0.0
  %1629 = vmatprep.subr.mxu0 0.0
  %1630 = vmatpush2.msra.mxu0 0.0
  %1631 = vmatprep.subr.mxu0 0.0
  %1632 = vmatpush2.msra.mxu0 0.0
  %1633 = vmatprep.subr.mxu0 0.0
  %1634 = vmatpush2.msra.mxu0 0.0
  %1635 = vmatprep.subr.mxu0 0.0
  %1636 = vmatpush2.msra.mxu0 0.0
  %1637 = vmatprep.subr.mxu0 0.0
  %1638 = vmatpush2.msra.mxu0 0.0
  %1639 = vmatprep.subr.mxu0 0.0
  %1640 = vmatpush2.msra.mxu0 0.0
  %1641 = vmatprep.subr.mxu0 0.0
  %1642 = vmatpush2.msra.mxu0 0.0
  %1643 = vmatprep.subr.mxu0 0.0
  %1644 = vmatpush2.msra.mxu0 0.0
  %1645 = vmatprep.subr.mxu0 0.0
  %1646 = vmatpush2.msra.mxu0 0.0
  %1647 = vmatprep.subr.mxu0 0.0
  %1648 = vmatpush2.msra.mxu0 0.0
  %1649 = vmatprep.subr.mxu0 0.0
  %1650 = vmatpush2.msra.mxu0 0.0
  %1651 = vmatprep.subr.mxu0 0.0
  %1652 = vmatpush2.msra.mxu0 0.0
  %1653 = vmatprep.mubr.f32.mxu0 0.0
  %1654 = vmatmul.mubr.f32.gmra.mxu0 %v1587
  %v1655 = vpop.f32.mrf.mxu0
  %v1656 = vadd.f32 0.0, %v1655
  %v1657 = vpop.f32.mrf.mxu0
  %v1658 = vadd.f32 0.0, %v1657
  %1659 = vdwg.mxu0
  %1660 = vmatprep.subr.mxu0 0.0
  %1661 = vmatpush1.msra.mxu0 0.0
  %1662 = vmatprep.subr.mxu0 0.0
  %1663 = vmatpush1.msra.mxu0 0.0
  %1664 = vmatprep.subr.mxu0 0.0
  %1665 = vmatpush1.msra.mxu0 0.0
  %1666 = vmatprep.subr.mxu0 0.0
  %1667 = vmatpush1.msra.mxu0 0.0
  %1668 = vmatprep.subr.mxu0 0.0
  %1669 = vmatpush1.msra.mxu0 0.0
  %1670 = vmatprep.subr.mxu0 0.0
  %1671 = vmatpush1.msra.mxu0 0.0
  %1672 = vmatprep.subr.mxu0 0.0
  %1673 = vmatpush1.msra.mxu0 0.0
  %1674 = vmatprep.subr.mxu0 0.0
  %1675 = vmatpush1.msra.mxu0 0.0
  %1676 = vmatprep.subr.mxu0 0.0
  %1677 = vmatpush1.msra.mxu0 0.0
  %1678 = vmatprep.subr.mxu0 0.0
  %1679 = vmatpush1.msra.mxu0 0.0
  %1680 = vmatprep.subr.mxu0 0.0
  %1681 = vmatpush1.msra.mxu0 0.0
  %1682 = vmatprep.subr.mxu0 0.0
  %1683 = vmatpush1.msra.mxu0 0.0
  %1684 = vmatprep.subr.mxu0 0.0
  %1685 = vmatpush1.msra.mxu0 0.0
  %1686 = vmatprep.subr.mxu0 0.0
  %1687 = vmatpush1.msra.mxu0 0.0
  %1688 = vmatprep.subr.mxu0 0.0
  %1689 = vmatpush1.msra.mxu0 0.0
  %1690 = vmatprep.subr.mxu0 %v1581
  %1691 = vmatpush1.msra.mxu0 %v1580
  %1692 = vmatprep.subr.mxu0 0.0
  %1693 = vmatpush2.msra.mxu0 0.0
  %1694 = vmatprep.subr.mxu0 0.0
  %1695 = vmatpush2.msra.mxu0 0.0
  %1696 = vmatprep.subr.mxu0 0.0
  %1697 = vmatpush2.msra.mxu0 0.0
  %1698 = vmatprep.subr.mxu0 0.0
  %1699 = vmatpush2.msra.mxu0 0.0
  %1700 = vmatprep.subr.mxu0 0.0
  %1701 = vmatpush2.msra.mxu0 0.0
  %1702 = vmatprep.subr.mxu0 0.0
  %1703 = vmatpush2.msra.mxu0 0.0
  %1704 = vmatprep.subr.mxu0 0.0
  %1705 = vmatpush2.msra.mxu0 0.0
  %1706 = vmatprep.subr.mxu0 0.0
  %1707 = vmatpush2.msra.mxu0 0.0
  %1708 = vmatprep.subr.mxu0 0.0
  %1709 = vmatpush2.msra.mxu0 0.0
  %1710 = vmatprep.subr.mxu0 0.0
  %1711 = vmatpush2.msra.mxu0 0.0
  %1712 = vmatprep.subr.mxu0 0.0
  %1713 = vmatpush2.msra.mxu0 0.0
  %1714 = vmatprep.subr.mxu0 0.0
  %1715 = vmatpush2.msra.mxu0 0.0
  %1716 = vmatprep.subr.mxu0 0.0
  %1717 = vmatpush2.msra.mxu0 0.0
  %1718 = vmatprep.subr.mxu0 0.0
  %1719 = vmatpush2.msra.mxu0 0.0
  %1720 = vmatprep.subr.mxu0 0.0
  %1721 = vmatpush2.msra.mxu0 0.0
  %1722 = vmatprep.subr.mxu0 0.0
  %1723 = vmatpush2.msra.mxu0 0.0
  %1724 = vmatprep.mubr.f32.mxu0 0.0
  %1725 = vmatmul.mubr.f32.gmra.mxu0 %v1587
  %v1726 = vpop.f32.mrf.mxu0
  %v1727 = vadd.f32 0.0, %v1726
  %v1728 = vpop.f32.mrf.mxu0
  %v1729 = vadd.f32 0.0, %v1728
  %1730 = vdwg.mxu0
  %v1731 = vadd.f32 %v1552, %v1656
  %v1732 = vadd.f32 %v1553, %v1658
  %v1733 = vadd.f32 %v1554, %v1727
  %v1734 = vadd.f32 %v1555, %v1729
  %1735 = vst [vmem:[%s5] sm:$0xff] %v1731
  %1736 = vst [vmem:[%s5 + $0x8] sm:$0xff] %v1732
  %1737 = vst [vmem:[%s5 + $0x10] sm:$0xff] %v1733
  %1738 = vst [vmem:[%s5 + $0x18] sm:$0xff] %v1734
  %v1743 = vcombine.low %v1731, %v1732
  %v1744 = vcombine.high %v1731, %v1732
  %v1745 = vcombine.low %v1733, %v1734
  %v1746 = vcombine.high %v1733, %v1734
  %v1751 = vcombine.high %v1743, %v1743
  %v1752 = vcombine.high %v1745, %v1745
  %v1753 = vcombine.high %v1744, %v1744
  %v1754 = vcombine.high %v1746, %v1746
  %vm1759 = vcmask 1043456
  %v1760 = vsel %vm1759, %v1743, 0.0
  %v1761 = vsel %vm1759, %v1751, 0.0
  %v1762 = vadd.f32 %v1760, %v1761
  %v1763 = vsel %vm1759, %v1745, 0.0
  %v1764 = vadd.f32 %v1762, %v1763
  %v1765 = vsel %vm1759, %v1752, 0.0
  %v1766 = vadd.f32 %v1764, %v1765
  %1767 = vadd.xlane.f32.xlu0 %v1766
  %v1768 = vpop.xlane.xlu0 %1767
  %v1769 = vsel %vm1759, %v1744, 0.0
  %v1770 = vsel %vm1759, %v1753, 0.0
  %v1771 = vadd.f32 %v1769, %v1770
  %v1772 = vsel %vm1759, %v1746, 0.0
  %v1773 = vadd.f32 %v1771, %v1772
  %v1774 = vsel %vm1759, %v1754, 0.0
  %v1775 = vadd.f32 %v1773, %v1774
  %1776 = vadd.xlane.f32.xlu0 %v1775
  %v1777 = vpop.xlane.xlu0 %1776
  %v1778 = vsel %vm1759, %v1768, 0.0
  %v1779 = vsel %vm1759, %v1777, 0.0
  %v1780 = vadd.f32 %v1778, %v1779
  %v1781 = vadd.f32 %v1780, 0.0
  %v1782 = vld [vmem:[#allocation2 + $0x20] sm:$0xff]
  %v1783 = vld [vmem:[#allocation2 + $0x28] sm:$0xff]
  %v1784 = vld [vmem:[#allocation2 + $0x30] sm:$0xff]
  %v1785 = vld [vmem:[#allocation2 + $0x38] sm:$0xff]
  %v1786 = vld [vmem:[#allocation2 + $0x40] sm:$0xff]
  %s1787 = scalar_lea.vmem %s2, 8
  %v1788 = vld [vmem:[%s1787] ss:$2 sm:$0xf]
  %v1790 = vlaneseq
  %v1791 = vshrl.u32 %v1790, 7
  %v1792 = vsub.s32 0, %v1791
  %v1793 = vrot.slane %v1788, %v1792
  %v1794 = vlaneseq
  %v1795 = vshrl.u32 %v1794, 7
  %v1796 = vsub.s32 1, %v1795
  %v1797 = vrot.slane %v1788, %v1796
  %v1798 = vlaneseq
  %v1799 = vshrl.u32 %v1798, 7
  %v1800 = vsub.s32 2, %v1799
  %v1801 = vrot.slane %v1788, %v1800
  %v1802 = vlaneseq
  %v1803 = vshrl.u32 %v1802, 7
  %v1804 = vsub.s32 3, %v1803
  %v1805 = vrot.slane %v1788, %v1804
  %1806 = vrot.lane.b32.xlu0 %v1793, 63
  %v1807 = vpop.permute.xlu0 %1806
  %1808 = vrot.lane.b32.xlu0 %v1797, 63
  %v1809 = vpop.permute.xlu0 %1808
  %1810 = vrot.lane.b32.xlu0 %v1801, 63
  %v1811 = vpop.permute.xlu0 %1810
  %1812 = vrot.lane.b32.xlu0 %v1805, 63
  %v1813 = vpop.permute.xlu0 %1812
  %v1814 = vsel %vm85, %v1807, %v1809
  %v1815 = vsel %vm85, %v1809, %v1811
  %v1816 = vsel %vm85, %v1811, %v1813
  %v1822 = vmul.f32 %v1782, %v1807
  %v1823 = vmul.f32 %v1783, %v1814
  %v1824 = vmul.f32 %v1784, %v1815
  %v1825 = vmul.f32 %v1785, %v1816
  %v1826 = vmul.f32 %v1786, %v1813
  %v1827 = vld [vmem:[%s1] sm:$0xff]
  %v1828 = vld [vmem:[%s100] sm:$0xff]
  %1834 = vrot.lane.b32.xlu0 %v1782, 64
  %v1835 = vpop.permute.xlu0 %1834
  %1836 = vrot.lane.b32.xlu0 %v1783, 64
  %v1837 = vpop.permute.xlu0 %1836
  %1838 = vrot.lane.b32.xlu0 %v1784, 64
  %v1839 = vpop.permute.xlu0 %1838
  %1840 = vrot.lane.b32.xlu0 %v1785, 64
  %v1841 = vpop.permute.xlu0 %1840
  %1842 = vrot.lane.b32.xlu0 %v1786, 64
  %v1843 = vpop.permute.xlu0 %1842
  %v1844 = vsel %vm117, %v1835, %v1837
  %v1845 = vsel %vm117, %v1837, %v1839
  %v1846 = vsel %vm117, %v1839, %v1841
  %v1847 = vsel %vm117, %v1841, %v1843
  %v1853 = vsel %vm126, %v1828, 0
  %1855 = vmatprep.subr.mxu0 0.0
  %1856 = vmatpush1.msra.mxu0 0.0
  %1857 = vmatprep.subr.mxu0 0.0
  %1858 = vmatpush1.msra.mxu0 0.0
  %1859 = vmatprep.subr.mxu0 0.0
  %1860 = vmatpush1.msra.mxu0 0.0
  %1861 = vmatprep.subr.mxu0 0.0
  %1862 = vmatpush1.msra.mxu0 0.0
  %1863 = vmatprep.subr.mxu0 0.0
  %1864 = vmatpush1.msra.mxu0 0.0
  %1865 = vmatprep.subr.mxu0 0.0
  %1866 = vmatpush1.msra.mxu0 0.0
  %1867 = vmatprep.subr.mxu0 0.0
  %1868 = vmatpush1.msra.mxu0 0.0
  %1869 = vmatprep.subr.mxu0 0.0
  %1870 = vmatpush1.msra.mxu0 0.0
  %1871 = vmatprep.subr.mxu0 0.0
  %1872 = vmatpush1.msra.mxu0 0.0
  %1873 = vmatprep.subr.mxu0 0.0
  %1874 = vmatpush1.msra.mxu0 0.0
  %1875 = vmatprep.subr.mxu0 0.0
  %1876 = vmatpush1.msra.mxu0 0.0
  %1877 = vmatprep.subr.mxu0 0.0
  %1878 = vmatpush1.msra.mxu0 0.0
  %1879 = vmatprep.subr.mxu0 0.0
  %1880 = vmatpush1.msra.mxu0 0.0
  %1881 = vmatprep.subr.mxu0 0.0
  %1882 = vmatpush1.msra.mxu0 0.0
  %1883 = vmatprep.subr.mxu0 0.0
  %1884 = vmatpush1.msra.mxu0 0.0
  %1885 = vmatprep.subr.mxu0 %v1845
  %1886 = vmatpush1.msra.mxu0 %v1844
  %1887 = vmatprep.subr.mxu0 0.0
  %1888 = vmatpush2.msra.mxu0 0.0
  %1889 = vmatprep.subr.mxu0 0.0
  %1890 = vmatpush2.msra.mxu0 0.0
  %1891 = vmatprep.subr.mxu0 0.0
  %1892 = vmatpush2.msra.mxu0 0.0
  %1893 = vmatprep.subr.mxu0 0.0
  %1894 = vmatpush2.msra.mxu0 0.0
  %1895 = vmatprep.subr.mxu0 0.0
  %1896 = vmatpush2.msra.mxu0 0.0
  %1897 = vmatprep.subr.mxu0 0.0
  %1898 = vmatpush2.msra.mxu0 0.0
  %1899 = vmatprep.subr.mxu0 0.0
  %1900 = vmatpush2.msra.mxu0 0.0
  %1901 = vmatprep.subr.mxu0 0.0
  %1902 = vmatpush2.msra.mxu0 0.0
  %1903 = vmatprep.subr.mxu0 0.0
  %1904 = vmatpush2.msra.mxu0 0.0
  %1905 = vmatprep.subr.mxu0 0.0
  %1906 = vmatpush2.msra.mxu0 0.0
  %1907 = vmatprep.subr.mxu0 0.0
  %1908 = vmatpush2.msra.mxu0 0.0
  %1909 = vmatprep.subr.mxu0 0.0
  %1910 = vmatpush2.msra.mxu0 0.0
  %1911 = vmatprep.subr.mxu0 0.0
  %1912 = vmatpush2.msra.mxu0 0.0
  %1913 = vmatprep.subr.mxu0 0.0
  %1914 = vmatpush2.msra.mxu0 0.0
  %1915 = vmatprep.subr.mxu0 0.0
  %1916 = vmatpush2.msra.mxu0 0.0
  %1917 = vmatprep.subr.mxu0 0.0
  %1918 = vmatpush2.msra.mxu0 0.0
  %1919 = vmatprep.mubr.f32.mxu0 0.0
  %1920 = vmatmul.mubr.f32.gmra.mxu0 %v1853
  %v1921 = vpop.f32.mrf.mxu0
  %v1922 = vadd.f32 0.0, %v1921
  %v1923 = vpop.f32.mrf.mxu0
  %v1924 = vadd.f32 0.0, %v1923
  %1925 = vdwg.mxu0
  %1926 = vmatprep.subr.mxu0 0.0
  %1927 = vmatpush1.msra.mxu0 0.0
  %1928 = vmatprep.subr.mxu0 0.0
  %1929 = vmatpush1.msra.mxu0 0.0
  %1930 = vmatprep.subr.mxu0 0.0
  %1931 = vmatpush1.msra.mxu0 0.0
  %1932 = vmatprep.subr.mxu0 0.0
  %1933 = vmatpush1.msra.mxu0 0.0
  %1934 = vmatprep.subr.mxu0 0.0
  %1935 = vmatpush1.msra.mxu0 0.0
  %1936 = vmatprep.subr.mxu0 0.0
  %1937 = vmatpush1.msra.mxu0 0.0
  %1938 = vmatprep.subr.mxu0 0.0
  %1939 = vmatpush1.msra.mxu0 0.0
  %1940 = vmatprep.subr.mxu0 0.0
  %1941 = vmatpush1.msra.mxu0 0.0
  %1942 = vmatprep.subr.mxu0 0.0
  %1943 = vmatpush1.msra.mxu0 0.0
  %1944 = vmatprep.subr.mxu0 0.0
  %1945 = vmatpush1.msra.mxu0 0.0
  %1946 = vmatprep.subr.mxu0 0.0
  %1947 = vmatpush1.msra.mxu0 0.0
  %1948 = vmatprep.subr.mxu0 0.0
  %1949 = vmatpush1.msra.mxu0 0.0
  %1950 = vmatprep.subr.mxu0 0.0
  %1951 = vmatpush1.msra.mxu0 0.0
  %1952 = vmatprep.subr.mxu0 0.0
  %1953 = vmatpush1.msra.mxu0 0.0
  %1954 = vmatprep.subr.mxu0 0.0
  %1955 = vmatpush1.msra.mxu0 0.0
  %1956 = vmatprep.subr.mxu0 %v1847
  %1957 = vmatpush1.msra.mxu0 %v1846
  %1958 = vmatprep.subr.mxu0 0.0
  %1959 = vmatpush2.msra.mxu0 0.0
  %1960 = vmatprep.subr.mxu0 0.0
  %1961 = vmatpush2.msra.mxu0 0.0
  %1962 = vmatprep.subr.mxu0 0.0
  %1963 = vmatpush2.msra.mxu0 0.0
  %1964 = vmatprep.subr.mxu0 0.0
  %1965 = vmatpush2.msra.mxu0 0.0
  %1966 = vmatprep.subr.mxu0 0.0
  %1967 = vmatpush2.msra.mxu0 0.0
  %1968 = vmatprep.subr.mxu0 0.0
  %1969 = vmatpush2.msra.mxu0 0.0
  %1970 = vmatprep.subr.mxu0 0.0
  %1971 = vmatpush2.msra.mxu0 0.0
  %1972 = vmatprep.subr.mxu0 0.0
  %1973 = vmatpush2.msra.mxu0 0.0
  %1974 = vmatprep.subr.mxu0 0.0
  %1975 = vmatpush2.msra.mxu0 0.0
  %1976 = vmatprep.subr.mxu0 0.0
  %1977 = vmatpush2.msra.mxu0 0.0
  %1978 = vmatprep.subr.mxu0 0.0
  %1979 = vmatpush2.msra.mxu0 0.0
  %1980 = vmatprep.subr.mxu0 0.0
  %1981 = vmatpush2.msra.mxu0 0.0
  %1982 = vmatprep.subr.mxu0 0.0
  %1983 = vmatpush2.msra.mxu0 0.0
  %1984 = vmatprep.subr.mxu0 0.0
  %1985 = vmatpush2.msra.mxu0 0.0
  %1986 = vmatprep.subr.mxu0 0.0
  %1987 = vmatpush2.msra.mxu0 0.0
  %1988 = vmatprep.subr.mxu0 0.0
  %1989 = vmatpush2.msra.mxu0 0.0
  %1990 = vmatprep.mubr.f32.mxu0 0.0
  %1991 = vmatmul.mubr.f32.gmra.mxu0 %v1853
  %v1992 = vpop.f32.mrf.mxu0
  %v1993 = vadd.f32 0.0, %v1992
  %v1994 = vpop.f32.mrf.mxu0
  %v1995 = vadd.f32 0.0, %v1994
  %1996 = vdwg.mxu0
  %2002 = vrot.lane.b32.xlu0 %v1822, 65
  %v2003 = vpop.permute.xlu0 %2002
  %2004 = vrot.lane.b32.xlu0 %v1823, 65
  %v2005 = vpop.permute.xlu0 %2004
  %2006 = vrot.lane.b32.xlu0 %v1824, 65
  %v2007 = vpop.permute.xlu0 %2006
  %2008 = vrot.lane.b32.xlu0 %v1825, 65
  %v2009 = vpop.permute.xlu0 %2008
  %2010 = vrot.lane.b32.xlu0 %v1826, 65
  %v2011 = vpop.permute.xlu0 %2010
  %v2012 = vsel %vm287, %v2003, %v2005
  %v2013 = vsel %vm287, %v2005, %v2007
  %v2014 = vsel %vm287, %v2007, %v2009
  %v2015 = vsel %vm287, %v2009, %v2011
  %v2021 = vsel %vm126, %v1827, 0
  %2023 = vmatprep.subr.mxu0 0.0
  %2024 = vmatpush1.msra.mxu0 0.0
  %2025 = vmatprep.subr.mxu0 0.0
  %2026 = vmatpush1.msra.mxu0 0.0
  %2027 = vmatprep.subr.mxu0 0.0
  %2028 = vmatpush1.msra.mxu0 0.0
  %2029 = vmatprep.subr.mxu0 0.0
  %2030 = vmatpush1.msra.mxu0 0.0
  %2031 = vmatprep.subr.mxu0 0.0
  %2032 = vmatpush1.msra.mxu0 0.0
  %2033 = vmatprep.subr.mxu0 0.0
  %2034 = vmatpush1.msra.mxu0 0.0
  %2035 = vmatprep.subr.mxu0 0.0
  %2036 = vmatpush1.msra.mxu0 0.0
  %2037 = vmatprep.subr.mxu0 0.0
  %2038 = vmatpush1.msra.mxu0 0.0
  %2039 = vmatprep.subr.mxu0 0.0
  %2040 = vmatpush1.msra.mxu0 0.0
  %2041 = vmatprep.subr.mxu0 0.0
  %2042 = vmatpush1.msra.mxu0 0.0
  %2043 = vmatprep.subr.mxu0 0.0
  %2044 = vmatpush1.msra.mxu0 0.0
  %2045 = vmatprep.subr.mxu0 0.0
  %2046 = vmatpush1.msra.mxu0 0.0
  %2047 = vmatprep.subr.mxu0 0.0
  %2048 = vmatpush1.msra.mxu0 0.0
  %2049 = vmatprep.subr.mxu0 0.0
  %2050 = vmatpush1.msra.mxu0 0.0
  %2051 = vmatprep.subr.mxu0 0.0
  %2052 = vmatpush1.msra.mxu0 0.0
  %2053 = vmatprep.subr.mxu0 %v2013
  %2054 = vmatpush1.msra.mxu0 %v2012
  %2055 = vmatprep.subr.mxu0 0.0
  %2056 = vmatpush2.msra.mxu0 0.0
  %2057 = vmatprep.subr.mxu0 0.0
  %2058 = vmatpush2.msra.mxu0 0.0
  %2059 = vmatprep.subr.mxu0 0.0
  %2060 = vmatpush2.msra.mxu0 0.0
  %2061 = vmatprep.subr.mxu0 0.0
  %2062 = vmatpush2.msra.mxu0 0.0
  %2063 = vmatprep.subr.mxu0 0.0
  %2064 = vmatpush2.msra.mxu0 0.0
  %2065 = vmatprep.subr.mxu0 0.0
  %2066 = vmatpush2.msra.mxu0 0.0
  %2067 = vmatprep.subr.mxu0 0.0
  %2068 = vmatpush2.msra.mxu0 0.0
  %2069 = vmatprep.subr.mxu0 0.0
  %2070 = vmatpush2.msra.mxu0 0.0
  %2071 = vmatprep.subr.mxu0 0.0
  %2072 = vmatpush2.msra.mxu0 0.0
  %2073 = vmatprep.subr.mxu0 0.0
  %2074 = vmatpush2.msra.mxu0 0.0
  %2075 = vmatprep.subr.mxu0 0.0
  %2076 = vmatpush2.msra.mxu0 0.0
  %2077 = vmatprep.subr.mxu0 0.0
  %2078 = vmatpush2.msra.mxu0 0.0
  %2079 = vmatprep.subr.mxu0 0.0
  %2080 = vmatpush2.msra.mxu0 0.0
  %2081 = vmatprep.subr.mxu0 0.0
  %2082 = vmatpush2.msra.mxu0 0.0
  %2083 = vmatprep.subr.mxu0 0.0
  %2084 = vmatpush2.msra.mxu0 0.0
  %2085 = vmatprep.subr.mxu0 0.0
  %2086 = vmatpush2.msra.mxu0 0.0
  %2087 = vmatprep.mubr.f32.mxu0 0.0
  %2088 = vmatmul.mubr.f32.gmra.mxu0 %v2021
  %v2089 = vpop.f32.mrf.mxu0
  %v2090 = vadd.f32 %v1922, %v2089
  %v2091 = vpop.f32.mrf.mxu0
  %v2092 = vadd.f32 %v1924, %v2091
  %2093 = vdwg.mxu0
  %2094 = vmatprep.subr.mxu0 0.0
  %2095 = vmatpush1.msra.mxu0 0.0
  %2096 = vmatprep.subr.mxu0 0.0
  %2097 = vmatpush1.msra.mxu0 0.0
  %2098 = vmatprep.subr.mxu0 0.0
  %2099 = vmatpush1.msra.mxu0 0.0
  %2100 = vmatprep.subr.mxu0 0.0
  %2101 = vmatpush1.msra.mxu0 0.0
  %2102 = vmatprep.subr.mxu0 0.0
  %2103 = vmatpush1.msra.mxu0 0.0
  %2104 = vmatprep.subr.mxu0 0.0
  %2105 = vmatpush1.msra.mxu0 0.0
  %2106 = vmatprep.subr.mxu0 0.0
  %2107 = vmatpush1.msra.mxu0 0.0
  %2108 = vmatprep.subr.mxu0 0.0
  %2109 = vmatpush1.msra.mxu0 0.0
  %2110 = vmatprep.subr.mxu0 0.0
  %2111 = vmatpush1.msra.mxu0 0.0
  %2112 = vmatprep.subr.mxu0 0.0
  %2113 = vmatpush1.msra.mxu0 0.0
  %2114 = vmatprep.subr.mxu0 0.0
  %2115 = vmatpush1.msra.mxu0 0.0
  %2116 = vmatprep.subr.mxu0 0.0
  %2117 = vmatpush1.msra.mxu0 0.0
  %2118 = vmatprep.subr.mxu0 0.0
  %2119 = vmatpush1.msra.mxu0 0.0
  %2120 = vmatprep.subr.mxu0 0.0
  %2121 = vmatpush1.msra.mxu0 0.0
  %2122 = vmatprep.subr.mxu0 0.0
  %2123 = vmatpush1.msra.mxu0 0.0
  %2124 = vmatprep.subr.mxu0 %v2015
  %2125 = vmatpush1.msra.mxu0 %v2014
  %2126 = vmatprep.subr.mxu0 0.0
  %2127 = vmatpush2.msra.mxu0 0.0
  %2128 = vmatprep.subr.mxu0 0.0
  %2129 = vmatpush2.msra.mxu0 0.0
  %2130 = vmatprep.subr.mxu0 0.0
  %2131 = vmatpush2.msra.mxu0 0.0
  %2132 = vmatprep.subr.mxu0 0.0
  %2133 = vmatpush2.msra.mxu0 0.0
  %2134 = vmatprep.subr.mxu0 0.0
  %2135 = vmatpush2.msra.mxu0 0.0
  %2136 = vmatprep.subr.mxu0 0.0
  %2137 = vmatpush2.msra.mxu0 0.0
  %2138 = vmatprep.subr.mxu0 0.0
  %2139 = vmatpush2.msra.mxu0 0.0
  %2140 = vmatprep.subr.mxu0 0.0
  %2141 = vmatpush2.msra.mxu0 0.0
  %2142 = vmatprep.subr.mxu0 0.0
  %2143 = vmatpush2.msra.mxu0 0.0
  %2144 = vmatprep.subr.mxu0 0.0
  %2145 = vmatpush2.msra.mxu0 0.0
  %2146 = vmatprep.subr.mxu0 0.0
  %2147 = vmatpush2.msra.mxu0 0.0
  %2148 = vmatprep.subr.mxu0 0.0
  %2149 = vmatpush2.msra.mxu0 0.0
  %2150 = vmatprep.subr.mxu0 0.0
  %2151 = vmatpush2.msra.mxu0 0.0
  %2152 = vmatprep.subr.mxu0 0.0
  %2153 = vmatpush2.msra.mxu0 0.0
  %2154 = vmatprep.subr.mxu0 0.0
  %2155 = vmatpush2.msra.mxu0 0.0
  %2156 = vmatprep.subr.mxu0 0.0
  %2157 = vmatpush2.msra.mxu0 0.0
  %2158 = vmatprep.mubr.f32.mxu0 0.0
  %2159 = vmatmul.mubr.f32.gmra.mxu0 %v2021
  %v2160 = vpop.f32.mrf.mxu0
  %v2161 = vadd.f32 %v1993, %v2160
  %v2162 = vpop.f32.mrf.mxu0
  %v2163 = vadd.f32 %v1995, %v2162
  %2164 = vdwg.mxu0
  %s2165 = scalar_lea.vmem %s2, 9
  %v2166 = vld [vmem:[%s2165] ss:$2 sm:$0xf]
  %v2168 = vlaneseq
  %v2169 = vshrl.u32 %v2168, 7
  %v2170 = vsub.s32 0, %v2169
  %v2171 = vrot.slane %v2166, %v2170
  %v2172 = vlaneseq
  %v2173 = vshrl.u32 %v2172, 7
  %v2174 = vsub.s32 1, %v2173
  %v2175 = vrot.slane %v2166, %v2174
  %v2176 = vlaneseq
  %v2177 = vshrl.u32 %v2176, 7
  %v2178 = vsub.s32 2, %v2177
  %v2179 = vrot.slane %v2166, %v2178
  %v2180 = vlaneseq
  %v2181 = vshrl.u32 %v2180, 7
  %v2182 = vsub.s32 3, %v2181
  %v2183 = vrot.slane %v2166, %v2182
  %2184 = vrot.lane.b32.xlu0 %v2171, 65
  %v2185 = vpop.permute.xlu0 %2184
  %2186 = vrot.lane.b32.xlu0 %v2175, 65
  %v2187 = vpop.permute.xlu0 %2186
  %2188 = vrot.lane.b32.xlu0 %v2179, 65
  %v2189 = vpop.permute.xlu0 %2188
  %2190 = vrot.lane.b32.xlu0 %v2183, 65
  %v2191 = vpop.permute.xlu0 %2190
  %v2192 = vsel %vm287, %v2185, %v2187
  %v2193 = vsel %vm287, %v2187, %v2189
  %v2194 = vsel %vm287, %v2189, %v2191
  %v2200 = vmul.f32 %v1782, %v2185
  %v2201 = vmul.f32 %v1783, %v2192
  %v2202 = vmul.f32 %v1784, %v2193
  %v2203 = vmul.f32 %v1785, %v2194
  %v2204 = vmul.f32 %v1786, %v2191
  %v2205 = vld [vmem:[%s481] sm:$0xff]
  %2211 = vrot.lane.b32.xlu0 %v2200, 63
  %v2212 = vpop.permute.xlu0 %2211
  %2213 = vrot.lane.b32.xlu0 %v2201, 63
  %v2214 = vpop.permute.xlu0 %2213
  %2215 = vrot.lane.b32.xlu0 %v2202, 63
  %v2216 = vpop.permute.xlu0 %2215
  %2217 = vrot.lane.b32.xlu0 %v2203, 63
  %v2218 = vpop.permute.xlu0 %2217
  %2219 = vrot.lane.b32.xlu0 %v2204, 63
  %v2220 = vpop.permute.xlu0 %2219
  %v2221 = vsel %vm85, %v2212, %v2214
  %v2222 = vsel %vm85, %v2214, %v2216
  %v2223 = vsel %vm85, %v2216, %v2218
  %v2224 = vsel %vm85, %v2218, %v2220
  %v2230 = vsel %vm126, %v2205, 0
  %2232 = vmatprep.subr.mxu0 0.0
  %2233 = vmatpush1.msra.mxu0 0.0
  %2234 = vmatprep.subr.mxu0 0.0
  %2235 = vmatpush1.msra.mxu0 0.0
  %2236 = vmatprep.subr.mxu0 0.0
  %2237 = vmatpush1.msra.mxu0 0.0
  %2238 = vmatprep.subr.mxu0 0.0
  %2239 = vmatpush1.msra.mxu0 0.0
  %2240 = vmatprep.subr.mxu0 0.0
  %2241 = vmatpush1.msra.mxu0 0.0
  %2242 = vmatprep.subr.mxu0 0.0
  %2243 = vmatpush1.msra.mxu0 0.0
  %2244 = vmatprep.subr.mxu0 0.0
  %2245 = vmatpush1.msra.mxu0 0.0
  %2246 = vmatprep.subr.mxu0 0.0
  %2247 = vmatpush1.msra.mxu0 0.0
  %2248 = vmatprep.subr.mxu0 0.0
  %2249 = vmatpush1.msra.mxu0 0.0
  %2250 = vmatprep.subr.mxu0 0.0
  %2251 = vmatpush1.msra.mxu0 0.0
  %2252 = vmatprep.subr.mxu0 0.0
  %2253 = vmatpush1.msra.mxu0 0.0
  %2254 = vmatprep.subr.mxu0 0.0
  %2255 = vmatpush1.msra.mxu0 0.0
  %2256 = vmatprep.subr.mxu0 0.0
  %2257 = vmatpush1.msra.mxu0 0.0
  %2258 = vmatprep.subr.mxu0 0.0
  %2259 = vmatpush1.msra.mxu0 0.0
  %2260 = vmatprep.subr.mxu0 0.0
  %2261 = vmatpush1.msra.mxu0 0.0
  %2262 = vmatprep.subr.mxu0 %v2222
  %2263 = vmatpush1.msra.mxu0 %v2221
  %2264 = vmatprep.subr.mxu0 0.0
  %2265 = vmatpush2.msra.mxu0 0.0
  %2266 = vmatprep.subr.mxu0 0.0
  %2267 = vmatpush2.msra.mxu0 0.0
  %2268 = vmatprep.subr.mxu0 0.0
  %2269 = vmatpush2.msra.mxu0 0.0
  %2270 = vmatprep.subr.mxu0 0.0
  %2271 = vmatpush2.msra.mxu0 0.0
  %2272 = vmatprep.subr.mxu0 0.0
  %2273 = vmatpush2.msra.mxu0 0.0
  %2274 = vmatprep.subr.mxu0 0.0
  %2275 = vmatpush2.msra.mxu0 0.0
  %2276 = vmatprep.subr.mxu0 0.0
  %2277 = vmatpush2.msra.mxu0 0.0
  %2278 = vmatprep.subr.mxu0 0.0
  %2279 = vmatpush2.msra.mxu0 0.0
  %2280 = vmatprep.subr.mxu0 0.0
  %2281 = vmatpush2.msra.mxu0 0.0
  %2282 = vmatprep.subr.mxu0 0.0
  %2283 = vmatpush2.msra.mxu0 0.0
  %2284 = vmatprep.subr.mxu0 0.0
  %2285 = vmatpush2.msra.mxu0 0.0
  %2286 = vmatprep.subr.mxu0 0.0
  %2287 = vmatpush2.msra.mxu0 0.0
  %2288 = vmatprep.subr.mxu0 0.0
  %2289 = vmatpush2.msra.mxu0 0.0
  %2290 = vmatprep.subr.mxu0 0.0
  %2291 = vmatpush2.msra.mxu0 0.0
  %2292 = vmatprep.subr.mxu0 0.0
  %2293 = vmatpush2.msra.mxu0 0.0
  %2294 = vmatprep.subr.mxu0 0.0
  %2295 = vmatpush2.msra.mxu0 0.0
  %2296 = vmatprep.mubr.f32.mxu0 0.0
  %2297 = vmatmul.mubr.f32.gmra.mxu0 %v2230
  %v2298 = vpop.f32.mrf.mxu0
  %v2299 = vadd.f32 0.0, %v2298
  %v2300 = vpop.f32.mrf.mxu0
  %v2301 = vadd.f32 0.0, %v2300
  %2302 = vdwg.mxu0
  %2303 = vmatprep.subr.mxu0 0.0
  %2304 = vmatpush1.msra.mxu0 0.0
  %2305 = vmatprep.subr.mxu0 0.0
  %2306 = vmatpush1.msra.mxu0 0.0
  %2307 = vmatprep.subr.mxu0 0.0
  %2308 = vmatpush1.msra.mxu0 0.0
  %2309 = vmatprep.subr.mxu0 0.0
  %2310 = vmatpush1.msra.mxu0 0.0
  %2311 = vmatprep.subr.mxu0 0.0
  %2312 = vmatpush1.msra.mxu0 0.0
  %2313 = vmatprep.subr.mxu0 0.0
  %2314 = vmatpush1.msra.mxu0 0.0
  %2315 = vmatprep.subr.mxu0 0.0
  %2316 = vmatpush1.msra.mxu0 0.0
  %2317 = vmatprep.subr.mxu0 0.0
  %2318 = vmatpush1.msra.mxu0 0.0
  %2319 = vmatprep.subr.mxu0 0.0
  %2320 = vmatpush1.msra.mxu0 0.0
  %2321 = vmatprep.subr.mxu0 0.0
  %2322 = vmatpush1.msra.mxu0 0.0
  %2323 = vmatprep.subr.mxu0 0.0
  %2324 = vmatpush1.msra.mxu0 0.0
  %2325 = vmatprep.subr.mxu0 0.0
  %2326 = vmatpush1.msra.mxu0 0.0
  %2327 = vmatprep.subr.mxu0 0.0
  %2328 = vmatpush1.msra.mxu0 0.0
  %2329 = vmatprep.subr.mxu0 0.0
  %2330 = vmatpush1.msra.mxu0 0.0
  %2331 = vmatprep.subr.mxu0 0.0
  %2332 = vmatpush1.msra.mxu0 0.0
  %2333 = vmatprep.subr.mxu0 %v2224
  %2334 = vmatpush1.msra.mxu0 %v2223
  %2335 = vmatprep.subr.mxu0 0.0
  %2336 = vmatpush2.msra.mxu0 0.0
  %2337 = vmatprep.subr.mxu0 0.0
  %2338 = vmatpush2.msra.mxu0 0.0
  %2339 = vmatprep.subr.mxu0 0.0
  %2340 = vmatpush2.msra.mxu0 0.0
  %2341 = vmatprep.subr.mxu0 0.0
  %2342 = vmatpush2.msra.mxu0 0.0
  %2343 = vmatprep.subr.mxu0 0.0
  %2344 = vmatpush2.msra.mxu0 0.0
  %2345 = vmatprep.subr.mxu0 0.0
  %2346 = vmatpush2.msra.mxu0 0.0
  %2347 = vmatprep.subr.mxu0 0.0
  %2348 = vmatpush2.msra.mxu0 0.0
  %2349 = vmatprep.subr.mxu0 0.0
  %2350 = vmatpush2.msra.mxu0 0.0
  %2351 = vmatprep.subr.mxu0 0.0
  %2352 = vmatpush2.msra.mxu0 0.0
  %2353 = vmatprep.subr.mxu0 0.0
  %2354 = vmatpush2.msra.mxu0 0.0
  %2355 = vmatprep.subr.mxu0 0.0
  %2356 = vmatpush2.msra.mxu0 0.0
  %2357 = vmatprep.subr.mxu0 0.0
  %2358 = vmatpush2.msra.mxu0 0.0
  %2359 = vmatprep.subr.mxu0 0.0
  %2360 = vmatpush2.msra.mxu0 0.0
  %2361 = vmatprep.subr.mxu0 0.0
  %2362 = vmatpush2.msra.mxu0 0.0
  %2363 = vmatprep.subr.mxu0 0.0
  %2364 = vmatpush2.msra.mxu0 0.0
  %2365 = vmatprep.subr.mxu0 0.0
  %2366 = vmatpush2.msra.mxu0 0.0
  %2367 = vmatprep.mubr.f32.mxu0 0.0
  %2368 = vmatmul.mubr.f32.gmra.mxu0 %v2230
  %v2369 = vpop.f32.mrf.mxu0
  %v2370 = vadd.f32 0.0, %v2369
  %v2371 = vpop.f32.mrf.mxu0
  %v2372 = vadd.f32 0.0, %v2371
  %2373 = vdwg.mxu0
  %v2374 = vadd.f32 %v2090, %v2299
  %v2375 = vadd.f32 %v2092, %v2301
  %v2376 = vadd.f32 %v2161, %v2370
  %v2377 = vadd.f32 %v2163, %v2372
  %2378 = vrot.lane.b32.xlu0 %v1793, 127
  %v2379 = vpop.permute.xlu0 %2378
  %2380 = vrot.lane.b32.xlu0 %v1797, 127
  %v2381 = vpop.permute.xlu0 %2380
  %2382 = vrot.lane.b32.xlu0 %v1801, 127
  %v2383 = vpop.permute.xlu0 %2382
  %2384 = vrot.lane.b32.xlu0 %v1805, 127
  %v2385 = vpop.permute.xlu0 %2384
  %v2386 = vsel %vm663, %v2379, %v2381
  %v2387 = vsel %vm663, %v2381, %v2383
  %v2388 = vsel %vm663, %v2383, %v2385
  %v2394 = vmul.f32 %v1782, %v2379
  %v2395 = vmul.f32 %v1783, %v2386
  %v2396 = vmul.f32 %v1784, %v2387
  %v2397 = vmul.f32 %v1785, %v2388
  %v2398 = vmul.f32 %v1786, %v2385
  %v2399 = vld [vmem:[%s677] sm:$0xff]
  %2405 = vrot.lane.b32.xlu0 %v2394, 1
  %v2406 = vpop.permute.xlu0 %2405
  %2407 = vrot.lane.b32.xlu0 %v2395, 1
  %v2408 = vpop.permute.xlu0 %2407
  %2409 = vrot.lane.b32.xlu0 %v2396, 1
  %v2410 = vpop.permute.xlu0 %2409
  %2411 = vrot.lane.b32.xlu0 %v2397, 1
  %v2412 = vpop.permute.xlu0 %2411
  %2413 = vrot.lane.b32.xlu0 %v2398, 1
  %v2414 = vpop.permute.xlu0 %2413
  %v2415 = vsel %vm694, %v2406, %v2408
  %v2416 = vsel %vm694, %v2408, %v2410
  %v2417 = vsel %vm694, %v2410, %v2412
  %v2418 = vsel %vm694, %v2412, %v2414
  %v2424 = vsel %vm126, %v2399, 0
  %2426 = vmatprep.subr.mxu0 0.0
  %2427 = vmatpush1.msra.mxu0 0.0
  %2428 = vmatprep.subr.mxu0 0.0
  %2429 = vmatpush1.msra.mxu0 0.0
  %2430 = vmatprep.subr.mxu0 0.0
  %2431 = vmatpush1.msra.mxu0 0.0
  %2432 = vmatprep.subr.mxu0 0.0
  %2433 = vmatpush1.msra.mxu0 0.0
  %2434 = vmatprep.subr.mxu0 0.0
  %2435 = vmatpush1.msra.mxu0 0.0
  %2436 = vmatprep.subr.mxu0 0.0
  %2437 = vmatpush1.msra.mxu0 0.0
  %2438 = vmatprep.subr.mxu0 0.0
  %2439 = vmatpush1.msra.mxu0 0.0
  %2440 = vmatprep.subr.mxu0 0.0
  %2441 = vmatpush1.msra.mxu0 0.0
  %2442 = vmatprep.subr.mxu0 0.0
  %2443 = vmatpush1.msra.mxu0 0.0
  %2444 = vmatprep.subr.mxu0 0.0
  %2445 = vmatpush1.msra.mxu0 0.0
  %2446 = vmatprep.subr.mxu0 0.0
  %2447 = vmatpush1.msra.mxu0 0.0
  %2448 = vmatprep.subr.mxu0 0.0
  %2449 = vmatpush1.msra.mxu0 0.0
  %2450 = vmatprep.subr.mxu0 0.0
  %2451 = vmatpush1.msra.mxu0 0.0
  %2452 = vmatprep.subr.mxu0 0.0
  %2453 = vmatpush1.msra.mxu0 0.0
  %2454 = vmatprep.subr.mxu0 0.0
  %2455 = vmatpush1.msra.mxu0 0.0
  %2456 = vmatprep.subr.mxu0 %v2416
  %2457 = vmatpush1.msra.mxu0 %v2415
  %2458 = vmatprep.subr.mxu0 0.0
  %2459 = vmatpush2.msra.mxu0 0.0
  %2460 = vmatprep.subr.mxu0 0.0
  %2461 = vmatpush2.msra.mxu0 0.0
  %2462 = vmatprep.subr.mxu0 0.0
  %2463 = vmatpush2.msra.mxu0 0.0
  %2464 = vmatprep.subr.mxu0 0.0
  %2465 = vmatpush2.msra.mxu0 0.0
  %2466 = vmatprep.subr.mxu0 0.0
  %2467 = vmatpush2.msra.mxu0 0.0
  %2468 = vmatprep.subr.mxu0 0.0
  %2469 = vmatpush2.msra.mxu0 0.0
  %2470 = vmatprep.subr.mxu0 0.0
  %2471 = vmatpush2.msra.mxu0 0.0
  %2472 = vmatprep.subr.mxu0 0.0
  %2473 = vmatpush2.msra.mxu0 0.0
  %2474 = vmatprep.subr.mxu0 0.0
  %2475 = vmatpush2.msra.mxu0 0.0
  %2476 = vmatprep.subr.mxu0 0.0
  %2477 = vmatpush2.msra.mxu0 0.0
  %2478 = vmatprep.subr.mxu0 0.0
  %2479 = vmatpush2.msra.mxu0 0.0
  %2480 = vmatprep.subr.mxu0 0.0
  %2481 = vmatpush2.msra.mxu0 0.0
  %2482 = vmatprep.subr.mxu0 0.0
  %2483 = vmatpush2.msra.mxu0 0.0
  %2484 = vmatprep.subr.mxu0 0.0
  %2485 = vmatpush2.msra.mxu0 0.0
  %2486 = vmatprep.subr.mxu0 0.0
  %2487 = vmatpush2.msra.mxu0 0.0
  %2488 = vmatprep.subr.mxu0 0.0
  %2489 = vmatpush2.msra.mxu0 0.0
  %2490 = vmatprep.mubr.f32.mxu0 0.0
  %2491 = vmatmul.mubr.f32.gmra.mxu0 %v2424
  %v2492 = vpop.f32.mrf.mxu0
  %v2493 = vadd.f32 0.0, %v2492
  %v2494 = vpop.f32.mrf.mxu0
  %v2495 = vadd.f32 0.0, %v2494
  %2496 = vdwg.mxu0
  %2497 = vmatprep.subr.mxu0 0.0
  %2498 = vmatpush1.msra.mxu0 0.0
  %2499 = vmatprep.subr.mxu0 0.0
  %2500 = vmatpush1.msra.mxu0 0.0
  %2501 = vmatprep.subr.mxu0 0.0
  %2502 = vmatpush1.msra.mxu0 0.0
  %2503 = vmatprep.subr.mxu0 0.0
  %2504 = vmatpush1.msra.mxu0 0.0
  %2505 = vmatprep.subr.mxu0 0.0
  %2506 = vmatpush1.msra.mxu0 0.0
  %2507 = vmatprep.subr.mxu0 0.0
  %2508 = vmatpush1.msra.mxu0 0.0
  %2509 = vmatprep.subr.mxu0 0.0
  %2510 = vmatpush1.msra.mxu0 0.0
  %2511 = vmatprep.subr.mxu0 0.0
  %2512 = vmatpush1.msra.mxu0 0.0
  %2513 = vmatprep.subr.mxu0 0.0
  %2514 = vmatpush1.msra.mxu0 0.0
  %2515 = vmatprep.subr.mxu0 0.0
  %2516 = vmatpush1.msra.mxu0 0.0
  %2517 = vmatprep.subr.mxu0 0.0
  %2518 = vmatpush1.msra.mxu0 0.0
  %2519 = vmatprep.subr.mxu0 0.0
  %2520 = vmatpush1.msra.mxu0 0.0
  %2521 = vmatprep.subr.mxu0 0.0
  %2522 = vmatpush1.msra.mxu0 0.0
  %2523 = vmatprep.subr.mxu0 0.0
  %2524 = vmatpush1.msra.mxu0 0.0
  %2525 = vmatprep.subr.mxu0 0.0
  %2526 = vmatpush1.msra.mxu0 0.0
  %2527 = vmatprep.subr.mxu0 %v2418
  %2528 = vmatpush1.msra.mxu0 %v2417
  %2529 = vmatprep.subr.mxu0 0.0
  %2530 = vmatpush2.msra.mxu0 0.0
  %2531 = vmatprep.subr.mxu0 0.0
  %2532 = vmatpush2.msra.mxu0 0.0
  %2533 = vmatprep.subr.mxu0 0.0
  %2534 = vmatpush2.msra.mxu0 0.0
  %2535 = vmatprep.subr.mxu0 0.0
  %2536 = vmatpush2.msra.mxu0 0.0
  %2537 = vmatprep.subr.mxu0 0.0
  %2538 = vmatpush2.msra.mxu0 0.0
  %2539 = vmatprep.subr.mxu0 0.0
  %2540 = vmatpush2.msra.mxu0 0.0
  %2541 = vmatprep.subr.mxu0 0.0
  %2542 = vmatpush2.msra.mxu0 0.0
  %2543 = vmatprep.subr.mxu0 0.0
  %2544 = vmatpush2.msra.mxu0 0.0
  %2545 = vmatprep.subr.mxu0 0.0
  %2546 = vmatpush2.msra.mxu0 0.0
  %2547 = vmatprep.subr.mxu0 0.0
  %2548 = vmatpush2.msra.mxu0 0.0
  %2549 = vmatprep.subr.mxu0 0.0
  %2550 = vmatpush2.msra.mxu0 0.0
  %2551 = vmatprep.subr.mxu0 0.0
  %2552 = vmatpush2.msra.mxu0 0.0
  %2553 = vmatprep.subr.mxu0 0.0
  %2554 = vmatpush2.msra.mxu0 0.0
  %2555 = vmatprep.subr.mxu0 0.0
  %2556 = vmatpush2.msra.mxu0 0.0
  %2557 = vmatprep.subr.mxu0 0.0
  %2558 = vmatpush2.msra.mxu0 0.0
  %2559 = vmatprep.subr.mxu0 0.0
  %2560 = vmatpush2.msra.mxu0 0.0
  %2561 = vmatprep.mubr.f32.mxu0 0.0
  %2562 = vmatmul.mubr.f32.gmra.mxu0 %v2424
  %v2563 = vpop.f32.mrf.mxu0
  %v2564 = vadd.f32 0.0, %v2563
  %v2565 = vpop.f32.mrf.mxu0
  %v2566 = vadd.f32 0.0, %v2565
  %2567 = vdwg.mxu0
  %v2568 = vadd.f32 %v2374, %v2493
  %v2569 = vadd.f32 %v2375, %v2495
  %v2570 = vadd.f32 %v2376, %v2564
  %v2571 = vadd.f32 %v2377, %v2566
  %v2572 = vld [vmem:[%s852] sm:$0xff]
  %v2574 = vsel %vm126, %v2572, 0
  %2576 = vmatprep.subr.mxu0 0.0
  %2577 = vmatpush1.msra.mxu0 0.0
  %2578 = vmatprep.subr.mxu0 0.0
  %2579 = vmatpush1.msra.mxu0 0.0
  %2580 = vmatprep.subr.mxu0 0.0
  %2581 = vmatpush1.msra.mxu0 0.0
  %2582 = vmatprep.subr.mxu0 0.0
  %2583 = vmatpush1.msra.mxu0 0.0
  %2584 = vmatprep.subr.mxu0 0.0
  %2585 = vmatpush1.msra.mxu0 0.0
  %2586 = vmatprep.subr.mxu0 0.0
  %2587 = vmatpush1.msra.mxu0 0.0
  %2588 = vmatprep.subr.mxu0 0.0
  %2589 = vmatpush1.msra.mxu0 0.0
  %2590 = vmatprep.subr.mxu0 0.0
  %2591 = vmatpush1.msra.mxu0 0.0
  %2592 = vmatprep.subr.mxu0 0.0
  %2593 = vmatpush1.msra.mxu0 0.0
  %2594 = vmatprep.subr.mxu0 0.0
  %2595 = vmatpush1.msra.mxu0 0.0
  %2596 = vmatprep.subr.mxu0 0.0
  %2597 = vmatpush1.msra.mxu0 0.0
  %2598 = vmatprep.subr.mxu0 0.0
  %2599 = vmatpush1.msra.mxu0 0.0
  %2600 = vmatprep.subr.mxu0 0.0
  %2601 = vmatpush1.msra.mxu0 0.0
  %2602 = vmatprep.subr.mxu0 0.0
  %2603 = vmatpush1.msra.mxu0 0.0
  %2604 = vmatprep.subr.mxu0 0.0
  %2605 = vmatpush1.msra.mxu0 0.0
  %2606 = vmatprep.subr.mxu0 %v1784
  %2607 = vmatpush1.msra.mxu0 %v1783
  %2608 = vmatprep.subr.mxu0 0.0
  %2609 = vmatpush2.msra.mxu0 0.0
  %2610 = vmatprep.subr.mxu0 0.0
  %2611 = vmatpush2.msra.mxu0 0.0
  %2612 = vmatprep.subr.mxu0 0.0
  %2613 = vmatpush2.msra.mxu0 0.0
  %2614 = vmatprep.subr.mxu0 0.0
  %2615 = vmatpush2.msra.mxu0 0.0
  %2616 = vmatprep.subr.mxu0 0.0
  %2617 = vmatpush2.msra.mxu0 0.0
  %2618 = vmatprep.subr.mxu0 0.0
  %2619 = vmatpush2.msra.mxu0 0.0
  %2620 = vmatprep.subr.mxu0 0.0
  %2621 = vmatpush2.msra.mxu0 0.0
  %2622 = vmatprep.subr.mxu0 0.0
  %2623 = vmatpush2.msra.mxu0 0.0
  %2624 = vmatprep.subr.mxu0 0.0
  %2625 = vmatpush2.msra.mxu0 0.0
  %2626 = vmatprep.subr.mxu0 0.0
  %2627 = vmatpush2.msra.mxu0 0.0
  %2628 = vmatprep.subr.mxu0 0.0
  %2629 = vmatpush2.msra.mxu0 0.0
  %2630 = vmatprep.subr.mxu0 0.0
  %2631 = vmatpush2.msra.mxu0 0.0
  %2632 = vmatprep.subr.mxu0 0.0
  %2633 = vmatpush2.msra.mxu0 0.0
  %2634 = vmatprep.subr.mxu0 0.0
  %2635 = vmatpush2.msra.mxu0 0.0
  %2636 = vmatprep.subr.mxu0 0.0
  %2637 = vmatpush2.msra.mxu0 0.0
  %2638 = vmatprep.subr.mxu0 0.0
  %2639 = vmatpush2.msra.mxu0 0.0
  %2640 = vmatprep.mubr.f32.mxu0 0.0
  %2641 = vmatmul.mubr.f32.gmra.mxu0 %v2574
  %v2642 = vpop.f32.mrf.mxu0
  %v2643 = vadd.f32 0.0, %v2642
  %v2644 = vpop.f32.mrf.mxu0
  %v2645 = vadd.f32 0.0, %v2644
  %2646 = vdwg.mxu0
  %2647 = vmatprep.subr.mxu0 0.0
  %2648 = vmatpush1.msra.mxu0 0.0
  %2649 = vmatprep.subr.mxu0 0.0
  %2650 = vmatpush1.msra.mxu0 0.0
  %2651 = vmatprep.subr.mxu0 0.0
  %2652 = vmatpush1.msra.mxu0 0.0
  %2653 = vmatprep.subr.mxu0 0.0
  %2654 = vmatpush1.msra.mxu0 0.0
  %2655 = vmatprep.subr.mxu0 0.0
  %2656 = vmatpush1.msra.mxu0 0.0
  %2657 = vmatprep.subr.mxu0 0.0
  %2658 = vmatpush1.msra.mxu0 0.0
  %2659 = vmatprep.subr.mxu0 0.0
  %2660 = vmatpush1.msra.mxu0 0.0
  %2661 = vmatprep.subr.mxu0 0.0
  %2662 = vmatpush1.msra.mxu0 0.0
  %2663 = vmatprep.subr.mxu0 0.0
  %2664 = vmatpush1.msra.mxu0 0.0
  %2665 = vmatprep.subr.mxu0 0.0
  %2666 = vmatpush1.msra.mxu0 0.0
  %2667 = vmatprep.subr.mxu0 0.0
  %2668 = vmatpush1.msra.mxu0 0.0
  %2669 = vmatprep.subr.mxu0 0.0
  %2670 = vmatpush1.msra.mxu0 0.0
  %2671 = vmatprep.subr.mxu0 0.0
  %2672 = vmatpush1.msra.mxu0 0.0
  %2673 = vmatprep.subr.mxu0 0.0
  %2674 = vmatpush1.msra.mxu0 0.0
  %2675 = vmatprep.subr.mxu0 0.0
  %2676 = vmatpush1.msra.mxu0 0.0
  %2677 = vmatprep.subr.mxu0 %v1786
  %2678 = vmatpush1.msra.mxu0 %v1785
  %2679 = vmatprep.subr.mxu0 0.0
  %2680 = vmatpush2.msra.mxu0 0.0
  %2681 = vmatprep.subr.mxu0 0.0
  %2682 = vmatpush2.msra.mxu0 0.0
  %2683 = vmatprep.subr.mxu0 0.0
  %2684 = vmatpush2.msra.mxu0 0.0
  %2685 = vmatprep.subr.mxu0 0.0
  %2686 = vmatpush2.msra.mxu0 0.0
  %2687 = vmatprep.subr.mxu0 0.0
  %2688 = vmatpush2.msra.mxu0 0.0
  %2689 = vmatprep.subr.mxu0 0.0
  %2690 = vmatpush2.msra.mxu0 0.0
  %2691 = vmatprep.subr.mxu0 0.0
  %2692 = vmatpush2.msra.mxu0 0.0
  %2693 = vmatprep.subr.mxu0 0.0
  %2694 = vmatpush2.msra.mxu0 0.0
  %2695 = vmatprep.subr.mxu0 0.0
  %2696 = vmatpush2.msra.mxu0 0.0
  %2697 = vmatprep.subr.mxu0 0.0
  %2698 = vmatpush2.msra.mxu0 0.0
  %2699 = vmatprep.subr.mxu0 0.0
  %2700 = vmatpush2.msra.mxu0 0.0
  %2701 = vmatprep.subr.mxu0 0.0
  %2702 = vmatpush2.msra.mxu0 0.0
  %2703 = vmatprep.subr.mxu0 0.0
  %2704 = vmatpush2.msra.mxu0 0.0
  %2705 = vmatprep.subr.mxu0 0.0
  %2706 = vmatpush2.msra.mxu0 0.0
  %2707 = vmatprep.subr.mxu0 0.0
  %2708 = vmatpush2.msra.mxu0 0.0
  %2709 = vmatprep.subr.mxu0 0.0
  %2710 = vmatpush2.msra.mxu0 0.0
  %2711 = vmatprep.mubr.f32.mxu0 0.0
  %2712 = vmatmul.mubr.f32.gmra.mxu0 %v2574
  %v2713 = vpop.f32.mrf.mxu0
  %v2714 = vadd.f32 0.0, %v2713
  %v2715 = vpop.f32.mrf.mxu0
  %v2716 = vadd.f32 0.0, %v2715
  %2717 = vdwg.mxu0
  %v2718 = vadd.f32 %v2568, %v2643
  %v2719 = vadd.f32 %v2569, %v2645
  %v2720 = vadd.f32 %v2570, %v2714
  %v2721 = vadd.f32 %v2571, %v2716
  %v2722 = vld [vmem:[#allocation2 + $0x28] sm:$0xff]
  %v2723 = vld [vmem:[#allocation2 + $0x30] sm:$0xff]
  %v2724 = vld [vmem:[#allocation2 + $0x38] sm:$0xff]
  %v2725 = vld [vmem:[#allocation2 + $0x40] sm:$0xff]
  %v2726 = vld [vmem:[#allocation2 + $0x48] sm:$0xff]
  %2727 = vrot.lane.b32.xlu0 %v2171, 1
  %v2728 = vpop.permute.xlu0 %2727
  %2729 = vrot.lane.b32.xlu0 %v2175, 1
  %v2730 = vpop.permute.xlu0 %2729
  %2731 = vrot.lane.b32.xlu0 %v2179, 1
  %v2732 = vpop.permute.xlu0 %2731
  %2733 = vrot.lane.b32.xlu0 %v2183, 1
  %v2734 = vpop.permute.xlu0 %2733
  %v2735 = vsel %vm694, %v2728, %v2730
  %v2736 = vsel %vm694, %v2730, %v2732
  %v2737 = vsel %vm694, %v2732, %v2734
  %v2743 = vmul.f32 %v2722, %v2728
  %v2744 = vmul.f32 %v2723, %v2735
  %v2745 = vmul.f32 %v2724, %v2736
  %v2746 = vmul.f32 %v2725, %v2737
  %v2747 = vmul.f32 %v2726, %v2734
  %v2748 = vld [vmem:[%s1029] sm:$0xff]
  %2754 = vrot.lane.b32.xlu0 %v2743, 127
  %v2755 = vpop.permute.xlu0 %2754
  %2756 = vrot.lane.b32.xlu0 %v2744, 127
  %v2757 = vpop.permute.xlu0 %2756
  %2758 = vrot.lane.b32.xlu0 %v2745, 127
  %v2759 = vpop.permute.xlu0 %2758
  %2760 = vrot.lane.b32.xlu0 %v2746, 127
  %v2761 = vpop.permute.xlu0 %2760
  %2762 = vrot.lane.b32.xlu0 %v2747, 127
  %v2763 = vpop.permute.xlu0 %2762
  %v2764 = vsel %vm663, %v2755, %v2757
  %v2765 = vsel %vm663, %v2757, %v2759
  %v2766 = vsel %vm663, %v2759, %v2761
  %v2767 = vsel %vm663, %v2761, %v2763
  %v2773 = vsel %vm126, %v2748, 0
  %2775 = vmatprep.subr.mxu0 0.0
  %2776 = vmatpush1.msra.mxu0 0.0
  %2777 = vmatprep.subr.mxu0 0.0
  %2778 = vmatpush1.msra.mxu0 0.0
  %2779 = vmatprep.subr.mxu0 0.0
  %2780 = vmatpush1.msra.mxu0 0.0
  %2781 = vmatprep.subr.mxu0 0.0
  %2782 = vmatpush1.msra.mxu0 0.0
  %2783 = vmatprep.subr.mxu0 0.0
  %2784 = vmatpush1.msra.mxu0 0.0
  %2785 = vmatprep.subr.mxu0 0.0
  %2786 = vmatpush1.msra.mxu0 0.0
  %2787 = vmatprep.subr.mxu0 0.0
  %2788 = vmatpush1.msra.mxu0 0.0
  %2789 = vmatprep.subr.mxu0 0.0
  %2790 = vmatpush1.msra.mxu0 0.0
  %2791 = vmatprep.subr.mxu0 0.0
  %2792 = vmatpush1.msra.mxu0 0.0
  %2793 = vmatprep.subr.mxu0 0.0
  %2794 = vmatpush1.msra.mxu0 0.0
  %2795 = vmatprep.subr.mxu0 0.0
  %2796 = vmatpush1.msra.mxu0 0.0
  %2797 = vmatprep.subr.mxu0 0.0
  %2798 = vmatpush1.msra.mxu0 0.0
  %2799 = vmatprep.subr.mxu0 0.0
  %2800 = vmatpush1.msra.mxu0 0.0
  %2801 = vmatprep.subr.mxu0 0.0
  %2802 = vmatpush1.msra.mxu0 0.0
  %2803 = vmatprep.subr.mxu0 0.0
  %2804 = vmatpush1.msra.mxu0 0.0
  %2805 = vmatprep.subr.mxu0 %v2765
  %2806 = vmatpush1.msra.mxu0 %v2764
  %2807 = vmatprep.subr.mxu0 0.0
  %2808 = vmatpush2.msra.mxu0 0.0
  %2809 = vmatprep.subr.mxu0 0.0
  %2810 = vmatpush2.msra.mxu0 0.0
  %2811 = vmatprep.subr.mxu0 0.0
  %2812 = vmatpush2.msra.mxu0 0.0
  %2813 = vmatprep.subr.mxu0 0.0
  %2814 = vmatpush2.msra.mxu0 0.0
  %2815 = vmatprep.subr.mxu0 0.0
  %2816 = vmatpush2.msra.mxu0 0.0
  %2817 = vmatprep.subr.mxu0 0.0
  %2818 = vmatpush2.msra.mxu0 0.0
  %2819 = vmatprep.subr.mxu0 0.0
  %2820 = vmatpush2.msra.mxu0 0.0
  %2821 = vmatprep.subr.mxu0 0.0
  %2822 = vmatpush2.msra.mxu0 0.0
  %2823 = vmatprep.subr.mxu0 0.0
  %2824 = vmatpush2.msra.mxu0 0.0
  %2825 = vmatprep.subr.mxu0 0.0
  %2826 = vmatpush2.msra.mxu0 0.0
  %2827 = vmatprep.subr.mxu0 0.0
  %2828 = vmatpush2.msra.mxu0 0.0
  %2829 = vmatprep.subr.mxu0 0.0
  %2830 = vmatpush2.msra.mxu0 0.0
  %2831 = vmatprep.subr.mxu0 0.0
  %2832 = vmatpush2.msra.mxu0 0.0
  %2833 = vmatprep.subr.mxu0 0.0
  %2834 = vmatpush2.msra.mxu0 0.0
  %2835 = vmatprep.subr.mxu0 0.0
  %2836 = vmatpush2.msra.mxu0 0.0
  %2837 = vmatprep.subr.mxu0 0.0
  %2838 = vmatpush2.msra.mxu0 0.0
  %2839 = vmatprep.mubr.f32.mxu0 0.0
  %2840 = vmatmul.mubr.f32.gmra.mxu0 %v2773
  %v2841 = vpop.f32.mrf.mxu0
  %v2842 = vadd.f32 0.0, %v2841
  %v2843 = vpop.f32.mrf.mxu0
  %v2844 = vadd.f32 0.0, %v2843
  %2845 = vdwg.mxu0
  %2846 = vmatprep.subr.mxu0 0.0
  %2847 = vmatpush1.msra.mxu0 0.0
  %2848 = vmatprep.subr.mxu0 0.0
  %2849 = vmatpush1.msra.mxu0 0.0
  %2850 = vmatprep.subr.mxu0 0.0
  %2851 = vmatpush1.msra.mxu0 0.0
  %2852 = vmatprep.subr.mxu0 0.0
  %2853 = vmatpush1.msra.mxu0 0.0
  %2854 = vmatprep.subr.mxu0 0.0
  %2855 = vmatpush1.msra.mxu0 0.0
  %2856 = vmatprep.subr.mxu0 0.0
  %2857 = vmatpush1.msra.mxu0 0.0
  %2858 = vmatprep.subr.mxu0 0.0
  %2859 = vmatpush1.msra.mxu0 0.0
  %2860 = vmatprep.subr.mxu0 0.0
  %2861 = vmatpush1.msra.mxu0 0.0
  %2862 = vmatprep.subr.mxu0 0.0
  %2863 = vmatpush1.msra.mxu0 0.0
  %2864 = vmatprep.subr.mxu0 0.0
  %2865 = vmatpush1.msra.mxu0 0.0
  %2866 = vmatprep.subr.mxu0 0.0
  %2867 = vmatpush1.msra.mxu0 0.0
  %2868 = vmatprep.subr.mxu0 0.0
  %2869 = vmatpush1.msra.mxu0 0.0
  %2870 = vmatprep.subr.mxu0 0.0
  %2871 = vmatpush1.msra.mxu0 0.0
  %2872 = vmatprep.subr.mxu0 0.0
  %2873 = vmatpush1.msra.mxu0 0.0
  %2874 = vmatprep.subr.mxu0 0.0
  %2875 = vmatpush1.msra.mxu0 0.0
  %2876 = vmatprep.subr.mxu0 %v2767
  %2877 = vmatpush1.msra.mxu0 %v2766
  %2878 = vmatprep.subr.mxu0 0.0
  %2879 = vmatpush2.msra.mxu0 0.0
  %2880 = vmatprep.subr.mxu0 0.0
  %2881 = vmatpush2.msra.mxu0 0.0
  %2882 = vmatprep.subr.mxu0 0.0
  %2883 = vmatpush2.msra.mxu0 0.0
  %2884 = vmatprep.subr.mxu0 0.0
  %2885 = vmatpush2.msra.mxu0 0.0
  %2886 = vmatprep.subr.mxu0 0.0
  %2887 = vmatpush2.msra.mxu0 0.0
  %2888 = vmatprep.subr.mxu0 0.0
  %2889 = vmatpush2.msra.mxu0 0.0
  %2890 = vmatprep.subr.mxu0 0.0
  %2891 = vmatpush2.msra.mxu0 0.0
  %2892 = vmatprep.subr.mxu0 0.0
  %2893 = vmatpush2.msra.mxu0 0.0
  %2894 = vmatprep.subr.mxu0 0.0
  %2895 = vmatpush2.msra.mxu0 0.0
  %2896 = vmatprep.subr.mxu0 0.0
  %2897 = vmatpush2.msra.mxu0 0.0
  %2898 = vmatprep.subr.mxu0 0.0
  %2899 = vmatpush2.msra.mxu0 0.0
  %2900 = vmatprep.subr.mxu0 0.0
  %2901 = vmatpush2.msra.mxu0 0.0
  %2902 = vmatprep.subr.mxu0 0.0
  %2903 = vmatpush2.msra.mxu0 0.0
  %2904 = vmatprep.subr.mxu0 0.0
  %2905 = vmatpush2.msra.mxu0 0.0
  %2906 = vmatprep.subr.mxu0 0.0
  %2907 = vmatpush2.msra.mxu0 0.0
  %2908 = vmatprep.subr.mxu0 0.0
  %2909 = vmatpush2.msra.mxu0 0.0
  %2910 = vmatprep.mubr.f32.mxu0 0.0
  %2911 = vmatmul.mubr.f32.gmra.mxu0 %v2773
  %v2912 = vpop.f32.mrf.mxu0
  %v2913 = vadd.f32 0.0, %v2912
  %v2914 = vpop.f32.mrf.mxu0
  %v2915 = vadd.f32 0.0, %v2914
  %2916 = vdwg.mxu0
  %v2917 = vadd.f32 %v2718, %v2842
  %v2918 = vadd.f32 %v2719, %v2844
  %v2919 = vadd.f32 %v2720, %v2913
  %v2920 = vadd.f32 %v2721, %v2915
  %v2921 = vmul.f32 %v2722, %v1807
  %v2922 = vmul.f32 %v2723, %v1814
  %v2923 = vmul.f32 %v2724, %v1815
  %v2924 = vmul.f32 %v2725, %v1816
  %v2925 = vmul.f32 %v2726, %v1813
  %v2926 = vld [vmem:[%s1208] sm:$0xff]
  %2932 = vrot.lane.b32.xlu0 %v2921, 65
  %v2933 = vpop.permute.xlu0 %2932
  %2934 = vrot.lane.b32.xlu0 %v2922, 65
  %v2935 = vpop.permute.xlu0 %2934
  %2936 = vrot.lane.b32.xlu0 %v2923, 65
  %v2937 = vpop.permute.xlu0 %2936
  %2938 = vrot.lane.b32.xlu0 %v2924, 65
  %v2939 = vpop.permute.xlu0 %2938
  %2940 = vrot.lane.b32.xlu0 %v2925, 65
  %v2941 = vpop.permute.xlu0 %2940
  %v2942 = vsel %vm287, %v2933, %v2935
  %v2943 = vsel %vm287, %v2935, %v2937
  %v2944 = vsel %vm287, %v2937, %v2939
  %v2945 = vsel %vm287, %v2939, %v2941
  %v2951 = vsel %vm126, %v2926, 0
  %2953 = vmatprep.subr.mxu0 0.0
  %2954 = vmatpush1.msra.mxu0 0.0
  %2955 = vmatprep.subr.mxu0 0.0
  %2956 = vmatpush1.msra.mxu0 0.0
  %2957 = vmatprep.subr.mxu0 0.0
  %2958 = vmatpush1.msra.mxu0 0.0
  %2959 = vmatprep.subr.mxu0 0.0
  %2960 = vmatpush1.msra.mxu0 0.0
  %2961 = vmatprep.subr.mxu0 0.0
  %2962 = vmatpush1.msra.mxu0 0.0
  %2963 = vmatprep.subr.mxu0 0.0
  %2964 = vmatpush1.msra.mxu0 0.0
  %2965 = vmatprep.subr.mxu0 0.0
  %2966 = vmatpush1.msra.mxu0 0.0
  %2967 = vmatprep.subr.mxu0 0.0
  %2968 = vmatpush1.msra.mxu0 0.0
  %2969 = vmatprep.subr.mxu0 0.0
  %2970 = vmatpush1.msra.mxu0 0.0
  %2971 = vmatprep.subr.mxu0 0.0
  %2972 = vmatpush1.msra.mxu0 0.0
  %2973 = vmatprep.subr.mxu0 0.0
  %2974 = vmatpush1.msra.mxu0 0.0
  %2975 = vmatprep.subr.mxu0 0.0
  %2976 = vmatpush1.msra.mxu0 0.0
  %2977 = vmatprep.subr.mxu0 0.0
  %2978 = vmatpush1.msra.mxu0 0.0
  %2979 = vmatprep.subr.mxu0 0.0
  %2980 = vmatpush1.msra.mxu0 0.0
  %2981 = vmatprep.subr.mxu0 0.0
  %2982 = vmatpush1.msra.mxu0 0.0
  %2983 = vmatprep.subr.mxu0 %v2943
  %2984 = vmatpush1.msra.mxu0 %v2942
  %2985 = vmatprep.subr.mxu0 0.0
  %2986 = vmatpush2.msra.mxu0 0.0
  %2987 = vmatprep.subr.mxu0 0.0
  %2988 = vmatpush2.msra.mxu0 0.0
  %2989 = vmatprep.subr.mxu0 0.0
  %2990 = vmatpush2.msra.mxu0 0.0
  %2991 = vmatprep.subr.mxu0 0.0
  %2992 = vmatpush2.msra.mxu0 0.0
  %2993 = vmatprep.subr.mxu0 0.0
  %2994 = vmatpush2.msra.mxu0 0.0
  %2995 = vmatprep.subr.mxu0 0.0
  %2996 = vmatpush2.msra.mxu0 0.0
  %2997 = vmatprep.subr.mxu0 0.0
  %2998 = vmatpush2.msra.mxu0 0.0
  %2999 = vmatprep.subr.mxu0 0.0
  %3000 = vmatpush2.msra.mxu0 0.0
  %3001 = vmatprep.subr.mxu0 0.0
  %3002 = vmatpush2.msra.mxu0 0.0
  %3003 = vmatprep.subr.mxu0 0.0
  %3004 = vmatpush2.msra.mxu0 0.0
  %3005 = vmatprep.subr.mxu0 0.0
  %3006 = vmatpush2.msra.mxu0 0.0
  %3007 = vmatprep.subr.mxu0 0.0
  %3008 = vmatpush2.msra.mxu0 0.0
  %3009 = vmatprep.subr.mxu0 0.0
  %3010 = vmatpush2.msra.mxu0 0.0
  %3011 = vmatprep.subr.mxu0 0.0
  %3012 = vmatpush2.msra.mxu0 0.0
  %3013 = vmatprep.subr.mxu0 0.0
  %3014 = vmatpush2.msra.mxu0 0.0
  %3015 = vmatprep.subr.mxu0 0.0
  %3016 = vmatpush2.msra.mxu0 0.0
  %3017 = vmatprep.mubr.f32.mxu0 0.0
  %3018 = vmatmul.mubr.f32.gmra.mxu0 %v2951
  %v3019 = vpop.f32.mrf.mxu0
  %v3020 = vadd.f32 0.0, %v3019
  %v3021 = vpop.f32.mrf.mxu0
  %v3022 = vadd.f32 0.0, %v3021
  %3023 = vdwg.mxu0
  %3024 = vmatprep.subr.mxu0 0.0
  %3025 = vmatpush1.msra.mxu0 0.0
  %3026 = vmatprep.subr.mxu0 0.0
  %3027 = vmatpush1.msra.mxu0 0.0
  %3028 = vmatprep.subr.mxu0 0.0
  %3029 = vmatpush1.msra.mxu0 0.0
  %3030 = vmatprep.subr.mxu0 0.0
  %3031 = vmatpush1.msra.mxu0 0.0
  %3032 = vmatprep.subr.mxu0 0.0
  %3033 = vmatpush1.msra.mxu0 0.0
  %3034 = vmatprep.subr.mxu0 0.0
  %3035 = vmatpush1.msra.mxu0 0.0
  %3036 = vmatprep.subr.mxu0 0.0
  %3037 = vmatpush1.msra.mxu0 0.0
  %3038 = vmatprep.subr.mxu0 0.0
  %3039 = vmatpush1.msra.mxu0 0.0
  %3040 = vmatprep.subr.mxu0 0.0
  %3041 = vmatpush1.msra.mxu0 0.0
  %3042 = vmatprep.subr.mxu0 0.0
  %3043 = vmatpush1.msra.mxu0 0.0
  %3044 = vmatprep.subr.mxu0 0.0
  %3045 = vmatpush1.msra.mxu0 0.0
  %3046 = vmatprep.subr.mxu0 0.0
  %3047 = vmatpush1.msra.mxu0 0.0
  %3048 = vmatprep.subr.mxu0 0.0
  %3049 = vmatpush1.msra.mxu0 0.0
  %3050 = vmatprep.subr.mxu0 0.0
  %3051 = vmatpush1.msra.mxu0 0.0
  %3052 = vmatprep.subr.mxu0 0.0
  %3053 = vmatpush1.msra.mxu0 0.0
  %3054 = vmatprep.subr.mxu0 %v2945
  %3055 = vmatpush1.msra.mxu0 %v2944
  %3056 = vmatprep.subr.mxu0 0.0
  %3057 = vmatpush2.msra.mxu0 0.0
  %3058 = vmatprep.subr.mxu0 0.0
  %3059 = vmatpush2.msra.mxu0 0.0
  %3060 = vmatprep.subr.mxu0 0.0
  %3061 = vmatpush2.msra.mxu0 0.0
  %3062 = vmatprep.subr.mxu0 0.0
  %3063 = vmatpush2.msra.mxu0 0.0
  %3064 = vmatprep.subr.mxu0 0.0
  %3065 = vmatpush2.msra.mxu0 0.0
  %3066 = vmatprep.subr.mxu0 0.0
  %3067 = vmatpush2.msra.mxu0 0.0
  %3068 = vmatprep.subr.mxu0 0.0
  %3069 = vmatpush2.msra.mxu0 0.0
  %3070 = vmatprep.subr.mxu0 0.0
  %3071 = vmatpush2.msra.mxu0 0.0
  %3072 = vmatprep.subr.mxu0 0.0
  %3073 = vmatpush2.msra.mxu0 0.0
  %3074 = vmatprep.subr.mxu0 0.0
  %3075 = vmatpush2.msra.mxu0 0.0
  %3076 = vmatprep.subr.mxu0 0.0
  %3077 = vmatpush2.msra.mxu0 0.0
  %3078 = vmatprep.subr.mxu0 0.0
  %3079 = vmatpush2.msra.mxu0 0.0
  %3080 = vmatprep.subr.mxu0 0.0
  %3081 = vmatpush2.msra.mxu0 0.0
  %3082 = vmatprep.subr.mxu0 0.0
  %3083 = vmatpush2.msra.mxu0 0.0
  %3084 = vmatprep.subr.mxu0 0.0
  %3085 = vmatpush2.msra.mxu0 0.0
  %3086 = vmatprep.subr.mxu0 0.0
  %3087 = vmatpush2.msra.mxu0 0.0
  %3088 = vmatprep.mubr.f32.mxu0 0.0
  %3089 = vmatmul.mubr.f32.gmra.mxu0 %v2951
  %v3090 = vpop.f32.mrf.mxu0
  %v3091 = vadd.f32 0.0, %v3090
  %v3092 = vpop.f32.mrf.mxu0
  %v3093 = vadd.f32 0.0, %v3092
  %3094 = vdwg.mxu0
  %v3095 = vadd.f32 %v2917, %v3020
  %v3096 = vadd.f32 %v2918, %v3022
  %v3097 = vadd.f32 %v2919, %v3091
  %v3098 = vadd.f32 %v2920, %v3093
  %v3099 = vld [vmem:[%s1382] sm:$0xff]
  %3105 = vrot.lane.b32.xlu0 %v2722, 64
  %v3106 = vpop.permute.xlu0 %3105
  %3107 = vrot.lane.b32.xlu0 %v2723, 64
  %v3108 = vpop.permute.xlu0 %3107
  %3109 = vrot.lane.b32.xlu0 %v2724, 64
  %v3110 = vpop.permute.xlu0 %3109
  %3111 = vrot.lane.b32.xlu0 %v2725, 64
  %v3112 = vpop.permute.xlu0 %3111
  %3113 = vrot.lane.b32.xlu0 %v2726, 64
  %v3114 = vpop.permute.xlu0 %3113
  %v3115 = vsel %vm117, %v3106, %v3108
  %v3116 = vsel %vm117, %v3108, %v3110
  %v3117 = vsel %vm117, %v3110, %v3112
  %v3118 = vsel %vm117, %v3112, %v3114
  %v3124 = vsel %vm126, %v3099, 0
  %3126 = vmatprep.subr.mxu0 0.0
  %3127 = vmatpush1.msra.mxu0 0.0
  %3128 = vmatprep.subr.mxu0 0.0
  %3129 = vmatpush1.msra.mxu0 0.0
  %3130 = vmatprep.subr.mxu0 0.0
  %3131 = vmatpush1.msra.mxu0 0.0
  %3132 = vmatprep.subr.mxu0 0.0
  %3133 = vmatpush1.msra.mxu0 0.0
  %3134 = vmatprep.subr.mxu0 0.0
  %3135 = vmatpush1.msra.mxu0 0.0
  %3136 = vmatprep.subr.mxu0 0.0
  %3137 = vmatpush1.msra.mxu0 0.0
  %3138 = vmatprep.subr.mxu0 0.0
  %3139 = vmatpush1.msra.mxu0 0.0
  %3140 = vmatprep.subr.mxu0 0.0
  %3141 = vmatpush1.msra.mxu0 0.0
  %3142 = vmatprep.subr.mxu0 0.0
  %3143 = vmatpush1.msra.mxu0 0.0
  %3144 = vmatprep.subr.mxu0 0.0
  %3145 = vmatpush1.msra.mxu0 0.0
  %3146 = vmatprep.subr.mxu0 0.0
  %3147 = vmatpush1.msra.mxu0 0.0
  %3148 = vmatprep.subr.mxu0 0.0
  %3149 = vmatpush1.msra.mxu0 0.0
  %3150 = vmatprep.subr.mxu0 0.0
  %3151 = vmatpush1.msra.mxu0 0.0
  %3152 = vmatprep.subr.mxu0 0.0
  %3153 = vmatpush1.msra.mxu0 0.0
  %3154 = vmatprep.subr.mxu0 0.0
  %3155 = vmatpush1.msra.mxu0 0.0
  %3156 = vmatprep.subr.mxu0 %v3116
  %3157 = vmatpush1.msra.mxu0 %v3115
  %3158 = vmatprep.subr.mxu0 0.0
  %3159 = vmatpush2.msra.mxu0 0.0
  %3160 = vmatprep.subr.mxu0 0.0
  %3161 = vmatpush2.msra.mxu0 0.0
  %3162 = vmatprep.subr.mxu0 0.0
  %3163 = vmatpush2.msra.mxu0 0.0
  %3164 = vmatprep.subr.mxu0 0.0
  %3165 = vmatpush2.msra.mxu0 0.0
  %3166 = vmatprep.subr.mxu0 0.0
  %3167 = vmatpush2.msra.mxu0 0.0
  %3168 = vmatprep.subr.mxu0 0.0
  %3169 = vmatpush2.msra.mxu0 0.0
  %3170 = vmatprep.subr.mxu0 0.0
  %3171 = vmatpush2.msra.mxu0 0.0
  %3172 = vmatprep.subr.mxu0 0.0
  %3173 = vmatpush2.msra.mxu0 0.0
  %3174 = vmatprep.subr.mxu0 0.0
  %3175 = vmatpush2.msra.mxu0 0.0
  %3176 = vmatprep.subr.mxu0 0.0
  %3177 = vmatpush2.msra.mxu0 0.0
  %3178 = vmatprep.subr.mxu0 0.0
  %3179 = vmatpush2.msra.mxu0 0.0
  %3180 = vmatprep.subr.mxu0 0.0
  %3181 = vmatpush2.msra.mxu0 0.0
  %3182 = vmatprep.subr.mxu0 0.0
  %3183 = vmatpush2.msra.mxu0 0.0
  %3184 = vmatprep.subr.mxu0 0.0
  %3185 = vmatpush2.msra.mxu0 0.0
  %3186 = vmatprep.subr.mxu0 0.0
  %3187 = vmatpush2.msra.mxu0 0.0
  %3188 = vmatprep.subr.mxu0 0.0
  %3189 = vmatpush2.msra.mxu0 0.0
  %3190 = vmatprep.mubr.f32.mxu0 0.0
  %3191 = vmatmul.mubr.f32.gmra.mxu0 %v3124
  %v3192 = vpop.f32.mrf.mxu0
  %v3193 = vadd.f32 0.0, %v3192
  %v3194 = vpop.f32.mrf.mxu0
  %v3195 = vadd.f32 0.0, %v3194
  %3196 = vdwg.mxu0
  %3197 = vmatprep.subr.mxu0 0.0
  %3198 = vmatpush1.msra.mxu0 0.0
  %3199 = vmatprep.subr.mxu0 0.0
  %3200 = vmatpush1.msra.mxu0 0.0
  %3201 = vmatprep.subr.mxu0 0.0
  %3202 = vmatpush1.msra.mxu0 0.0
  %3203 = vmatprep.subr.mxu0 0.0
  %3204 = vmatpush1.msra.mxu0 0.0
  %3205 = vmatprep.subr.mxu0 0.0
  %3206 = vmatpush1.msra.mxu0 0.0
  %3207 = vmatprep.subr.mxu0 0.0
  %3208 = vmatpush1.msra.mxu0 0.0
  %3209 = vmatprep.subr.mxu0 0.0
  %3210 = vmatpush1.msra.mxu0 0.0
  %3211 = vmatprep.subr.mxu0 0.0
  %3212 = vmatpush1.msra.mxu0 0.0
  %3213 = vmatprep.subr.mxu0 0.0
  %3214 = vmatpush1.msra.mxu0 0.0
  %3215 = vmatprep.subr.mxu0 0.0
  %3216 = vmatpush1.msra.mxu0 0.0
  %3217 = vmatprep.subr.mxu0 0.0
  %3218 = vmatpush1.msra.mxu0 0.0
  %3219 = vmatprep.subr.mxu0 0.0
  %3220 = vmatpush1.msra.mxu0 0.0
  %3221 = vmatprep.subr.mxu0 0.0
  %3222 = vmatpush1.msra.mxu0 0.0
  %3223 = vmatprep.subr.mxu0 0.0
  %3224 = vmatpush1.msra.mxu0 0.0
  %3225 = vmatprep.subr.mxu0 0.0
  %3226 = vmatpush1.msra.mxu0 0.0
  %3227 = vmatprep.subr.mxu0 %v3118
  %3228 = vmatpush1.msra.mxu0 %v3117
  %3229 = vmatprep.subr.mxu0 0.0
  %3230 = vmatpush2.msra.mxu0 0.0
  %3231 = vmatprep.subr.mxu0 0.0
  %3232 = vmatpush2.msra.mxu0 0.0
  %3233 = vmatprep.subr.mxu0 0.0
  %3234 = vmatpush2.msra.mxu0 0.0
  %3235 = vmatprep.subr.mxu0 0.0
  %3236 = vmatpush2.msra.mxu0 0.0
  %3237 = vmatprep.subr.mxu0 0.0
  %3238 = vmatpush2.msra.mxu0 0.0
  %3239 = vmatprep.subr.mxu0 0.0
  %3240 = vmatpush2.msra.mxu0 0.0
  %3241 = vmatprep.subr.mxu0 0.0
  %3242 = vmatpush2.msra.mxu0 0.0
  %3243 = vmatprep.subr.mxu0 0.0
  %3244 = vmatpush2.msra.mxu0 0.0
  %3245 = vmatprep.subr.mxu0 0.0
  %3246 = vmatpush2.msra.mxu0 0.0
  %3247 = vmatprep.subr.mxu0 0.0
  %3248 = vmatpush2.msra.mxu0 0.0
  %3249 = vmatprep.subr.mxu0 0.0
  %3250 = vmatpush2.msra.mxu0 0.0
  %3251 = vmatprep.subr.mxu0 0.0
  %3252 = vmatpush2.msra.mxu0 0.0
  %3253 = vmatprep.subr.mxu0 0.0
  %3254 = vmatpush2.msra.mxu0 0.0
  %3255 = vmatprep.subr.mxu0 0.0
  %3256 = vmatpush2.msra.mxu0 0.0
  %3257 = vmatprep.subr.mxu0 0.0
  %3258 = vmatpush2.msra.mxu0 0.0
  %3259 = vmatprep.subr.mxu0 0.0
  %3260 = vmatpush2.msra.mxu0 0.0
  %3261 = vmatprep.mubr.f32.mxu0 0.0
  %3262 = vmatmul.mubr.f32.gmra.mxu0 %v3124
  %v3263 = vpop.f32.mrf.mxu0
  %v3264 = vadd.f32 0.0, %v3263
  %v3265 = vpop.f32.mrf.mxu0
  %v3266 = vadd.f32 0.0, %v3265
  %3267 = vdwg.mxu0
  %v3268 = vadd.f32 %v3095, %v3193
  %v3269 = vadd.f32 %v3096, %v3195
  %v3270 = vadd.f32 %v3097, %v3264
  %v3271 = vadd.f32 %v3098, %v3266
  %v3272 = vmul.f32 %v2722, %v2185
  %v3273 = vmul.f32 %v2723, %v2192
  %v3274 = vmul.f32 %v2724, %v2193
  %v3275 = vmul.f32 %v2725, %v2194
  %v3276 = vmul.f32 %v2726, %v2191
  %v3277 = vld [vmem:[%s1561] sm:$0xff]
  %3283 = vrot.lane.b32.xlu0 %v3272, 63
  %v3284 = vpop.permute.xlu0 %3283
  %3285 = vrot.lane.b32.xlu0 %v3273, 63
  %v3286 = vpop.permute.xlu0 %3285
  %3287 = vrot.lane.b32.xlu0 %v3274, 63
  %v3288 = vpop.permute.xlu0 %3287
  %3289 = vrot.lane.b32.xlu0 %v3275, 63
  %v3290 = vpop.permute.xlu0 %3289
  %3291 = vrot.lane.b32.xlu0 %v3276, 63
  %v3292 = vpop.permute.xlu0 %3291
  %v3293 = vsel %vm85, %v3284, %v3286
  %v3294 = vsel %vm85, %v3286, %v3288
  %v3295 = vsel %vm85, %v3288, %v3290
  %v3296 = vsel %vm85, %v3290, %v3292
  %v3302 = vsel %vm126, %v3277, 0
  %3304 = vmatprep.subr.mxu0 0.0
  %3305 = vmatpush1.msra.mxu0 0.0
  %3306 = vmatprep.subr.mxu0 0.0
  %3307 = vmatpush1.msra.mxu0 0.0
  %3308 = vmatprep.subr.mxu0 0.0
  %3309 = vmatpush1.msra.mxu0 0.0
  %3310 = vmatprep.subr.mxu0 0.0
  %3311 = vmatpush1.msra.mxu0 0.0
  %3312 = vmatprep.subr.mxu0 0.0
  %3313 = vmatpush1.msra.mxu0 0.0
  %3314 = vmatprep.subr.mxu0 0.0
  %3315 = vmatpush1.msra.mxu0 0.0
  %3316 = vmatprep.subr.mxu0 0.0
  %3317 = vmatpush1.msra.mxu0 0.0
  %3318 = vmatprep.subr.mxu0 0.0
  %3319 = vmatpush1.msra.mxu0 0.0
  %3320 = vmatprep.subr.mxu0 0.0
  %3321 = vmatpush1.msra.mxu0 0.0
  %3322 = vmatprep.subr.mxu0 0.0
  %3323 = vmatpush1.msra.mxu0 0.0
  %3324 = vmatprep.subr.mxu0 0.0
  %3325 = vmatpush1.msra.mxu0 0.0
  %3326 = vmatprep.subr.mxu0 0.0
  %3327 = vmatpush1.msra.mxu0 0.0
  %3328 = vmatprep.subr.mxu0 0.0
  %3329 = vmatpush1.msra.mxu0 0.0
  %3330 = vmatprep.subr.mxu0 0.0
  %3331 = vmatpush1.msra.mxu0 0.0
  %3332 = vmatprep.subr.mxu0 0.0
  %3333 = vmatpush1.msra.mxu0 0.0
  %3334 = vmatprep.subr.mxu0 %v3294
  %3335 = vmatpush1.msra.mxu0 %v3293
  %3336 = vmatprep.subr.mxu0 0.0
  %3337 = vmatpush2.msra.mxu0 0.0
  %3338 = vmatprep.subr.mxu0 0.0
  %3339 = vmatpush2.msra.mxu0 0.0
  %3340 = vmatprep.subr.mxu0 0.0
  %3341 = vmatpush2.msra.mxu0 0.0
  %3342 = vmatprep.subr.mxu0 0.0
  %3343 = vmatpush2.msra.mxu0 0.0
  %3344 = vmatprep.subr.mxu0 0.0
  %3345 = vmatpush2.msra.mxu0 0.0
  %3346 = vmatprep.subr.mxu0 0.0
  %3347 = vmatpush2.msra.mxu0 0.0
  %3348 = vmatprep.subr.mxu0 0.0
  %3349 = vmatpush2.msra.mxu0 0.0
  %3350 = vmatprep.subr.mxu0 0.0
  %3351 = vmatpush2.msra.mxu0 0.0
  %3352 = vmatprep.subr.mxu0 0.0
  %3353 = vmatpush2.msra.mxu0 0.0
  %3354 = vmatprep.subr.mxu0 0.0
  %3355 = vmatpush2.msra.mxu0 0.0
  %3356 = vmatprep.subr.mxu0 0.0
  %3357 = vmatpush2.msra.mxu0 0.0
  %3358 = vmatprep.subr.mxu0 0.0
  %3359 = vmatpush2.msra.mxu0 0.0
  %3360 = vmatprep.subr.mxu0 0.0
  %3361 = vmatpush2.msra.mxu0 0.0
  %3362 = vmatprep.subr.mxu0 0.0
  %3363 = vmatpush2.msra.mxu0 0.0
  %3364 = vmatprep.subr.mxu0 0.0
  %3365 = vmatpush2.msra.mxu0 0.0
  %3366 = vmatprep.subr.mxu0 0.0
  %3367 = vmatpush2.msra.mxu0 0.0
  %3368 = vmatprep.mubr.f32.mxu0 0.0
  %3369 = vmatmul.mubr.f32.gmra.mxu0 %v3302
  %v3370 = vpop.f32.mrf.mxu0
  %v3371 = vadd.f32 0.0, %v3370
  %v3372 = vpop.f32.mrf.mxu0
  %v3373 = vadd.f32 0.0, %v3372
  %3374 = vdwg.mxu0
  %3375 = vmatprep.subr.mxu0 0.0
  %3376 = vmatpush1.msra.mxu0 0.0
  %3377 = vmatprep.subr.mxu0 0.0
  %3378 = vmatpush1.msra.mxu0 0.0
  %3379 = vmatprep.subr.mxu0 0.0
  %3380 = vmatpush1.msra.mxu0 0.0
  %3381 = vmatprep.subr.mxu0 0.0
  %3382 = vmatpush1.msra.mxu0 0.0
  %3383 = vmatprep.subr.mxu0 0.0
  %3384 = vmatpush1.msra.mxu0 0.0
  %3385 = vmatprep.subr.mxu0 0.0
  %3386 = vmatpush1.msra.mxu0 0.0
  %3387 = vmatprep.subr.mxu0 0.0
  %3388 = vmatpush1.msra.mxu0 0.0
  %3389 = vmatprep.subr.mxu0 0.0
  %3390 = vmatpush1.msra.mxu0 0.0
  %3391 = vmatprep.subr.mxu0 0.0
  %3392 = vmatpush1.msra.mxu0 0.0
  %3393 = vmatprep.subr.mxu0 0.0
  %3394 = vmatpush1.msra.mxu0 0.0
  %3395 = vmatprep.subr.mxu0 0.0
  %3396 = vmatpush1.msra.mxu0 0.0
  %3397 = vmatprep.subr.mxu0 0.0
  %3398 = vmatpush1.msra.mxu0 0.0
  %3399 = vmatprep.subr.mxu0 0.0
  %3400 = vmatpush1.msra.mxu0 0.0
  %3401 = vmatprep.subr.mxu0 0.0
  %3402 = vmatpush1.msra.mxu0 0.0
  %3403 = vmatprep.subr.mxu0 0.0
  %3404 = vmatpush1.msra.mxu0 0.0
  %3405 = vmatprep.subr.mxu0 %v3296
  %3406 = vmatpush1.msra.mxu0 %v3295
  %3407 = vmatprep.subr.mxu0 0.0
  %3408 = vmatpush2.msra.mxu0 0.0
  %3409 = vmatprep.subr.mxu0 0.0
  %3410 = vmatpush2.msra.mxu0 0.0
  %3411 = vmatprep.subr.mxu0 0.0
  %3412 = vmatpush2.msra.mxu0 0.0
  %3413 = vmatprep.subr.mxu0 0.0
  %3414 = vmatpush2.msra.mxu0 0.0
  %3415 = vmatprep.subr.mxu0 0.0
  %3416 = vmatpush2.msra.mxu0 0.0
  %3417 = vmatprep.subr.mxu0 0.0
  %3418 = vmatpush2.msra.mxu0 0.0
  %3419 = vmatprep.subr.mxu0 0.0
  %3420 = vmatpush2.msra.mxu0 0.0
  %3421 = vmatprep.subr.mxu0 0.0
  %3422 = vmatpush2.msra.mxu0 0.0
  %3423 = vmatprep.subr.mxu0 0.0
  %3424 = vmatpush2.msra.mxu0 0.0
  %3425 = vmatprep.subr.mxu0 0.0
  %3426 = vmatpush2.msra.mxu0 0.0
  %3427 = vmatprep.subr.mxu0 0.0
  %3428 = vmatpush2.msra.mxu0 0.0
  %3429 = vmatprep.subr.mxu0 0.0
  %3430 = vmatpush2.msra.mxu0 0.0
  %3431 = vmatprep.subr.mxu0 0.0
  %3432 = vmatpush2.msra.mxu0 0.0
  %3433 = vmatprep.subr.mxu0 0.0
  %3434 = vmatpush2.msra.mxu0 0.0
  %3435 = vmatprep.subr.mxu0 0.0
  %3436 = vmatpush2.msra.mxu0 0.0
  %3437 = vmatprep.subr.mxu0 0.0
  %3438 = vmatpush2.msra.mxu0 0.0
  %3439 = vmatprep.mubr.f32.mxu0 0.0
  %3440 = vmatmul.mubr.f32.gmra.mxu0 %v3302
  %v3441 = vpop.f32.mrf.mxu0
  %v3442 = vadd.f32 0.0, %v3441
  %v3443 = vpop.f32.mrf.mxu0
  %v3444 = vadd.f32 0.0, %v3443
  %3445 = vdwg.mxu0
  %v3446 = vadd.f32 %v3268, %v3371
  %v3447 = vadd.f32 %v3269, %v3373
  %v3448 = vadd.f32 %v3270, %v3442
  %v3449 = vadd.f32 %v3271, %v3444
  %3450 = vst [vmem:[%s5 + $0x20] sm:$0xff] %v3446
  %3451 = vst [vmem:[%s5 + $0x28] sm:$0xff] %v3447
  %3452 = vst [vmem:[%s5 + $0x30] sm:$0xff] %v3448
  %3453 = vst [vmem:[%s5 + $0x38] sm:$0xff] %v3449
  %v3458 = vcombine.low %v3446, %v3447
  %v3459 = vcombine.high %v3446, %v3447
  %v3460 = vcombine.low %v3448, %v3449
  %v3461 = vcombine.high %v3448, %v3449
  %v3466 = vcombine.high %v3458, %v3458
  %v3467 = vcombine.high %v3460, %v3460
  %v3468 = vcombine.high %v3459, %v3459
  %v3469 = vcombine.high %v3461, %v3461
  %v3474 = vsel %vm1759, %v3458, 0.0
  %v3475 = vsel %vm1759, %v3466, 0.0
  %v3476 = vadd.f32 %v3474, %v3475
  %v3477 = vsel %vm1759, %v3460, 0.0
  %v3478 = vadd.f32 %v3476, %v3477
  %v3479 = vsel %vm1759, %v3467, 0.0
  %v3480 = vadd.f32 %v3478, %v3479
  %3481 = vadd.xlane.f32.xlu0 %v3480
  %v3482 = vpop.xlane.xlu0 %3481
  %v3483 = vsel %vm1759, %v3459, 0.0
  %v3484 = vsel %vm1759, %v3468, 0.0
  %v3485 = vadd.f32 %v3483, %v3484
  %v3486 = vsel %vm1759, %v3461, 0.0
  %v3487 = vadd.f32 %v3485, %v3486
  %v3488 = vsel %vm1759, %v3469, 0.0
  %v3489 = vadd.f32 %v3487, %v3488
  %3490 = vadd.xlane.f32.xlu0 %v3489
  %v3491 = vpop.xlane.xlu0 %3490
  %v3492 = vsel %vm1759, %v3482, 0.0
  %v3493 = vsel %vm1759, %v3491, 0.0
  %v3494 = vadd.f32 %v3492, %v3493
  %v3495 = vadd.f32 %v1781, %v3494
  %v3496 = vld [vmem:[#allocation2 + $0x40] sm:$0xff]
  %v3497 = vld [vmem:[#allocation2 + $0x48] sm:$0xff]
  %v3498 = vld [vmem:[#allocation2 + $0x50] sm:$0xff]
  %v3499 = vld [vmem:[#allocation2 + $0x58] sm:$0xff]
  %v3500 = vld [vmem:[#allocation2 + $0x60] sm:$0xff]
  %s3501 = scalar_lea.vmem %s2, 16
  %v3502 = vld [vmem:[%s3501] ss:$2 sm:$0xf]
  %v3504 = vlaneseq
  %v3505 = vshrl.u32 %v3504, 7
  %v3506 = vsub.s32 0, %v3505
  %v3507 = vrot.slane %v3502, %v3506
  %v3508 = vlaneseq
  %v3509 = vshrl.u32 %v3508, 7
  %v3510 = vsub.s32 1, %v3509
  %v3511 = vrot.slane %v3502, %v3510
  %v3512 = vlaneseq
  %v3513 = vshrl.u32 %v3512, 7
  %v3514 = vsub.s32 2, %v3513
  %v3515 = vrot.slane %v3502, %v3514
  %v3516 = vlaneseq
  %v3517 = vshrl.u32 %v3516, 7
  %v3518 = vsub.s32 3, %v3517
  %v3519 = vrot.slane %v3502, %v3518
  %3520 = vrot.lane.b32.xlu0 %v3507, 63
  %v3521 = vpop.permute.xlu0 %3520
  %3522 = vrot.lane.b32.xlu0 %v3511, 63
  %v3523 = vpop.permute.xlu0 %3522
  %3524 = vrot.lane.b32.xlu0 %v3515, 63
  %v3525 = vpop.permute.xlu0 %3524
  %3526 = vrot.lane.b32.xlu0 %v3519, 63
  %v3527 = vpop.permute.xlu0 %3526
  %v3528 = vsel %vm85, %v3521, %v3523
  %v3529 = vsel %vm85, %v3523, %v3525
  %v3530 = vsel %vm85, %v3525, %v3527
  %v3536 = vmul.f32 %v3496, %v3521
  %v3537 = vmul.f32 %v3497, %v3528
  %v3538 = vmul.f32 %v3498, %v3529
  %v3539 = vmul.f32 %v3499, %v3530
  %v3540 = vmul.f32 %v3500, %v3527
  %v3541 = vld [vmem:[%s1] sm:$0xff]
  %v3542 = vld [vmem:[%s100] sm:$0xff]
  %3548 = vrot.lane.b32.xlu0 %v3496, 64
  %v3549 = vpop.permute.xlu0 %3548
  %3550 = vrot.lane.b32.xlu0 %v3497, 64
  %v3551 = vpop.permute.xlu0 %3550
  %3552 = vrot.lane.b32.xlu0 %v3498, 64
  %v3553 = vpop.permute.xlu0 %3552
  %3554 = vrot.lane.b32.xlu0 %v3499, 64
  %v3555 = vpop.permute.xlu0 %3554
  %3556 = vrot.lane.b32.xlu0 %v3500, 64
  %v3557 = vpop.permute.xlu0 %3556
  %v3558 = vsel %vm117, %v3549, %v3551
  %v3559 = vsel %vm117, %v3551, %v3553
  %v3560 = vsel %vm117, %v3553, %v3555
  %v3561 = vsel %vm117, %v3555, %v3557
  %v3567 = vsel %vm126, %v3542, 0
  %3569 = vmatprep.subr.mxu0 0.0
  %3570 = vmatpush1.msra.mxu0 0.0
  %3571 = vmatprep.subr.mxu0 0.0
  %3572 = vmatpush1.msra.mxu0 0.0
  %3573 = vmatprep.subr.mxu0 0.0
  %3574 = vmatpush1.msra.mxu0 0.0
  %3575 = vmatprep.subr.mxu0 0.0
  %3576 = vmatpush1.msra.mxu0 0.0
  %3577 = vmatprep.subr.mxu0 0.0
  %3578 = vmatpush1.msra.mxu0 0.0
  %3579 = vmatprep.subr.mxu0 0.0
  %3580 = vmatpush1.msra.mxu0 0.0
  %3581 = vmatprep.subr.mxu0 0.0
  %3582 = vmatpush1.msra.mxu0 0.0
  %3583 = vmatprep.subr.mxu0 0.0
  %3584 = vmatpush1.msra.mxu0 0.0
  %3585 = vmatprep.subr.mxu0 0.0
  %3586 = vmatpush1.msra.mxu0 0.0
  %3587 = vmatprep.subr.mxu0 0.0
  %3588 = vmatpush1.msra.mxu0 0.0
  %3589 = vmatprep.subr.mxu0 0.0
  %3590 = vmatpush1.msra.mxu0 0.0
  %3591 = vmatprep.subr.mxu0 0.0
  %3592 = vmatpush1.msra.mxu0 0.0
  %3593 = vmatprep.subr.mxu0 0.0
  %3594 = vmatpush1.msra.mxu0 0.0
  %3595 = vmatprep.subr.mxu0 0.0
  %3596 = vmatpush1.msra.mxu0 0.0
  %3597 = vmatprep.subr.mxu0 0.0
  %3598 = vmatpush1.msra.mxu0 0.0
  %3599 = vmatprep.subr.mxu0 %v3559
  %3600 = vmatpush1.msra.mxu0 %v3558
  %3601 = vmatprep.subr.mxu0 0.0
  %3602 = vmatpush2.msra.mxu0 0.0
  %3603 = vmatprep.subr.mxu0 0.0
  %3604 = vmatpush2.msra.mxu0 0.0
  %3605 = vmatprep.subr.mxu0 0.0
  %3606 = vmatpush2.msra.mxu0 0.0
  %3607 = vmatprep.subr.mxu0 0.0
  %3608 = vmatpush2.msra.mxu0 0.0
  %3609 = vmatprep.subr.mxu0 0.0
  %3610 = vmatpush2.msra.mxu0 0.0
  %3611 = vmatprep.subr.mxu0 0.0
  %3612 = vmatpush2.msra.mxu0 0.0
  %3613 = vmatprep.subr.mxu0 0.0
  %3614 = vmatpush2.msra.mxu0 0.0
  %3615 = vmatprep.subr.mxu0 0.0
  %3616 = vmatpush2.msra.mxu0 0.0
  %3617 = vmatprep.subr.mxu0 0.0
  %3618 = vmatpush2.msra.mxu0 0.0
  %3619 = vmatprep.subr.mxu0 0.0
  %3620 = vmatpush2.msra.mxu0 0.0
  %3621 = vmatprep.subr.mxu0 0.0
  %3622 = vmatpush2.msra.mxu0 0.0
  %3623 = vmatprep.subr.mxu0 0.0
  %3624 = vmatpush2.msra.mxu0 0.0
  %3625 = vmatprep.subr.mxu0 0.0
  %3626 = vmatpush2.msra.mxu0 0.0
  %3627 = vmatprep.subr.mxu0 0.0
  %3628 = vmatpush2.msra.mxu0 0.0
  %3629 = vmatprep.subr.mxu0 0.0
  %3630 = vmatpush2.msra.mxu0 0.0
  %3631 = vmatprep.subr.mxu0 0.0
  %3632 = vmatpush2.msra.mxu0 0.0
  %3633 = vmatprep.mubr.f32.mxu0 0.0
  %3634 = vmatmul.mubr.f32.gmra.mxu0 %v3567
  %v3635 = vpop.f32.mrf.mxu0
  %v3636 = vadd.f32 0.0, %v3635
  %v3637 = vpop.f32.mrf.mxu0
  %v3638 = vadd.f32 0.0, %v3637
  %3639 = vdwg.mxu0
  %3640 = vmatprep.subr.mxu0 0.0
  %3641 = vmatpush1.msra.mxu0 0.0
  %3642 = vmatprep.subr.mxu0 0.0
  %3643 = vmatpush1.msra.mxu0 0.0
  %3644 = vmatprep.subr.mxu0 0.0
  %3645 = vmatpush1.msra.mxu0 0.0
  %3646 = vmatprep.subr.mxu0 0.0
  %3647 = vmatpush1.msra.mxu0 0.0
  %3648 = vmatprep.subr.mxu0 0.0
  %3649 = vmatpush1.msra.mxu0 0.0
  %3650 = vmatprep.subr.mxu0 0.0
  %3651 = vmatpush1.msra.mxu0 0.0
  %3652 = vmatprep.subr.mxu0 0.0
  %3653 = vmatpush1.msra.mxu0 0.0
  %3654 = vmatprep.subr.mxu0 0.0
  %3655 = vmatpush1.msra.mxu0 0.0
  %3656 = vmatprep.subr.mxu0 0.0
  %3657 = vmatpush1.msra.mxu0 0.0
  %3658 = vmatprep.subr.mxu0 0.0
  %3659 = vmatpush1.msra.mxu0 0.0
  %3660 = vmatprep.subr.mxu0 0.0
  %3661 = vmatpush1.msra.mxu0 0.0
  %3662 = vmatprep.subr.mxu0 0.0
  %3663 = vmatpush1.msra.mxu0 0.0
  %3664 = vmatprep.subr.mxu0 0.0
  %3665 = vmatpush1.msra.mxu0 0.0
  %3666 = vmatprep.subr.mxu0 0.0
  %3667 = vmatpush1.msra.mxu0 0.0
  %3668 = vmatprep.subr.mxu0 0.0
  %3669 = vmatpush1.msra.mxu0 0.0
  %3670 = vmatprep.subr.mxu0 %v3561
  %3671 = vmatpush1.msra.mxu0 %v3560
  %3672 = vmatprep.subr.mxu0 0.0
  %3673 = vmatpush2.msra.mxu0 0.0
  %3674 = vmatprep.subr.mxu0 0.0
  %3675 = vmatpush2.msra.mxu0 0.0
  %3676 = vmatprep.subr.mxu0 0.0
  %3677 = vmatpush2.msra.mxu0 0.0
  %3678 = vmatprep.subr.mxu0 0.0
  %3679 = vmatpush2.msra.mxu0 0.0
  %3680 = vmatprep.subr.mxu0 0.0
  %3681 = vmatpush2.msra.mxu0 0.0
  %3682 = vmatprep.subr.mxu0 0.0
  %3683 = vmatpush2.msra.mxu0 0.0
  %3684 = vmatprep.subr.mxu0 0.0
  %3685 = vmatpush2.msra.mxu0 0.0
  %3686 = vmatprep.subr.mxu0 0.0
  %3687 = vmatpush2.msra.mxu0 0.0
  %3688 = vmatprep.subr.mxu0 0.0
  %3689 = vmatpush2.msra.mxu0 0.0
  %3690 = vmatprep.subr.mxu0 0.0
  %3691 = vmatpush2.msra.mxu0 0.0
  %3692 = vmatprep.subr.mxu0 0.0
  %3693 = vmatpush2.msra.mxu0 0.0
  %3694 = vmatprep.subr.mxu0 0.0
  %3695 = vmatpush2.msra.mxu0 0.0
  %3696 = vmatprep.subr.mxu0 0.0
  %3697 = vmatpush2.msra.mxu0 0.0
  %3698 = vmatprep.subr.mxu0 0.0
  %3699 = vmatpush2.msra.mxu0 0.0
  %3700 = vmatprep.subr.mxu0 0.0
  %3701 = vmatpush2.msra.mxu0 0.0
  %3702 = vmatprep.subr.mxu0 0.0
  %3703 = vmatpush2.msra.mxu0 0.0
  %3704 = vmatprep.mubr.f32.mxu0 0.0
  %3705 = vmatmul.mubr.f32.gmra.mxu0 %v3567
  %v3706 = vpop.f32.mrf.mxu0
  %v3707 = vadd.f32 0.0, %v3706
  %v3708 = vpop.f32.mrf.mxu0
  %v3709 = vadd.f32 0.0, %v3708
  %3710 = vdwg.mxu0
  %3716 = vrot.lane.b32.xlu0 %v3536, 65
  %v3717 = vpop.permute.xlu0 %3716
  %3718 = vrot.lane.b32.xlu0 %v3537, 65
  %v3719 = vpop.permute.xlu0 %3718
  %3720 = vrot.lane.b32.xlu0 %v3538, 65
  %v3721 = vpop.permute.xlu0 %3720
  %3722 = vrot.lane.b32.xlu0 %v3539, 65
  %v3723 = vpop.permute.xlu0 %3722
  %3724 = vrot.lane.b32.xlu0 %v3540, 65
  %v3725 = vpop.permute.xlu0 %3724
  %v3726 = vsel %vm287, %v3717, %v3719
  %v3727 = vsel %vm287, %v3719, %v3721
  %v3728 = vsel %vm287, %v3721, %v3723
  %v3729 = vsel %vm287, %v3723, %v3725
  %v3735 = vsel %vm126, %v3541, 0
  %3737 = vmatprep.subr.mxu0 0.0
  %3738 = vmatpush1.msra.mxu0 0.0
  %3739 = vmatprep.subr.mxu0 0.0
  %3740 = vmatpush1.msra.mxu0 0.0
  %3741 = vmatprep.subr.mxu0 0.0
  %3742 = vmatpush1.msra.mxu0 0.0
  %3743 = vmatprep.subr.mxu0 0.0
  %3744 = vmatpush1.msra.mxu0 0.0
  %3745 = vmatprep.subr.mxu0 0.0
  %3746 = vmatpush1.msra.mxu0 0.0
  %3747 = vmatprep.subr.mxu0 0.0
  %3748 = vmatpush1.msra.mxu0 0.0
  %3749 = vmatprep.subr.mxu0 0.0
  %3750 = vmatpush1.msra.mxu0 0.0
  %3751 = vmatprep.subr.mxu0 0.0
  %3752 = vmatpush1.msra.mxu0 0.0
  %3753 = vmatprep.subr.mxu0 0.0
  %3754 = vmatpush1.msra.mxu0 0.0
  %3755 = vmatprep.subr.mxu0 0.0
  %3756 = vmatpush1.msra.mxu0 0.0
  %3757 = vmatprep.subr.mxu0 0.0
  %3758 = vmatpush1.msra.mxu0 0.0
  %3759 = vmatprep.subr.mxu0 0.0
  %3760 = vmatpush1.msra.mxu0 0.0
  %3761 = vmatprep.subr.mxu0 0.0
  %3762 = vmatpush1.msra.mxu0 0.0
  %3763 = vmatprep.subr.mxu0 0.0
  %3764 = vmatpush1.msra.mxu0 0.0
  %3765 = vmatprep.subr.mxu0 0.0
  %3766 = vmatpush1.msra.mxu0 0.0
  %3767 = vmatprep.subr.mxu0 %v3727
  %3768 = vmatpush1.msra.mxu0 %v3726
  %3769 = vmatprep.subr.mxu0 0.0
  %3770 = vmatpush2.msra.mxu0 0.0
  %3771 = vmatprep.subr.mxu0 0.0
  %3772 = vmatpush2.msra.mxu0 0.0
  %3773 = vmatprep.subr.mxu0 0.0
  %3774 = vmatpush2.msra.mxu0 0.0
  %3775 = vmatprep.subr.mxu0 0.0
  %3776 = vmatpush2.msra.mxu0 0.0
  %3777 = vmatprep.subr.mxu0 0.0
  %3778 = vmatpush2.msra.mxu0 0.0
  %3779 = vmatprep.subr.mxu0 0.0
  %3780 = vmatpush2.msra.mxu0 0.0
  %3781 = vmatprep.subr.mxu0 0.0
  %3782 = vmatpush2.msra.mxu0 0.0
  %3783 = vmatprep.subr.mxu0 0.0
  %3784 = vmatpush2.msra.mxu0 0.0
  %3785 = vmatprep.subr.mxu0 0.0
  %3786 = vmatpush2.msra.mxu0 0.0
  %3787 = vmatprep.subr.mxu0 0.0
  %3788 = vmatpush2.msra.mxu0 0.0
  %3789 = vmatprep.subr.mxu0 0.0
  %3790 = vmatpush2.msra.mxu0 0.0
  %3791 = vmatprep.subr.mxu0 0.0
  %3792 = vmatpush2.msra.mxu0 0.0
  %3793 = vmatprep.subr.mxu0 0.0
  %3794 = vmatpush2.msra.mxu0 0.0
  %3795 = vmatprep.subr.mxu0 0.0
  %3796 = vmatpush2.msra.mxu0 0.0
  %3797 = vmatprep.subr.mxu0 0.0
  %3798 = vmatpush2.msra.mxu0 0.0
  %3799 = vmatprep.subr.mxu0 0.0
  %3800 = vmatpush2.msra.mxu0 0.0
  %3801 = vmatprep.mubr.f32.mxu0 0.0
  %3802 = vmatmul.mubr.f32.gmra.mxu0 %v3735
  %v3803 = vpop.f32.mrf.mxu0
  %v3804 = vadd.f32 %v3636, %v3803
  %v3805 = vpop.f32.mrf.mxu0
  %v3806 = vadd.f32 %v3638, %v3805
  %3807 = vdwg.mxu0
  %3808 = vmatprep.subr.mxu0 0.0
  %3809 = vmatpush1.msra.mxu0 0.0
  %3810 = vmatprep.subr.mxu0 0.0
  %3811 = vmatpush1.msra.mxu0 0.0
  %3812 = vmatprep.subr.mxu0 0.0
  %3813 = vmatpush1.msra.mxu0 0.0
  %3814 = vmatprep.subr.mxu0 0.0
  %3815 = vmatpush1.msra.mxu0 0.0
  %3816 = vmatprep.subr.mxu0 0.0
  %3817 = vmatpush1.msra.mxu0 0.0
  %3818 = vmatprep.subr.mxu0 0.0
  %3819 = vmatpush1.msra.mxu0 0.0
  %3820 = vmatprep.subr.mxu0 0.0
  %3821 = vmatpush1.msra.mxu0 0.0
  %3822 = vmatprep.subr.mxu0 0.0
  %3823 = vmatpush1.msra.mxu0 0.0
  %3824 = vmatprep.subr.mxu0 0.0
  %3825 = vmatpush1.msra.mxu0 0.0
  %3826 = vmatprep.subr.mxu0 0.0
  %3827 = vmatpush1.msra.mxu0 0.0
  %3828 = vmatprep.subr.mxu0 0.0
  %3829 = vmatpush1.msra.mxu0 0.0
  %3830 = vmatprep.subr.mxu0 0.0
  %3831 = vmatpush1.msra.mxu0 0.0
  %3832 = vmatprep.subr.mxu0 0.0
  %3833 = vmatpush1.msra.mxu0 0.0
  %3834 = vmatprep.subr.mxu0 0.0
  %3835 = vmatpush1.msra.mxu0 0.0
  %3836 = vmatprep.subr.mxu0 0.0
  %3837 = vmatpush1.msra.mxu0 0.0
  %3838 = vmatprep.subr.mxu0 %v3729
  %3839 = vmatpush1.msra.mxu0 %v3728
  %3840 = vmatprep.subr.mxu0 0.0
  %3841 = vmatpush2.msra.mxu0 0.0
  %3842 = vmatprep.subr.mxu0 0.0
  %3843 = vmatpush2.msra.mxu0 0.0
  %3844 = vmatprep.subr.mxu0 0.0
  %3845 = vmatpush2.msra.mxu0 0.0
  %3846 = vmatprep.subr.mxu0 0.0
  %3847 = vmatpush2.msra.mxu0 0.0
  %3848 = vmatprep.subr.mxu0 0.0
  %3849 = vmatpush2.msra.mxu0 0.0
  %3850 = vmatprep.subr.mxu0 0.0
  %3851 = vmatpush2.msra.mxu0 0.0
  %3852 = vmatprep.subr.mxu0 0.0
  %3853 = vmatpush2.msra.mxu0 0.0
  %3854 = vmatprep.subr.mxu0 0.0
  %3855 = vmatpush2.msra.mxu0 0.0
  %3856 = vmatprep.subr.mxu0 0.0
  %3857 = vmatpush2.msra.mxu0 0.0
  %3858 = vmatprep.subr.mxu0 0.0
  %3859 = vmatpush2.msra.mxu0 0.0
  %3860 = vmatprep.subr.mxu0 0.0
  %3861 = vmatpush2.msra.mxu0 0.0
  %3862 = vmatprep.subr.mxu0 0.0
  %3863 = vmatpush2.msra.mxu0 0.0
  %3864 = vmatprep.subr.mxu0 0.0
  %3865 = vmatpush2.msra.mxu0 0.0
  %3866 = vmatprep.subr.mxu0 0.0
  %3867 = vmatpush2.msra.mxu0 0.0
  %3868 = vmatprep.subr.mxu0 0.0
  %3869 = vmatpush2.msra.mxu0 0.0
  %3870 = vmatprep.subr.mxu0 0.0
  %3871 = vmatpush2.msra.mxu0 0.0
  %3872 = vmatprep.mubr.f32.mxu0 0.0
  %3873 = vmatmul.mubr.f32.gmra.mxu0 %v3735
  %v3874 = vpop.f32.mrf.mxu0
  %v3875 = vadd.f32 %v3707, %v3874
  %v3876 = vpop.f32.mrf.mxu0
  %v3877 = vadd.f32 %v3709, %v3876
  %3878 = vdwg.mxu0
  %s3879 = scalar_lea.vmem %s2, 17
  %v3880 = vld [vmem:[%s3879] ss:$2 sm:$0xf]
  %v3882 = vlaneseq
  %v3883 = vshrl.u32 %v3882, 7
  %v3884 = vsub.s32 0, %v3883
  %v3885 = vrot.slane %v3880, %v3884
  %v3886 = vlaneseq
  %v3887 = vshrl.u32 %v3886, 7
  %v3888 = vsub.s32 1, %v3887
  %v3889 = vrot.slane %v3880, %v3888
  %v3890 = vlaneseq
  %v3891 = vshrl.u32 %v3890, 7
  %v3892 = vsub.s32 2, %v3891
  %v3893 = vrot.slane %v3880, %v3892
  %v3894 = vlaneseq
  %v3895 = vshrl.u32 %v3894, 7
  %v3896 = vsub.s32 3, %v3895
  %v3897 = vrot.slane %v3880, %v3896
  %3898 = vrot.lane.b32.xlu0 %v3885, 65
  %v3899 = vpop.permute.xlu0 %3898
  %3900 = vrot.lane.b32.xlu0 %v3889, 65
  %v3901 = vpop.permute.xlu0 %3900
  %3902 = vrot.lane.b32.xlu0 %v3893, 65
  %v3903 = vpop.permute.xlu0 %3902
  %3904 = vrot.lane.b32.xlu0 %v3897, 65
  %v3905 = vpop.permute.xlu0 %3904
  %v3906 = vsel %vm287, %v3899, %v3901
  %v3907 = vsel %vm287, %v3901, %v3903
  %v3908 = vsel %vm287, %v3903, %v3905
  %v3914 = vmul.f32 %v3496, %v3899
  %v3915 = vmul.f32 %v3497, %v3906
  %v3916 = vmul.f32 %v3498, %v3907
  %v3917 = vmul.f32 %v3499, %v3908
  %v3918 = vmul.f32 %v3500, %v3905
  %v3919 = vld [vmem:[%s481] sm:$0xff]
  %3925 = vrot.lane.b32.xlu0 %v3914, 63
  %v3926 = vpop.permute.xlu0 %3925
  %3927 = vrot.lane.b32.xlu0 %v3915, 63
  %v3928 = vpop.permute.xlu0 %3927
  %3929 = vrot.lane.b32.xlu0 %v3916, 63
  %v3930 = vpop.permute.xlu0 %3929
  %3931 = vrot.lane.b32.xlu0 %v3917, 63
  %v3932 = vpop.permute.xlu0 %3931
  %3933 = vrot.lane.b32.xlu0 %v3918, 63
  %v3934 = vpop.permute.xlu0 %3933
  %v3935 = vsel %vm85, %v3926, %v3928
  %v3936 = vsel %vm85, %v3928, %v3930
  %v3937 = vsel %vm85, %v3930, %v3932
  %v3938 = vsel %vm85, %v3932, %v3934
  %v3944 = vsel %vm126, %v3919, 0
  %3946 = vmatprep.subr.mxu0 0.0
  %3947 = vmatpush1.msra.mxu0 0.0
  %3948 = vmatprep.subr.mxu0 0.0
  %3949 = vmatpush1.msra.mxu0 0.0
  %3950 = vmatprep.subr.mxu0 0.0
  %3951 = vmatpush1.msra.mxu0 0.0
  %3952 = vmatprep.subr.mxu0 0.0
  %3953 = vmatpush1.msra.mxu0 0.0
  %3954 = vmatprep.subr.mxu0 0.0
  %3955 = vmatpush1.msra.mxu0 0.0
  %3956 = vmatprep.subr.mxu0 0.0
  %3957 = vmatpush1.msra.mxu0 0.0
  %3958 = vmatprep.subr.mxu0 0.0
  %3959 = vmatpush1.msra.mxu0 0.0
  %3960 = vmatprep.subr.mxu0 0.0
  %3961 = vmatpush1.msra.mxu0 0.0
  %3962 = vmatprep.subr.mxu0 0.0
  %3963 = vmatpush1.msra.mxu0 0.0
  %3964 = vmatprep.subr.mxu0 0.0
  %3965 = vmatpush1.msra.mxu0 0.0
  %3966 = vmatprep.subr.mxu0 0.0
  %3967 = vmatpush1.msra.mxu0 0.0
  %3968 = vmatprep.subr.mxu0 0.0
  %3969 = vmatpush1.msra.mxu0 0.0
  %3970 = vmatprep.subr.mxu0 0.0
  %3971 = vmatpush1.msra.mxu0 0.0
  %3972 = vmatprep.subr.mxu0 0.0
  %3973 = vmatpush1.msra.mxu0 0.0
  %3974 = vmatprep.subr.mxu0 0.0
  %3975 = vmatpush1.msra.mxu0 0.0
  %3976 = vmatprep.subr.mxu0 %v3936
  %3977 = vmatpush1.msra.mxu0 %v3935
  %3978 = vmatprep.subr.mxu0 0.0
  %3979 = vmatpush2.msra.mxu0 0.0
  %3980 = vmatprep.subr.mxu0 0.0
  %3981 = vmatpush2.msra.mxu0 0.0
  %3982 = vmatprep.subr.mxu0 0.0
  %3983 = vmatpush2.msra.mxu0 0.0
  %3984 = vmatprep.subr.mxu0 0.0
  %3985 = vmatpush2.msra.mxu0 0.0
  %3986 = vmatprep.subr.mxu0 0.0
  %3987 = vmatpush2.msra.mxu0 0.0
  %3988 = vmatprep.subr.mxu0 0.0
  %3989 = vmatpush2.msra.mxu0 0.0
  %3990 = vmatprep.subr.mxu0 0.0
  %3991 = vmatpush2.msra.mxu0 0.0
  %3992 = vmatprep.subr.mxu0 0.0
  %3993 = vmatpush2.msra.mxu0 0.0
  %3994 = vmatprep.subr.mxu0 0.0
  %3995 = vmatpush2.msra.mxu0 0.0
  %3996 = vmatprep.subr.mxu0 0.0
  %3997 = vmatpush2.msra.mxu0 0.0
  %3998 = vmatprep.subr.mxu0 0.0
  %3999 = vmatpush2.msra.mxu0 0.0
  %4000 = vmatprep.subr.mxu0 0.0
  %4001 = vmatpush2.msra.mxu0 0.0
  %4002 = vmatprep.subr.mxu0 0.0
  %4003 = vmatpush2.msra.mxu0 0.0
  %4004 = vmatprep.subr.mxu0 0.0
  %4005 = vmatpush2.msra.mxu0 0.0
  %4006 = vmatprep.subr.mxu0 0.0
  %4007 = vmatpush2.msra.mxu0 0.0
  %4008 = vmatprep.subr.mxu0 0.0
  %4009 = vmatpush2.msra.mxu0 0.0
  %4010 = vmatprep.mubr.f32.mxu0 0.0
  %4011 = vmatmul.mubr.f32.gmra.mxu0 %v3944
  %v4012 = vpop.f32.mrf.mxu0
  %v4013 = vadd.f32 0.0, %v4012
  %v4014 = vpop.f32.mrf.mxu0
  %v4015 = vadd.f32 0.0, %v4014
  %4016 = vdwg.mxu0
  %4017 = vmatprep.subr.mxu0 0.0
  %4018 = vmatpush1.msra.mxu0 0.0
  %4019 = vmatprep.subr.mxu0 0.0
  %4020 = vmatpush1.msra.mxu0 0.0
  %4021 = vmatprep.subr.mxu0 0.0
  %4022 = vmatpush1.msra.mxu0 0.0
  %4023 = vmatprep.subr.mxu0 0.0
  %4024 = vmatpush1.msra.mxu0 0.0
  %4025 = vmatprep.subr.mxu0 0.0
  %4026 = vmatpush1.msra.mxu0 0.0
  %4027 = vmatprep.subr.mxu0 0.0
  %4028 = vmatpush1.msra.mxu0 0.0
  %4029 = vmatprep.subr.mxu0 0.0
  %4030 = vmatpush1.msra.mxu0 0.0
  %4031 = vmatprep.subr.mxu0 0.0
  %4032 = vmatpush1.msra.mxu0 0.0
  %4033 = vmatprep.subr.mxu0 0.0
  %4034 = vmatpush1.msra.mxu0 0.0
  %4035 = vmatprep.subr.mxu0 0.0
  %4036 = vmatpush1.msra.mxu0 0.0
  %4037 = vmatprep.subr.mxu0 0.0
  %4038 = vmatpush1.msra.mxu0 0.0
  %4039 = vmatprep.subr.mxu0 0.0
  %4040 = vmatpush1.msra.mxu0 0.0
  %4041 = vmatprep.subr.mxu0 0.0
  %4042 = vmatpush1.msra.mxu0 0.0
  %4043 = vmatprep.subr.mxu0 0.0
  %4044 = vmatpush1.msra.mxu0 0.0
  %4045 = vmatprep.subr.mxu0 0.0
  %4046 = vmatpush1.msra.mxu0 0.0
  %4047 = vmatprep.subr.mxu0 %v3938
  %4048 = vmatpush1.msra.mxu0 %v3937
  %4049 = vmatprep.subr.mxu0 0.0
  %4050 = vmatpush2.msra.mxu0 0.0
  %4051 = vmatprep.subr.mxu0 0.0
  %4052 = vmatpush2.msra.mxu0 0.0
  %4053 = vmatprep.subr.mxu0 0.0
  %4054 = vmatpush2.msra.mxu0 0.0
  %4055 = vmatprep.subr.mxu0 0.0
  %4056 = vmatpush2.msra.mxu0 0.0
  %4057 = vmatprep.subr.mxu0 0.0
  %4058 = vmatpush2.msra.mxu0 0.0
  %4059 = vmatprep.subr.mxu0 0.0
  %4060 = vmatpush2.msra.mxu0 0.0
  %4061 = vmatprep.subr.mxu0 0.0
  %4062 = vmatpush2.msra.mxu0 0.0
  %4063 = vmatprep.subr.mxu0 0.0
  %4064 = vmatpush2.msra.mxu0 0.0
  %4065 = vmatprep.subr.mxu0 0.0
  %4066 = vmatpush2.msra.mxu0 0.0
  %4067 = vmatprep.subr.mxu0 0.0
  %4068 = vmatpush2.msra.mxu0 0.0
  %4069 = vmatprep.subr.mxu0 0.0
  %4070 = vmatpush2.msra.mxu0 0.0
  %4071 = vmatprep.subr.mxu0 0.0
  %4072 = vmatpush2.msra.mxu0 0.0
  %4073 = vmatprep.subr.mxu0 0.0
  %4074 = vmatpush2.msra.mxu0 0.0
  %4075 = vmatprep.subr.mxu0 0.0
  %4076 = vmatpush2.msra.mxu0 0.0
  %4077 = vmatprep.subr.mxu0 0.0
  %4078 = vmatpush2.msra.mxu0 0.0
  %4079 = vmatprep.subr.mxu0 0.0
  %4080 = vmatpush2.msra.mxu0 0.0
  %4081 = vmatprep.mubr.f32.mxu0 0.0
  %4082 = vmatmul.mubr.f32.gmra.mxu0 %v3944
  %v4083 = vpop.f32.mrf.mxu0
  %v4084 = vadd.f32 0.0, %v4083
  %v4085 = vpop.f32.mrf.mxu0
  %v4086 = vadd.f32 0.0, %v4085
  %4087 = vdwg.mxu0
  %v4088 = vadd.f32 %v3804, %v4013
  %v4089 = vadd.f32 %v3806, %v4015
  %v4090 = vadd.f32 %v3875, %v4084
  %v4091 = vadd.f32 %v3877, %v4086
  %4092 = vrot.lane.b32.xlu0 %v3507, 127
  %v4093 = vpop.permute.xlu0 %4092
  %4094 = vrot.lane.b32.xlu0 %v3511, 127
  %v4095 = vpop.permute.xlu0 %4094
  %4096 = vrot.lane.b32.xlu0 %v3515, 127
  %v4097 = vpop.permute.xlu0 %4096
  %4098 = vrot.lane.b32.xlu0 %v3519, 127
  %v4099 = vpop.permute.xlu0 %4098
  %v4100 = vsel %vm663, %v4093, %v4095
  %v4101 = vsel %vm663, %v4095, %v4097
  %v4102 = vsel %vm663, %v4097, %v4099
  %v4108 = vmul.f32 %v3496, %v4093
  %v4109 = vmul.f32 %v3497, %v4100
  %v4110 = vmul.f32 %v3498, %v4101
  %v4111 = vmul.f32 %v3499, %v4102
  %v4112 = vmul.f32 %v3500, %v4099
  %v4113 = vld [vmem:[%s677] sm:$0xff]
  %4119 = vrot.lane.b32.xlu0 %v4108, 1
  %v4120 = vpop.permute.xlu0 %4119
  %4121 = vrot.lane.b32.xlu0 %v4109, 1
  %v4122 = vpop.permute.xlu0 %4121
  %4123 = vrot.lane.b32.xlu0 %v4110, 1
  %v4124 = vpop.permute.xlu0 %4123
  %4125 = vrot.lane.b32.xlu0 %v4111, 1
  %v4126 = vpop.permute.xlu0 %4125
  %4127 = vrot.lane.b32.xlu0 %v4112, 1
  %v4128 = vpop.permute.xlu0 %4127
  %v4129 = vsel %vm694, %v4120, %v4122
  %v4130 = vsel %vm694, %v4122, %v4124
  %v4131 = vsel %vm694, %v4124, %v4126
  %v4132 = vsel %vm694, %v4126, %v4128
  %v4138 = vsel %vm126, %v4113, 0
  %4140 = vmatprep.subr.mxu0 0.0
  %4141 = vmatpush1.msra.mxu0 0.0
  %4142 = vmatprep.subr.mxu0 0.0
  %4143 = vmatpush1.msra.mxu0 0.0
  %4144 = vmatprep.subr.mxu0 0.0
  %4145 = vmatpush1.msra.mxu0 0.0
  %4146 = vmatprep.subr.mxu0 0.0
  %4147 = vmatpush1.msra.mxu0 0.0
  %4148 = vmatprep.subr.mxu0 0.0
  %4149 = vmatpush1.msra.mxu0 0.0
  %4150 = vmatprep.subr.mxu0 0.0
  %4151 = vmatpush1.msra.mxu0 0.0
  %4152 = vmatprep.subr.mxu0 0.0
  %4153 = vmatpush1.msra.mxu0 0.0
  %4154 = vmatprep.subr.mxu0 0.0
  %4155 = vmatpush1.msra.mxu0 0.0
  %4156 = vmatprep.subr.mxu0 0.0
  %4157 = vmatpush1.msra.mxu0 0.0
  %4158 = vmatprep.subr.mxu0 0.0
  %4159 = vmatpush1.msra.mxu0 0.0
  %4160 = vmatprep.subr.mxu0 0.0
  %4161 = vmatpush1.msra.mxu0 0.0
  %4162 = vmatprep.subr.mxu0 0.0
  %4163 = vmatpush1.msra.mxu0 0.0
  %4164 = vmatprep.subr.mxu0 0.0
  %4165 = vmatpush1.msra.mxu0 0.0
  %4166 = vmatprep.subr.mxu0 0.0
  %4167 = vmatpush1.msra.mxu0 0.0
  %4168 = vmatprep.subr.mxu0 0.0
  %4169 = vmatpush1.msra.mxu0 0.0
  %4170 = vmatprep.subr.mxu0 %v4130
  %4171 = vmatpush1.msra.mxu0 %v4129
  %4172 = vmatprep.subr.mxu0 0.0
  %4173 = vmatpush2.msra.mxu0 0.0
  %4174 = vmatprep.subr.mxu0 0.0
  %4175 = vmatpush2.msra.mxu0 0.0
  %4176 = vmatprep.subr.mxu0 0.0
  %4177 = vmatpush2.msra.mxu0 0.0
  %4178 = vmatprep.subr.mxu0 0.0
  %4179 = vmatpush2.msra.mxu0 0.0
  %4180 = vmatprep.subr.mxu0 0.0
  %4181 = vmatpush2.msra.mxu0 0.0
  %4182 = vmatprep.subr.mxu0 0.0
  %4183 = vmatpush2.msra.mxu0 0.0
  %4184 = vmatprep.subr.mxu0 0.0
  %4185 = vmatpush2.msra.mxu0 0.0
  %4186 = vmatprep.subr.mxu0 0.0
  %4187 = vmatpush2.msra.mxu0 0.0
  %4188 = vmatprep.subr.mxu0 0.0
  %4189 = vmatpush2.msra.mxu0 0.0
  %4190 = vmatprep.subr.mxu0 0.0
  %4191 = vmatpush2.msra.mxu0 0.0
  %4192 = vmatprep.subr.mxu0 0.0
  %4193 = vmatpush2.msra.mxu0 0.0
  %4194 = vmatprep.subr.mxu0 0.0
  %4195 = vmatpush2.msra.mxu0 0.0
  %4196 = vmatprep.subr.mxu0 0.0
  %4197 = vmatpush2.msra.mxu0 0.0
  %4198 = vmatprep.subr.mxu0 0.0
  %4199 = vmatpush2.msra.mxu0 0.0
  %4200 = vmatprep.subr.mxu0 0.0
  %4201 = vmatpush2.msra.mxu0 0.0
  %4202 = vmatprep.subr.mxu0 0.0
  %4203 = vmatpush2.msra.mxu0 0.0
  %4204 = vmatprep.mubr.f32.mxu0 0.0
  %4205 = vmatmul.mubr.f32.gmra.mxu0 %v4138
  %v4206 = vpop.f32.mrf.mxu0
  %v4207 = vadd.f32 0.0, %v4206
  %v4208 = vpop.f32.mrf.mxu0
  %v4209 = vadd.f32 0.0, %v4208
  %4210 = vdwg.mxu0
  %4211 = vmatprep.subr.mxu0 0.0
  %4212 = vmatpush1.msra.mxu0 0.0
  %4213 = vmatprep.subr.mxu0 0.0
  %4214 = vmatpush1.msra.mxu0 0.0
  %4215 = vmatprep.subr.mxu0 0.0
  %4216 = vmatpush1.msra.mxu0 0.0
  %4217 = vmatprep.subr.mxu0 0.0
  %4218 = vmatpush1.msra.mxu0 0.0
  %4219 = vmatprep.subr.mxu0 0.0
  %4220 = vmatpush1.msra.mxu0 0.0
  %4221 = vmatprep.subr.mxu0 0.0
  %4222 = vmatpush1.msra.mxu0 0.0
  %4223 = vmatprep.subr.mxu0 0.0
  %4224 = vmatpush1.msra.mxu0 0.0
  %4225 = vmatprep.subr.mxu0 0.0
  %4226 = vmatpush1.msra.mxu0 0.0
  %4227 = vmatprep.subr.mxu0 0.0
  %4228 = vmatpush1.msra.mxu0 0.0
  %4229 = vmatprep.subr.mxu0 0.0
  %4230 = vmatpush1.msra.mxu0 0.0
  %4231 = vmatprep.subr.mxu0 0.0
  %4232 = vmatpush1.msra.mxu0 0.0
  %4233 = vmatprep.subr.mxu0 0.0
  %4234 = vmatpush1.msra.mxu0 0.0
  %4235 = vmatprep.subr.mxu0 0.0
  %4236 = vmatpush1.msra.mxu0 0.0
  %4237 = vmatprep.subr.mxu0 0.0
  %4238 = vmatpush1.msra.mxu0 0.0
  %4239 = vmatprep.subr.mxu0 0.0
  %4240 = vmatpush1.msra.mxu0 0.0
  %4241 = vmatprep.subr.mxu0 %v4132
  %4242 = vmatpush1.msra.mxu0 %v4131
  %4243 = vmatprep.subr.mxu0 0.0
  %4244 = vmatpush2.msra.mxu0 0.0
  %4245 = vmatprep.subr.mxu0 0.0
  %4246 = vmatpush2.msra.mxu0 0.0
  %4247 = vmatprep.subr.mxu0 0.0
  %4248 = vmatpush2.msra.mxu0 0.0
  %4249 = vmatprep.subr.mxu0 0.0
  %4250 = vmatpush2.msra.mxu0 0.0
  %4251 = vmatprep.subr.mxu0 0.0
  %4252 = vmatpush2.msra.mxu0 0.0
  %4253 = vmatprep.subr.mxu0 0.0
  %4254 = vmatpush2.msra.mxu0 0.0
  %4255 = vmatprep.subr.mxu0 0.0
  %4256 = vmatpush2.msra.mxu0 0.0
  %4257 = vmatprep.subr.mxu0 0.0
  %4258 = vmatpush2.msra.mxu0 0.0
  %4259 = vmatprep.subr.mxu0 0.0
  %4260 = vmatpush2.msra.mxu0 0.0
  %4261 = vmatprep.subr.mxu0 0.0
  %4262 = vmatpush2.msra.mxu0 0.0
  %4263 = vmatprep.subr.mxu0 0.0
  %4264 = vmatpush2.msra.mxu0 0.0
  %4265 = vmatprep.subr.mxu0 0.0
  %4266 = vmatpush2.msra.mxu0 0.0
  %4267 = vmatprep.subr.mxu0 0.0
  %4268 = vmatpush2.msra.mxu0 0.0
  %4269 = vmatprep.subr.mxu0 0.0
  %4270 = vmatpush2.msra.mxu0 0.0
  %4271 = vmatprep.subr.mxu0 0.0
  %4272 = vmatpush2.msra.mxu0 0.0
  %4273 = vmatprep.subr.mxu0 0.0
  %4274 = vmatpush2.msra.mxu0 0.0
  %4275 = vmatprep.mubr.f32.mxu0 0.0
  %4276 = vmatmul.mubr.f32.gmra.mxu0 %v4138
  %v4277 = vpop.f32.mrf.mxu0
  %v4278 = vadd.f32 0.0, %v4277
  %v4279 = vpop.f32.mrf.mxu0
  %v4280 = vadd.f32 0.0, %v4279
  %4281 = vdwg.mxu0
  %v4282 = vadd.f32 %v4088, %v4207
  %v4283 = vadd.f32 %v4089, %v4209
  %v4284 = vadd.f32 %v4090, %v4278
  %v4285 = vadd.f32 %v4091, %v4280
  %v4286 = vld [vmem:[%s852] sm:$0xff]
  %v4288 = vsel %vm126, %v4286, 0
  %4290 = vmatprep.subr.mxu0 0.0
  %4291 = vmatpush1.msra.mxu0 0.0
  %4292 = vmatprep.subr.mxu0 0.0
  %4293 = vmatpush1.msra.mxu0 0.0
  %4294 = vmatprep.subr.mxu0 0.0
  %4295 = vmatpush1.msra.mxu0 0.0
  %4296 = vmatprep.subr.mxu0 0.0
  %4297 = vmatpush1.msra.mxu0 0.0
  %4298 = vmatprep.subr.mxu0 0.0
  %4299 = vmatpush1.msra.mxu0 0.0
  %4300 = vmatprep.subr.mxu0 0.0
  %4301 = vmatpush1.msra.mxu0 0.0
  %4302 = vmatprep.subr.mxu0 0.0
  %4303 = vmatpush1.msra.mxu0 0.0
  %4304 = vmatprep.subr.mxu0 0.0
  %4305 = vmatpush1.msra.mxu0 0.0
  %4306 = vmatprep.subr.mxu0 0.0
  %4307 = vmatpush1.msra.mxu0 0.0
  %4308 = vmatprep.subr.mxu0 0.0
  %4309 = vmatpush1.msra.mxu0 0.0
  %4310 = vmatprep.subr.mxu0 0.0
  %4311 = vmatpush1.msra.mxu0 0.0
  %4312 = vmatprep.subr.mxu0 0.0
  %4313 = vmatpush1.msra.mxu0 0.0
  %4314 = vmatprep.subr.mxu0 0.0
  %4315 = vmatpush1.msra.mxu0 0.0
  %4316 = vmatprep.subr.mxu0 0.0
  %4317 = vmatpush1.msra.mxu0 0.0
  %4318 = vmatprep.subr.mxu0 0.0
  %4319 = vmatpush1.msra.mxu0 0.0
  %4320 = vmatprep.subr.mxu0 %v3498
  %4321 = vmatpush1.msra.mxu0 %v3497
  %4322 = vmatprep.subr.mxu0 0.0
  %4323 = vmatpush2.msra.mxu0 0.0
  %4324 = vmatprep.subr.mxu0 0.0
  %4325 = vmatpush2.msra.mxu0 0.0
  %4326 = vmatprep.subr.mxu0 0.0
  %4327 = vmatpush2.msra.mxu0 0.0
  %4328 = vmatprep.subr.mxu0 0.0
  %4329 = vmatpush2.msra.mxu0 0.0
  %4330 = vmatprep.subr.mxu0 0.0
  %4331 = vmatpush2.msra.mxu0 0.0
  %4332 = vmatprep.subr.mxu0 0.0
  %4333 = vmatpush2.msra.mxu0 0.0
  %4334 = vmatprep.subr.mxu0 0.0
  %4335 = vmatpush2.msra.mxu0 0.0
  %4336 = vmatprep.subr.mxu0 0.0
  %4337 = vmatpush2.msra.mxu0 0.0
  %4338 = vmatprep.subr.mxu0 0.0
  %4339 = vmatpush2.msra.mxu0 0.0
  %4340 = vmatprep.subr.mxu0 0.0
  %4341 = vmatpush2.msra.mxu0 0.0
  %4342 = vmatprep.subr.mxu0 0.0
  %4343 = vmatpush2.msra.mxu0 0.0
  %4344 = vmatprep.subr.mxu0 0.0
  %4345 = vmatpush2.msra.mxu0 0.0
  %4346 = vmatprep.subr.mxu0 0.0
  %4347 = vmatpush2.msra.mxu0 0.0
  %4348 = vmatprep.subr.mxu0 0.0
  %4349 = vmatpush2.msra.mxu0 0.0
  %4350 = vmatprep.subr.mxu0 0.0
  %4351 = vmatpush2.msra.mxu0 0.0
  %4352 = vmatprep.subr.mxu0 0.0
  %4353 = vmatpush2.msra.mxu0 0.0
  %4354 = vmatprep.mubr.f32.mxu0 0.0
  %4355 = vmatmul.mubr.f32.gmra.mxu0 %v4288
  %v4356 = vpop.f32.mrf.mxu0
  %v4357 = vadd.f32 0.0, %v4356
  %v4358 = vpop.f32.mrf.mxu0
  %v4359 = vadd.f32 0.0, %v4358
  %4360 = vdwg.mxu0
  %4361 = vmatprep.subr.mxu0 0.0
  %4362 = vmatpush1.msra.mxu0 0.0
  %4363 = vmatprep.subr.mxu0 0.0
  %4364 = vmatpush1.msra.mxu0 0.0
  %4365 = vmatprep.subr.mxu0 0.0
  %4366 = vmatpush1.msra.mxu0 0.0
  %4367 = vmatprep.subr.mxu0 0.0
  %4368 = vmatpush1.msra.mxu0 0.0
  %4369 = vmatprep.subr.mxu0 0.0
  %4370 = vmatpush1.msra.mxu0 0.0
  %4371 = vmatprep.subr.mxu0 0.0
  %4372 = vmatpush1.msra.mxu0 0.0
  %4373 = vmatprep.subr.mxu0 0.0
  %4374 = vmatpush1.msra.mxu0 0.0
  %4375 = vmatprep.subr.mxu0 0.0
  %4376 = vmatpush1.msra.mxu0 0.0
  %4377 = vmatprep.subr.mxu0 0.0
  %4378 = vmatpush1.msra.mxu0 0.0
  %4379 = vmatprep.subr.mxu0 0.0
  %4380 = vmatpush1.msra.mxu0 0.0
  %4381 = vmatprep.subr.mxu0 0.0
  %4382 = vmatpush1.msra.mxu0 0.0
  %4383 = vmatprep.subr.mxu0 0.0
  %4384 = vmatpush1.msra.mxu0 0.0
  %4385 = vmatprep.subr.mxu0 0.0
  %4386 = vmatpush1.msra.mxu0 0.0
  %4387 = vmatprep.subr.mxu0 0.0
  %4388 = vmatpush1.msra.mxu0 0.0
  %4389 = vmatprep.subr.mxu0 0.0
  %4390 = vmatpush1.msra.mxu0 0.0
  %4391 = vmatprep.subr.mxu0 %v3500
  %4392 = vmatpush1.msra.mxu0 %v3499
  %4393 = vmatprep.subr.mxu0 0.0
  %4394 = vmatpush2.msra.mxu0 0.0
  %4395 = vmatprep.subr.mxu0 0.0
  %4396 = vmatpush2.msra.mxu0 0.0
  %4397 = vmatprep.subr.mxu0 0.0
  %4398 = vmatpush2.msra.mxu0 0.0
  %4399 = vmatprep.subr.mxu0 0.0
  %4400 = vmatpush2.msra.mxu0 0.0
  %4401 = vmatprep.subr.mxu0 0.0
  %4402 = vmatpush2.msra.mxu0 0.0
  %4403 = vmatprep.subr.mxu0 0.0
  %4404 = vmatpush2.msra.mxu0 0.0
  %4405 = vmatprep.subr.mxu0 0.0
  %4406 = vmatpush2.msra.mxu0 0.0
  %4407 = vmatprep.subr.mxu0 0.0
  %4408 = vmatpush2.msra.mxu0 0.0
  %4409 = vmatprep.subr.mxu0 0.0
  %4410 = vmatpush2.msra.mxu0 0.0
  %4411 = vmatprep.subr.mxu0 0.0
  %4412 = vmatpush2.msra.mxu0 0.0
  %4413 = vmatprep.subr.mxu0 0.0
  %4414 = vmatpush2.msra.mxu0 0.0
  %4415 = vmatprep.subr.mxu0 0.0
  %4416 = vmatpush2.msra.mxu0 0.0
  %4417 = vmatprep.subr.mxu0 0.0
  %4418 = vmatpush2.msra.mxu0 0.0
  %4419 = vmatprep.subr.mxu0 0.0
  %4420 = vmatpush2.msra.mxu0 0.0
  %4421 = vmatprep.subr.mxu0 0.0
  %4422 = vmatpush2.msra.mxu0 0.0
  %4423 = vmatprep.subr.mxu0 0.0
  %4424 = vmatpush2.msra.mxu0 0.0
  %4425 = vmatprep.mubr.f32.mxu0 0.0
  %4426 = vmatmul.mubr.f32.gmra.mxu0 %v4288
  %v4427 = vpop.f32.mrf.mxu0
  %v4428 = vadd.f32 0.0, %v4427
  %v4429 = vpop.f32.mrf.mxu0
  %v4430 = vadd.f32 0.0, %v4429
  %4431 = vdwg.mxu0
  %v4432 = vadd.f32 %v4282, %v4357
  %v4433 = vadd.f32 %v4283, %v4359
  %v4434 = vadd.f32 %v4284, %v4428
  %v4435 = vadd.f32 %v4285, %v4430
  %v4436 = vld [vmem:[#allocation2 + $0x48] sm:$0xff]
  %v4437 = vld [vmem:[#allocation2 + $0x50] sm:$0xff]
  %v4438 = vld [vmem:[#allocation2 + $0x58] sm:$0xff]
  %v4439 = vld [vmem:[#allocation2 + $0x60] sm:$0xff]
  %v4440 = vld [vmem:[#allocation2 + $0x68] sm:$0xff]
  %4441 = vrot.lane.b32.xlu0 %v3885, 1
  %v4442 = vpop.permute.xlu0 %4441
  %4443 = vrot.lane.b32.xlu0 %v3889, 1
  %v4444 = vpop.permute.xlu0 %4443
  %4445 = vrot.lane.b32.xlu0 %v3893, 1
  %v4446 = vpop.permute.xlu0 %4445
  %4447 = vrot.lane.b32.xlu0 %v3897, 1
  %v4448 = vpop.permute.xlu0 %4447
  %v4449 = vsel %vm694, %v4442, %v4444
  %v4450 = vsel %vm694, %v4444, %v4446
  %v4451 = vsel %vm694, %v4446, %v4448
  %v4457 = vmul.f32 %v4436, %v4442
  %v4458 = vmul.f32 %v4437, %v4449
  %v4459 = vmul.f32 %v4438, %v4450
  %v4460 = vmul.f32 %v4439, %v4451
  %v4461 = vmul.f32 %v4440, %v4448
  %v4462 = vld [vmem:[%s1029] sm:$0xff]
  %4468 = vrot.lane.b32.xlu0 %v4457, 127
  %v4469 = vpop.permute.xlu0 %4468
  %4470 = vrot.lane.b32.xlu0 %v4458, 127
  %v4471 = vpop.permute.xlu0 %4470
  %4472 = vrot.lane.b32.xlu0 %v4459, 127
  %v4473 = vpop.permute.xlu0 %4472
  %4474 = vrot.lane.b32.xlu0 %v4460, 127
  %v4475 = vpop.permute.xlu0 %4474
  %4476 = vrot.lane.b32.xlu0 %v4461, 127
  %v4477 = vpop.permute.xlu0 %4476
  %v4478 = vsel %vm663, %v4469, %v4471
  %v4479 = vsel %vm663, %v4471, %v4473
  %v4480 = vsel %vm663, %v4473, %v4475
  %v4481 = vsel %vm663, %v4475, %v4477
  %v4487 = vsel %vm126, %v4462, 0
  %4489 = vmatprep.subr.mxu0 0.0
  %4490 = vmatpush1.msra.mxu0 0.0
  %4491 = vmatprep.subr.mxu0 0.0
  %4492 = vmatpush1.msra.mxu0 0.0
  %4493 = vmatprep.subr.mxu0 0.0
  %4494 = vmatpush1.msra.mxu0 0.0
  %4495 = vmatprep.subr.mxu0 0.0
  %4496 = vmatpush1.msra.mxu0 0.0
  %4497 = vmatprep.subr.mxu0 0.0
  %4498 = vmatpush1.msra.mxu0 0.0
  %4499 = vmatprep.subr.mxu0 0.0
  %4500 = vmatpush1.msra.mxu0 0.0
  %4501 = vmatprep.subr.mxu0 0.0
  %4502 = vmatpush1.msra.mxu0 0.0
  %4503 = vmatprep.subr.mxu0 0.0
  %4504 = vmatpush1.msra.mxu0 0.0
  %4505 = vmatprep.subr.mxu0 0.0
  %4506 = vmatpush1.msra.mxu0 0.0
  %4507 = vmatprep.subr.mxu0 0.0
  %4508 = vmatpush1.msra.mxu0 0.0
  %4509 = vmatprep.subr.mxu0 0.0
  %4510 = vmatpush1.msra.mxu0 0.0
  %4511 = vmatprep.subr.mxu0 0.0
  %4512 = vmatpush1.msra.mxu0 0.0
  %4513 = vmatprep.subr.mxu0 0.0
  %4514 = vmatpush1.msra.mxu0 0.0
  %4515 = vmatprep.subr.mxu0 0.0
  %4516 = vmatpush1.msra.mxu0 0.0
  %4517 = vmatprep.subr.mxu0 0.0
  %4518 = vmatpush1.msra.mxu0 0.0
  %4519 = vmatprep.subr.mxu0 %v4479
  %4520 = vmatpush1.msra.mxu0 %v4478
  %4521 = vmatprep.subr.mxu0 0.0
  %4522 = vmatpush2.msra.mxu0 0.0
  %4523 = vmatprep.subr.mxu0 0.0
  %4524 = vmatpush2.msra.mxu0 0.0
  %4525 = vmatprep.subr.mxu0 0.0
  %4526 = vmatpush2.msra.mxu0 0.0
  %4527 = vmatprep.subr.mxu0 0.0
  %4528 = vmatpush2.msra.mxu0 0.0
  %4529 = vmatprep.subr.mxu0 0.0
  %4530 = vmatpush2.msra.mxu0 0.0
  %4531 = vmatprep.subr.mxu0 0.0
  %4532 = vmatpush2.msra.mxu0 0.0
  %4533 = vmatprep.subr.mxu0 0.0
  %4534 = vmatpush2.msra.mxu0 0.0
  %4535 = vmatprep.subr.mxu0 0.0
  %4536 = vmatpush2.msra.mxu0 0.0
  %4537 = vmatprep.subr.mxu0 0.0
  %4538 = vmatpush2.msra.mxu0 0.0
  %4539 = vmatprep.subr.mxu0 0.0
  %4540 = vmatpush2.msra.mxu0 0.0
  %4541 = vmatprep.subr.mxu0 0.0
  %4542 = vmatpush2.msra.mxu0 0.0
  %4543 = vmatprep.subr.mxu0 0.0
  %4544 = vmatpush2.msra.mxu0 0.0
  %4545 = vmatprep.subr.mxu0 0.0
  %4546 = vmatpush2.msra.mxu0 0.0
  %4547 = vmatprep.subr.mxu0 0.0
  %4548 = vmatpush2.msra.mxu0 0.0
  %4549 = vmatprep.subr.mxu0 0.0
  %4550 = vmatpush2.msra.mxu0 0.0
  %4551 = vmatprep.subr.mxu0 0.0
  %4552 = vmatpush2.msra.mxu0 0.0
  %4553 = vmatprep.mubr.f32.mxu0 0.0
  %4554 = vmatmul.mubr.f32.gmra.mxu0 %v4487
  %v4555 = vpop.f32.mrf.mxu0
  %v4556 = vadd.f32 0.0, %v4555
  %v4557 = vpop.f32.mrf.mxu0
  %v4558 = vadd.f32 0.0, %v4557
  %4559 = vdwg.mxu0
  %4560 = vmatprep.subr.mxu0 0.0
  %4561 = vmatpush1.msra.mxu0 0.0
  %4562 = vmatprep.subr.mxu0 0.0
  %4563 = vmatpush1.msra.mxu0 0.0
  %4564 = vmatprep.subr.mxu0 0.0
  %4565 = vmatpush1.msra.mxu0 0.0
  %4566 = vmatprep.subr.mxu0 0.0
  %4567 = vmatpush1.msra.mxu0 0.0
  %4568 = vmatprep.subr.mxu0 0.0
  %4569 = vmatpush1.msra.mxu0 0.0
  %4570 = vmatprep.subr.mxu0 0.0
  %4571 = vmatpush1.msra.mxu0 0.0
  %4572 = vmatprep.subr.mxu0 0.0
  %4573 = vmatpush1.msra.mxu0 0.0
  %4574 = vmatprep.subr.mxu0 0.0
  %4575 = vmatpush1.msra.mxu0 0.0
  %4576 = vmatprep.subr.mxu0 0.0
  %4577 = vmatpush1.msra.mxu0 0.0
  %4578 = vmatprep.subr.mxu0 0.0
  %4579 = vmatpush1.msra.mxu0 0.0
  %4580 = vmatprep.subr.mxu0 0.0
  %4581 = vmatpush1.msra.mxu0 0.0
  %4582 = vmatprep.subr.mxu0 0.0
  %4583 = vmatpush1.msra.mxu0 0.0
  %4584 = vmatprep.subr.mxu0 0.0
  %4585 = vmatpush1.msra.mxu0 0.0
  %4586 = vmatprep.subr.mxu0 0.0
  %4587 = vmatpush1.msra.mxu0 0.0
  %4588 = vmatprep.subr.mxu0 0.0
  %4589 = vmatpush1.msra.mxu0 0.0
  %4590 = vmatprep.subr.mxu0 %v4481
  %4591 = vmatpush1.msra.mxu0 %v4480
  %4592 = vmatprep.subr.mxu0 0.0
  %4593 = vmatpush2.msra.mxu0 0.0
  %4594 = vmatprep.subr.mxu0 0.0
  %4595 = vmatpush2.msra.mxu0 0.0
  %4596 = vmatprep.subr.mxu0 0.0
  %4597 = vmatpush2.msra.mxu0 0.0
  %4598 = vmatprep.subr.mxu0 0.0
  %4599 = vmatpush2.msra.mxu0 0.0
  %4600 = vmatprep.subr.mxu0 0.0
  %4601 = vmatpush2.msra.mxu0 0.0
  %4602 = vmatprep.subr.mxu0 0.0
  %4603 = vmatpush2.msra.mxu0 0.0
  %4604 = vmatprep.subr.mxu0 0.0
  %4605 = vmatpush2.msra.mxu0 0.0
  %4606 = vmatprep.subr.mxu0 0.0
  %4607 = vmatpush2.msra.mxu0 0.0
  %4608 = vmatprep.subr.mxu0 0.0
  %4609 = vmatpush2.msra.mxu0 0.0
  %4610 = vmatprep.subr.mxu0 0.0
  %4611 = vmatpush2.msra.mxu0 0.0
  %4612 = vmatprep.subr.mxu0 0.0
  %4613 = vmatpush2.msra.mxu0 0.0
  %4614 = vmatprep.subr.mxu0 0.0
  %4615 = vmatpush2.msra.mxu0 0.0
  %4616 = vmatprep.subr.mxu0 0.0
  %4617 = vmatpush2.msra.mxu0 0.0
  %4618 = vmatprep.subr.mxu0 0.0
  %4619 = vmatpush2.msra.mxu0 0.0
  %4620 = vmatprep.subr.mxu0 0.0
  %4621 = vmatpush2.msra.mxu0 0.0
  %4622 = vmatprep.subr.mxu0 0.0
  %4623 = vmatpush2.msra.mxu0 0.0
  %4624 = vmatprep.mubr.f32.mxu0 0.0
  %4625 = vmatmul.mubr.f32.gmra.mxu0 %v4487
  %v4626 = vpop.f32.mrf.mxu0
  %v4627 = vadd.f32 0.0, %v4626
  %v4628 = vpop.f32.mrf.mxu0
  %v4629 = vadd.f32 0.0, %v4628
  %4630 = vdwg.mxu0
  %v4631 = vadd.f32 %v4432, %v4556
  %v4632 = vadd.f32 %v4433, %v4558
  %v4633 = vadd.f32 %v4434, %v4627
  %v4634 = vadd.f32 %v4435, %v4629
  %v4635 = vmul.f32 %v4436, %v3521
  %v4636 = vmul.f32 %v4437, %v3528
  %v4637 = vmul.f32 %v4438, %v3529
  %v4638 = vmul.f32 %v4439, %v3530
  %v4639 = vmul.f32 %v4440, %v3527
  %v4640 = vld [vmem:[%s1208] sm:$0xff]
  %4646 = vrot.lane.b32.xlu0 %v4635, 65
  %v4647 = vpop.permute.xlu0 %4646
  %4648 = vrot.lane.b32.xlu0 %v4636, 65
  %v4649 = vpop.permute.xlu0 %4648
  %4650 = vrot.lane.b32.xlu0 %v4637, 65
  %v4651 = vpop.permute.xlu0 %4650
  %4652 = vrot.lane.b32.xlu0 %v4638, 65
  %v4653 = vpop.permute.xlu0 %4652
  %4654 = vrot.lane.b32.xlu0 %v4639, 65
  %v4655 = vpop.permute.xlu0 %4654
  %v4656 = vsel %vm287, %v4647, %v4649
  %v4657 = vsel %vm287, %v4649, %v4651
  %v4658 = vsel %vm287, %v4651, %v4653
  %v4659 = vsel %vm287, %v4653, %v4655
  %v4665 = vsel %vm126, %v4640, 0
  %4667 = vmatprep.subr.mxu0 0.0
  %4668 = vmatpush1.msra.mxu0 0.0
  %4669 = vmatprep.subr.mxu0 0.0
  %4670 = vmatpush1.msra.mxu0 0.0
  %4671 = vmatprep.subr.mxu0 0.0
  %4672 = vmatpush1.msra.mxu0 0.0
  %4673 = vmatprep.subr.mxu0 0.0
  %4674 = vmatpush1.msra.mxu0 0.0
  %4675 = vmatprep.subr.mxu0 0.0
  %4676 = vmatpush1.msra.mxu0 0.0
  %4677 = vmatprep.subr.mxu0 0.0
  %4678 = vmatpush1.msra.mxu0 0.0
  %4679 = vmatprep.subr.mxu0 0.0
  %4680 = vmatpush1.msra.mxu0 0.0
  %4681 = vmatprep.subr.mxu0 0.0
  %4682 = vmatpush1.msra.mxu0 0.0
  %4683 = vmatprep.subr.mxu0 0.0
  %4684 = vmatpush1.msra.mxu0 0.0
  %4685 = vmatprep.subr.mxu0 0.0
  %4686 = vmatpush1.msra.mxu0 0.0
  %4687 = vmatprep.subr.mxu0 0.0
  %4688 = vmatpush1.msra.mxu0 0.0
  %4689 = vmatprep.subr.mxu0 0.0
  %4690 = vmatpush1.msra.mxu0 0.0
  %4691 = vmatprep.subr.mxu0 0.0
  %4692 = vmatpush1.msra.mxu0 0.0
  %4693 = vmatprep.subr.mxu0 0.0
  %4694 = vmatpush1.msra.mxu0 0.0
  %4695 = vmatprep.subr.mxu0 0.0
  %4696 = vmatpush1.msra.mxu0 0.0
  %4697 = vmatprep.subr.mxu0 %v4657
  %4698 = vmatpush1.msra.mxu0 %v4656
  %4699 = vmatprep.subr.mxu0 0.0
  %4700 = vmatpush2.msra.mxu0 0.0
  %4701 = vmatprep.subr.mxu0 0.0
  %4702 = vmatpush2.msra.mxu0 0.0
  %4703 = vmatprep.subr.mxu0 0.0
  %4704 = vmatpush2.msra.mxu0 0.0
  %4705 = vmatprep.subr.mxu0 0.0
  %4706 = vmatpush2.msra.mxu0 0.0
  %4707 = vmatprep.subr.mxu0 0.0
  %4708 = vmatpush2.msra.mxu0 0.0
  %4709 = vmatprep.subr.mxu0 0.0
  %4710 = vmatpush2.msra.mxu0 0.0
  %4711 = vmatprep.subr.mxu0 0.0
  %4712 = vmatpush2.msra.mxu0 0.0
  %4713 = vmatprep.subr.mxu0 0.0
  %4714 = vmatpush2.msra.mxu0 0.0
  %4715 = vmatprep.subr.mxu0 0.0
  %4716 = vmatpush2.msra.mxu0 0.0
  %4717 = vmatprep.subr.mxu0 0.0
  %4718 = vmatpush2.msra.mxu0 0.0
  %4719 = vmatprep.subr.mxu0 0.0
  %4720 = vmatpush2.msra.mxu0 0.0
  %4721 = vmatprep.subr.mxu0 0.0
  %4722 = vmatpush2.msra.mxu0 0.0
  %4723 = vmatprep.subr.mxu0 0.0
  %4724 = vmatpush2.msra.mxu0 0.0
  %4725 = vmatprep.subr.mxu0 0.0
  %4726 = vmatpush2.msra.mxu0 0.0
  %4727 = vmatprep.subr.mxu0 0.0
  %4728 = vmatpush2.msra.mxu0 0.0
  %4729 = vmatprep.subr.mxu0 0.0
  %4730 = vmatpush2.msra.mxu0 0.0
  %4731 = vmatprep.mubr.f32.mxu0 0.0
  %4732 = vmatmul.mubr.f32.gmra.mxu0 %v4665
  %v4733 = vpop.f32.mrf.mxu0
  %v4734 = vadd.f32 0.0, %v4733
  %v4735 = vpop.f32.mrf.mxu0
  %v4736 = vadd.f32 0.0, %v4735
  %4737 = vdwg.mxu0
  %4738 = vmatprep.subr.mxu0 0.0
  %4739 = vmatpush1.msra.mxu0 0.0
  %4740 = vmatprep.subr.mxu0 0.0
  %4741 = vmatpush1.msra.mxu0 0.0
  %4742 = vmatprep.subr.mxu0 0.0
  %4743 = vmatpush1.msra.mxu0 0.0
  %4744 = vmatprep.subr.mxu0 0.0
  %4745 = vmatpush1.msra.mxu0 0.0
  %4746 = vmatprep.subr.mxu0 0.0
  %4747 = vmatpush1.msra.mxu0 0.0
  %4748 = vmatprep.subr.mxu0 0.0
  %4749 = vmatpush1.msra.mxu0 0.0
  %4750 = vmatprep.subr.mxu0 0.0
  %4751 = vmatpush1.msra.mxu0 0.0
  %4752 = vmatprep.subr.mxu0 0.0
  %4753 = vmatpush1.msra.mxu0 0.0
  %4754 = vmatprep.subr.mxu0 0.0
  %4755 = vmatpush1.msra.mxu0 0.0
  %4756 = vmatprep.subr.mxu0 0.0
  %4757 = vmatpush1.msra.mxu0 0.0
  %4758 = vmatprep.subr.mxu0 0.0
  %4759 = vmatpush1.msra.mxu0 0.0
  %4760 = vmatprep.subr.mxu0 0.0
  %4761 = vmatpush1.msra.mxu0 0.0
  %4762 = vmatprep.subr.mxu0 0.0
  %4763 = vmatpush1.msra.mxu0 0.0
  %4764 = vmatprep.subr.mxu0 0.0
  %4765 = vmatpush1.msra.mxu0 0.0
  %4766 = vmatprep.subr.mxu0 0.0
  %4767 = vmatpush1.msra.mxu0 0.0
  %4768 = vmatprep.subr.mxu0 %v4659
  %4769 = vmatpush1.msra.mxu0 %v4658
  %4770 = vmatprep.subr.mxu0 0.0
  %4771 = vmatpush2.msra.mxu0 0.0
  %4772 = vmatprep.subr.mxu0 0.0
  %4773 = vmatpush2.msra.mxu0 0.0
  %4774 = vmatprep.subr.mxu0 0.0
  %4775 = vmatpush2.msra.mxu0 0.0
  %4776 = vmatprep.subr.mxu0 0.0
  %4777 = vmatpush2.msra.mxu0 0.0
  %4778 = vmatprep.subr.mxu0 0.0
  %4779 = vmatpush2.msra.mxu0 0.0
  %4780 = vmatprep.subr.mxu0 0.0
  %4781 = vmatpush2.msra.mxu0 0.0
  %4782 = vmatprep.subr.mxu0 0.0
  %4783 = vmatpush2.msra.mxu0 0.0
  %4784 = vmatprep.subr.mxu0 0.0
  %4785 = vmatpush2.msra.mxu0 0.0
  %4786 = vmatprep.subr.mxu0 0.0
  %4787 = vmatpush2.msra.mxu0 0.0
  %4788 = vmatprep.subr.mxu0 0.0
  %4789 = vmatpush2.msra.mxu0 0.0
  %4790 = vmatprep.subr.mxu0 0.0
  %4791 = vmatpush2.msra.mxu0 0.0
  %4792 = vmatprep.subr.mxu0 0.0
  %4793 = vmatpush2.msra.mxu0 0.0
  %4794 = vmatprep.subr.mxu0 0.0
  %4795 = vmatpush2.msra.mxu0 0.0
  %4796 = vmatprep.subr.mxu0 0.0
  %4797 = vmatpush2.msra.mxu0 0.0
  %4798 = vmatprep.subr.mxu0 0.0
  %4799 = vmatpush2.msra.mxu0 0.0
  %4800 = vmatprep.subr.mxu0 0.0
  %4801 = vmatpush2.msra.mxu0 0.0
  %4802 = vmatprep.mubr.f32.mxu0 0.0
  %4803 = vmatmul.mubr.f32.gmra.mxu0 %v4665
  %v4804 = vpop.f32.mrf.mxu0
  %v4805 = vadd.f32 0.0, %v4804
  %v4806 = vpop.f32.mrf.mxu0
  %v4807 = vadd.f32 0.0, %v4806
  %4808 = vdwg.mxu0
  %v4809 = vadd.f32 %v4631, %v4734
  %v4810 = vadd.f32 %v4632, %v4736
  %v4811 = vadd.f32 %v4633, %v4805
  %v4812 = vadd.f32 %v4634, %v4807
  %v4813 = vld [vmem:[%s1382] sm:$0xff]
  %4819 = vrot.lane.b32.xlu0 %v4436, 64
  %v4820 = vpop.permute.xlu0 %4819
  %4821 = vrot.lane.b32.xlu0 %v4437, 64
  %v4822 = vpop.permute.xlu0 %4821
  %4823 = vrot.lane.b32.xlu0 %v4438, 64
  %v4824 = vpop.permute.xlu0 %4823
  %4825 = vrot.lane.b32.xlu0 %v4439, 64
  %v4826 = vpop.permute.xlu0 %4825
  %4827 = vrot.lane.b32.xlu0 %v4440, 64
  %v4828 = vpop.permute.xlu0 %4827
  %v4829 = vsel %vm117, %v4820, %v4822
  %v4830 = vsel %vm117, %v4822, %v4824
  %v4831 = vsel %vm117, %v4824, %v4826
  %v4832 = vsel %vm117, %v4826, %v4828
  %v4838 = vsel %vm126, %v4813, 0
  %4840 = vmatprep.subr.mxu0 0.0
  %4841 = vmatpush1.msra.mxu0 0.0
  %4842 = vmatprep.subr.mxu0 0.0
  %4843 = vmatpush1.msra.mxu0 0.0
  %4844 = vmatprep.subr.mxu0 0.0
  %4845 = vmatpush1.msra.mxu0 0.0
  %4846 = vmatprep.subr.mxu0 0.0
  %4847 = vmatpush1.msra.mxu0 0.0
  %4848 = vmatprep.subr.mxu0 0.0
  %4849 = vmatpush1.msra.mxu0 0.0
  %4850 = vmatprep.subr.mxu0 0.0
  %4851 = vmatpush1.msra.mxu0 0.0
  %4852 = vmatprep.subr.mxu0 0.0
  %4853 = vmatpush1.msra.mxu0 0.0
  %4854 = vmatprep.subr.mxu0 0.0
  %4855 = vmatpush1.msra.mxu0 0.0
  %4856 = vmatprep.subr.mxu0 0.0
  %4857 = vmatpush1.msra.mxu0 0.0
  %4858 = vmatprep.subr.mxu0 0.0
  %4859 = vmatpush1.msra.mxu0 0.0
  %4860 = vmatprep.subr.mxu0 0.0
  %4861 = vmatpush1.msra.mxu0 0.0
  %4862 = vmatprep.subr.mxu0 0.0
  %4863 = vmatpush1.msra.mxu0 0.0
  %4864 = vmatprep.subr.mxu0 0.0
  %4865 = vmatpush1.msra.mxu0 0.0
  %4866 = vmatprep.subr.mxu0 0.0
  %4867 = vmatpush1.msra.mxu0 0.0
  %4868 = vmatprep.subr.mxu0 0.0
  %4869 = vmatpush1.msra.mxu0 0.0
  %4870 = vmatprep.subr.mxu0 %v4830
  %4871 = vmatpush1.msra.mxu0 %v4829
  %4872 = vmatprep.subr.mxu0 0.0
  %4873 = vmatpush2.msra.mxu0 0.0
  %4874 = vmatprep.subr.mxu0 0.0
  %4875 = vmatpush2.msra.mxu0 0.0
  %4876 = vmatprep.subr.mxu0 0.0
  %4877 = vmatpush2.msra.mxu0 0.0
  %4878 = vmatprep.subr.mxu0 0.0
  %4879 = vmatpush2.msra.mxu0 0.0
  %4880 = vmatprep.subr.mxu0 0.0
  %4881 = vmatpush2.msra.mxu0 0.0
  %4882 = vmatprep.subr.mxu0 0.0
  %4883 = vmatpush2.msra.mxu0 0.0
  %4884 = vmatprep.subr.mxu0 0.0
  %4885 = vmatpush2.msra.mxu0 0.0
  %4886 = vmatprep.subr.mxu0 0.0
  %4887 = vmatpush2.msra.mxu0 0.0
  %4888 = vmatprep.subr.mxu0 0.0
  %4889 = vmatpush2.msra.mxu0 0.0
  %4890 = vmatprep.subr.mxu0 0.0
  %4891 = vmatpush2.msra.mxu0 0.0
  %4892 = vmatprep.subr.mxu0 0.0
  %4893 = vmatpush2.msra.mxu0 0.0
  %4894 = vmatprep.subr.mxu0 0.0
  %4895 = vmatpush2.msra.mxu0 0.0
  %4896 = vmatprep.subr.mxu0 0.0
  %4897 = vmatpush2.msra.mxu0 0.0
  %4898 = vmatprep.subr.mxu0 0.0
  %4899 = vmatpush2.msra.mxu0 0.0
  %4900 = vmatprep.subr.mxu0 0.0
  %4901 = vmatpush2.msra.mxu0 0.0
  %4902 = vmatprep.subr.mxu0 0.0
  %4903 = vmatpush2.msra.mxu0 0.0
  %4904 = vmatprep.mubr.f32.mxu0 0.0
  %4905 = vmatmul.mubr.f32.gmra.mxu0 %v4838
  %v4906 = vpop.f32.mrf.mxu0
  %v4907 = vadd.f32 0.0, %v4906
  %v4908 = vpop.f32.mrf.mxu0
  %v4909 = vadd.f32 0.0, %v4908
  %4910 = vdwg.mxu0
  %4911 = vmatprep.subr.mxu0 0.0
  %4912 = vmatpush1.msra.mxu0 0.0
  %4913 = vmatprep.subr.mxu0 0.0
  %4914 = vmatpush1.msra.mxu0 0.0
  %4915 = vmatprep.subr.mxu0 0.0
  %4916 = vmatpush1.msra.mxu0 0.0
  %4917 = vmatprep.subr.mxu0 0.0
  %4918 = vmatpush1.msra.mxu0 0.0
  %4919 = vmatprep.subr.mxu0 0.0
  %4920 = vmatpush1.msra.mxu0 0.0
  %4921 = vmatprep.subr.mxu0 0.0
  %4922 = vmatpush1.msra.mxu0 0.0
  %4923 = vmatprep.subr.mxu0 0.0
  %4924 = vmatpush1.msra.mxu0 0.0
  %4925 = vmatprep.subr.mxu0 0.0
  %4926 = vmatpush1.msra.mxu0 0.0
  %4927 = vmatprep.subr.mxu0 0.0
  %4928 = vmatpush1.msra.mxu0 0.0
  %4929 = vmatprep.subr.mxu0 0.0
  %4930 = vmatpush1.msra.mxu0 0.0
  %4931 = vmatprep.subr.mxu0 0.0
  %4932 = vmatpush1.msra.mxu0 0.0
  %4933 = vmatprep.subr.mxu0 0.0
  %4934 = vmatpush1.msra.mxu0 0.0
  %4935 = vmatprep.subr.mxu0 0.0
  %4936 = vmatpush1.msra.mxu0 0.0
  %4937 = vmatprep.subr.mxu0 0.0
  %4938 = vmatpush1.msra.mxu0 0.0
  %4939 = vmatprep.subr.mxu0 0.0
  %4940 = vmatpush1.msra.mxu0 0.0
  %4941 = vmatprep.subr.mxu0 %v4832
  %4942 = vmatpush1.msra.mxu0 %v4831
  %4943 = vmatprep.subr.mxu0 0.0
  %4944 = vmatpush2.msra.mxu0 0.0
  %4945 = vmatprep.subr.mxu0 0.0
  %4946 = vmatpush2.msra.mxu0 0.0
  %4947 = vmatprep.subr.mxu0 0.0
  %4948 = vmatpush2.msra.mxu0 0.0
  %4949 = vmatprep.subr.mxu0 0.0
  %4950 = vmatpush2.msra.mxu0 0.0
  %4951 = vmatprep.subr.mxu0 0.0
  %4952 = vmatpush2.msra.mxu0 0.0
  %4953 = vmatprep.subr.mxu0 0.0
  %4954 = vmatpush2.msra.mxu0 0.0
  %4955 = vmatprep.subr.mxu0 0.0
  %4956 = vmatpush2.msra.mxu0 0.0
  %4957 = vmatprep.subr.mxu0 0.0
  %4958 = vmatpush2.msra.mxu0 0.0
  %4959 = vmatprep.subr.mxu0 0.0
  %4960 = vmatpush2.msra.mxu0 0.0
  %4961 = vmatprep.subr.mxu0 0.0
  %4962 = vmatpush2.msra.mxu0 0.0
  %4963 = vmatprep.subr.mxu0 0.0
  %4964 = vmatpush2.msra.mxu0 0.0
  %4965 = vmatprep.subr.mxu0 0.0
  %4966 = vmatpush2.msra.mxu0 0.0
  %4967 = vmatprep.subr.mxu0 0.0
  %4968 = vmatpush2.msra.mxu0 0.0
  %4969 = vmatprep.subr.mxu0 0.0
  %4970 = vmatpush2.msra.mxu0 0.0
  %4971 = vmatprep.subr.mxu0 0.0
  %4972 = vmatpush2.msra.mxu0 0.0
  %4973 = vmatprep.subr.mxu0 0.0
  %4974 = vmatpush2.msra.mxu0 0.0
  %4975 = vmatprep.mubr.f32.mxu0 0.0
  %4976 = vmatmul.mubr.f32.gmra.mxu0 %v4838
  %v4977 = vpop.f32.mrf.mxu0
  %v4978 = vadd.f32 0.0, %v4977
  %v4979 = vpop.f32.mrf.mxu0
  %v4980 = vadd.f32 0.0, %v4979
  %4981 = vdwg.mxu0
  %v4982 = vadd.f32 %v4809, %v4907
  %v4983 = vadd.f32 %v4810, %v4909
  %v4984 = vadd.f32 %v4811, %v4978
  %v4985 = vadd.f32 %v4812, %v4980
  %v4986 = vmul.f32 %v4436, %v3899
  %v4987 = vmul.f32 %v4437, %v3906
  %v4988 = vmul.f32 %v4438, %v3907
  %v4989 = vmul.f32 %v4439, %v3908
  %v4990 = vmul.f32 %v4440, %v3905
  %v4991 = vld [vmem:[%s1561] sm:$0xff]
  %4997 = vrot.lane.b32.xlu0 %v4986, 63
  %v4998 = vpop.permute.xlu0 %4997
  %4999 = vrot.lane.b32.xlu0 %v4987, 63
  %v5000 = vpop.permute.xlu0 %4999
  %5001 = vrot.lane.b32.xlu0 %v4988, 63
  %v5002 = vpop.permute.xlu0 %5001
  %5003 = vrot.lane.b32.xlu0 %v4989, 63
  %v5004 = vpop.permute.xlu0 %5003
  %5005 = vrot.lane.b32.xlu0 %v4990, 63
  %v5006 = vpop.permute.xlu0 %5005
  %v5007 = vsel %vm85, %v4998, %v5000
  %v5008 = vsel %vm85, %v5000, %v5002
  %v5009 = vsel %vm85, %v5002, %v5004
  %v5010 = vsel %vm85, %v5004, %v5006
  %v5016 = vsel %vm126, %v4991, 0
  %5018 = vmatprep.subr.mxu0 0.0
  %5019 = vmatpush1.msra.mxu0 0.0
  %5020 = vmatprep.subr.mxu0 0.0
  %5021 = vmatpush1.msra.mxu0 0.0
  %5022 = vmatprep.subr.mxu0 0.0
  %5023 = vmatpush1.msra.mxu0 0.0
  %5024 = vmatprep.subr.mxu0 0.0
  %5025 = vmatpush1.msra.mxu0 0.0
  %5026 = vmatprep.subr.mxu0 0.0
  %5027 = vmatpush1.msra.mxu0 0.0
  %5028 = vmatprep.subr.mxu0 0.0
  %5029 = vmatpush1.msra.mxu0 0.0
  %5030 = vmatprep.subr.mxu0 0.0
  %5031 = vmatpush1.msra.mxu0 0.0
  %5032 = vmatprep.subr.mxu0 0.0
  %5033 = vmatpush1.msra.mxu0 0.0
  %5034 = vmatprep.subr.mxu0 0.0
  %5035 = vmatpush1.msra.mxu0 0.0
  %5036 = vmatprep.subr.mxu0 0.0
  %5037 = vmatpush1.msra.mxu0 0.0
  %5038 = vmatprep.subr.mxu0 0.0
  %5039 = vmatpush1.msra.mxu0 0.0
  %5040 = vmatprep.subr.mxu0 0.0
  %5041 = vmatpush1.msra.mxu0 0.0
  %5042 = vmatprep.subr.mxu0 0.0
  %5043 = vmatpush1.msra.mxu0 0.0
  %5044 = vmatprep.subr.mxu0 0.0
  %5045 = vmatpush1.msra.mxu0 0.0
  %5046 = vmatprep.subr.mxu0 0.0
  %5047 = vmatpush1.msra.mxu0 0.0
  %5048 = vmatprep.subr.mxu0 %v5008
  %5049 = vmatpush1.msra.mxu0 %v5007
  %5050 = vmatprep.subr.mxu0 0.0
  %5051 = vmatpush2.msra.mxu0 0.0
  %5052 = vmatprep.subr.mxu0 0.0
  %5053 = vmatpush2.msra.mxu0 0.0
  %5054 = vmatprep.subr.mxu0 0.0
  %5055 = vmatpush2.msra.mxu0 0.0
  %5056 = vmatprep.subr.mxu0 0.0
  %5057 = vmatpush2.msra.mxu0 0.0
  %5058 = vmatprep.subr.mxu0 0.0
  %5059 = vmatpush2.msra.mxu0 0.0
  %5060 = vmatprep.subr.mxu0 0.0
  %5061 = vmatpush2.msra.mxu0 0.0
  %5062 = vmatprep.subr.mxu0 0.0
  %5063 = vmatpush2.msra.mxu0 0.0
  %5064 = vmatprep.subr.mxu0 0.0
  %5065 = vmatpush2.msra.mxu0 0.0
  %5066 = vmatprep.subr.mxu0 0.0
  %5067 = vmatpush2.msra.mxu0 0.0
  %5068 = vmatprep.subr.mxu0 0.0
  %5069 = vmatpush2.msra.mxu0 0.0
  %5070 = vmatprep.subr.mxu0 0.0
  %5071 = vmatpush2.msra.mxu0 0.0
  %5072 = vmatprep.subr.mxu0 0.0
  %5073 = vmatpush2.msra.mxu0 0.0
  %5074 = vmatprep.subr.mxu0 0.0
  %5075 = vmatpush2.msra.mxu0 0.0
  %5076 = vmatprep.subr.mxu0 0.0
  %5077 = vmatpush2.msra.mxu0 0.0
  %5078 = vmatprep.subr.mxu0 0.0
  %5079 = vmatpush2.msra.mxu0 0.0
  %5080 = vmatprep.subr.mxu0 0.0
  %5081 = vmatpush2.msra.mxu0 0.0
  %5082 = vmatprep.mubr.f32.mxu0 0.0
  %5083 = vmatmul.mubr.f32.gmra.mxu0 %v5016
  %v5084 = vpop.f32.mrf.mxu0
  %v5085 = vadd.f32 0.0, %v5084
  %v5086 = vpop.f32.mrf.mxu0
  %v5087 = vadd.f32 0.0, %v5086
  %5088 = vdwg.mxu0
  %5089 = vmatprep.subr.mxu0 0.0
  %5090 = vmatpush1.msra.mxu0 0.0
  %5091 = vmatprep.subr.mxu0 0.0
  %5092 = vmatpush1.msra.mxu0 0.0
  %5093 = vmatprep.subr.mxu0 0.0
  %5094 = vmatpush1.msra.mxu0 0.0
  %5095 = vmatprep.subr.mxu0 0.0
  %5096 = vmatpush1.msra.mxu0 0.0
  %5097 = vmatprep.subr.mxu0 0.0
  %5098 = vmatpush1.msra.mxu0 0.0
  %5099 = vmatprep.subr.mxu0 0.0
  %5100 = vmatpush1.msra.mxu0 0.0
  %5101 = vmatprep.subr.mxu0 0.0
  %5102 = vmatpush1.msra.mxu0 0.0
  %5103 = vmatprep.subr.mxu0 0.0
  %5104 = vmatpush1.msra.mxu0 0.0
  %5105 = vmatprep.subr.mxu0 0.0
  %5106 = vmatpush1.msra.mxu0 0.0
  %5107 = vmatprep.subr.mxu0 0.0
  %5108 = vmatpush1.msra.mxu0 0.0
  %5109 = vmatprep.subr.mxu0 0.0
  %5110 = vmatpush1.msra.mxu0 0.0
  %5111 = vmatprep.subr.mxu0 0.0
  %5112 = vmatpush1.msra.mxu0 0.0
  %5113 = vmatprep.subr.mxu0 0.0
  %5114 = vmatpush1.msra.mxu0 0.0
  %5115 = vmatprep.subr.mxu0 0.0
  %5116 = vmatpush1.msra.mxu0 0.0
  %5117 = vmatprep.subr.mxu0 0.0
  %5118 = vmatpush1.msra.mxu0 0.0
  %5119 = vmatprep.subr.mxu0 %v5010
  %5120 = vmatpush1.msra.mxu0 %v5009
  %5121 = vmatprep.subr.mxu0 0.0
  %5122 = vmatpush2.msra.mxu0 0.0
  %5123 = vmatprep.subr.mxu0 0.0
  %5124 = vmatpush2.msra.mxu0 0.0
  %5125 = vmatprep.subr.mxu0 0.0
  %5126 = vmatpush2.msra.mxu0 0.0
  %5127 = vmatprep.subr.mxu0 0.0
  %5128 = vmatpush2.msra.mxu0 0.0
  %5129 = vmatprep.subr.mxu0 0.0
  %5130 = vmatpush2.msra.mxu0 0.0
  %5131 = vmatprep.subr.mxu0 0.0
  %5132 = vmatpush2.msra.mxu0 0.0
  %5133 = vmatprep.subr.mxu0 0.0
  %5134 = vmatpush2.msra.mxu0 0.0
  %5135 = vmatprep.subr.mxu0 0.0
  %5136 = vmatpush2.msra.mxu0 0.0
  %5137 = vmatprep.subr.mxu0 0.0
  %5138 = vmatpush2.msra.mxu0 0.0
  %5139 = vmatprep.subr.mxu0 0.0
  %5140 = vmatpush2.msra.mxu0 0.0
  %5141 = vmatprep.subr.mxu0 0.0
  %5142 = vmatpush2.msra.mxu0 0.0
  %5143 = vmatprep.subr.mxu0 0.0
  %5144 = vmatpush2.msra.mxu0 0.0
  %5145 = vmatprep.subr.mxu0 0.0
  %5146 = vmatpush2.msra.mxu0 0.0
  %5147 = vmatprep.subr.mxu0 0.0
  %5148 = vmatpush2.msra.mxu0 0.0
  %5149 = vmatprep.subr.mxu0 0.0
  %5150 = vmatpush2.msra.mxu0 0.0
  %5151 = vmatprep.subr.mxu0 0.0
  %5152 = vmatpush2.msra.mxu0 0.0
  %5153 = vmatprep.mubr.f32.mxu0 0.0
  %5154 = vmatmul.mubr.f32.gmra.mxu0 %v5016
  %v5155 = vpop.f32.mrf.mxu0
  %v5156 = vadd.f32 0.0, %v5155
  %v5157 = vpop.f32.mrf.mxu0
  %v5158 = vadd.f32 0.0, %v5157
  %5159 = vdwg.mxu0
  %v5160 = vadd.f32 %v4982, %v5085
  %v5161 = vadd.f32 %v4983, %v5087
  %v5162 = vadd.f32 %v4984, %v5156
  %v5163 = vadd.f32 %v4985, %v5158
  %5164 = vst [vmem:[%s5 + $0x40] sm:$0xff] %v5160
  %5165 = vst [vmem:[%s5 + $0x48] sm:$0xff] %v5161
  %5166 = vst [vmem:[%s5 + $0x50] sm:$0xff] %v5162
  %5167 = vst [vmem:[%s5 + $0x58] sm:$0xff] %v5163
  %v5172 = vcombine.low %v5160, %v5161
  %v5173 = vcombine.high %v5160, %v5161
  %v5174 = vcombine.low %v5162, %v5163
  %v5175 = vcombine.high %v5162, %v5163
  %v5180 = vcombine.high %v5172, %v5172
  %v5181 = vcombine.high %v5174, %v5174
  %v5182 = vcombine.high %v5173, %v5173
  %v5183 = vcombine.high %v5175, %v5175
  %v5188 = vsel %vm1759, %v5172, 0.0
  %v5189 = vsel %vm1759, %v5180, 0.0
  %v5190 = vadd.f32 %v5188, %v5189
  %v5191 = vsel %vm1759, %v5174, 0.0
  %v5192 = vadd.f32 %v5190, %v5191
  %v5193 = vsel %vm1759, %v5181, 0.0
  %v5194 = vadd.f32 %v5192, %v5193
  %5195 = vadd.xlane.f32.xlu0 %v5194
  %v5196 = vpop.xlane.xlu0 %5195
  %v5197 = vsel %vm1759, %v5173, 0.0
  %v5198 = vsel %vm1759, %v5182, 0.0
  %v5199 = vadd.f32 %v5197, %v5198
  %v5200 = vsel %vm1759, %v5175, 0.0
  %v5201 = vadd.f32 %v5199, %v5200
  %v5202 = vsel %vm1759, %v5183, 0.0
  %v5203 = vadd.f32 %v5201, %v5202
  %5204 = vadd.xlane.f32.xlu0 %v5203
  %v5205 = vpop.xlane.xlu0 %5204
  %v5206 = vsel %vm1759, %v5196, 0.0
  %v5207 = vsel %vm1759, %v5205, 0.0
  %v5208 = vadd.f32 %v5206, %v5207
  %v5209 = vadd.f32 %v3495, %v5208
  %v5210 = vld [vmem:[#allocation2 + $0x60] sm:$0xff]
  %v5211 = vld [vmem:[#allocation2 + $0x68] sm:$0xff]
  %v5212 = vld [vmem:[#allocation2 + $0x70] sm:$0xff]
  %v5213 = vld [vmem:[#allocation2 + $0x78] sm:$0xff]
  %v5214 = vld [vmem:[#allocation2 + $0x80] sm:$0xff]
  %s5215 = scalar_lea.vmem %s2, 24
  %v5216 = vld [vmem:[%s5215] ss:$2 sm:$0xf]
  %v5218 = vlaneseq
  %v5219 = vshrl.u32 %v5218, 7
  %v5220 = vsub.s32 0, %v5219
  %v5221 = vrot.slane %v5216, %v5220
  %v5222 = vlaneseq
  %v5223 = vshrl.u32 %v5222, 7
  %v5224 = vsub.s32 1, %v5223
  %v5225 = vrot.slane %v5216, %v5224
  %v5226 = vlaneseq
  %v5227 = vshrl.u32 %v5226, 7
  %v5228 = vsub.s32 2, %v5227
  %v5229 = vrot.slane %v5216, %v5228
  %v5230 = vlaneseq
  %v5231 = vshrl.u32 %v5230, 7
  %v5232 = vsub.s32 3, %v5231
  %v5233 = vrot.slane %v5216, %v5232
  %5234 = vrot.lane.b32.xlu0 %v5221, 63
  %v5235 = vpop.permute.xlu0 %5234
  %5236 = vrot.lane.b32.xlu0 %v5225, 63
  %v5237 = vpop.permute.xlu0 %5236
  %5238 = vrot.lane.b32.xlu0 %v5229, 63
  %v5239 = vpop.permute.xlu0 %5238
  %5240 = vrot.lane.b32.xlu0 %v5233, 63
  %v5241 = vpop.permute.xlu0 %5240
  %v5242 = vsel %vm85, %v5235, %v5237
  %v5243 = vsel %vm85, %v5237, %v5239
  %v5244 = vsel %vm85, %v5239, %v5241
  %v5250 = vmul.f32 %v5210, %v5235
  %v5251 = vmul.f32 %v5211, %v5242
  %v5252 = vmul.f32 %v5212, %v5243
  %v5253 = vmul.f32 %v5213, %v5244
  %v5254 = vmul.f32 %v5214, %v5241
  %v5255 = vld [vmem:[%s1] sm:$0xff]
  %v5256 = vld [vmem:[%s100] sm:$0xff]
  %5262 = vrot.lane.b32.xlu0 %v5210, 64
  %v5263 = vpop.permute.xlu0 %5262
  %5264 = vrot.lane.b32.xlu0 %v5211, 64
  %v5265 = vpop.permute.xlu0 %5264
  %5266 = vrot.lane.b32.xlu0 %v5212, 64
  %v5267 = vpop.permute.xlu0 %5266
  %5268 = vrot.lane.b32.xlu0 %v5213, 64
  %v5269 = vpop.permute.xlu0 %5268
  %5270 = vrot.lane.b32.xlu0 %v5214, 64
  %v5271 = vpop.permute.xlu0 %5270
  %v5272 = vsel %vm117, %v5263, %v5265
  %v5273 = vsel %vm117, %v5265, %v5267
  %v5274 = vsel %vm117, %v5267, %v5269
  %v5275 = vsel %vm117, %v5269, %v5271
  %v5281 = vsel %vm126, %v5256, 0
  %5283 = vmatprep.subr.mxu0 0.0
  %5284 = vmatpush1.msra.mxu0 0.0
  %5285 = vmatprep.subr.mxu0 0.0
  %5286 = vmatpush1.msra.mxu0 0.0
  %5287 = vmatprep.subr.mxu0 0.0
  %5288 = vmatpush1.msra.mxu0 0.0
  %5289 = vmatprep.subr.mxu0 0.0
  %5290 = vmatpush1.msra.mxu0 0.0
  %5291 = vmatprep.subr.mxu0 0.0
  %5292 = vmatpush1.msra.mxu0 0.0
  %5293 = vmatprep.subr.mxu0 0.0
  %5294 = vmatpush1.msra.mxu0 0.0
  %5295 = vmatprep.subr.mxu0 0.0
  %5296 = vmatpush1.msra.mxu0 0.0
  %5297 = vmatprep.subr.mxu0 0.0
  %5298 = vmatpush1.msra.mxu0 0.0
  %5299 = vmatprep.subr.mxu0 0.0
  %5300 = vmatpush1.msra.mxu0 0.0
  %5301 = vmatprep.subr.mxu0 0.0
  %5302 = vmatpush1.msra.mxu0 0.0
  %5303 = vmatprep.subr.mxu0 0.0
  %5304 = vmatpush1.msra.mxu0 0.0
  %5305 = vmatprep.subr.mxu0 0.0
  %5306 = vmatpush1.msra.mxu0 0.0
  %5307 = vmatprep.subr.mxu0 0.0
  %5308 = vmatpush1.msra.mxu0 0.0
  %5309 = vmatprep.subr.mxu0 0.0
  %5310 = vmatpush1.msra.mxu0 0.0
  %5311 = vmatprep.subr.mxu0 0.0
  %5312 = vmatpush1.msra.mxu0 0.0
  %5313 = vmatprep.subr.mxu0 %v5273
  %5314 = vmatpush1.msra.mxu0 %v5272
  %5315 = vmatprep.subr.mxu0 0.0
  %5316 = vmatpush2.msra.mxu0 0.0
  %5317 = vmatprep.subr.mxu0 0.0
  %5318 = vmatpush2.msra.mxu0 0.0
  %5319 = vmatprep.subr.mxu0 0.0
  %5320 = vmatpush2.msra.mxu0 0.0
  %5321 = vmatprep.subr.mxu0 0.0
  %5322 = vmatpush2.msra.mxu0 0.0
  %5323 = vmatprep.subr.mxu0 0.0
  %5324 = vmatpush2.msra.mxu0 0.0
  %5325 = vmatprep.subr.mxu0 0.0
  %5326 = vmatpush2.msra.mxu0 0.0
  %5327 = vmatprep.subr.mxu0 0.0
  %5328 = vmatpush2.msra.mxu0 0.0
  %5329 = vmatprep.subr.mxu0 0.0
  %5330 = vmatpush2.msra.mxu0 0.0
  %5331 = vmatprep.subr.mxu0 0.0
  %5332 = vmatpush2.msra.mxu0 0.0
  %5333 = vmatprep.subr.mxu0 0.0
  %5334 = vmatpush2.msra.mxu0 0.0
  %5335 = vmatprep.subr.mxu0 0.0
  %5336 = vmatpush2.msra.mxu0 0.0
  %5337 = vmatprep.subr.mxu0 0.0
  %5338 = vmatpush2.msra.mxu0 0.0
  %5339 = vmatprep.subr.mxu0 0.0
  %5340 = vmatpush2.msra.mxu0 0.0
  %5341 = vmatprep.subr.mxu0 0.0
  %5342 = vmatpush2.msra.mxu0 0.0
  %5343 = vmatprep.subr.mxu0 0.0
  %5344 = vmatpush2.msra.mxu0 0.0
  %5345 = vmatprep.subr.mxu0 0.0
  %5346 = vmatpush2.msra.mxu0 0.0
  %5347 = vmatprep.mubr.f32.mxu0 0.0
  %5348 = vmatmul.mubr.f32.gmra.mxu0 %v5281
  %v5349 = vpop.f32.mrf.mxu0
  %v5350 = vadd.f32 0.0, %v5349
  %v5351 = vpop.f32.mrf.mxu0
  %v5352 = vadd.f32 0.0, %v5351
  %5353 = vdwg.mxu0
  %5354 = vmatprep.subr.mxu0 0.0
  %5355 = vmatpush1.msra.mxu0 0.0
  %5356 = vmatprep.subr.mxu0 0.0
  %5357 = vmatpush1.msra.mxu0 0.0
  %5358 = vmatprep.subr.mxu0 0.0
  %5359 = vmatpush1.msra.mxu0 0.0
  %5360 = vmatprep.subr.mxu0 0.0
  %5361 = vmatpush1.msra.mxu0 0.0
  %5362 = vmatprep.subr.mxu0 0.0
  %5363 = vmatpush1.msra.mxu0 0.0
  %5364 = vmatprep.subr.mxu0 0.0
  %5365 = vmatpush1.msra.mxu0 0.0
  %5366 = vmatprep.subr.mxu0 0.0
  %5367 = vmatpush1.msra.mxu0 0.0
  %5368 = vmatprep.subr.mxu0 0.0
  %5369 = vmatpush1.msra.mxu0 0.0
  %5370 = vmatprep.subr.mxu0 0.0
  %5371 = vmatpush1.msra.mxu0 0.0
  %5372 = vmatprep.subr.mxu0 0.0
  %5373 = vmatpush1.msra.mxu0 0.0
  %5374 = vmatprep.subr.mxu0 0.0
  %5375 = vmatpush1.msra.mxu0 0.0
  %5376 = vmatprep.subr.mxu0 0.0
  %5377 = vmatpush1.msra.mxu0 0.0
  %5378 = vmatprep.subr.mxu0 0.0
  %5379 = vmatpush1.msra.mxu0 0.0
  %5380 = vmatprep.subr.mxu0 0.0
  %5381 = vmatpush1.msra.mxu0 0.0
  %5382 = vmatprep.subr.mxu0 0.0
  %5383 = vmatpush1.msra.mxu0 0.0
  %5384 = vmatprep.subr.mxu0 %v5275
  %5385 = vmatpush1.msra.mxu0 %v5274
  %5386 = vmatprep.subr.mxu0 0.0
  %5387 = vmatpush2.msra.mxu0 0.0
  %5388 = vmatprep.subr.mxu0 0.0
  %5389 = vmatpush2.msra.mxu0 0.0
  %5390 = vmatprep.subr.mxu0 0.0
  %5391 = vmatpush2.msra.mxu0 0.0
  %5392 = vmatprep.subr.mxu0 0.0
  %5393 = vmatpush2.msra.mxu0 0.0
  %5394 = vmatprep.subr.mxu0 0.0
  %5395 = vmatpush2.msra.mxu0 0.0
  %5396 = vmatprep.subr.mxu0 0.0
  %5397 = vmatpush2.msra.mxu0 0.0
  %5398 = vmatprep.subr.mxu0 0.0
  %5399 = vmatpush2.msra.mxu0 0.0
  %5400 = vmatprep.subr.mxu0 0.0
  %5401 = vmatpush2.msra.mxu0 0.0
  %5402 = vmatprep.subr.mxu0 0.0
  %5403 = vmatpush2.msra.mxu0 0.0
  %5404 = vmatprep.subr.mxu0 0.0
  %5405 = vmatpush2.msra.mxu0 0.0
  %5406 = vmatprep.subr.mxu0 0.0
  %5407 = vmatpush2.msra.mxu0 0.0
  %5408 = vmatprep.subr.mxu0 0.0
  %5409 = vmatpush2.msra.mxu0 0.0
  %5410 = vmatprep.subr.mxu0 0.0
  %5411 = vmatpush2.msra.mxu0 0.0
  %5412 = vmatprep.subr.mxu0 0.0
  %5413 = vmatpush2.msra.mxu0 0.0
  %5414 = vmatprep.subr.mxu0 0.0
  %5415 = vmatpush2.msra.mxu0 0.0
  %5416 = vmatprep.subr.mxu0 0.0
  %5417 = vmatpush2.msra.mxu0 0.0
  %5418 = vmatprep.mubr.f32.mxu0 0.0
  %5419 = vmatmul.mubr.f32.gmra.mxu0 %v5281
  %v5420 = vpop.f32.mrf.mxu0
  %v5421 = vadd.f32 0.0, %v5420
  %v5422 = vpop.f32.mrf.mxu0
  %v5423 = vadd.f32 0.0, %v5422
  %5424 = vdwg.mxu0
  %5430 = vrot.lane.b32.xlu0 %v5250, 65
  %v5431 = vpop.permute.xlu0 %5430
  %5432 = vrot.lane.b32.xlu0 %v5251, 65
  %v5433 = vpop.permute.xlu0 %5432
  %5434 = vrot.lane.b32.xlu0 %v5252, 65
  %v5435 = vpop.permute.xlu0 %5434
  %5436 = vrot.lane.b32.xlu0 %v5253, 65
  %v5437 = vpop.permute.xlu0 %5436
  %5438 = vrot.lane.b32.xlu0 %v5254, 65
  %v5439 = vpop.permute.xlu0 %5438
  %v5440 = vsel %vm287, %v5431, %v5433
  %v5441 = vsel %vm287, %v5433, %v5435
  %v5442 = vsel %vm287, %v5435, %v5437
  %v5443 = vsel %vm287, %v5437, %v5439
  %v5449 = vsel %vm126, %v5255, 0
  %5451 = vmatprep.subr.mxu0 0.0
  %5452 = vmatpush1.msra.mxu0 0.0
  %5453 = vmatprep.subr.mxu0 0.0
  %5454 = vmatpush1.msra.mxu0 0.0
  %5455 = vmatprep.subr.mxu0 0.0
  %5456 = vmatpush1.msra.mxu0 0.0
  %5457 = vmatprep.subr.mxu0 0.0
  %5458 = vmatpush1.msra.mxu0 0.0
  %5459 = vmatprep.subr.mxu0 0.0
  %5460 = vmatpush1.msra.mxu0 0.0
  %5461 = vmatprep.subr.mxu0 0.0
  %5462 = vmatpush1.msra.mxu0 0.0
  %5463 = vmatprep.subr.mxu0 0.0
  %5464 = vmatpush1.msra.mxu0 0.0
  %5465 = vmatprep.subr.mxu0 0.0
  %5466 = vmatpush1.msra.mxu0 0.0
  %5467 = vmatprep.subr.mxu0 0.0
  %5468 = vmatpush1.msra.mxu0 0.0
  %5469 = vmatprep.subr.mxu0 0.0
  %5470 = vmatpush1.msra.mxu0 0.0
  %5471 = vmatprep.subr.mxu0 0.0
  %5472 = vmatpush1.msra.mxu0 0.0
  %5473 = vmatprep.subr.mxu0 0.0
  %5474 = vmatpush1.msra.mxu0 0.0
  %5475 = vmatprep.subr.mxu0 0.0
  %5476 = vmatpush1.msra.mxu0 0.0
  %5477 = vmatprep.subr.mxu0 0.0
  %5478 = vmatpush1.msra.mxu0 0.0
  %5479 = vmatprep.subr.mxu0 0.0
  %5480 = vmatpush1.msra.mxu0 0.0
  %5481 = vmatprep.subr.mxu0 %v5441
  %5482 = vmatpush1.msra.mxu0 %v5440
  %5483 = vmatprep.subr.mxu0 0.0
  %5484 = vmatpush2.msra.mxu0 0.0
  %5485 = vmatprep.subr.mxu0 0.0
  %5486 = vmatpush2.msra.mxu0 0.0
  %5487 = vmatprep.subr.mxu0 0.0
  %5488 = vmatpush2.msra.mxu0 0.0
  %5489 = vmatprep.subr.mxu0 0.0
  %5490 = vmatpush2.msra.mxu0 0.0
  %5491 = vmatprep.subr.mxu0 0.0
  %5492 = vmatpush2.msra.mxu0 0.0
  %5493 = vmatprep.subr.mxu0 0.0
  %5494 = vmatpush2.msra.mxu0 0.0
  %5495 = vmatprep.subr.mxu0 0.0
  %5496 = vmatpush2.msra.mxu0 0.0
  %5497 = vmatprep.subr.mxu0 0.0
  %5498 = vmatpush2.msra.mxu0 0.0
  %5499 = vmatprep.subr.mxu0 0.0
  %5500 = vmatpush2.msra.mxu0 0.0
  %5501 = vmatprep.subr.mxu0 0.0
  %5502 = vmatpush2.msra.mxu0 0.0
  %5503 = vmatprep.subr.mxu0 0.0
  %5504 = vmatpush2.msra.mxu0 0.0
  %5505 = vmatprep.subr.mxu0 0.0
  %5506 = vmatpush2.msra.mxu0 0.0
  %5507 = vmatprep.subr.mxu0 0.0
  %5508 = vmatpush2.msra.mxu0 0.0
  %5509 = vmatprep.subr.mxu0 0.0
  %5510 = vmatpush2.msra.mxu0 0.0
  %5511 = vmatprep.subr.mxu0 0.0
  %5512 = vmatpush2.msra.mxu0 0.0
  %5513 = vmatprep.subr.mxu0 0.0
  %5514 = vmatpush2.msra.mxu0 0.0
  %5515 = vmatprep.mubr.f32.mxu0 0.0
  %5516 = vmatmul.mubr.f32.gmra.mxu0 %v5449
  %v5517 = vpop.f32.mrf.mxu0
  %v5518 = vadd.f32 %v5350, %v5517
  %v5519 = vpop.f32.mrf.mxu0
  %v5520 = vadd.f32 %v5352, %v5519
  %5521 = vdwg.mxu0
  %5522 = vmatprep.subr.mxu0 0.0
  %5523 = vmatpush1.msra.mxu0 0.0
  %5524 = vmatprep.subr.mxu0 0.0
  %5525 = vmatpush1.msra.mxu0 0.0
  %5526 = vmatprep.subr.mxu0 0.0
  %5527 = vmatpush1.msra.mxu0 0.0
  %5528 = vmatprep.subr.mxu0 0.0
  %5529 = vmatpush1.msra.mxu0 0.0
  %5530 = vmatprep.subr.mxu0 0.0
  %5531 = vmatpush1.msra.mxu0 0.0
  %5532 = vmatprep.subr.mxu0 0.0
  %5533 = vmatpush1.msra.mxu0 0.0
  %5534 = vmatprep.subr.mxu0 0.0
  %5535 = vmatpush1.msra.mxu0 0.0
  %5536 = vmatprep.subr.mxu0 0.0
  %5537 = vmatpush1.msra.mxu0 0.0
  %5538 = vmatprep.subr.mxu0 0.0
  %5539 = vmatpush1.msra.mxu0 0.0
  %5540 = vmatprep.subr.mxu0 0.0
  %5541 = vmatpush1.msra.mxu0 0.0
  %5542 = vmatprep.subr.mxu0 0.0
  %5543 = vmatpush1.msra.mxu0 0.0
  %5544 = vmatprep.subr.mxu0 0.0
  %5545 = vmatpush1.msra.mxu0 0.0
  %5546 = vmatprep.subr.mxu0 0.0
  %5547 = vmatpush1.msra.mxu0 0.0
  %5548 = vmatprep.subr.mxu0 0.0
  %5549 = vmatpush1.msra.mxu0 0.0
  %5550 = vmatprep.subr.mxu0 0.0
  %5551 = vmatpush1.msra.mxu0 0.0
  %5552 = vmatprep.subr.mxu0 %v5443
  %5553 = vmatpush1.msra.mxu0 %v5442
  %5554 = vmatprep.subr.mxu0 0.0
  %5555 = vmatpush2.msra.mxu0 0.0
  %5556 = vmatprep.subr.mxu0 0.0
  %5557 = vmatpush2.msra.mxu0 0.0
  %5558 = vmatprep.subr.mxu0 0.0
  %5559 = vmatpush2.msra.mxu0 0.0
  %5560 = vmatprep.subr.mxu0 0.0
  %5561 = vmatpush2.msra.mxu0 0.0
  %5562 = vmatprep.subr.mxu0 0.0
  %5563 = vmatpush2.msra.mxu0 0.0
  %5564 = vmatprep.subr.mxu0 0.0
  %5565 = vmatpush2.msra.mxu0 0.0
  %5566 = vmatprep.subr.mxu0 0.0
  %5567 = vmatpush2.msra.mxu0 0.0
  %5568 = vmatprep.subr.mxu0 0.0
  %5569 = vmatpush2.msra.mxu0 0.0
  %5570 = vmatprep.subr.mxu0 0.0
  %5571 = vmatpush2.msra.mxu0 0.0
  %5572 = vmatprep.subr.mxu0 0.0
  %5573 = vmatpush2.msra.mxu0 0.0
  %5574 = vmatprep.subr.mxu0 0.0
  %5575 = vmatpush2.msra.mxu0 0.0
  %5576 = vmatprep.subr.mxu0 0.0
  %5577 = vmatpush2.msra.mxu0 0.0
  %5578 = vmatprep.subr.mxu0 0.0
  %5579 = vmatpush2.msra.mxu0 0.0
  %5580 = vmatprep.subr.mxu0 0.0
  %5581 = vmatpush2.msra.mxu0 0.0
  %5582 = vmatprep.subr.mxu0 0.0
  %5583 = vmatpush2.msra.mxu0 0.0
  %5584 = vmatprep.subr.mxu0 0.0
  %5585 = vmatpush2.msra.mxu0 0.0
  %5586 = vmatprep.mubr.f32.mxu0 0.0
  %5587 = vmatmul.mubr.f32.gmra.mxu0 %v5449
  %v5588 = vpop.f32.mrf.mxu0
  %v5589 = vadd.f32 %v5421, %v5588
  %v5590 = vpop.f32.mrf.mxu0
  %v5591 = vadd.f32 %v5423, %v5590
  %5592 = vdwg.mxu0
  %s5593 = scalar_lea.vmem %s2, 25
  %v5594 = vld [vmem:[%s5593] ss:$2 sm:$0xf]
  %v5596 = vlaneseq
  %v5597 = vshrl.u32 %v5596, 7
  %v5598 = vsub.s32 0, %v5597
  %v5599 = vrot.slane %v5594, %v5598
  %v5600 = vlaneseq
  %v5601 = vshrl.u32 %v5600, 7
  %v5602 = vsub.s32 1, %v5601
  %v5603 = vrot.slane %v5594, %v5602
  %v5604 = vlaneseq
  %v5605 = vshrl.u32 %v5604, 7
  %v5606 = vsub.s32 2, %v5605
  %v5607 = vrot.slane %v5594, %v5606
  %v5608 = vlaneseq
  %v5609 = vshrl.u32 %v5608, 7
  %v5610 = vsub.s32 3, %v5609
  %v5611 = vrot.slane %v5594, %v5610
  %5612 = vrot.lane.b32.xlu0 %v5599, 65
  %v5613 = vpop.permute.xlu0 %5612
  %5614 = vrot.lane.b32.xlu0 %v5603, 65
  %v5615 = vpop.permute.xlu0 %5614
  %5616 = vrot.lane.b32.xlu0 %v5607, 65
  %v5617 = vpop.permute.xlu0 %5616
  %5618 = vrot.lane.b32.xlu0 %v5611, 65
  %v5619 = vpop.permute.xlu0 %5618
  %v5620 = vsel %vm287, %v5613, %v5615
  %v5621 = vsel %vm287, %v5615, %v5617
  %v5622 = vsel %vm287, %v5617, %v5619
  %v5628 = vmul.f32 %v5210, %v5613
  %v5629 = vmul.f32 %v5211, %v5620
  %v5630 = vmul.f32 %v5212, %v5621
  %v5631 = vmul.f32 %v5213, %v5622
  %v5632 = vmul.f32 %v5214, %v5619
  %v5633 = vld [vmem:[%s481] sm:$0xff]
  %5639 = vrot.lane.b32.xlu0 %v5628, 63
  %v5640 = vpop.permute.xlu0 %5639
  %5641 = vrot.lane.b32.xlu0 %v5629, 63
  %v5642 = vpop.permute.xlu0 %5641
  %5643 = vrot.lane.b32.xlu0 %v5630, 63
  %v5644 = vpop.permute.xlu0 %5643
  %5645 = vrot.lane.b32.xlu0 %v5631, 63
  %v5646 = vpop.permute.xlu0 %5645
  %5647 = vrot.lane.b32.xlu0 %v5632, 63
  %v5648 = vpop.permute.xlu0 %5647
  %v5649 = vsel %vm85, %v5640, %v5642
  %v5650 = vsel %vm85, %v5642, %v5644
  %v5651 = vsel %vm85, %v5644, %v5646
  %v5652 = vsel %vm85, %v5646, %v5648
  %v5658 = vsel %vm126, %v5633, 0
  %5660 = vmatprep.subr.mxu0 0.0
  %5661 = vmatpush1.msra.mxu0 0.0
  %5662 = vmatprep.subr.mxu0 0.0
  %5663 = vmatpush1.msra.mxu0 0.0
  %5664 = vmatprep.subr.mxu0 0.0
  %5665 = vmatpush1.msra.mxu0 0.0
  %5666 = vmatprep.subr.mxu0 0.0
  %5667 = vmatpush1.msra.mxu0 0.0
  %5668 = vmatprep.subr.mxu0 0.0
  %5669 = vmatpush1.msra.mxu0 0.0
  %5670 = vmatprep.subr.mxu0 0.0
  %5671 = vmatpush1.msra.mxu0 0.0
  %5672 = vmatprep.subr.mxu0 0.0
  %5673 = vmatpush1.msra.mxu0 0.0
  %5674 = vmatprep.subr.mxu0 0.0
  %5675 = vmatpush1.msra.mxu0 0.0
  %5676 = vmatprep.subr.mxu0 0.0
  %5677 = vmatpush1.msra.mxu0 0.0
  %5678 = vmatprep.subr.mxu0 0.0
  %5679 = vmatpush1.msra.mxu0 0.0
  %5680 = vmatprep.subr.mxu0 0.0
  %5681 = vmatpush1.msra.mxu0 0.0
  %5682 = vmatprep.subr.mxu0 0.0
  %5683 = vmatpush1.msra.mxu0 0.0
  %5684 = vmatprep.subr.mxu0 0.0
  %5685 = vmatpush1.msra.mxu0 0.0
  %5686 = vmatprep.subr.mxu0 0.0
  %5687 = vmatpush1.msra.mxu0 0.0
  %5688 = vmatprep.subr.mxu0 0.0
  %5689 = vmatpush1.msra.mxu0 0.0
  %5690 = vmatprep.subr.mxu0 %v5650
  %5691 = vmatpush1.msra.mxu0 %v5649
  %5692 = vmatprep.subr.mxu0 0.0
  %5693 = vmatpush2.msra.mxu0 0.0
  %5694 = vmatprep.subr.mxu0 0.0
  %5695 = vmatpush2.msra.mxu0 0.0
  %5696 = vmatprep.subr.mxu0 0.0
  %5697 = vmatpush2.msra.mxu0 0.0
  %5698 = vmatprep.subr.mxu0 0.0
  %5699 = vmatpush2.msra.mxu0 0.0
  %5700 = vmatprep.subr.mxu0 0.0
  %5701 = vmatpush2.msra.mxu0 0.0
  %5702 = vmatprep.subr.mxu0 0.0
  %5703 = vmatpush2.msra.mxu0 0.0
  %5704 = vmatprep.subr.mxu0 0.0
  %5705 = vmatpush2.msra.mxu0 0.0
  %5706 = vmatprep.subr.mxu0 0.0
  %5707 = vmatpush2.msra.mxu0 0.0
  %5708 = vmatprep.subr.mxu0 0.0
  %5709 = vmatpush2.msra.mxu0 0.0
  %5710 = vmatprep.subr.mxu0 0.0
  %5711 = vmatpush2.msra.mxu0 0.0
  %5712 = vmatprep.subr.mxu0 0.0
  %5713 = vmatpush2.msra.mxu0 0.0
  %5714 = vmatprep.subr.mxu0 0.0
  %5715 = vmatpush2.msra.mxu0 0.0
  %5716 = vmatprep.subr.mxu0 0.0
  %5717 = vmatpush2.msra.mxu0 0.0
  %5718 = vmatprep.subr.mxu0 0.0
  %5719 = vmatpush2.msra.mxu0 0.0
  %5720 = vmatprep.subr.mxu0 0.0
  %5721 = vmatpush2.msra.mxu0 0.0
  %5722 = vmatprep.subr.mxu0 0.0
  %5723 = vmatpush2.msra.mxu0 0.0
  %5724 = vmatprep.mubr.f32.mxu0 0.0
  %5725 = vmatmul.mubr.f32.gmra.mxu0 %v5658
  %v5726 = vpop.f32.mrf.mxu0
  %v5727 = vadd.f32 0.0, %v5726
  %v5728 = vpop.f32.mrf.mxu0
  %v5729 = vadd.f32 0.0, %v5728
  %5730 = vdwg.mxu0
  %5731 = vmatprep.subr.mxu0 0.0
  %5732 = vmatpush1.msra.mxu0 0.0
  %5733 = vmatprep.subr.mxu0 0.0
  %5734 = vmatpush1.msra.mxu0 0.0
  %5735 = vmatprep.subr.mxu0 0.0
  %5736 = vmatpush1.msra.mxu0 0.0
  %5737 = vmatprep.subr.mxu0 0.0
  %5738 = vmatpush1.msra.mxu0 0.0
  %5739 = vmatprep.subr.mxu0 0.0
  %5740 = vmatpush1.msra.mxu0 0.0
  %5741 = vmatprep.subr.mxu0 0.0
  %5742 = vmatpush1.msra.mxu0 0.0
  %5743 = vmatprep.subr.mxu0 0.0
  %5744 = vmatpush1.msra.mxu0 0.0
  %5745 = vmatprep.subr.mxu0 0.0
  %5746 = vmatpush1.msra.mxu0 0.0
  %5747 = vmatprep.subr.mxu0 0.0
  %5748 = vmatpush1.msra.mxu0 0.0
  %5749 = vmatprep.subr.mxu0 0.0
  %5750 = vmatpush1.msra.mxu0 0.0
  %5751 = vmatprep.subr.mxu0 0.0
  %5752 = vmatpush1.msra.mxu0 0.0
  %5753 = vmatprep.subr.mxu0 0.0
  %5754 = vmatpush1.msra.mxu0 0.0
  %5755 = vmatprep.subr.mxu0 0.0
  %5756 = vmatpush1.msra.mxu0 0.0
  %5757 = vmatprep.subr.mxu0 0.0
  %5758 = vmatpush1.msra.mxu0 0.0
  %5759 = vmatprep.subr.mxu0 0.0
  %5760 = vmatpush1.msra.mxu0 0.0
  %5761 = vmatprep.subr.mxu0 %v5652
  %5762 = vmatpush1.msra.mxu0 %v5651
  %5763 = vmatprep.subr.mxu0 0.0
  %5764 = vmatpush2.msra.mxu0 0.0
  %5765 = vmatprep.subr.mxu0 0.0
  %5766 = vmatpush2.msra.mxu0 0.0
  %5767 = vmatprep.subr.mxu0 0.0
  %5768 = vmatpush2.msra.mxu0 0.0
  %5769 = vmatprep.subr.mxu0 0.0
  %5770 = vmatpush2.msra.mxu0 0.0
  %5771 = vmatprep.subr.mxu0 0.0
  %5772 = vmatpush2.msra.mxu0 0.0
  %5773 = vmatprep.subr.mxu0 0.0
  %5774 = vmatpush2.msra.mxu0 0.0
  %5775 = vmatprep.subr.mxu0 0.0
  %5776 = vmatpush2.msra.mxu0 0.0
  %5777 = vmatprep.subr.mxu0 0.0
  %5778 = vmatpush2.msra.mxu0 0.0
  %5779 = vmatprep.subr.mxu0 0.0
  %5780 = vmatpush2.msra.mxu0 0.0
  %5781 = vmatprep.subr.mxu0 0.0
  %5782 = vmatpush2.msra.mxu0 0.0
  %5783 = vmatprep.subr.mxu0 0.0
  %5784 = vmatpush2.msra.mxu0 0.0
  %5785 = vmatprep.subr.mxu0 0.0
  %5786 = vmatpush2.msra.mxu0 0.0
  %5787 = vmatprep.subr.mxu0 0.0
  %5788 = vmatpush2.msra.mxu0 0.0
  %5789 = vmatprep.subr.mxu0 0.0
  %5790 = vmatpush2.msra.mxu0 0.0
  %5791 = vmatprep.subr.mxu0 0.0
  %5792 = vmatpush2.msra.mxu0 0.0
  %5793 = vmatprep.subr.mxu0 0.0
  %5794 = vmatpush2.msra.mxu0 0.0
  %5795 = vmatprep.mubr.f32.mxu0 0.0
  %5796 = vmatmul.mubr.f32.gmra.mxu0 %v5658
  %v5797 = vpop.f32.mrf.mxu0
  %v5798 = vadd.f32 0.0, %v5797
  %v5799 = vpop.f32.mrf.mxu0
  %v5800 = vadd.f32 0.0, %v5799
  %5801 = vdwg.mxu0
  %v5802 = vadd.f32 %v5518, %v5727
  %v5803 = vadd.f32 %v5520, %v5729
  %v5804 = vadd.f32 %v5589, %v5798
  %v5805 = vadd.f32 %v5591, %v5800
  %5806 = vrot.lane.b32.xlu0 %v5221, 127
  %v5807 = vpop.permute.xlu0 %5806
  %5808 = vrot.lane.b32.xlu0 %v5225, 127
  %v5809 = vpop.permute.xlu0 %5808
  %5810 = vrot.lane.b32.xlu0 %v5229, 127
  %v5811 = vpop.permute.xlu0 %5810
  %5812 = vrot.lane.b32.xlu0 %v5233, 127
  %v5813 = vpop.permute.xlu0 %5812
  %v5814 = vsel %vm663, %v5807, %v5809
  %v5815 = vsel %vm663, %v5809, %v5811
  %v5816 = vsel %vm663, %v5811, %v5813
  %v5822 = vmul.f32 %v5210, %v5807
  %v5823 = vmul.f32 %v5211, %v5814
  %v5824 = vmul.f32 %v5212, %v5815
  %v5825 = vmul.f32 %v5213, %v5816
  %v5826 = vmul.f32 %v5214, %v5813
  %v5827 = vld [vmem:[%s677] sm:$0xff]
  %5833 = vrot.lane.b32.xlu0 %v5822, 1
  %v5834 = vpop.permute.xlu0 %5833
  %5835 = vrot.lane.b32.xlu0 %v5823, 1
  %v5836 = vpop.permute.xlu0 %5835
  %5837 = vrot.lane.b32.xlu0 %v5824, 1
  %v5838 = vpop.permute.xlu0 %5837
  %5839 = vrot.lane.b32.xlu0 %v5825, 1
  %v5840 = vpop.permute.xlu0 %5839
  %5841 = vrot.lane.b32.xlu0 %v5826, 1
  %v5842 = vpop.permute.xlu0 %5841
  %v5843 = vsel %vm694, %v5834, %v5836
  %v5844 = vsel %vm694, %v5836, %v5838
  %v5845 = vsel %vm694, %v5838, %v5840
  %v5846 = vsel %vm694, %v5840, %v5842
  %v5852 = vsel %vm126, %v5827, 0
  %5854 = vmatprep.subr.mxu0 0.0
  %5855 = vmatpush1.msra.mxu0 0.0
  %5856 = vmatprep.subr.mxu0 0.0
  %5857 = vmatpush1.msra.mxu0 0.0
  %5858 = vmatprep.subr.mxu0 0.0
  %5859 = vmatpush1.msra.mxu0 0.0
  %5860 = vmatprep.subr.mxu0 0.0
  %5861 = vmatpush1.msra.mxu0 0.0
  %5862 = vmatprep.subr.mxu0 0.0
  %5863 = vmatpush1.msra.mxu0 0.0
  %5864 = vmatprep.subr.mxu0 0.0
  %5865 = vmatpush1.msra.mxu0 0.0
  %5866 = vmatprep.subr.mxu0 0.0
  %5867 = vmatpush1.msra.mxu0 0.0
  %5868 = vmatprep.subr.mxu0 0.0
  %5869 = vmatpush1.msra.mxu0 0.0
  %5870 = vmatprep.subr.mxu0 0.0
  %5871 = vmatpush1.msra.mxu0 0.0
  %5872 = vmatprep.subr.mxu0 0.0
  %5873 = vmatpush1.msra.mxu0 0.0
  %5874 = vmatprep.subr.mxu0 0.0
  %5875 = vmatpush1.msra.mxu0 0.0
  %5876 = vmatprep.subr.mxu0 0.0
  %5877 = vmatpush1.msra.mxu0 0.0
  %5878 = vmatprep.subr.mxu0 0.0
  %5879 = vmatpush1.msra.mxu0 0.0
  %5880 = vmatprep.subr.mxu0 0.0
  %5881 = vmatpush1.msra.mxu0 0.0
  %5882 = vmatprep.subr.mxu0 0.0
  %5883 = vmatpush1.msra.mxu0 0.0
  %5884 = vmatprep.subr.mxu0 %v5844
  %5885 = vmatpush1.msra.mxu0 %v5843
  %5886 = vmatprep.subr.mxu0 0.0
  %5887 = vmatpush2.msra.mxu0 0.0
  %5888 = vmatprep.subr.mxu0 0.0
  %5889 = vmatpush2.msra.mxu0 0.0
  %5890 = vmatprep.subr.mxu0 0.0
  %5891 = vmatpush2.msra.mxu0 0.0
  %5892 = vmatprep.subr.mxu0 0.0
  %5893 = vmatpush2.msra.mxu0 0.0
  %5894 = vmatprep.subr.mxu0 0.0
  %5895 = vmatpush2.msra.mxu0 0.0
  %5896 = vmatprep.subr.mxu0 0.0
  %5897 = vmatpush2.msra.mxu0 0.0
  %5898 = vmatprep.subr.mxu0 0.0
  %5899 = vmatpush2.msra.mxu0 0.0
  %5900 = vmatprep.subr.mxu0 0.0
  %5901 = vmatpush2.msra.mxu0 0.0
  %5902 = vmatprep.subr.mxu0 0.0
  %5903 = vmatpush2.msra.mxu0 0.0
  %5904 = vmatprep.subr.mxu0 0.0
  %5905 = vmatpush2.msra.mxu0 0.0
  %5906 = vmatprep.subr.mxu0 0.0
  %5907 = vmatpush2.msra.mxu0 0.0
  %5908 = vmatprep.subr.mxu0 0.0
  %5909 = vmatpush2.msra.mxu0 0.0
  %5910 = vmatprep.subr.mxu0 0.0
  %5911 = vmatpush2.msra.mxu0 0.0
  %5912 = vmatprep.subr.mxu0 0.0
  %5913 = vmatpush2.msra.mxu0 0.0
  %5914 = vmatprep.subr.mxu0 0.0
  %5915 = vmatpush2.msra.mxu0 0.0
  %5916 = vmatprep.subr.mxu0 0.0
  %5917 = vmatpush2.msra.mxu0 0.0
  %5918 = vmatprep.mubr.f32.mxu0 0.0
  %5919 = vmatmul.mubr.f32.gmra.mxu0 %v5852
  %v5920 = vpop.f32.mrf.mxu0
  %v5921 = vadd.f32 0.0, %v5920
  %v5922 = vpop.f32.mrf.mxu0
  %v5923 = vadd.f32 0.0, %v5922
  %5924 = vdwg.mxu0
  %5925 = vmatprep.subr.mxu0 0.0
  %5926 = vmatpush1.msra.mxu0 0.0
  %5927 = vmatprep.subr.mxu0 0.0
  %5928 = vmatpush1.msra.mxu0 0.0
  %5929 = vmatprep.subr.mxu0 0.0
  %5930 = vmatpush1.msra.mxu0 0.0
  %5931 = vmatprep.subr.mxu0 0.0
  %5932 = vmatpush1.msra.mxu0 0.0
  %5933 = vmatprep.subr.mxu0 0.0
  %5934 = vmatpush1.msra.mxu0 0.0
  %5935 = vmatprep.subr.mxu0 0.0
  %5936 = vmatpush1.msra.mxu0 0.0
  %5937 = vmatprep.subr.mxu0 0.0
  %5938 = vmatpush1.msra.mxu0 0.0
  %5939 = vmatprep.subr.mxu0 0.0
  %5940 = vmatpush1.msra.mxu0 0.0
  %5941 = vmatprep.subr.mxu0 0.0
  %5942 = vmatpush1.msra.mxu0 0.0
  %5943 = vmatprep.subr.mxu0 0.0
  %5944 = vmatpush1.msra.mxu0 0.0
  %5945 = vmatprep.subr.mxu0 0.0
  %5946 = vmatpush1.msra.mxu0 0.0
  %5947 = vmatprep.subr.mxu0 0.0
  %5948 = vmatpush1.msra.mxu0 0.0
  %5949 = vmatprep.subr.mxu0 0.0
  %5950 = vmatpush1.msra.mxu0 0.0
  %5951 = vmatprep.subr.mxu0 0.0
  %5952 = vmatpush1.msra.mxu0 0.0
  %5953 = vmatprep.subr.mxu0 0.0
  %5954 = vmatpush1.msra.mxu0 0.0
  %5955 = vmatprep.subr.mxu0 %v5846
  %5956 = vmatpush1.msra.mxu0 %v5845
  %5957 = vmatprep.subr.mxu0 0.0
  %5958 = vmatpush2.msra.mxu0 0.0
  %5959 = vmatprep.subr.mxu0 0.0
  %5960 = vmatpush2.msra.mxu0 0.0
  %5961 = vmatprep.subr.mxu0 0.0
  %5962 = vmatpush2.msra.mxu0 0.0
  %5963 = vmatprep.subr.mxu0 0.0
  %5964 = vmatpush2.msra.mxu0 0.0
  %5965 = vmatprep.subr.mxu0 0.0
  %5966 = vmatpush2.msra.mxu0 0.0
  %5967 = vmatprep.subr.mxu0 0.0
  %5968 = vmatpush2.msra.mxu0 0.0
  %5969 = vmatprep.subr.mxu0 0.0
  %5970 = vmatpush2.msra.mxu0 0.0
  %5971 = vmatprep.subr.mxu0 0.0
  %5972 = vmatpush2.msra.mxu0 0.0
  %5973 = vmatprep.subr.mxu0 0.0
  %5974 = vmatpush2.msra.mxu0 0.0
  %5975 = vmatprep.subr.mxu0 0.0
  %5976 = vmatpush2.msra.mxu0 0.0
  %5977 = vmatprep.subr.mxu0 0.0
  %5978 = vmatpush2.msra.mxu0 0.0
  %5979 = vmatprep.subr.mxu0 0.0
  %5980 = vmatpush2.msra.mxu0 0.0
  %5981 = vmatprep.subr.mxu0 0.0
  %5982 = vmatpush2.msra.mxu0 0.0
  %5983 = vmatprep.subr.mxu0 0.0
  %5984 = vmatpush2.msra.mxu0 0.0
  %5985 = vmatprep.subr.mxu0 0.0
  %5986 = vmatpush2.msra.mxu0 0.0
  %5987 = vmatprep.subr.mxu0 0.0
  %5988 = vmatpush2.msra.mxu0 0.0
  %5989 = vmatprep.mubr.f32.mxu0 0.0
  %5990 = vmatmul.mubr.f32.gmra.mxu0 %v5852
  %v5991 = vpop.f32.mrf.mxu0
  %v5992 = vadd.f32 0.0, %v5991
  %v5993 = vpop.f32.mrf.mxu0
  %v5994 = vadd.f32 0.0, %v5993
  %5995 = vdwg.mxu0
  %v5996 = vadd.f32 %v5802, %v5921
  %v5997 = vadd.f32 %v5803, %v5923
  %v5998 = vadd.f32 %v5804, %v5992
  %v5999 = vadd.f32 %v5805, %v5994
  %v6000 = vld [vmem:[%s852] sm:$0xff]
  %v6002 = vsel %vm126, %v6000, 0
  %6004 = vmatprep.subr.mxu0 0.0
  %6005 = vmatpush1.msra.mxu0 0.0
  %6006 = vmatprep.subr.mxu0 0.0
  %6007 = vmatpush1.msra.mxu0 0.0
  %6008 = vmatprep.subr.mxu0 0.0
  %6009 = vmatpush1.msra.mxu0 0.0
  %6010 = vmatprep.subr.mxu0 0.0
  %6011 = vmatpush1.msra.mxu0 0.0
  %6012 = vmatprep.subr.mxu0 0.0
  %6013 = vmatpush1.msra.mxu0 0.0
  %6014 = vmatprep.subr.mxu0 0.0
  %6015 = vmatpush1.msra.mxu0 0.0
  %6016 = vmatprep.subr.mxu0 0.0
  %6017 = vmatpush1.msra.mxu0 0.0
  %6018 = vmatprep.subr.mxu0 0.0
  %6019 = vmatpush1.msra.mxu0 0.0
  %6020 = vmatprep.subr.mxu0 0.0
  %6021 = vmatpush1.msra.mxu0 0.0
  %6022 = vmatprep.subr.mxu0 0.0
  %6023 = vmatpush1.msra.mxu0 0.0
  %6024 = vmatprep.subr.mxu0 0.0
  %6025 = vmatpush1.msra.mxu0 0.0
  %6026 = vmatprep.subr.mxu0 0.0
  %6027 = vmatpush1.msra.mxu0 0.0
  %6028 = vmatprep.subr.mxu0 0.0
  %6029 = vmatpush1.msra.mxu0 0.0
  %6030 = vmatprep.subr.mxu0 0.0
  %6031 = vmatpush1.msra.mxu0 0.0
  %6032 = vmatprep.subr.mxu0 0.0
  %6033 = vmatpush1.msra.mxu0 0.0
  %6034 = vmatprep.subr.mxu0 %v5212
  %6035 = vmatpush1.msra.mxu0 %v5211
  %6036 = vmatprep.subr.mxu0 0.0
  %6037 = vmatpush2.msra.mxu0 0.0
  %6038 = vmatprep.subr.mxu0 0.0
  %6039 = vmatpush2.msra.mxu0 0.0
  %6040 = vmatprep.subr.mxu0 0.0
  %6041 = vmatpush2.msra.mxu0 0.0
  %6042 = vmatprep.subr.mxu0 0.0
  %6043 = vmatpush2.msra.mxu0 0.0
  %6044 = vmatprep.subr.mxu0 0.0
  %6045 = vmatpush2.msra.mxu0 0.0
  %6046 = vmatprep.subr.mxu0 0.0
  %6047 = vmatpush2.msra.mxu0 0.0
  %6048 = vmatprep.subr.mxu0 0.0
  %6049 = vmatpush2.msra.mxu0 0.0
  %6050 = vmatprep.subr.mxu0 0.0
  %6051 = vmatpush2.msra.mxu0 0.0
  %6052 = vmatprep.subr.mxu0 0.0
  %6053 = vmatpush2.msra.mxu0 0.0
  %6054 = vmatprep.subr.mxu0 0.0
  %6055 = vmatpush2.msra.mxu0 0.0
  %6056 = vmatprep.subr.mxu0 0.0
  %6057 = vmatpush2.msra.mxu0 0.0
  %6058 = vmatprep.subr.mxu0 0.0
  %6059 = vmatpush2.msra.mxu0 0.0
  %6060 = vmatprep.subr.mxu0 0.0
  %6061 = vmatpush2.msra.mxu0 0.0
  %6062 = vmatprep.subr.mxu0 0.0
  %6063 = vmatpush2.msra.mxu0 0.0
  %6064 = vmatprep.subr.mxu0 0.0
  %6065 = vmatpush2.msra.mxu0 0.0
  %6066 = vmatprep.subr.mxu0 0.0
  %6067 = vmatpush2.msra.mxu0 0.0
  %6068 = vmatprep.mubr.f32.mxu0 0.0
  %6069 = vmatmul.mubr.f32.gmra.mxu0 %v6002
  %v6070 = vpop.f32.mrf.mxu0
  %v6071 = vadd.f32 0.0, %v6070
  %v6072 = vpop.f32.mrf.mxu0
  %v6073 = vadd.f32 0.0, %v6072
  %6074 = vdwg.mxu0
  %6075 = vmatprep.subr.mxu0 0.0
  %6076 = vmatpush1.msra.mxu0 0.0
  %6077 = vmatprep.subr.mxu0 0.0
  %6078 = vmatpush1.msra.mxu0 0.0
  %6079 = vmatprep.subr.mxu0 0.0
  %6080 = vmatpush1.msra.mxu0 0.0
  %6081 = vmatprep.subr.mxu0 0.0
  %6082 = vmatpush1.msra.mxu0 0.0
  %6083 = vmatprep.subr.mxu0 0.0
  %6084 = vmatpush1.msra.mxu0 0.0
  %6085 = vmatprep.subr.mxu0 0.0
  %6086 = vmatpush1.msra.mxu0 0.0
  %6087 = vmatprep.subr.mxu0 0.0
  %6088 = vmatpush1.msra.mxu0 0.0
  %6089 = vmatprep.subr.mxu0 0.0
  %6090 = vmatpush1.msra.mxu0 0.0
  %6091 = vmatprep.subr.mxu0 0.0
  %6092 = vmatpush1.msra.mxu0 0.0
  %6093 = vmatprep.subr.mxu0 0.0
  %6094 = vmatpush1.msra.mxu0 0.0
  %6095 = vmatprep.subr.mxu0 0.0
  %6096 = vmatpush1.msra.mxu0 0.0
  %6097 = vmatprep.subr.mxu0 0.0
  %6098 = vmatpush1.msra.mxu0 0.0
  %6099 = vmatprep.subr.mxu0 0.0
  %6100 = vmatpush1.msra.mxu0 0.0
  %6101 = vmatprep.subr.mxu0 0.0
  %6102 = vmatpush1.msra.mxu0 0.0
  %6103 = vmatprep.subr.mxu0 0.0
  %6104 = vmatpush1.msra.mxu0 0.0
  %6105 = vmatprep.subr.mxu0 %v5214
  %6106 = vmatpush1.msra.mxu0 %v5213
  %6107 = vmatprep.subr.mxu0 0.0
  %6108 = vmatpush2.msra.mxu0 0.0
  %6109 = vmatprep.subr.mxu0 0.0
  %6110 = vmatpush2.msra.mxu0 0.0
  %6111 = vmatprep.subr.mxu0 0.0
  %6112 = vmatpush2.msra.mxu0 0.0
  %6113 = vmatprep.subr.mxu0 0.0
  %6114 = vmatpush2.msra.mxu0 0.0
  %6115 = vmatprep.subr.mxu0 0.0
  %6116 = vmatpush2.msra.mxu0 0.0
  %6117 = vmatprep.subr.mxu0 0.0
  %6118 = vmatpush2.msra.mxu0 0.0
  %6119 = vmatprep.subr.mxu0 0.0
  %6120 = vmatpush2.msra.mxu0 0.0
  %6121 = vmatprep.subr.mxu0 0.0
  %6122 = vmatpush2.msra.mxu0 0.0
  %6123 = vmatprep.subr.mxu0 0.0
  %6124 = vmatpush2.msra.mxu0 0.0
  %6125 = vmatprep.subr.mxu0 0.0
  %6126 = vmatpush2.msra.mxu0 0.0
  %6127 = vmatprep.subr.mxu0 0.0
  %6128 = vmatpush2.msra.mxu0 0.0
  %6129 = vmatprep.subr.mxu0 0.0
  %6130 = vmatpush2.msra.mxu0 0.0
  %6131 = vmatprep.subr.mxu0 0.0
  %6132 = vmatpush2.msra.mxu0 0.0
  %6133 = vmatprep.subr.mxu0 0.0
  %6134 = vmatpush2.msra.mxu0 0.0
  %6135 = vmatprep.subr.mxu0 0.0
  %6136 = vmatpush2.msra.mxu0 0.0
  %6137 = vmatprep.subr.mxu0 0.0
  %6138 = vmatpush2.msra.mxu0 0.0
  %6139 = vmatprep.mubr.f32.mxu0 0.0
  %6140 = vmatmul.mubr.f32.gmra.mxu0 %v6002
  %v6141 = vpop.f32.mrf.mxu0
  %v6142 = vadd.f32 0.0, %v6141
  %v6143 = vpop.f32.mrf.mxu0
  %v6144 = vadd.f32 0.0, %v6143
  %6145 = vdwg.mxu0
  %v6146 = vadd.f32 %v5996, %v6071
  %v6147 = vadd.f32 %v5997, %v6073
  %v6148 = vadd.f32 %v5998, %v6142
  %v6149 = vadd.f32 %v5999, %v6144
  %v6150 = vld [vmem:[#allocation2 + $0x68] sm:$0xff]
  %v6151 = vld [vmem:[#allocation2 + $0x70] sm:$0xff]
  %v6152 = vld [vmem:[#allocation2 + $0x78] sm:$0xff]
  %v6153 = vld [vmem:[#allocation2 + $0x80] sm:$0xff]
  %v6154 = vld [vmem:[#allocation2 + $0x88] sm:$0xff]
  %6155 = vrot.lane.b32.xlu0 %v5599, 1
  %v6156 = vpop.permute.xlu0 %6155
  %6157 = vrot.lane.b32.xlu0 %v5603, 1
  %v6158 = vpop.permute.xlu0 %6157
  %6159 = vrot.lane.b32.xlu0 %v5607, 1
  %v6160 = vpop.permute.xlu0 %6159
  %6161 = vrot.lane.b32.xlu0 %v5611, 1
  %v6162 = vpop.permute.xlu0 %6161
  %v6163 = vsel %vm694, %v6156, %v6158
  %v6164 = vsel %vm694, %v6158, %v6160
  %v6165 = vsel %vm694, %v6160, %v6162
  %v6171 = vmul.f32 %v6150, %v6156
  %v6172 = vmul.f32 %v6151, %v6163
  %v6173 = vmul.f32 %v6152, %v6164
  %v6174 = vmul.f32 %v6153, %v6165
  %v6175 = vmul.f32 %v6154, %v6162
  %v6176 = vld [vmem:[%s1029] sm:$0xff]
  %6182 = vrot.lane.b32.xlu0 %v6171, 127
  %v6183 = vpop.permute.xlu0 %6182
  %6184 = vrot.lane.b32.xlu0 %v6172, 127
  %v6185 = vpop.permute.xlu0 %6184
  %6186 = vrot.lane.b32.xlu0 %v6173, 127
  %v6187 = vpop.permute.xlu0 %6186
  %6188 = vrot.lane.b32.xlu0 %v6174, 127
  %v6189 = vpop.permute.xlu0 %6188
  %6190 = vrot.lane.b32.xlu0 %v6175, 127
  %v6191 = vpop.permute.xlu0 %6190
  %v6192 = vsel %vm663, %v6183, %v6185
  %v6193 = vsel %vm663, %v6185, %v6187
  %v6194 = vsel %vm663, %v6187, %v6189
  %v6195 = vsel %vm663, %v6189, %v6191
  %v6201 = vsel %vm126, %v6176, 0
  %6203 = vmatprep.subr.mxu0 0.0
  %6204 = vmatpush1.msra.mxu0 0.0
  %6205 = vmatprep.subr.mxu0 0.0
  %6206 = vmatpush1.msra.mxu0 0.0
  %6207 = vmatprep.subr.mxu0 0.0
  %6208 = vmatpush1.msra.mxu0 0.0
  %6209 = vmatprep.subr.mxu0 0.0
  %6210 = vmatpush1.msra.mxu0 0.0
  %6211 = vmatprep.subr.mxu0 0.0
  %6212 = vmatpush1.msra.mxu0 0.0
  %6213 = vmatprep.subr.mxu0 0.0
  %6214 = vmatpush1.msra.mxu0 0.0
  %6215 = vmatprep.subr.mxu0 0.0
  %6216 = vmatpush1.msra.mxu0 0.0
  %6217 = vmatprep.subr.mxu0 0.0
  %6218 = vmatpush1.msra.mxu0 0.0
  %6219 = vmatprep.subr.mxu0 0.0
  %6220 = vmatpush1.msra.mxu0 0.0
  %6221 = vmatprep.subr.mxu0 0.0
  %6222 = vmatpush1.msra.mxu0 0.0
  %6223 = vmatprep.subr.mxu0 0.0
  %6224 = vmatpush1.msra.mxu0 0.0
  %6225 = vmatprep.subr.mxu0 0.0
  %6226 = vmatpush1.msra.mxu0 0.0
  %6227 = vmatprep.subr.mxu0 0.0
  %6228 = vmatpush1.msra.mxu0 0.0
  %6229 = vmatprep.subr.mxu0 0.0
  %6230 = vmatpush1.msra.mxu0 0.0
  %6231 = vmatprep.subr.mxu0 0.0
  %6232 = vmatpush1.msra.mxu0 0.0
  %6233 = vmatprep.subr.mxu0 %v6193
  %6234 = vmatpush1.msra.mxu0 %v6192
  %6235 = vmatprep.subr.mxu0 0.0
  %6236 = vmatpush2.msra.mxu0 0.0
  %6237 = vmatprep.subr.mxu0 0.0
  %6238 = vmatpush2.msra.mxu0 0.0
  %6239 = vmatprep.subr.mxu0 0.0
  %6240 = vmatpush2.msra.mxu0 0.0
  %6241 = vmatprep.subr.mxu0 0.0
  %6242 = vmatpush2.msra.mxu0 0.0
  %6243 = vmatprep.subr.mxu0 0.0
  %6244 = vmatpush2.msra.mxu0 0.0
  %6245 = vmatprep.subr.mxu0 0.0
  %6246 = vmatpush2.msra.mxu0 0.0
  %6247 = vmatprep.subr.mxu0 0.0
  %6248 = vmatpush2.msra.mxu0 0.0
  %6249 = vmatprep.subr.mxu0 0.0
  %6250 = vmatpush2.msra.mxu0 0.0
  %6251 = vmatprep.subr.mxu0 0.0
  %6252 = vmatpush2.msra.mxu0 0.0
  %6253 = vmatprep.subr.mxu0 0.0
  %6254 = vmatpush2.msra.mxu0 0.0
  %6255 = vmatprep.subr.mxu0 0.0
  %6256 = vmatpush2.msra.mxu0 0.0
  %6257 = vmatprep.subr.mxu0 0.0
  %6258 = vmatpush2.msra.mxu0 0.0
  %6259 = vmatprep.subr.mxu0 0.0
  %6260 = vmatpush2.msra.mxu0 0.0
  %6261 = vmatprep.subr.mxu0 0.0
  %6262 = vmatpush2.msra.mxu0 0.0
  %6263 = vmatprep.subr.mxu0 0.0
  %6264 = vmatpush2.msra.mxu0 0.0
  %6265 = vmatprep.subr.mxu0 0.0
  %6266 = vmatpush2.msra.mxu0 0.0
  %6267 = vmatprep.mubr.f32.mxu0 0.0
  %6268 = vmatmul.mubr.f32.gmra.mxu0 %v6201
  %v6269 = vpop.f32.mrf.mxu0
  %v6270 = vadd.f32 0.0, %v6269
  %v6271 = vpop.f32.mrf.mxu0
  %v6272 = vadd.f32 0.0, %v6271
  %6273 = vdwg.mxu0
  %6274 = vmatprep.subr.mxu0 0.0
  %6275 = vmatpush1.msra.mxu0 0.0
  %6276 = vmatprep.subr.mxu0 0.0
  %6277 = vmatpush1.msra.mxu0 0.0
  %6278 = vmatprep.subr.mxu0 0.0
  %6279 = vmatpush1.msra.mxu0 0.0
  %6280 = vmatprep.subr.mxu0 0.0
  %6281 = vmatpush1.msra.mxu0 0.0
  %6282 = vmatprep.subr.mxu0 0.0
  %6283 = vmatpush1.msra.mxu0 0.0
  %6284 = vmatprep.subr.mxu0 0.0
  %6285 = vmatpush1.msra.mxu0 0.0
  %6286 = vmatprep.subr.mxu0 0.0
  %6287 = vmatpush1.msra.mxu0 0.0
  %6288 = vmatprep.subr.mxu0 0.0
  %6289 = vmatpush1.msra.mxu0 0.0
  %6290 = vmatprep.subr.mxu0 0.0
  %6291 = vmatpush1.msra.mxu0 0.0
  %6292 = vmatprep.subr.mxu0 0.0
  %6293 = vmatpush1.msra.mxu0 0.0
  %6294 = vmatprep.subr.mxu0 0.0
  %6295 = vmatpush1.msra.mxu0 0.0
  %6296 = vmatprep.subr.mxu0 0.0
  %6297 = vmatpush1.msra.mxu0 0.0
  %6298 = vmatprep.subr.mxu0 0.0
  %6299 = vmatpush1.msra.mxu0 0.0
  %6300 = vmatprep.subr.mxu0 0.0
  %6301 = vmatpush1.msra.mxu0 0.0
  %6302 = vmatprep.subr.mxu0 0.0
  %6303 = vmatpush1.msra.mxu0 0.0
  %6304 = vmatprep.subr.mxu0 %v6195
  %6305 = vmatpush1.msra.mxu0 %v6194
  %6306 = vmatprep.subr.mxu0 0.0
  %6307 = vmatpush2.msra.mxu0 0.0
  %6308 = vmatprep.subr.mxu0 0.0
  %6309 = vmatpush2.msra.mxu0 0.0
  %6310 = vmatprep.subr.mxu0 0.0
  %6311 = vmatpush2.msra.mxu0 0.0
  %6312 = vmatprep.subr.mxu0 0.0
  %6313 = vmatpush2.msra.mxu0 0.0
  %6314 = vmatprep.subr.mxu0 0.0
  %6315 = vmatpush2.msra.mxu0 0.0
  %6316 = vmatprep.subr.mxu0 0.0
  %6317 = vmatpush2.msra.mxu0 0.0
  %6318 = vmatprep.subr.mxu0 0.0
  %6319 = vmatpush2.msra.mxu0 0.0
  %6320 = vmatprep.subr.mxu0 0.0
  %6321 = vmatpush2.msra.mxu0 0.0
  %6322 = vmatprep.subr.mxu0 0.0
  %6323 = vmatpush2.msra.mxu0 0.0
  %6324 = vmatprep.subr.mxu0 0.0
  %6325 = vmatpush2.msra.mxu0 0.0
  %6326 = vmatprep.subr.mxu0 0.0
  %6327 = vmatpush2.msra.mxu0 0.0
  %6328 = vmatprep.subr.mxu0 0.0
  %6329 = vmatpush2.msra.mxu0 0.0
  %6330 = vmatprep.subr.mxu0 0.0
  %6331 = vmatpush2.msra.mxu0 0.0
  %6332 = vmatprep.subr.mxu0 0.0
  %6333 = vmatpush2.msra.mxu0 0.0
  %6334 = vmatprep.subr.mxu0 0.0
  %6335 = vmatpush2.msra.mxu0 0.0
  %6336 = vmatprep.subr.mxu0 0.0
  %6337 = vmatpush2.msra.mxu0 0.0
  %6338 = vmatprep.mubr.f32.mxu0 0.0
  %6339 = vmatmul.mubr.f32.gmra.mxu0 %v6201
  %v6340 = vpop.f32.mrf.mxu0
  %v6341 = vadd.f32 0.0, %v6340
  %v6342 = vpop.f32.mrf.mxu0
  %v6343 = vadd.f32 0.0, %v6342
  %6344 = vdwg.mxu0
  %v6345 = vadd.f32 %v6146, %v6270
  %v6346 = vadd.f32 %v6147, %v6272
  %v6347 = vadd.f32 %v6148, %v6341
  %v6348 = vadd.f32 %v6149, %v6343
  %v6349 = vmul.f32 %v6150, %v5235
  %v6350 = vmul.f32 %v6151, %v5242
  %v6351 = vmul.f32 %v6152, %v5243
  %v6352 = vmul.f32 %v6153, %v5244
  %v6353 = vmul.f32 %v6154, %v5241
  %v6354 = vld [vmem:[%s1208] sm:$0xff]
  %6360 = vrot.lane.b32.xlu0 %v6349, 65
  %v6361 = vpop.permute.xlu0 %6360
  %6362 = vrot.lane.b32.xlu0 %v6350, 65
  %v6363 = vpop.permute.xlu0 %6362
  %6364 = vrot.lane.b32.xlu0 %v6351, 65
  %v6365 = vpop.permute.xlu0 %6364
  %6366 = vrot.lane.b32.xlu0 %v6352, 65
  %v6367 = vpop.permute.xlu0 %6366
  %6368 = vrot.lane.b32.xlu0 %v6353, 65
  %v6369 = vpop.permute.xlu0 %6368
  %v6370 = vsel %vm287, %v6361, %v6363
  %v6371 = vsel %vm287, %v6363, %v6365
  %v6372 = vsel %vm287, %v6365, %v6367
  %v6373 = vsel %vm287, %v6367, %v6369
  %v6379 = vsel %vm126, %v6354, 0
  %6381 = vmatprep.subr.mxu0 0.0
  %6382 = vmatpush1.msra.mxu0 0.0
  %6383 = vmatprep.subr.mxu0 0.0
  %6384 = vmatpush1.msra.mxu0 0.0
  %6385 = vmatprep.subr.mxu0 0.0
  %6386 = vmatpush1.msra.mxu0 0.0
  %6387 = vmatprep.subr.mxu0 0.0
  %6388 = vmatpush1.msra.mxu0 0.0
  %6389 = vmatprep.subr.mxu0 0.0
  %6390 = vmatpush1.msra.mxu0 0.0
  %6391 = vmatprep.subr.mxu0 0.0
  %6392 = vmatpush1.msra.mxu0 0.0
  %6393 = vmatprep.subr.mxu0 0.0
  %6394 = vmatpush1.msra.mxu0 0.0
  %6395 = vmatprep.subr.mxu0 0.0
  %6396 = vmatpush1.msra.mxu0 0.0
  %6397 = vmatprep.subr.mxu0 0.0
  %6398 = vmatpush1.msra.mxu0 0.0
  %6399 = vmatprep.subr.mxu0 0.0
  %6400 = vmatpush1.msra.mxu0 0.0
  %6401 = vmatprep.subr.mxu0 0.0
  %6402 = vmatpush1.msra.mxu0 0.0
  %6403 = vmatprep.subr.mxu0 0.0
  %6404 = vmatpush1.msra.mxu0 0.0
  %6405 = vmatprep.subr.mxu0 0.0
  %6406 = vmatpush1.msra.mxu0 0.0
  %6407 = vmatprep.subr.mxu0 0.0
  %6408 = vmatpush1.msra.mxu0 0.0
  %6409 = vmatprep.subr.mxu0 0.0
  %6410 = vmatpush1.msra.mxu0 0.0
  %6411 = vmatprep.subr.mxu0 %v6371
  %6412 = vmatpush1.msra.mxu0 %v6370
  %6413 = vmatprep.subr.mxu0 0.0
  %6414 = vmatpush2.msra.mxu0 0.0
  %6415 = vmatprep.subr.mxu0 0.0
  %6416 = vmatpush2.msra.mxu0 0.0
  %6417 = vmatprep.subr.mxu0 0.0
  %6418 = vmatpush2.msra.mxu0 0.0
  %6419 = vmatprep.subr.mxu0 0.0
  %6420 = vmatpush2.msra.mxu0 0.0
  %6421 = vmatprep.subr.mxu0 0.0
  %6422 = vmatpush2.msra.mxu0 0.0
  %6423 = vmatprep.subr.mxu0 0.0
  %6424 = vmatpush2.msra.mxu0 0.0
  %6425 = vmatprep.subr.mxu0 0.0
  %6426 = vmatpush2.msra.mxu0 0.0
  %6427 = vmatprep.subr.mxu0 0.0
  %6428 = vmatpush2.msra.mxu0 0.0
  %6429 = vmatprep.subr.mxu0 0.0
  %6430 = vmatpush2.msra.mxu0 0.0
  %6431 = vmatprep.subr.mxu0 0.0
  %6432 = vmatpush2.msra.mxu0 0.0
  %6433 = vmatprep.subr.mxu0 0.0
  %6434 = vmatpush2.msra.mxu0 0.0
  %6435 = vmatprep.subr.mxu0 0.0
  %6436 = vmatpush2.msra.mxu0 0.0
  %6437 = vmatprep.subr.mxu0 0.0
  %6438 = vmatpush2.msra.mxu0 0.0
  %6439 = vmatprep.subr.mxu0 0.0
  %6440 = vmatpush2.msra.mxu0 0.0
  %6441 = vmatprep.subr.mxu0 0.0
  %6442 = vmatpush2.msra.mxu0 0.0
  %6443 = vmatprep.subr.mxu0 0.0
  %6444 = vmatpush2.msra.mxu0 0.0
  %6445 = vmatprep.mubr.f32.mxu0 0.0
  %6446 = vmatmul.mubr.f32.gmra.mxu0 %v6379
  %v6447 = vpop.f32.mrf.mxu0
  %v6448 = vadd.f32 0.0, %v6447
  %v6449 = vpop.f32.mrf.mxu0
  %v6450 = vadd.f32 0.0, %v6449
  %6451 = vdwg.mxu0
  %6452 = vmatprep.subr.mxu0 0.0
  %6453 = vmatpush1.msra.mxu0 0.0
  %6454 = vmatprep.subr.mxu0 0.0
  %6455 = vmatpush1.msra.mxu0 0.0
  %6456 = vmatprep.subr.mxu0 0.0
  %6457 = vmatpush1.msra.mxu0 0.0
  %6458 = vmatprep.subr.mxu0 0.0
  %6459 = vmatpush1.msra.mxu0 0.0
  %6460 = vmatprep.subr.mxu0 0.0
  %6461 = vmatpush1.msra.mxu0 0.0
  %6462 = vmatprep.subr.mxu0 0.0
  %6463 = vmatpush1.msra.mxu0 0.0
  %6464 = vmatprep.subr.mxu0 0.0
  %6465 = vmatpush1.msra.mxu0 0.0
  %6466 = vmatprep.subr.mxu0 0.0
  %6467 = vmatpush1.msra.mxu0 0.0
  %6468 = vmatprep.subr.mxu0 0.0
  %6469 = vmatpush1.msra.mxu0 0.0
  %6470 = vmatprep.subr.mxu0 0.0
  %6471 = vmatpush1.msra.mxu0 0.0
  %6472 = vmatprep.subr.mxu0 0.0
  %6473 = vmatpush1.msra.mxu0 0.0
  %6474 = vmatprep.subr.mxu0 0.0
  %6475 = vmatpush1.msra.mxu0 0.0
  %6476 = vmatprep.subr.mxu0 0.0
  %6477 = vmatpush1.msra.mxu0 0.0
  %6478 = vmatprep.subr.mxu0 0.0
  %6479 = vmatpush1.msra.mxu0 0.0
  %6480 = vmatprep.subr.mxu0 0.0
  %6481 = vmatpush1.msra.mxu0 0.0
  %6482 = vmatprep.subr.mxu0 %v6373
  %6483 = vmatpush1.msra.mxu0 %v6372
  %6484 = vmatprep.subr.mxu0 0.0
  %6485 = vmatpush2.msra.mxu0 0.0
  %6486 = vmatprep.subr.mxu0 0.0
  %6487 = vmatpush2.msra.mxu0 0.0
  %6488 = vmatprep.subr.mxu0 0.0
  %6489 = vmatpush2.msra.mxu0 0.0
  %6490 = vmatprep.subr.mxu0 0.0
  %6491 = vmatpush2.msra.mxu0 0.0
  %6492 = vmatprep.subr.mxu0 0.0
  %6493 = vmatpush2.msra.mxu0 0.0
  %6494 = vmatprep.subr.mxu0 0.0
  %6495 = vmatpush2.msra.mxu0 0.0
  %6496 = vmatprep.subr.mxu0 0.0
  %6497 = vmatpush2.msra.mxu0 0.0
  %6498 = vmatprep.subr.mxu0 0.0
  %6499 = vmatpush2.msra.mxu0 0.0
  %6500 = vmatprep.subr.mxu0 0.0
  %6501 = vmatpush2.msra.mxu0 0.0
  %6502 = vmatprep.subr.mxu0 0.0
  %6503 = vmatpush2.msra.mxu0 0.0
  %6504 = vmatprep.subr.mxu0 0.0
  %6505 = vmatpush2.msra.mxu0 0.0
  %6506 = vmatprep.subr.mxu0 0.0
  %6507 = vmatpush2.msra.mxu0 0.0
  %6508 = vmatprep.subr.mxu0 0.0
  %6509 = vmatpush2.msra.mxu0 0.0
  %6510 = vmatprep.subr.mxu0 0.0
  %6511 = vmatpush2.msra.mxu0 0.0
  %6512 = vmatprep.subr.mxu0 0.0
  %6513 = vmatpush2.msra.mxu0 0.0
  %6514 = vmatprep.subr.mxu0 0.0
  %6515 = vmatpush2.msra.mxu0 0.0
  %6516 = vmatprep.mubr.f32.mxu0 0.0
  %6517 = vmatmul.mubr.f32.gmra.mxu0 %v6379
  %v6518 = vpop.f32.mrf.mxu0
  %v6519 = vadd.f32 0.0, %v6518
  %v6520 = vpop.f32.mrf.mxu0
  %v6521 = vadd.f32 0.0, %v6520
  %6522 = vdwg.mxu0
  %v6523 = vadd.f32 %v6345, %v6448
  %v6524 = vadd.f32 %v6346, %v6450
  %v6525 = vadd.f32 %v6347, %v6519
  %v6526 = vadd.f32 %v6348, %v6521
  %v6527 = vld [vmem:[%s1382] sm:$0xff]
  %6533 = vrot.lane.b32.xlu0 %v6150, 64
  %v6534 = vpop.permute.xlu0 %6533
  %6535 = vrot.lane.b32.xlu0 %v6151, 64
  %v6536 = vpop.permute.xlu0 %6535
  %6537 = vrot.lane.b32.xlu0 %v6152, 64
  %v6538 = vpop.permute.xlu0 %6537
  %6539 = vrot.lane.b32.xlu0 %v6153, 64
  %v6540 = vpop.permute.xlu0 %6539
  %6541 = vrot.lane.b32.xlu0 %v6154, 64
  %v6542 = vpop.permute.xlu0 %6541
  %v6543 = vsel %vm117, %v6534, %v6536
  %v6544 = vsel %vm117, %v6536, %v6538
  %v6545 = vsel %vm117, %v6538, %v6540
  %v6546 = vsel %vm117, %v6540, %v6542
  %v6552 = vsel %vm126, %v6527, 0
  %6554 = vmatprep.subr.mxu0 0.0
  %6555 = vmatpush1.msra.mxu0 0.0
  %6556 = vmatprep.subr.mxu0 0.0
  %6557 = vmatpush1.msra.mxu0 0.0
  %6558 = vmatprep.subr.mxu0 0.0
  %6559 = vmatpush1.msra.mxu0 0.0
  %6560 = vmatprep.subr.mxu0 0.0
  %6561 = vmatpush1.msra.mxu0 0.0
  %6562 = vmatprep.subr.mxu0 0.0
  %6563 = vmatpush1.msra.mxu0 0.0
  %6564 = vmatprep.subr.mxu0 0.0
  %6565 = vmatpush1.msra.mxu0 0.0
  %6566 = vmatprep.subr.mxu0 0.0
  %6567 = vmatpush1.msra.mxu0 0.0
  %6568 = vmatprep.subr.mxu0 0.0
  %6569 = vmatpush1.msra.mxu0 0.0
  %6570 = vmatprep.subr.mxu0 0.0
  %6571 = vmatpush1.msra.mxu0 0.0
  %6572 = vmatprep.subr.mxu0 0.0
  %6573 = vmatpush1.msra.mxu0 0.0
  %6574 = vmatprep.subr.mxu0 0.0
  %6575 = vmatpush1.msra.mxu0 0.0
  %6576 = vmatprep.subr.mxu0 0.0
  %6577 = vmatpush1.msra.mxu0 0.0
  %6578 = vmatprep.subr.mxu0 0.0
  %6579 = vmatpush1.msra.mxu0 0.0
  %6580 = vmatprep.subr.mxu0 0.0
  %6581 = vmatpush1.msra.mxu0 0.0
  %6582 = vmatprep.subr.mxu0 0.0
  %6583 = vmatpush1.msra.mxu0 0.0
  %6584 = vmatprep.subr.mxu0 %v6544
  %6585 = vmatpush1.msra.mxu0 %v6543
  %6586 = vmatprep.subr.mxu0 0.0
  %6587 = vmatpush2.msra.mxu0 0.0
  %6588 = vmatprep.subr.mxu0 0.0
  %6589 = vmatpush2.msra.mxu0 0.0
  %6590 = vmatprep.subr.mxu0 0.0
  %6591 = vmatpush2.msra.mxu0 0.0
  %6592 = vmatprep.subr.mxu0 0.0
  %6593 = vmatpush2.msra.mxu0 0.0
  %6594 = vmatprep.subr.mxu0 0.0
  %6595 = vmatpush2.msra.mxu0 0.0
  %6596 = vmatprep.subr.mxu0 0.0
  %6597 = vmatpush2.msra.mxu0 0.0
  %6598 = vmatprep.subr.mxu0 0.0
  %6599 = vmatpush2.msra.mxu0 0.0
  %6600 = vmatprep.subr.mxu0 0.0
  %6601 = vmatpush2.msra.mxu0 0.0
  %6602 = vmatprep.subr.mxu0 0.0
  %6603 = vmatpush2.msra.mxu0 0.0
  %6604 = vmatprep.subr.mxu0 0.0
  %6605 = vmatpush2.msra.mxu0 0.0
  %6606 = vmatprep.subr.mxu0 0.0
  %6607 = vmatpush2.msra.mxu0 0.0
  %6608 = vmatprep.subr.mxu0 0.0
  %6609 = vmatpush2.msra.mxu0 0.0
  %6610 = vmatprep.subr.mxu0 0.0
  %6611 = vmatpush2.msra.mxu0 0.0
  %6612 = vmatprep.subr.mxu0 0.0
  %6613 = vmatpush2.msra.mxu0 0.0
  %6614 = vmatprep.subr.mxu0 0.0
  %6615 = vmatpush2.msra.mxu0 0.0
  %6616 = vmatprep.subr.mxu0 0.0
  %6617 = vmatpush2.msra.mxu0 0.0
  %6618 = vmatprep.mubr.f32.mxu0 0.0
  %6619 = vmatmul.mubr.f32.gmra.mxu0 %v6552
  %v6620 = vpop.f32.mrf.mxu0
  %v6621 = vadd.f32 0.0, %v6620
  %v6622 = vpop.f32.mrf.mxu0
  %v6623 = vadd.f32 0.0, %v6622
  %6624 = vdwg.mxu0
  %6625 = vmatprep.subr.mxu0 0.0
  %6626 = vmatpush1.msra.mxu0 0.0
  %6627 = vmatprep.subr.mxu0 0.0
  %6628 = vmatpush1.msra.mxu0 0.0
  %6629 = vmatprep.subr.mxu0 0.0
  %6630 = vmatpush1.msra.mxu0 0.0
  %6631 = vmatprep.subr.mxu0 0.0
  %6632 = vmatpush1.msra.mxu0 0.0
  %6633 = vmatprep.subr.mxu0 0.0
  %6634 = vmatpush1.msra.mxu0 0.0
  %6635 = vmatprep.subr.mxu0 0.0
  %6636 = vmatpush1.msra.mxu0 0.0
  %6637 = vmatprep.subr.mxu0 0.0
  %6638 = vmatpush1.msra.mxu0 0.0
  %6639 = vmatprep.subr.mxu0 0.0
  %6640 = vmatpush1.msra.mxu0 0.0
  %6641 = vmatprep.subr.mxu0 0.0
  %6642 = vmatpush1.msra.mxu0 0.0
  %6643 = vmatprep.subr.mxu0 0.0
  %6644 = vmatpush1.msra.mxu0 0.0
  %6645 = vmatprep.subr.mxu0 0.0
  %6646 = vmatpush1.msra.mxu0 0.0
  %6647 = vmatprep.subr.mxu0 0.0
  %6648 = vmatpush1.msra.mxu0 0.0
  %6649 = vmatprep.subr.mxu0 0.0
  %6650 = vmatpush1.msra.mxu0 0.0
  %6651 = vmatprep.subr.mxu0 0.0
  %6652 = vmatpush1.msra.mxu0 0.0
  %6653 = vmatprep.subr.mxu0 0.0
  %6654 = vmatpush1.msra.mxu0 0.0
  %6655 = vmatprep.subr.mxu0 %v6546
  %6656 = vmatpush1.msra.mxu0 %v6545
  %6657 = vmatprep.subr.mxu0 0.0
  %6658 = vmatpush2.msra.mxu0 0.0
  %6659 = vmatprep.subr.mxu0 0.0
  %6660 = vmatpush2.msra.mxu0 0.0
  %6661 = vmatprep.subr.mxu0 0.0
  %6662 = vmatpush2.msra.mxu0 0.0
  %6663 = vmatprep.subr.mxu0 0.0
  %6664 = vmatpush2.msra.mxu0 0.0
  %6665 = vmatprep.subr.mxu0 0.0
  %6666 = vmatpush2.msra.mxu0 0.0
  %6667 = vmatprep.subr.mxu0 0.0
  %6668 = vmatpush2.msra.mxu0 0.0
  %6669 = vmatprep.subr.mxu0 0.0
  %6670 = vmatpush2.msra.mxu0 0.0
  %6671 = vmatprep.subr.mxu0 0.0
  %6672 = vmatpush2.msra.mxu0 0.0
  %6673 = vmatprep.subr.mxu0 0.0
  %6674 = vmatpush2.msra.mxu0 0.0
  %6675 = vmatprep.subr.mxu0 0.0
  %6676 = vmatpush2.msra.mxu0 0.0
  %6677 = vmatprep.subr.mxu0 0.0
  %6678 = vmatpush2.msra.mxu0 0.0
  %6679 = vmatprep.subr.mxu0 0.0
  %6680 = vmatpush2.msra.mxu0 0.0
  %6681 = vmatprep.subr.mxu0 0.0
  %6682 = vmatpush2.msra.mxu0 0.0
  %6683 = vmatprep.subr.mxu0 0.0
  %6684 = vmatpush2.msra.mxu0 0.0
  %6685 = vmatprep.subr.mxu0 0.0
  %6686 = vmatpush2.msra.mxu0 0.0
  %6687 = vmatprep.subr.mxu0 0.0
  %6688 = vmatpush2.msra.mxu0 0.0
  %6689 = vmatprep.mubr.f32.mxu0 0.0
  %6690 = vmatmul.mubr.f32.gmra.mxu0 %v6552
  %v6691 = vpop.f32.mrf.mxu0
  %v6692 = vadd.f32 0.0, %v6691
  %v6693 = vpop.f32.mrf.mxu0
  %v6694 = vadd.f32 0.0, %v6693
  %6695 = vdwg.mxu0
  %v6696 = vadd.f32 %v6523, %v6621
  %v6697 = vadd.f32 %v6524, %v6623
  %v6698 = vadd.f32 %v6525, %v6692
  %v6699 = vadd.f32 %v6526, %v6694
  %v6700 = vmul.f32 %v6150, %v5613
  %v6701 = vmul.f32 %v6151, %v5620
  %v6702 = vmul.f32 %v6152, %v5621
  %v6703 = vmul.f32 %v6153, %v5622
  %v6704 = vmul.f32 %v6154, %v5619
  %v6705 = vld [vmem:[%s1561] sm:$0xff]
  %6711 = vrot.lane.b32.xlu0 %v6700, 63
  %v6712 = vpop.permute.xlu0 %6711
  %6713 = vrot.lane.b32.xlu0 %v6701, 63
  %v6714 = vpop.permute.xlu0 %6713
  %6715 = vrot.lane.b32.xlu0 %v6702, 63
  %v6716 = vpop.permute.xlu0 %6715
  %6717 = vrot.lane.b32.xlu0 %v6703, 63
  %v6718 = vpop.permute.xlu0 %6717
  %6719 = vrot.lane.b32.xlu0 %v6704, 63
  %v6720 = vpop.permute.xlu0 %6719
  %v6721 = vsel %vm85, %v6712, %v6714
  %v6722 = vsel %vm85, %v6714, %v6716
  %v6723 = vsel %vm85, %v6716, %v6718
  %v6724 = vsel %vm85, %v6718, %v6720
  %v6730 = vsel %vm126, %v6705, 0
  %6732 = vmatprep.subr.mxu0 0.0
  %6733 = vmatpush1.msra.mxu0 0.0
  %6734 = vmatprep.subr.mxu0 0.0
  %6735 = vmatpush1.msra.mxu0 0.0
  %6736 = vmatprep.subr.mxu0 0.0
  %6737 = vmatpush1.msra.mxu0 0.0
  %6738 = vmatprep.subr.mxu0 0.0
  %6739 = vmatpush1.msra.mxu0 0.0
  %6740 = vmatprep.subr.mxu0 0.0
  %6741 = vmatpush1.msra.mxu0 0.0
  %6742 = vmatprep.subr.mxu0 0.0
  %6743 = vmatpush1.msra.mxu0 0.0
  %6744 = vmatprep.subr.mxu0 0.0
  %6745 = vmatpush1.msra.mxu0 0.0
  %6746 = vmatprep.subr.mxu0 0.0
  %6747 = vmatpush1.msra.mxu0 0.0
  %6748 = vmatprep.subr.mxu0 0.0
  %6749 = vmatpush1.msra.mxu0 0.0
  %6750 = vmatprep.subr.mxu0 0.0
  %6751 = vmatpush1.msra.mxu0 0.0
  %6752 = vmatprep.subr.mxu0 0.0
  %6753 = vmatpush1.msra.mxu0 0.0
  %6754 = vmatprep.subr.mxu0 0.0
  %6755 = vmatpush1.msra.mxu0 0.0
  %6756 = vmatprep.subr.mxu0 0.0
  %6757 = vmatpush1.msra.mxu0 0.0
  %6758 = vmatprep.subr.mxu0 0.0
  %6759 = vmatpush1.msra.mxu0 0.0
  %6760 = vmatprep.subr.mxu0 0.0
  %6761 = vmatpush1.msra.mxu0 0.0
  %6762 = vmatprep.subr.mxu0 %v6722
  %6763 = vmatpush1.msra.mxu0 %v6721
  %6764 = vmatprep.subr.mxu0 0.0
  %6765 = vmatpush2.msra.mxu0 0.0
  %6766 = vmatprep.subr.mxu0 0.0
  %6767 = vmatpush2.msra.mxu0 0.0
  %6768 = vmatprep.subr.mxu0 0.0
  %6769 = vmatpush2.msra.mxu0 0.0
  %6770 = vmatprep.subr.mxu0 0.0
  %6771 = vmatpush2.msra.mxu0 0.0
  %6772 = vmatprep.subr.mxu0 0.0
  %6773 = vmatpush2.msra.mxu0 0.0
  %6774 = vmatprep.subr.mxu0 0.0
  %6775 = vmatpush2.msra.mxu0 0.0
  %6776 = vmatprep.subr.mxu0 0.0
  %6777 = vmatpush2.msra.mxu0 0.0
  %6778 = vmatprep.subr.mxu0 0.0
  %6779 = vmatpush2.msra.mxu0 0.0
  %6780 = vmatprep.subr.mxu0 0.0
  %6781 = vmatpush2.msra.mxu0 0.0
  %6782 = vmatprep.subr.mxu0 0.0
  %6783 = vmatpush2.msra.mxu0 0.0
  %6784 = vmatprep.subr.mxu0 0.0
  %6785 = vmatpush2.msra.mxu0 0.0
  %6786 = vmatprep.subr.mxu0 0.0
  %6787 = vmatpush2.msra.mxu0 0.0
  %6788 = vmatprep.subr.mxu0 0.0
  %6789 = vmatpush2.msra.mxu0 0.0
  %6790 = vmatprep.subr.mxu0 0.0
  %6791 = vmatpush2.msra.mxu0 0.0
  %6792 = vmatprep.subr.mxu0 0.0
  %6793 = vmatpush2.msra.mxu0 0.0
  %6794 = vmatprep.subr.mxu0 0.0
  %6795 = vmatpush2.msra.mxu0 0.0
  %6796 = vmatprep.mubr.f32.mxu0 0.0
  %6797 = vmatmul.mubr.f32.gmra.mxu0 %v6730
  %v6798 = vpop.f32.mrf.mxu0
  %v6799 = vadd.f32 0.0, %v6798
  %v6800 = vpop.f32.mrf.mxu0
  %v6801 = vadd.f32 0.0, %v6800
  %6802 = vdwg.mxu0
  %6803 = vmatprep.subr.mxu0 0.0
  %6804 = vmatpush1.msra.mxu0 0.0
  %6805 = vmatprep.subr.mxu0 0.0
  %6806 = vmatpush1.msra.mxu0 0.0
  %6807 = vmatprep.subr.mxu0 0.0
  %6808 = vmatpush1.msra.mxu0 0.0
  %6809 = vmatprep.subr.mxu0 0.0
  %6810 = vmatpush1.msra.mxu0 0.0
  %6811 = vmatprep.subr.mxu0 0.0
  %6812 = vmatpush1.msra.mxu0 0.0
  %6813 = vmatprep.subr.mxu0 0.0
  %6814 = vmatpush1.msra.mxu0 0.0
  %6815 = vmatprep.subr.mxu0 0.0
  %6816 = vmatpush1.msra.mxu0 0.0
  %6817 = vmatprep.subr.mxu0 0.0
  %6818 = vmatpush1.msra.mxu0 0.0
  %6819 = vmatprep.subr.mxu0 0.0
  %6820 = vmatpush1.msra.mxu0 0.0
  %6821 = vmatprep.subr.mxu0 0.0
  %6822 = vmatpush1.msra.mxu0 0.0
  %6823 = vmatprep.subr.mxu0 0.0
  %6824 = vmatpush1.msra.mxu0 0.0
  %6825 = vmatprep.subr.mxu0 0.0
  %6826 = vmatpush1.msra.mxu0 0.0
  %6827 = vmatprep.subr.mxu0 0.0
  %6828 = vmatpush1.msra.mxu0 0.0
  %6829 = vmatprep.subr.mxu0 0.0
  %6830 = vmatpush1.msra.mxu0 0.0
  %6831 = vmatprep.subr.mxu0 0.0
  %6832 = vmatpush1.msra.mxu0 0.0
  %6833 = vmatprep.subr.mxu0 %v6724
  %6834 = vmatpush1.msra.mxu0 %v6723
  %6835 = vmatprep.subr.mxu0 0.0
  %6836 = vmatpush2.msra.mxu0 0.0
  %6837 = vmatprep.subr.mxu0 0.0
  %6838 = vmatpush2.msra.mxu0 0.0
  %6839 = vmatprep.subr.mxu0 0.0
  %6840 = vmatpush2.msra.mxu0 0.0
  %6841 = vmatprep.subr.mxu0 0.0
  %6842 = vmatpush2.msra.mxu0 0.0
  %6843 = vmatprep.subr.mxu0 0.0
  %6844 = vmatpush2.msra.mxu0 0.0
  %6845 = vmatprep.subr.mxu0 0.0
  %6846 = vmatpush2.msra.mxu0 0.0
  %6847 = vmatprep.subr.mxu0 0.0
  %6848 = vmatpush2.msra.mxu0 0.0
  %6849 = vmatprep.subr.mxu0 0.0
  %6850 = vmatpush2.msra.mxu0 0.0
  %6851 = vmatprep.subr.mxu0 0.0
  %6852 = vmatpush2.msra.mxu0 0.0
  %6853 = vmatprep.subr.mxu0 0.0
  %6854 = vmatpush2.msra.mxu0 0.0
  %6855 = vmatprep.subr.mxu0 0.0
  %6856 = vmatpush2.msra.mxu0 0.0
  %6857 = vmatprep.subr.mxu0 0.0
  %6858 = vmatpush2.msra.mxu0 0.0
  %6859 = vmatprep.subr.mxu0 0.0
  %6860 = vmatpush2.msra.mxu0 0.0
  %6861 = vmatprep.subr.mxu0 0.0
  %6862 = vmatpush2.msra.mxu0 0.0
  %6863 = vmatprep.subr.mxu0 0.0
  %6864 = vmatpush2.msra.mxu0 0.0
  %6865 = vmatprep.subr.mxu0 0.0
  %6866 = vmatpush2.msra.mxu0 0.0
  %6867 = vmatprep.mubr.f32.mxu0 0.0
  %6868 = vmatmul.mubr.f32.gmra.mxu0 %v6730
  %v6869 = vpop.f32.mrf.mxu0
  %v6870 = vadd.f32 0.0, %v6869
  %v6871 = vpop.f32.mrf.mxu0
  %v6872 = vadd.f32 0.0, %v6871
  %6873 = vdwg.mxu0
  %v6874 = vadd.f32 %v6696, %v6799
  %v6875 = vadd.f32 %v6697, %v6801
  %v6876 = vadd.f32 %v6698, %v6870
  %v6877 = vadd.f32 %v6699, %v6872
  %6878 = vst [vmem:[%s5 + $0x60] sm:$0xff] %v6874
  %6879 = vst [vmem:[%s5 + $0x68] sm:$0xff] %v6875
  %6880 = vst [vmem:[%s5 + $0x70] sm:$0xff] %v6876
  %6881 = vst [vmem:[%s5 + $0x78] sm:$0xff] %v6877
  %v6886 = vcombine.low %v6874, %v6875
  %v6887 = vcombine.high %v6874, %v6875
  %v6888 = vcombine.low %v6876, %v6877
  %v6889 = vcombine.high %v6876, %v6877
  %v6894 = vcombine.high %v6886, %v6886
  %v6895 = vcombine.high %v6888, %v6888
  %v6896 = vcombine.high %v6887, %v6887
  %v6897 = vcombine.high %v6889, %v6889
  %v6902 = vsel %vm1759, %v6886, 0.0
  %v6903 = vsel %vm1759, %v6894, 0.0
  %v6904 = vadd.f32 %v6902, %v6903
  %v6905 = vsel %vm1759, %v6888, 0.0
  %v6906 = vadd.f32 %v6904, %v6905
  %v6907 = vsel %vm1759, %v6895, 0.0
  %v6908 = vadd.f32 %v6906, %v6907
  %6909 = vadd.xlane.f32.xlu0 %v6908
  %v6910 = vpop.xlane.xlu0 %6909
  %v6911 = vsel %vm1759, %v6887, 0.0
  %v6912 = vsel %vm1759, %v6896, 0.0
  %v6913 = vadd.f32 %v6911, %v6912
  %v6914 = vsel %vm1759, %v6889, 0.0
  %v6915 = vadd.f32 %v6913, %v6914
  %v6916 = vsel %vm1759, %v6897, 0.0
  %v6917 = vadd.f32 %v6915, %v6916
  %6918 = vadd.xlane.f32.xlu0 %v6917
  %v6919 = vpop.xlane.xlu0 %6918
  %v6920 = vsel %vm1759, %v6910, 0.0
  %v6921 = vsel %vm1759, %v6919, 0.0
  %v6922 = vadd.f32 %v6920, %v6921
  %v6923 = vadd.f32 %v5209, %v6922
  %v6924 = vmul.f32 %v6923, 0.00024414063
  %v6925 = vld [vmem:[%s5] sm:$0xff]
  %v6926 = vld [vmem:[%s5 + $0x8] sm:$0xff]
  %v6927 = vld [vmem:[%s5 + $0x10] sm:$0xff]
  %v6928 = vld [vmem:[%s5 + $0x18] sm:$0xff]
  %v6933 = vcombine.low %v6925, %v6926
  %v6934 = vcombine.high %v6925, %v6926
  %v6935 = vcombine.low %v6927, %v6928
  %v6936 = vcombine.high %v6927, %v6928
  %v6943 = vunpack.c.l.s4 839922192
  %v6944 = vunpack.c.0.s8 %v6943
  %v6945 = vlaneseq
  %v6946 = vshrl.u32 %v6945, 7
  %v6947 = vsub.s32 %v6944, %v6946
  %v6948 = vrot.slane %v6924, %v6947
  %v6950 = vsub.f32 %v6933, %v6948
  %v6951 = vsub.f32 %v6935, %v6948
  %v6952 = vsub.f32 %v6934, %v6948
  %v6953 = vsub.f32 %v6936, %v6948
  %v6954 = vmul.f32 %v6950, %v6950
  %v6955 = vmul.f32 %v6951, %v6951
  %v6956 = vmul.f32 %v6952, %v6952
  %v6957 = vmul.f32 %v6953, %v6953
  %v6962 = vcombine.high %v6954, %v6954
  %v6963 = vcombine.high %v6955, %v6955
  %v6964 = vcombine.high %v6956, %v6956
  %v6965 = vcombine.high %v6957, %v6957
  %v6970 = vsel %vm1759, %v6954, 0.0
  %v6971 = vsel %vm1759, %v6962, 0.0
  %v6972 = vadd.f32 %v6970, %v6971
  %v6973 = vsel %vm1759, %v6955, 0.0
  %v6974 = vadd.f32 %v6972, %v6973
  %v6975 = vsel %vm1759, %v6963, 0.0
  %v6976 = vadd.f32 %v6974, %v6975
  %6977 = vadd.xlane.f32.xlu0 %v6976
  %v6978 = vpop.xlane.xlu0 %6977
  %v6979 = vsel %vm1759, %v6956, 0.0
  %v6980 = vsel %vm1759, %v6964, 0.0
  %v6981 = vadd.f32 %v6979, %v6980
  %v6982 = vsel %vm1759, %v6957, 0.0
  %v6983 = vadd.f32 %v6981, %v6982
  %v6984 = vsel %vm1759, %v6965, 0.0
  %v6985 = vadd.f32 %v6983, %v6984
  %6986 = vadd.xlane.f32.xlu0 %v6985
  %v6987 = vpop.xlane.xlu0 %6986
  %v6988 = vsel %vm1759, %v6978, 0.0
  %v6989 = vsel %vm1759, %v6987, 0.0
  %v6990 = vadd.f32 %v6988, %v6989
  %v6991 = vadd.f32 %v6990, 0.0
  %v6992 = vld [vmem:[%s5 + $0x20] sm:$0xff]
  %v6993 = vld [vmem:[%s5 + $0x28] sm:$0xff]
  %v6994 = vld [vmem:[%s5 + $0x30] sm:$0xff]
  %v6995 = vld [vmem:[%s5 + $0x38] sm:$0xff]
  %v7000 = vcombine.low %v6992, %v6993
  %v7001 = vcombine.high %v6992, %v6993
  %v7002 = vcombine.low %v6994, %v6995
  %v7003 = vcombine.high %v6994, %v6995
  %v7008 = vsub.f32 %v7000, %v6948
  %v7009 = vsub.f32 %v7002, %v6948
  %v7010 = vsub.f32 %v7001, %v6948
  %v7011 = vsub.f32 %v7003, %v6948
  %v7012 = vmul.f32 %v7008, %v7008
  %v7013 = vmul.f32 %v7009, %v7009
  %v7014 = vmul.f32 %v7010, %v7010
  %v7015 = vmul.f32 %v7011, %v7011
  %v7020 = vcombine.high %v7012, %v7012
  %v7021 = vcombine.high %v7013, %v7013
  %v7022 = vcombine.high %v7014, %v7014
  %v7023 = vcombine.high %v7015, %v7015
  %v7028 = vsel %vm1759, %v7012, 0.0
  %v7029 = vsel %vm1759, %v7020, 0.0
  %v7030 = vadd.f32 %v7028, %v7029
  %v7031 = vsel %vm1759, %v7013, 0.0
  %v7032 = vadd.f32 %v7030, %v7031
  %v7033 = vsel %vm1759, %v7021, 0.0
  %v7034 = vadd.f32 %v7032, %v7033
  %7035 = vadd.xlane.f32.xlu0 %v7034
  %v7036 = vpop.xlane.xlu0 %7035
  %v7037 = vsel %vm1759, %v7014, 0.0
  %v7038 = vsel %vm1759, %v7022, 0.0
  %v7039 = vadd.f32 %v7037, %v7038
  %v7040 = vsel %vm1759, %v7015, 0.0
  %v7041 = vadd.f32 %v7039, %v7040
  %v7042 = vsel %vm1759, %v7023, 0.0
  %v7043 = vadd.f32 %v7041, %v7042
  %7044 = vadd.xlane.f32.xlu0 %v7043
  %v7045 = vpop.xlane.xlu0 %7044
  %v7046 = vsel %vm1759, %v7036, 0.0
  %v7047 = vsel %vm1759, %v7045, 0.0
  %v7048 = vadd.f32 %v7046, %v7047
  %v7049 = vadd.f32 %v6991, %v7048
  %v7050 = vld [vmem:[%s5 + $0x40] sm:$0xff]
  %v7051 = vld [vmem:[%s5 + $0x48] sm:$0xff]
  %v7052 = vld [vmem:[%s5 + $0x50] sm:$0xff]
  %v7053 = vld [vmem:[%s5 + $0x58] sm:$0xff]
  %v7058 = vcombine.low %v7050, %v7051
  %v7059 = vcombine.high %v7050, %v7051
  %v7060 = vcombine.low %v7052, %v7053
  %v7061 = vcombine.high %v7052, %v7053
  %v7066 = vsub.f32 %v7058, %v6948
  %v7067 = vsub.f32 %v7060, %v6948
  %v7068 = vsub.f32 %v7059, %v6948
  %v7069 = vsub.f32 %v7061, %v6948
  %v7070 = vmul.f32 %v7066, %v7066
  %v7071 = vmul.f32 %v7067, %v7067
  %v7072 = vmul.f32 %v7068, %v7068
  %v7073 = vmul.f32 %v7069, %v7069
  %v7078 = vcombine.high %v7070, %v7070
  %v7079 = vcombine.high %v7071, %v7071
  %v7080 = vcombine.high %v7072, %v7072
  %v7081 = vcombine.high %v7073, %v7073
  %v7086 = vsel %vm1759, %v7070, 0.0
  %v7087 = vsel %vm1759, %v7078, 0.0
  %v7088 = vadd.f32 %v7086, %v7087
  %v7089 = vsel %vm1759, %v7071, 0.0
  %v7090 = vadd.f32 %v7088, %v7089
  %v7091 = vsel %vm1759, %v7079, 0.0
  %v7092 = vadd.f32 %v7090, %v7091
  %7093 = vadd.xlane.f32.xlu0 %v7092
  %v7094 = vpop.xlane.xlu0 %7093
  %v7095 = vsel %vm1759, %v7072, 0.0
  %v7096 = vsel %vm1759, %v7080, 0.0
  %v7097 = vadd.f32 %v7095, %v7096
  %v7098 = vsel %vm1759, %v7073, 0.0
  %v7099 = vadd.f32 %v7097, %v7098
  %v7100 = vsel %vm1759, %v7081, 0.0
  %v7101 = vadd.f32 %v7099, %v7100
  %7102 = vadd.xlane.f32.xlu0 %v7101
  %v7103 = vpop.xlane.xlu0 %7102
  %v7104 = vsel %vm1759, %v7094, 0.0
  %v7105 = vsel %vm1759, %v7103, 0.0
  %v7106 = vadd.f32 %v7104, %v7105
  %v7107 = vadd.f32 %v7049, %v7106
  %v7108 = vld [vmem:[%s5 + $0x60] sm:$0xff]
  %v7109 = vld [vmem:[%s5 + $0x68] sm:$0xff]
  %v7110 = vld [vmem:[%s5 + $0x70] sm:$0xff]
  %v7111 = vld [vmem:[%s5 + $0x78] sm:$0xff]
  %v7116 = vcombine.low %v7108, %v7109
  %v7117 = vcombine.high %v7108, %v7109
  %v7118 = vcombine.low %v7110, %v7111
  %v7119 = vcombine.high %v7110, %v7111
  %v7124 = vsub.f32 %v7116, %v6948
  %v7125 = vsub.f32 %v7118, %v6948
  %v7126 = vsub.f32 %v7117, %v6948
  %v7127 = vsub.f32 %v7119, %v6948
  %v7128 = vmul.f32 %v7124, %v7124
  %v7129 = vmul.f32 %v7125, %v7125
  %v7130 = vmul.f32 %v7126, %v7126
  %v7131 = vmul.f32 %v7127, %v7127
  %v7136 = vcombine.high %v7128, %v7128
  %v7137 = vcombine.high %v7129, %v7129
  %v7138 = vcombine.high %v7130, %v7130
  %v7139 = vcombine.high %v7131, %v7131
  %v7144 = vsel %vm1759, %v7128, 0.0
  %v7145 = vsel %vm1759, %v7136, 0.0
  %v7146 = vadd.f32 %v7144, %v7145
  %v7147 = vsel %vm1759, %v7129, 0.0
  %v7148 = vadd.f32 %v7146, %v7147
  %v7149 = vsel %vm1759, %v7137, 0.0
  %v7150 = vadd.f32 %v7148, %v7149
  %7151 = vadd.xlane.f32.xlu0 %v7150
  %v7152 = vpop.xlane.xlu0 %7151
  %v7153 = vsel %vm1759, %v7130, 0.0
  %v7154 = vsel %vm1759, %v7138, 0.0
  %v7155 = vadd.f32 %v7153, %v7154
  %v7156 = vsel %vm1759, %v7131, 0.0
  %v7157 = vadd.f32 %v7155, %v7156
  %v7158 = vsel %vm1759, %v7139, 0.0
  %v7159 = vadd.f32 %v7157, %v7158
  %7160 = vadd.xlane.f32.xlu0 %v7159
  %v7161 = vpop.xlane.xlu0 %7160
  %v7162 = vsel %vm1759, %v7152, 0.0
  %v7163 = vsel %vm1759, %v7161, 0.0
  %v7164 = vadd.f32 %v7162, %v7163
  %v7165 = vadd.f32 %v7107, %v7164
  %v7166 = vmul.f32 %v7165, 0.00024414063
  %v7167 = vadd.f32 %v7166, 1e-05
  %v7168 = vrsqrt.pop %v7167
  %v7169 = vld [vmem:[%s3] sm:$0xf]
  %v7170 = vmul.f32 %v7168, %v7169
  %v7171 = vld [vmem:[%s4] sm:$0xf]
  %v7172 = vmul.f32 %v6924, %v7170
  %v7173 = vsub.f32 %v7171, %v7172
  %7175 = vset.pattern.permute.xlu0 0
  %7176 = vperm.xlu0 %7175, %v7170
  %v7177 = vpop.permute.xlu0 %7176
  %v7179 = vunpack.c.l.s4 839922192
  %v7180 = vunpack.c.0.s8 %v7179
  %v7181 = vlaneseq
  %v7182 = vshrl.u32 %v7181, 7
  %v7183 = vsub.s32 %v7180, %v7182
  %v7184 = vrot.slane %v7177, %v7183
  %v7186 = vmul.f32 %v6933, %v7184
  %v7187 = vmul.f32 %v6935, %v7184
  %v7188 = vmul.f32 %v6934, %v7184
  %v7189 = vmul.f32 %v6936, %v7184
  %7191 = vset.pattern.permute.xlu0 0
  %7192 = vperm.xlu0 %7191, %v7173
  %v7193 = vpop.permute.xlu0 %7192
  %v7195 = vunpack.c.l.s4 839922192
  %v7196 = vunpack.c.0.s8 %v7195
  %v7197 = vlaneseq
  %v7198 = vshrl.u32 %v7197, 7
  %v7199 = vsub.s32 %v7196, %v7198
  %v7200 = vrot.slane %v7193, %v7199
  %v7202 = vadd.f32 %v7186, %v7200
  %v7203 = vadd.f32 %v7187, %v7200
  %v7204 = vadd.f32 %v7188, %v7200
  %v7205 = vadd.f32 %v7189, %v7200
  %v7210 = vcombine.low %v7202, %v7204
  %v7211 = vcombine.high %v7202, %v7204
  %v7212 = vcombine.low %v7203, %v7205
  %v7213 = vcombine.high %v7203, %v7205
  %7218 = vst [vmem:[%s5] sm:$0xff] %v7210
  %7219 = vst [vmem:[%s5 + $0x8] sm:$0xff] %v7211
  %7220 = vst [vmem:[%s5 + $0x10] sm:$0xff] %v7212
  %7221 = vst [vmem:[%s5 + $0x18] sm:$0xff] %v7213
  %v7222 = vld [vmem:[%s5 + $0x20] sm:$0xff]
  %v7223 = vld [vmem:[%s5 + $0x28] sm:$0xff]
  %v7224 = vld [vmem:[%s5 + $0x30] sm:$0xff]
  %v7225 = vld [vmem:[%s5 + $0x38] sm:$0xff]
  %v7230 = vcombine.low %v7222, %v7223
  %v7231 = vcombine.high %v7222, %v7223
  %v7232 = vcombine.low %v7224, %v7225
  %v7233 = vcombine.high %v7224, %v7225
  %v7238 = vmul.f32 %v7230, %v7184
  %v7239 = vmul.f32 %v7232, %v7184
  %v7240 = vmul.f32 %v7231, %v7184
  %v7241 = vmul.f32 %v7233, %v7184
  %v7242 = vadd.f32 %v7238, %v7200
  %v7243 = vadd.f32 %v7239, %v7200
  %v7244 = vadd.f32 %v7240, %v7200
  %v7245 = vadd.f32 %v7241, %v7200
  %v7250 = vcombine.low %v7242, %v7244
  %v7251 = vcombine.high %v7242, %v7244
  %v7252 = vcombine.low %v7243, %v7245
  %v7253 = vcombine.high %v7243, %v7245
  %7258 = vst [vmem:[%s5 + $0x20] sm:$0xff] %v7250
  %7259 = vst [vmem:[%s5 + $0x28] sm:$0xff] %v7251
  %7260 = vst [vmem:[%s5 + $0x30] sm:$0xff] %v7252
  %7261 = vst [vmem:[%s5 + $0x38] sm:$0xff] %v7253
  %v7262 = vld [vmem:[%s5 + $0x40] sm:$0xff]
  %v7263 = vld [vmem:[%s5 + $0x48] sm:$0xff]
  %v7264 = vld [vmem:[%s5 + $0x50] sm:$0xff]
  %v7265 = vld [vmem:[%s5 + $0x58] sm:$0xff]
  %v7270 = vcombine.low %v7262, %v7263
  %v7271 = vcombine.high %v7262, %v7263
  %v7272 = vcombine.low %v7264, %v7265
  %v7273 = vcombine.high %v7264, %v7265
  %v7278 = vmul.f32 %v7270, %v7184
  %v7279 = vmul.f32 %v7272, %v7184
  %v7280 = vmul.f32 %v7271, %v7184
  %v7281 = vmul.f32 %v7273, %v7184
  %v7282 = vadd.f32 %v7278, %v7200
  %v7283 = vadd.f32 %v7279, %v7200
  %v7284 = vadd.f32 %v7280, %v7200
  %v7285 = vadd.f32 %v7281, %v7200
  %v7290 = vcombine.low %v7282, %v7284
  %v7291 = vcombine.high %v7282, %v7284
  %v7292 = vcombine.low %v7283, %v7285
  %v7293 = vcombine.high %v7283, %v7285
  %7298 = vst [vmem:[%s5 + $0x40] sm:$0xff] %v7290
  %7299 = vst [vmem:[%s5 + $0x48] sm:$0xff] %v7291
  %7300 = vst [vmem:[%s5 + $0x50] sm:$0xff] %v7292
  %7301 = vst [vmem:[%s5 + $0x58] sm:$0xff] %v7293
  %v7302 = vld [vmem:[%s5 + $0x60] sm:$0xff]
  %v7303 = vld [vmem:[%s5 + $0x68] sm:$0xff]
  %v7304 = vld [vmem:[%s5 + $0x70] sm:$0xff]
  %v7305 = vld [vmem:[%s5 + $0x78] sm:$0xff]
  %v7310 = vcombine.low %v7302, %v7303
  %v7311 = vcombine.high %v7302, %v7303
  %v7312 = vcombine.low %v7304, %v7305
  %v7313 = vcombine.high %v7304, %v7305
  %v7318 = vmul.f32 %v7310, %v7184
  %v7319 = vmul.f32 %v7312, %v7184
  %v7320 = vmul.f32 %v7311, %v7184
  %v7321 = vmul.f32 %v7313, %v7184
  %v7322 = vadd.f32 %v7318, %v7200
  %v7323 = vadd.f32 %v7319, %v7200
  %v7324 = vadd.f32 %v7320, %v7200
  %v7325 = vadd.f32 %v7321, %v7200
  %v7330 = vcombine.low %v7322, %v7324
  %v7331 = vcombine.high %v7322, %v7324
  %v7332 = vcombine.low %v7323, %v7325
  %v7333 = vcombine.high %v7323, %v7325
  %7338 = vst [vmem:[%s5 + $0x60] sm:$0xff] %v7330
  %7339 = vst [vmem:[%s5 + $0x68] sm:$0xff] %v7331
  %7340 = vst [vmem:[%s5 + $0x70] sm:$0xff] %v7332
  %7341 = vst [vmem:[%s5 + $0x78] sm:$0xff] %v7333
  // Predicated region
  $region22: #{c2eb_forward.3} parent=0 // pred_check
    _
  $region23: #{c2eb_forward.3} parent=0 // pred_check_branch
    %7343 = sbr.rel (0) target = $region25
  $region24: #{c2eb_forward.3} parent=0 // pred_region
    _
  $region25: #{c2eb_forward.3} parent=0 // pred_fallthru
    _
  // Predicated region
  $region26: #{c2eb_forward.3} parent=0 // pred_check
    _
  $region27: #{c2eb_forward.3} parent=0 // pred_check_branch
    %7345 = sbr.rel (0) target = $region29
  $region28: #{c2eb_forward.3} parent=0 // pred_region
    _
  $region29: #{c2eb_forward.3} parent=0 // pred_fallthru
    _

</llo_original>
